<compile_context>
chip_gen: v7x
topology: tpu7x:2x2x1
jax: 0.10.0
libtpu: 0.0.40
codegen_flags: <defaults>
</compile_context>

<pallas_src>
import functools

import jax
import jax.numpy as jnp
from jax.experimental import pallas as pl
from jax.experimental.pallas import tpu as pltpu

HIDDEN = 51        # logical hidden size (PyTorch model)
HP = 128           # per-gate padded width (one full lane group)
INPUT_SIZE = 1


def _lstm_kernel(T, B, x_ref, wih1_ref, whh1_ref, b1_ref,
                 wih2_ref, whh2_ref, b2_ref, wl_ref, bl_ref,
                 whh2fb_ref, b1f_ref, out_ref):
    hp = whh1_ref.shape[0]          # padded hidden width (128)
    g4 = whh1_ref.shape[1]          # 4 * hp
    T_total = out_ref.shape[0] // B

    # ---- hoisted constants (no per-step broadcasts) -------------------------
    wih1 = wih1_ref[...]                                   # (1, 4*HP)
    wl = wl_ref[...]                                       # (1, HP)
    bl = bl_ref[...]                                       # (1, 1)
    b1_b = jnp.broadcast_to(b1_ref[...], (B, g4))
    b2_b = jnp.broadcast_to(b2_ref[...], (B, g4))

    def gates_to_hc(z, c):
        # z: (B, 4*HP) pre-activations, gate order (i, f, o, g).  The i/f/o
        # columns were pre-scaled by 0.5 so sigmoid(g) == 0.5*(tanh(z)+1).
        t = jnp.tanh(z)
        i_g = 0.5 * (t[:, 0 * hp:1 * hp] + 1.0)
        f_g = 0.5 * (t[:, 1 * hp:2 * hp] + 1.0)
        o_g = 0.5 * (t[:, 2 * hp:3 * hp] + 1.0)
        g_g = t[:, 3 * hp:4 * hp]
        c_new = f_g * c + i_g * g_g
        h_new = o_g * jnp.tanh(c_new)
        return h_new, c_new

    zeros = jnp.zeros((B, hp), jnp.float32)

    # Layer-1 input contribution for the whole teacher-forced prefix (off the
    # serial chain).  x is time-major flattened: row t*B + b.
    gih1_all = x_ref[...] * wih1                           # (T*B, 4*HP)

    # ---- prefix: layer-1 recurrence only ------------------------------------
    h1, c1 = zeros, zeros
    h1_steps = []
    for t in range(T):
        rec1 = jnp.dot(h1, whh1_ref[...], preferred_element_type=jnp.float32)
        h1, c1 = gates_to_hc(gih1_all[t * B:(t + 1) * B] + rec1 + b1_b, c1)
        h1_steps.append(h1)

    # ---- batched inter-layer matmul: ONE MXU call for all T prefix steps ----
    h1_all = jnp.concatenate(h1_steps, axis=0)             # (T*B, HP)
    gih2_all = jnp.dot(h1_all, wih2_ref[...],
                       preferred_element_type=jnp.float32)  # (T*B, 4*HP)

    # ---- prefix: layer-2 recurrence only ------------------------------------
    h2, c2 = zeros, zeros
    h2_steps = []
    for t in range(T):
        rec2 = jnp.dot(h2, whh2_ref[...], preferred_element_type=jnp.float32)
        h2, c2 = gates_to_hc(gih2_all[t * B:(t + 1) * B] + rec2 + b2_b, c2)
        h2_steps.append(h2)

    # ---- autoregressive future rollout --------------------------------------
    if T_total > T:                                        # static decision
        b1f_b = jnp.broadcast_to(b1f_ref[...], (B, g4))
        for t in range(T, T_total):
            # One matmul on the previous h2 yields BOTH its layer-2 recurrent
            # contribution (cols [0, 4*HP)) and -- via W_fb = wl.T @ wih1 --
            # the next step's layer-1 input gates (cols [4*HP, 8*HP)): the
            # linear head never touches the serial chain.
            big = jnp.dot(h2, whh2fb_ref[...],
                          preferred_element_type=jnp.float32)  # (B, 8*HP)
            rec1 = jnp.dot(h1, whh1_ref[...],
                           preferred_element_type=jnp.float32)
            h1, c1 = gates_to_hc(big[:, g4:2 * g4] + rec1 + b1f_b, c1)
            gih2 = jnp.dot(h1, wih2_ref[...],
                           preferred_element_type=jnp.float32)
            h2, c2 = gates_to_hc(gih2 + big[:, 0:g4] + b2_b, c2)
            h2_steps.append(h2)

    # ---- deferred head for ALL steps: one multiply + lane-reduce + store ----
    h2_all = jnp.concatenate(h2_steps, axis=0)             # (T_total*B, HP)
    out_ref[...] = jnp.sum(h2_all * wl, axis=-1, keepdims=True) + bl


@functools.partial(jax.jit, static_argnames=("future",))
def lstm_trainer_forward(x, kparams, future=0):
    """x: (B, T) float32.  kparams from prepare_params.  Returns (B, T+future)."""
    (wih1, whh1, b1, wih2, whh2, b2, wl, bl, whh2fb, b1f) = kparams
    B, T = x.shape
    T_total = T + future
    x_flat = jnp.transpose(x).reshape(T * B, 1).astype(jnp.float32)  # (T*B, 1)

    def spec2d(a):
        return pl.BlockSpec(a.shape, lambda i: (0, 0))

    out_flat = pl.pallas_call(
        functools.partial(_lstm_kernel, T, B),
        out_shape=jax.ShapeDtypeStruct((T_total * B, 1), jnp.float32),
        grid=(1,),
        in_specs=[
            spec2d(x_flat),
            spec2d(wih1), spec2d(whh1), spec2d(b1),
            spec2d(wih2), spec2d(whh2), spec2d(b2),
            spec2d(wl), spec2d(bl),
            spec2d(whh2fb), spec2d(b1f),
        ],
        out_specs=pl.BlockSpec((T_total * B, 1), lambda i: (0, 0)),
        compiler_params=pltpu.CompilerParams(
            dimension_semantics=("arbitrary",)),
    )(x_flat, wih1, whh1, b1, wih2, whh2, b2, wl, bl, whh2fb, b1f)

    return jnp.transpose(out_flat.reshape(T_total, B))     # (B, T_total)


def make_params(key):
    """Raw parameters with PyTorch LSTMCell / Linear shapes and init."""
    H = HIDDEN
    bound = 1.0 / jnp.sqrt(jnp.float32(H))
    keys = jax.random.split(key, 10)

    def u(kk, shape):
        return jax.random.uniform(kk, shape, jnp.float32, -bound, bound)

    w_ih1 = u(keys[0], (4 * H, INPUT_SIZE))
    w_hh1 = u(keys[1], (4 * H, H))
    b_ih1 = u(keys[2], (4 * H,))
    b_hh1 = u(keys[3], (4 * H,))
    w_ih2 = u(keys[4], (4 * H, H))
    w_hh2 = u(keys[5], (4 * H, H))
    b_ih2 = u(keys[6], (4 * H,))
    b_hh2 = u(keys[7], (4 * H,))
    w_lin = u(keys[8], (1, H))
    b_lin = u(keys[9], (1,))
    return (w_ih1, w_hh1, b_ih1, b_hh1, w_ih2, w_hh2, b_ih2, b_hh2,
            w_lin, b_lin)


def prepare_params(raw):
    """Pack raw PyTorch-layout params into the kernel layout.

    * transpose weights so the contraction dim is leading,
    * reorder gate blocks (i, f, g, o) -> (i, f, o, g),
    * pre-scale the sigmoid gates (i, f, o) by 0.5 (exact power-of-2 scaling)
      so the kernel can use sigmoid(z) == 0.5 * (tanh(z/2) + 1),
    * zero-pad every gate block 51 -> 128 lanes and the hidden (contraction)
      dim 51 -> 128 rows.  Pad lanes stay exactly 0 through the recurrence
      (relies on zero-initialized c and zero-padded weights/biases),
    * fold the linear head into the autoregressive feedback:
        W_fb = wl.T @ wih1  (HP, 4*HP),  b1f = b1 + bl * wih1,
      and fuse W_fb with whh2 into one (HP, 8*HP) RHS so one matmul of the
      previous h2 produces both rec2 and the next-step layer-1 gates.
      The 0.5 i/f/o scaling is inherited automatically since it is already
      baked into the packed wih1 / b1.
    """
    (w_ih1, w_hh1, b_ih1, b_hh1, w_ih2, w_hh2, b_ih2, b_hh2,
     w_lin, b_lin) = raw
    H = w_hh1.shape[1]

    def pack_gates(mat_t, rows_pad):
        # mat_t: (rows, 4H) with torch gate order (i, f, g, o) along columns.
        rows = mat_t.shape[0]
        i_g, f_g, g_g, o_g = jnp.split(mat_t, 4, axis=1)

        def pad(m, scale):
            return jnp.pad(m * scale, ((0, rows_pad - rows), (0, HP - H)))

        return jnp.concatenate(
            [pad(i_g, 0.5), pad(f_g, 0.5), pad(o_g, 0.5), pad(g_g, 1.0)],
            axis=1)

    wih1 = pack_gates(w_ih1.T, 1)                       # (1, 4*HP)
    whh1 = pack_gates(w_hh1.T, HP)                      # (HP, 4*HP)
    b1 = pack_gates((b_ih1 + b_hh1)[None, :], 1)        # (1, 4*HP)
    wih2 = pack_gates(w_ih2.T, HP)                      # (HP, 4*HP)
    whh2 = pack_gates(w_hh2.T, HP)                      # (HP, 4*HP)
    b2 = pack_gates((b_ih2 + b_hh2)[None, :], 1)        # (1, 4*HP)
    wl = jnp.pad(w_lin, ((0, 0), (0, HP - H)))          # (1, HP)
    bl = b_lin[None, :]                                 # (1, 1)

    # Head folded into the feedback path (future rollout only).
    w_fb = wl.T @ wih1                                  # (HP, 4*HP)
    whh2fb = jnp.concatenate([whh2, w_fb], axis=1)      # (HP, 8*HP)
    b1f = b1 + bl * wih1                                # (1, 4*HP)

    return (wih1, whh1, b1, wih2, whh2, b2, wl, bl, whh2fb, b1f)


def reference_forward(x, raw, future=0):
    """Pure-JAX mirror of the PyTorch forward (float32), using raw params."""
    (w_ih1, w_hh1, b_ih1, b_hh1, w_ih2, w_hh2, b_ih2, b_hh2,
     w_lin, b_lin) = raw
    H = w_hh1.shape[1]
    B, T = x.shape

    def cell(x_in, h, c, w_ih, w_hh, b_ih, b_hh):
        gates = x_in @ w_ih.T + h @ w_hh.T + b_ih + b_hh
        i = jax.nn.sigmoid(gates[:, 0 * H:1 * H])
        f = jax.nn.sigmoid(gates[:, 1 * H:2 * H])
        g = jnp.tanh(gates[:, 2 * H:3 * H])
        o = jax.nn.sigmoid(gates[:, 3 * H:4 * H])
        c_new = f * c + i * g
        return o * jnp.tanh(c_new), c_new

    h1 = c1 = h2 = c2 = jnp.zeros((B, H), jnp.float32)
    out = jnp.zeros((B, 1), jnp.float32)
    outs = []
    for t in range(T + future):
        x_col = x[:, t:t + 1] if t < T else out
        h1, c1 = cell(x_col, h1, c1, w_ih1, w_hh1, b_ih1, b_hh1)
        h2, c2 = cell(h1, h2, c2, w_ih2, w_hh2, b_ih2, b_hh2)
        out = h2 @ w_lin.T + b_lin
        outs.append(out)
    return jnp.concatenate(outs, axis=1)               # (B, T + future)


if __name__ == "__main__":
    key = jax.random.PRNGKey(0)
    k_x, k_p = jax.random.split(key)

    B, T, FUTURE = 2, 8, 3
    x = jax.random.normal(k_x, (B, T), jnp.float32)
    raw = make_params(k_p)
    kparams = prepare_params(raw)

    out = lstm_trainer_forward(x, kparams, future=FUTURE)
    out = jax.block_until_ready(out)

    ref = reference_forward(x, raw, future=FUTURE)
    assert out.shape == (B, T + FUTURE), out.shape
    err = float(jnp.max(jnp.abs(out - ref)))
    assert jnp.allclose(out, ref, atol=2e-4, rtol=2e-4), (
        "max abs err = %r" % err)

    print("KERNEL_OK")
</pallas_src>

<mosaic_0001>
module attributes {stable_mosaic.version = 11 : i64} {
  func.func @_lstm_kernel(%arg0: i32, %arg1: memref<16x1xf32, #tpu.memory_space<vmem>>, %arg2: memref<1x512xf32, #tpu.memory_space<vmem>>, %arg3: memref<128x512xf32, #tpu.memory_space<vmem>>, %arg4: memref<1x512xf32, #tpu.memory_space<vmem>>, %arg5: memref<128x512xf32, #tpu.memory_space<vmem>>, %arg6: memref<128x512xf32, #tpu.memory_space<vmem>>, %arg7: memref<1x512xf32, #tpu.memory_space<vmem>>, %arg8: memref<1x128xf32, #tpu.memory_space<vmem>>, %arg9: memref<1x1xf32, #tpu.memory_space<vmem>>, %arg10: memref<128x1024xf32, #tpu.memory_space<vmem>>, %arg11: memref<1x512xf32, #tpu.memory_space<vmem>>, %arg12: memref<22x1xf32, #tpu.memory_space<vmem>>) attributes {dimension_semantics = [#tpu.dimension_semantics<arbitrary>], iteration_bounds = array<i64: 1>, scalar_prefetch = 0 : i64, scratch_operands = 0 : i64, tpu.core_type = #tpu.core_type<tc>, window_params = [{pipeline_mode = #tpu.pipeline_mode<synchronous>, transform_indices = @transform_0, window_bounds = array<i64: 16, 1>}, {pipeline_mode = #tpu.pipeline_mode<synchronous>, transform_indices = @transform_1, window_bounds = array<i64: 1, 512>}, {pipeline_mode = #tpu.pipeline_mode<synchronous>, transform_indices = @transform_2, window_bounds = array<i64: 128, 512>}, {pipeline_mode = #tpu.pipeline_mode<synchronous>, transform_indices = @transform_3, window_bounds = array<i64: 1, 512>}, {pipeline_mode = #tpu.pipeline_mode<synchronous>, transform_indices = @transform_4, window_bounds = array<i64: 128, 512>}, {pipeline_mode = #tpu.pipeline_mode<synchronous>, transform_indices = @transform_5, window_bounds = array<i64: 128, 512>}, {pipeline_mode = #tpu.pipeline_mode<synchronous>, transform_indices = @transform_6, window_bounds = array<i64: 1, 512>}, {pipeline_mode = #tpu.pipeline_mode<synchronous>, transform_indices = @transform_7, window_bounds = array<i64: 1, 128>}, {pipeline_mode = #tpu.pipeline_mode<synchronous>, transform_indices = @transform_8, window_bounds = array<i64: 1, 1>}, {pipeline_mode = #tpu.pipeline_mode<synchronous>, transform_indices = @transform_9, window_bounds = array<i64: 128, 1024>}, {pipeline_mode = #tpu.pipeline_mode<synchronous>, transform_indices = @transform_10, window_bounds = array<i64: 1, 512>}, {pipeline_mode = #tpu.pipeline_mode<synchronous>, transform_indices = @transform_11, window_bounds = array<i64: 22, 1>}]} {
    %c0 = arith.constant 0 : index
    %c0_0 = arith.constant 0 : index
    %0 = vector.load %arg2[%c0, %c0_0] : memref<1x512xf32, #tpu.memory_space<vmem>>, vector<1x512xf32>
    %c0_1 = arith.constant 0 : index
    %c0_2 = arith.constant 0 : index
    %1 = vector.load %arg8[%c0_1, %c0_2] : memref<1x128xf32, #tpu.memory_space<vmem>>, vector<1x128xf32>
    %c0_3 = arith.constant 0 : index
    %c0_4 = arith.constant 0 : index
    %2 = vector.load %arg9[%c0_3, %c0_4] : memref<1x1xf32, #tpu.memory_space<vmem>>, vector<1x1xf32>
    %c0_5 = arith.constant 0 : index
    %c0_6 = arith.constant 0 : index
    %3 = vector.load %arg4[%c0_5, %c0_6] : memref<1x512xf32, #tpu.memory_space<vmem>>, vector<1x512xf32>
    %4 = vector.shape_cast %3 : vector<1x512xf32> to vector<1x512xf32>
    %5 = vector.broadcast %4 : vector<1x512xf32> to vector<2x512xf32>
    %c0_7 = arith.constant 0 : index
    %c0_8 = arith.constant 0 : index
    %6 = vector.load %arg7[%c0_7, %c0_8] : memref<1x512xf32, #tpu.memory_space<vmem>>, vector<1x512xf32>
    %7 = vector.shape_cast %6 : vector<1x512xf32> to vector<1x512xf32>
    %8 = vector.broadcast %7 : vector<1x512xf32> to vector<2x512xf32>
    %cst = arith.constant 0.000000e+00 : f32
    %9 = vector.broadcast %cst : f32 to vector<2x128xf32>
    %c0_9 = arith.constant 0 : index
    %c0_10 = arith.constant 0 : index
    %10 = vector.load %arg1[%c0_9, %c0_10] : memref<16x1xf32, #tpu.memory_space<vmem>>, vector<16x1xf32>
    %11 = vector.broadcast %10 : vector<16x1xf32> to vector<16x512xf32>
    %12 = vector.broadcast %0 : vector<1x512xf32> to vector<16x512xf32>
    %13 = arith.mulf %11, %12 : vector<16x512xf32>
    %c0_11 = arith.constant 0 : index
    %c0_12 = arith.constant 0 : index
    %14 = vector.load %arg3[%c0_11, %c0_12] : memref<128x512xf32, #tpu.memory_space<vmem>>, vector<128x512xf32>
    %cst_13 = arith.constant dense<0.000000e+00> : vector<2x512xf32>
    %15 = tpu.matmul %9, %14, %cst_13 {dimension_numbers = #tpu.dot_dimension_numbers<[1], [0], [0], [1], [0, 0, 1, 1], [], []>} : vector<2x128xf32>, vector<128x512xf32>, vector<2x512xf32> -> vector<2x512xf32>
    %16 = vector.extract_strided_slice %13 {offsets = [0, 0], sizes = [2, 512], strides = [1, 1]} : vector<16x512xf32> to vector<2x512xf32>
    %17 = arith.addf %16, %15 : vector<2x512xf32>
    %18 = arith.addf %17, %5 : vector<2x512xf32>
    %19 = math.tanh %18 : vector<2x512xf32>
    %20 = vector.extract_strided_slice %19 {offsets = [0, 0], sizes = [2, 128], strides = [1, 1]} : vector<2x512xf32> to vector<2x128xf32>
    %cst_14 = arith.constant 1.000000e+00 : f32
    %21 = vector.broadcast %cst_14 : f32 to vector<2x128xf32>
    %22 = arith.addf %20, %21 : vector<2x128xf32>
    %cst_15 = arith.constant 5.000000e-01 : f32
    %23 = vector.broadcast %cst_15 : f32 to vector<2x128xf32>
    %24 = arith.mulf %23, %22 : vector<2x128xf32>
    %25 = vector.extract_strided_slice %19 {offsets = [0, 128], sizes = [2, 128], strides = [1, 1]} : vector<2x512xf32> to vector<2x128xf32>
    %cst_16 = arith.constant 1.000000e+00 : f32
    %26 = vector.broadcast %cst_16 : f32 to vector<2x128xf32>
    %27 = arith.addf %25, %26 : vector<2x128xf32>
    %cst_17 = arith.constant 5.000000e-01 : f32
    %28 = vector.broadcast %cst_17 : f32 to vector<2x128xf32>
    %29 = arith.mulf %28, %27 : vector<2x128xf32>
    %30 = vector.extract_strided_slice %19 {offsets = [0, 256], sizes = [2, 128], strides = [1, 1]} : vector<2x512xf32> to vector<2x128xf32>
    %cst_18 = arith.constant 1.000000e+00 : f32
    %31 = vector.broadcast %cst_18 : f32 to vector<2x128xf32>
    %32 = arith.addf %30, %31 : vector<2x128xf32>
    %cst_19 = arith.constant 5.000000e-01 : f32
    %33 = vector.broadcast %cst_19 : f32 to vector<2x128xf32>
    %34 = arith.mulf %33, %32 : vector<2x128xf32>
    %35 = vector.extract_strided_slice %19 {offsets = [0, 384], sizes = [2, 128], strides = [1, 1]} : vector<2x512xf32> to vector<2x128xf32>
    %36 = arith.mulf %29, %9 : vector<2x128xf32>
    %37 = arith.mulf %24, %35 : vector<2x128xf32>
    %38 = arith.addf %36, %37 : vector<2x128xf32>
    %39 = math.tanh %38 : vector<2x128xf32>
    %40 = arith.mulf %34, %39 : vector<2x128xf32>
    %c0_20 = arith.constant 0 : index
    %c0_21 = arith.constant 0 : index
    %41 = vector.load %arg3[%c0_20, %c0_21] : memref<128x512xf32, #tpu.memory_space<vmem>>, vector<128x512xf32>
    %cst_22 = arith.constant dense<0.000000e+00> : vector<2x512xf32>
    %42 = tpu.matmul %40, %41, %cst_22 {dimension_numbers = #tpu.dot_dimension_numbers<[1], [0], [0], [1], [0, 0, 1, 1], [], []>} : vector<2x128xf32>, vector<128x512xf32>, vector<2x512xf32> -> vector<2x512xf32>
    %43 = vector.extract_strided_slice %13 {offsets = [2, 0], sizes = [2, 512], strides = [1, 1]} : vector<16x512xf32> to vector<2x512xf32>
    %44 = arith.addf %43, %42 : vector<2x512xf32>
    %45 = arith.addf %44, %5 : vector<2x512xf32>
    %46 = math.tanh %45 : vector<2x512xf32>
    %47 = vector.extract_strided_slice %46 {offsets = [0, 0], sizes = [2, 128], strides = [1, 1]} : vector<2x512xf32> to vector<2x128xf32>
    %cst_23 = arith.constant 1.000000e+00 : f32
    %48 = vector.broadcast %cst_23 : f32 to vector<2x128xf32>
    %49 = arith.addf %47, %48 : vector<2x128xf32>
    %cst_24 = arith.constant 5.000000e-01 : f32
    %50 = vector.broadcast %cst_24 : f32 to vector<2x128xf32>
    %51 = arith.mulf %50, %49 : vector<2x128xf32>
    %52 = vector.extract_strided_slice %46 {offsets = [0, 128], sizes = [2, 128], strides = [1, 1]} : vector<2x512xf32> to vector<2x128xf32>
    %cst_25 = arith.constant 1.000000e+00 : f32
    %53 = vector.broadcast %cst_25 : f32 to vector<2x128xf32>
    %54 = arith.addf %52, %53 : vector<2x128xf32>
    %cst_26 = arith.constant 5.000000e-01 : f32
    %55 = vector.broadcast %cst_26 : f32 to vector<2x128xf32>
    %56 = arith.mulf %55, %54 : vector<2x128xf32>
    %57 = vector.extract_strided_slice %46 {offsets = [0, 256], sizes = [2, 128], strides = [1, 1]} : vector<2x512xf32> to vector<2x128xf32>
    %cst_27 = arith.constant 1.000000e+00 : f32
    %58 = vector.broadcast %cst_27 : f32 to vector<2x128xf32>
    %59 = arith.addf %57, %58 : vector<2x128xf32>
    %cst_28 = arith.constant 5.000000e-01 : f32
    %60 = vector.broadcast %cst_28 : f32 to vector<2x128xf32>
    %61 = arith.mulf %60, %59 : vector<2x128xf32>
    %62 = vector.extract_strided_slice %46 {offsets = [0, 384], sizes = [2, 128], strides = [1, 1]} : vector<2x512xf32> to vector<2x128xf32>
    %63 = arith.mulf %56, %38 : vector<2x128xf32>
    %64 = arith.mulf %51, %62 : vector<2x128xf32>
    %65 = arith.addf %63, %64 : vector<2x128xf32>
    %66 = math.tanh %65 : vector<2x128xf32>
    %67 = arith.mulf %61, %66 : vector<2x128xf32>
    %c0_29 = arith.constant 0 : index
    %c0_30 = arith.constant 0 : index
    %68 = vector.load %arg3[%c0_29, %c0_30] : memref<128x512xf32, #tpu.memory_space<vmem>>, vector<128x512xf32>
    %cst_31 = arith.constant dense<0.000000e+00> : vector<2x512xf32>
    %69 = tpu.matmul %67, %68, %cst_31 {dimension_numbers = #tpu.dot_dimension_numbers<[1], [0], [0], [1], [0, 0, 1, 1], [], []>} : vector<2x128xf32>, vector<128x512xf32>, vector<2x512xf32> -> vector<2x512xf32>
    %70 = vector.extract_strided_slice %13 {offsets = [4, 0], sizes = [2, 512], strides = [1, 1]} : vector<16x512xf32> to vector<2x512xf32>
    %71 = arith.addf %70, %69 : vector<2x512xf32>
    %72 = arith.addf %71, %5 : vector<2x512xf32>
    %73 = math.tanh %72 : vector<2x512xf32>
    %74 = vector.extract_strided_slice %73 {offsets = [0, 0], sizes = [2, 128], strides = [1, 1]} : vector<2x512xf32> to vector<2x128xf32>
    %cst_32 = arith.constant 1.000000e+00 : f32
    %75 = vector.broadcast %cst_32 : f32 to vector<2x128xf32>
    %76 = arith.addf %74, %75 : vector<2x128xf32>
    %cst_33 = arith.constant 5.000000e-01 : f32
    %77 = vector.broadcast %cst_33 : f32 to vector<2x128xf32>
    %78 = arith.mulf %77, %76 : vector<2x128xf32>
    %79 = vector.extract_strided_slice %73 {offsets = [0, 128], sizes = [2, 128], strides = [1, 1]} : vector<2x512xf32> to vector<2x128xf32>
    %cst_34 = arith.constant 1.000000e+00 : f32
    %80 = vector.broadcast %cst_34 : f32 to vector<2x128xf32>
    %81 = arith.addf %79, %80 : vector<2x128xf32>
    %cst_35 = arith.constant 5.000000e-01 : f32
    %82 = vector.broadcast %cst_35 : f32 to vector<2x128xf32>
    %83 = arith.mulf %82, %81 : vector<2x128xf32>
    %84 = vector.extract_strided_slice %73 {offsets = [0, 256], sizes = [2, 128], strides = [1, 1]} : vector<2x512xf32> to vector<2x128xf32>
    %cst_36 = arith.constant 1.000000e+00 : f32
    %85 = vector.broadcast %cst_36 : f32 to vector<2x128xf32>
    %86 = arith.addf %84, %85 : vector<2x128xf32>
    %cst_37 = arith.constant 5.000000e-01 : f32
    %87 = vector.broadcast %cst_37 : f32 to vector<2x128xf32>
    %88 = arith.mulf %87, %86 : vector<2x128xf32>
    %89 = vector.extract_strided_slice %73 {offsets = [0, 384], sizes = [2, 128], strides = [1, 1]} : vector<2x512xf32> to vector<2x128xf32>
    %90 = arith.mulf %83, %65 : vector<2x128xf32>
    %91 = arith.mulf %78, %89 : vector<2x128xf32>
    %92 = arith.addf %90, %91 : vector<2x128xf32>
    %93 = math.tanh %92 : vector<2x128xf32>
    %94 = arith.mulf %88, %93 : vector<2x128xf32>
    %c0_38 = arith.constant 0 : index
    %c0_39 = arith.constant 0 : index
    %95 = vector.load %arg3[%c0_38, %c0_39] : memref<128x512xf32, #tpu.memory_space<vmem>>, vector<128x512xf32>
    %cst_40 = arith.constant dense<0.000000e+00> : vector<2x512xf32>
    %96 = tpu.matmul %94, %95, %cst_40 {dimension_numbers = #tpu.dot_dimension_numbers<[1], [0], [0], [1], [0, 0, 1, 1], [], []>} : vector<2x128xf32>, vector<128x512xf32>, vector<2x512xf32> -> vector<2x512xf32>
    %97 = vector.extract_strided_slice %13 {offsets = [6, 0], sizes = [2, 512], strides = [1, 1]} : vector<16x512xf32> to vector<2x512xf32>
    %98 = arith.addf %97, %96 : vector<2x512xf32>
    %99 = arith.addf %98, %5 : vector<2x512xf32>
    %100 = math.tanh %99 : vector<2x512xf32>
    %101 = vector.extract_strided_slice %100 {offsets = [0, 0], sizes = [2, 128], strides = [1, 1]} : vector<2x512xf32> to vector<2x128xf32>
    %cst_41 = arith.constant 1.000000e+00 : f32
    %102 = vector.broadcast %cst_41 : f32 to vector<2x128xf32>
    %103 = arith.addf %101, %102 : vector<2x128xf32>
    %cst_42 = arith.constant 5.000000e-01 : f32
    %104 = vector.broadcast %cst_42 : f32 to vector<2x128xf32>
    %105 = arith.mulf %104, %103 : vector<2x128xf32>
    %106 = vector.extract_strided_slice %100 {offsets = [0, 128], sizes = [2, 128], strides = [1, 1]} : vector<2x512xf32> to vector<2x128xf32>
    %cst_43 = arith.constant 1.000000e+00 : f32
    %107 = vector.broadcast %cst_43 : f32 to vector<2x128xf32>
    %108 = arith.addf %106, %107 : vector<2x128xf32>
    %cst_44 = arith.constant 5.000000e-01 : f32
    %109 = vector.broadcast %cst_44 : f32 to vector<2x128xf32>
    %110 = arith.mulf %109, %108 : vector<2x128xf32>
    %111 = vector.extract_strided_slice %100 {offsets = [0, 256], sizes = [2, 128], strides = [1, 1]} : vector<2x512xf32> to vector<2x128xf32>
    %cst_45 = arith.constant 1.000000e+00 : f32
    %112 = vector.broadcast %cst_45 : f32 to vector<2x128xf32>
    %113 = arith.addf %111, %112 : vector<2x128xf32>
    %cst_46 = arith.constant 5.000000e-01 : f32
    %114 = vector.broadcast %cst_46 : f32 to vector<2x128xf32>
    %115 = arith.mulf %114, %113 : vector<2x128xf32>
    %116 = vector.extract_strided_slice %100 {offsets = [0, 384], sizes = [2, 128], strides = [1, 1]} : vector<2x512xf32> to vector<2x128xf32>
    %117 = arith.mulf %110, %92 : vector<2x128xf32>
    %118 = arith.mulf %105, %116 : vector<2x128xf32>
    %119 = arith.addf %117, %118 : vector<2x128xf32>
    %120 = math.tanh %119 : vector<2x128xf32>
    %121 = arith.mulf %115, %120 : vector<2x128xf32>
    %c0_47 = arith.constant 0 : index
    %c0_48 = arith.constant 0 : index
    %122 = vector.load %arg3[%c0_47, %c0_48] : memref<128x512xf32, #tpu.memory_space<vmem>>, vector<128x512xf32>
    %cst_49 = arith.constant dense<0.000000e+00> : vector<2x512xf32>
    %123 = tpu.matmul %121, %122, %cst_49 {dimension_numbers = #tpu.dot_dimension_numbers<[1], [0], [0], [1], [0, 0, 1, 1], [], []>} : vector<2x128xf32>, vector<128x512xf32>, vector<2x512xf32> -> vector<2x512xf32>
    %124 = vector.extract_strided_slice %13 {offsets = [8, 0], sizes = [2, 512], strides = [1, 1]} : vector<16x512xf32> to vector<2x512xf32>
    %125 = arith.addf %124, %123 : vector<2x512xf32>
    %126 = arith.addf %125, %5 : vector<2x512xf32>
    %127 = math.tanh %126 : vector<2x512xf32>
    %128 = vector.extract_strided_slice %127 {offsets = [0, 0], sizes = [2, 128], strides = [1, 1]} : vector<2x512xf32> to vector<2x128xf32>
    %cst_50 = arith.constant 1.000000e+00 : f32
    %129 = vector.broadcast %cst_50 : f32 to vector<2x128xf32>
    %130 = arith.addf %128, %129 : vector<2x128xf32>
    %cst_51 = arith.constant 5.000000e-01 : f32
    %131 = vector.broadcast %cst_51 : f32 to vector<2x128xf32>
    %132 = arith.mulf %131, %130 : vector<2x128xf32>
    %133 = vector.extract_strided_slice %127 {offsets = [0, 128], sizes = [2, 128], strides = [1, 1]} : vector<2x512xf32> to vector<2x128xf32>
    %cst_52 = arith.constant 1.000000e+00 : f32
    %134 = vector.broadcast %cst_52 : f32 to vector<2x128xf32>
    %135 = arith.addf %133, %134 : vector<2x128xf32>
    %cst_53 = arith.constant 5.000000e-01 : f32
    %136 = vector.broadcast %cst_53 : f32 to vector<2x128xf32>
    %137 = arith.mulf %136, %135 : vector<2x128xf32>
    %138 = vector.extract_strided_slice %127 {offsets = [0, 256], sizes = [2, 128], strides = [1, 1]} : vector<2x512xf32> to vector<2x128xf32>
    %cst_54 = arith.constant 1.000000e+00 : f32
    %139 = vector.broadcast %cst_54 : f32 to vector<2x128xf32>
    %140 = arith.addf %138, %139 : vector<2x128xf32>
    %cst_55 = arith.constant 5.000000e-01 : f32
    %141 = vector.broadcast %cst_55 : f32 to vector<2x128xf32>
    %142 = arith.mulf %141, %140 : vector<2x128xf32>
    %143 = vector.extract_strided_slice %127 {offsets = [0, 384], sizes = [2, 128], strides = [1, 1]} : vector<2x512xf32> to vector<2x128xf32>
    %144 = arith.mulf %137, %119 : vector<2x128xf32>
    %145 = arith.mulf %132, %143 : vector<2x128xf32>
    %146 = arith.addf %144, %145 : vector<2x128xf32>
    %147 = math.tanh %146 : vector<2x128xf32>
    %148 = arith.mulf %142, %147 : vector<2x128xf32>
    %c0_56 = arith.constant 0 : index
    %c0_57 = arith.constant 0 : index
    %149 = vector.load %arg3[%c0_56, %c0_57] : memref<128x512xf32, #tpu.memory_space<vmem>>, vector<128x512xf32>
    %cst_58 = arith.constant dense<0.000000e+00> : vector<2x512xf32>
    %150 = tpu.matmul %148, %149, %cst_58 {dimension_numbers = #tpu.dot_dimension_numbers<[1], [0], [0], [1], [0, 0, 1, 1], [], []>} : vector<2x128xf32>, vector<128x512xf32>, vector<2x512xf32> -> vector<2x512xf32>
    %151 = vector.extract_strided_slice %13 {offsets = [10, 0], sizes = [2, 512], strides = [1, 1]} : vector<16x512xf32> to vector<2x512xf32>
    %152 = arith.addf %151, %150 : vector<2x512xf32>
    %153 = arith.addf %152, %5 : vector<2x512xf32>
    %154 = math.tanh %153 : vector<2x512xf32>
    %155 = vector.extract_strided_slice %154 {offsets = [0, 0], sizes = [2, 128], strides = [1, 1]} : vector<2x512xf32> to vector<2x128xf32>
    %cst_59 = arith.constant 1.000000e+00 : f32
    %156 = vector.broadcast %cst_59 : f32 to vector<2x128xf32>
    %157 = arith.addf %155, %156 : vector<2x128xf32>
    %cst_60 = arith.constant 5.000000e-01 : f32
    %158 = vector.broadcast %cst_60 : f32 to vector<2x128xf32>
    %159 = arith.mulf %158, %157 : vector<2x128xf32>
    %160 = vector.extract_strided_slice %154 {offsets = [0, 128], sizes = [2, 128], strides = [1, 1]} : vector<2x512xf32> to vector<2x128xf32>
    %cst_61 = arith.constant 1.000000e+00 : f32
    %161 = vector.broadcast %cst_61 : f32 to vector<2x128xf32>
    %162 = arith.addf %160, %161 : vector<2x128xf32>
    %cst_62 = arith.constant 5.000000e-01 : f32
    %163 = vector.broadcast %cst_62 : f32 to vector<2x128xf32>
    %164 = arith.mulf %163, %162 : vector<2x128xf32>
    %165 = vector.extract_strided_slice %154 {offsets = [0, 256], sizes = [2, 128], strides = [1, 1]} : vector<2x512xf32> to vector<2x128xf32>
    %cst_63 = arith.constant 1.000000e+00 : f32
    %166 = vector.broadcast %cst_63 : f32 to vector<2x128xf32>
    %167 = arith.addf %165, %166 : vector<2x128xf32>
    %cst_64 = arith.constant 5.000000e-01 : f32
    %168 = vector.broadcast %cst_64 : f32 to vector<2x128xf32>
    %169 = arith.mulf %168, %167 : vector<2x128xf32>
    %170 = vector.extract_strided_slice %154 {offsets = [0, 384], sizes = [2, 128], strides = [1, 1]} : vector<2x512xf32> to vector<2x128xf32>
    %171 = arith.mulf %164, %146 : vector<2x128xf32>
    %172 = arith.mulf %159, %170 : vector<2x128xf32>
    %173 = arith.addf %171, %172 : vector<2x128xf32>
    %174 = math.tanh %173 : vector<2x128xf32>
    %175 = arith.mulf %169, %174 : vector<2x128xf32>
    %c0_65 = arith.constant 0 : index
    %c0_66 = arith.constant 0 : index
    %176 = vector.load %arg3[%c0_65, %c0_66] : memref<128x512xf32, #tpu.memory_space<vmem>>, vector<128x512xf32>
    %cst_67 = arith.constant dense<0.000000e+00> : vector<2x512xf32>
    %177 = tpu.matmul %175, %176, %cst_67 {dimension_numbers = #tpu.dot_dimension_numbers<[1], [0], [0], [1], [0, 0, 1, 1], [], []>} : vector<2x128xf32>, vector<128x512xf32>, vector<2x512xf32> -> vector<2x512xf32>
    %178 = vector.extract_strided_slice %13 {offsets = [12, 0], sizes = [2, 512], strides = [1, 1]} : vector<16x512xf32> to vector<2x512xf32>
    %179 = arith.addf %178, %177 : vector<2x512xf32>
    %180 = arith.addf %179, %5 : vector<2x512xf32>
    %181 = math.tanh %180 : vector<2x512xf32>
    %182 = vector.extract_strided_slice %181 {offsets = [0, 0], sizes = [2, 128], strides = [1, 1]} : vector<2x512xf32> to vector<2x128xf32>
    %cst_68 = arith.constant 1.000000e+00 : f32
    %183 = vector.broadcast %cst_68 : f32 to vector<2x128xf32>
    %184 = arith.addf %182, %183 : vector<2x128xf32>
    %cst_69 = arith.constant 5.000000e-01 : f32
    %185 = vector.broadcast %cst_69 : f32 to vector<2x128xf32>
    %186 = arith.mulf %185, %184 : vector<2x128xf32>
    %187 = vector.extract_strided_slice %181 {offsets = [0, 128], sizes = [2, 128], strides = [1, 1]} : vector<2x512xf32> to vector<2x128xf32>
    %cst_70 = arith.constant 1.000000e+00 : f32
    %188 = vector.broadcast %cst_70 : f32 to vector<2x128xf32>
    %189 = arith.addf %187, %188 : vector<2x128xf32>
    %cst_71 = arith.constant 5.000000e-01 : f32
    %190 = vector.broadcast %cst_71 : f32 to vector<2x128xf32>
    %191 = arith.mulf %190, %189 : vector<2x128xf32>
    %192 = vector.extract_strided_slice %181 {offsets = [0, 256], sizes = [2, 128], strides = [1, 1]} : vector<2x512xf32> to vector<2x128xf32>
    %cst_72 = arith.constant 1.000000e+00 : f32
    %193 = vector.broadcast %cst_72 : f32 to vector<2x128xf32>
    %194 = arith.addf %192, %193 : vector<2x128xf32>
    %cst_73 = arith.constant 5.000000e-01 : f32
    %195 = vector.broadcast %cst_73 : f32 to vector<2x128xf32>
    %196 = arith.mulf %195, %194 : vector<2x128xf32>
    %197 = vector.extract_strided_slice %181 {offsets = [0, 384], sizes = [2, 128], strides = [1, 1]} : vector<2x512xf32> to vector<2x128xf32>
    %198 = arith.mulf %191, %173 : vector<2x128xf32>
    %199 = arith.mulf %186, %197 : vector<2x128xf32>
    %200 = arith.addf %198, %199 : vector<2x128xf32>
    %201 = math.tanh %200 : vector<2x128xf32>
    %202 = arith.mulf %196, %201 : vector<2x128xf32>
    %c0_74 = arith.constant 0 : index
    %c0_75 = arith.constant 0 : index
    %203 = vector.load %arg3[%c0_74, %c0_75] : memref<128x512xf32, #tpu.memory_space<vmem>>, vector<128x512xf32>
    %cst_76 = arith.constant dense<0.000000e+00> : vector<2x512xf32>
    %204 = tpu.matmul %202, %203, %cst_76 {dimension_numbers = #tpu.dot_dimension_numbers<[1], [0], [0], [1], [0, 0, 1, 1], [], []>} : vector<2x128xf32>, vector<128x512xf32>, vector<2x512xf32> -> vector<2x512xf32>
    %205 = vector.extract_strided_slice %13 {offsets = [14, 0], sizes = [2, 512], strides = [1, 1]} : vector<16x512xf32> to vector<2x512xf32>
    %206 = arith.addf %205, %204 : vector<2x512xf32>
    %207 = arith.addf %206, %5 : vector<2x512xf32>
    %208 = math.tanh %207 : vector<2x512xf32>
    %209 = vector.extract_strided_slice %208 {offsets = [0, 0], sizes = [2, 128], strides = [1, 1]} : vector<2x512xf32> to vector<2x128xf32>
    %cst_77 = arith.constant 1.000000e+00 : f32
    %210 = vector.broadcast %cst_77 : f32 to vector<2x128xf32>
    %211 = arith.addf %209, %210 : vector<2x128xf32>
    %cst_78 = arith.constant 5.000000e-01 : f32
    %212 = vector.broadcast %cst_78 : f32 to vector<2x128xf32>
    %213 = arith.mulf %212, %211 : vector<2x128xf32>
    %214 = vector.extract_strided_slice %208 {offsets = [0, 128], sizes = [2, 128], strides = [1, 1]} : vector<2x512xf32> to vector<2x128xf32>
    %cst_79 = arith.constant 1.000000e+00 : f32
    %215 = vector.broadcast %cst_79 : f32 to vector<2x128xf32>
    %216 = arith.addf %214, %215 : vector<2x128xf32>
    %cst_80 = arith.constant 5.000000e-01 : f32
    %217 = vector.broadcast %cst_80 : f32 to vector<2x128xf32>
    %218 = arith.mulf %217, %216 : vector<2x128xf32>
    %219 = vector.extract_strided_slice %208 {offsets = [0, 256], sizes = [2, 128], strides = [1, 1]} : vector<2x512xf32> to vector<2x128xf32>
    %cst_81 = arith.constant 1.000000e+00 : f32
    %220 = vector.broadcast %cst_81 : f32 to vector<2x128xf32>
    %221 = arith.addf %219, %220 : vector<2x128xf32>
    %cst_82 = arith.constant 5.000000e-01 : f32
    %222 = vector.broadcast %cst_82 : f32 to vector<2x128xf32>
    %223 = arith.mulf %222, %221 : vector<2x128xf32>
    %224 = vector.extract_strided_slice %208 {offsets = [0, 384], sizes = [2, 128], strides = [1, 1]} : vector<2x512xf32> to vector<2x128xf32>
    %225 = arith.mulf %218, %200 : vector<2x128xf32>
    %226 = arith.mulf %213, %224 : vector<2x128xf32>
    %227 = arith.addf %225, %226 : vector<2x128xf32>
    %228 = math.tanh %227 : vector<2x128xf32>
    %229 = arith.mulf %223, %228 : vector<2x128xf32>
    %230 = tpu.concatenate %40, %67, %94, %121, %148, %175, %202, %229 in 0 : vector<2x128xf32>, vector<2x128xf32>, vector<2x128xf32>, vector<2x128xf32>, vector<2x128xf32>, vector<2x128xf32>, vector<2x128xf32>, vector<2x128xf32> -> vector<16x128xf32>
    %c0_83 = arith.constant 0 : index
    %c0_84 = arith.constant 0 : index
    %231 = vector.load %arg5[%c0_83, %c0_84] : memref<128x512xf32, #tpu.memory_space<vmem>>, vector<128x512xf32>
    %cst_85 = arith.constant dense<0.000000e+00> : vector<16x512xf32>
    %232 = tpu.matmul %230, %231, %cst_85 {dimension_numbers = #tpu.dot_dimension_numbers<[1], [0], [0], [1], [0, 0, 1, 1], [], []>} : vector<16x128xf32>, vector<128x512xf32>, vector<16x512xf32> -> vector<16x512xf32>
    %c0_86 = arith.constant 0 : index
    %c0_87 = arith.constant 0 : index
    %233 = vector.load %arg6[%c0_86, %c0_87] : memref<128x512xf32, #tpu.memory_space<vmem>>, vector<128x512xf32>
    %cst_88 = arith.constant dense<0.000000e+00> : vector<2x512xf32>
    %234 = tpu.matmul %9, %233, %cst_88 {dimension_numbers = #tpu.dot_dimension_numbers<[1], [0], [0], [1], [0, 0, 1, 1], [], []>} : vector<2x128xf32>, vector<128x512xf32>, vector<2x512xf32> -> vector<2x512xf32>
    %235 = vector.extract_strided_slice %232 {offsets = [0, 0], sizes = [2, 512], strides = [1, 1]} : vector<16x512xf32> to vector<2x512xf32>
    %236 = arith.addf %235, %234 : vector<2x512xf32>
    %237 = arith.addf %236, %8 : vector<2x512xf32>
    %238 = math.tanh %237 : vector<2x512xf32>
    %239 = vector.extract_strided_slice %238 {offsets = [0, 0], sizes = [2, 128], strides = [1, 1]} : vector<2x512xf32> to vector<2x128xf32>
    %cst_89 = arith.constant 1.000000e+00 : f32
    %240 = vector.broadcast %cst_89 : f32 to vector<2x128xf32>
    %241 = arith.addf %239, %240 : vector<2x128xf32>
    %cst_90 = arith.constant 5.000000e-01 : f32
    %242 = vector.broadcast %cst_90 : f32 to vector<2x128xf32>
    %243 = arith.mulf %242, %241 : vector<2x128xf32>
    %244 = vector.extract_strided_slice %238 {offsets = [0, 128], sizes = [2, 128], strides = [1, 1]} : vector<2x512xf32> to vector<2x128xf32>
    %cst_91 = arith.constant 1.000000e+00 : f32
    %245 = vector.broadcast %cst_91 : f32 to vector<2x128xf32>
    %246 = arith.addf %244, %245 : vector<2x128xf32>
    %cst_92 = arith.constant 5.000000e-01 : f32
    %247 = vector.broadcast %cst_92 : f32 to vector<2x128xf32>
    %248 = arith.mulf %247, %246 : vector<2x128xf32>
    %249 = vector.extract_strided_slice %238 {offsets = [0, 256], sizes = [2, 128], strides = [1, 1]} : vector<2x512xf32> to vector<2x128xf32>
    %cst_93 = arith.constant 1.000000e+00 : f32
    %250 = vector.broadcast %cst_93 : f32 to vector<2x128xf32>
    %251 = arith.addf %249, %250 : vector<2x128xf32>
    %cst_94 = arith.constant 5.000000e-01 : f32
    %252 = vector.broadcast %cst_94 : f32 to vector<2x128xf32>
    %253 = arith.mulf %252, %251 : vector<2x128xf32>
    %254 = vector.extract_strided_slice %238 {offsets = [0, 384], sizes = [2, 128], strides = [1, 1]} : vector<2x512xf32> to vector<2x128xf32>
    %255 = arith.mulf %248, %9 : vector<2x128xf32>
    %256 = arith.mulf %243, %254 : vector<2x128xf32>
    %257 = arith.addf %255, %256 : vector<2x128xf32>
    %258 = math.tanh %257 : vector<2x128xf32>
    %259 = arith.mulf %253, %258 : vector<2x128xf32>
    %c0_95 = arith.constant 0 : index
    %c0_96 = arith.constant 0 : index
    %260 = vector.load %arg6[%c0_95, %c0_96] : memref<128x512xf32, #tpu.memory_space<vmem>>, vector<128x512xf32>
    %cst_97 = arith.constant dense<0.000000e+00> : vector<2x512xf32>
    %261 = tpu.matmul %259, %260, %cst_97 {dimension_numbers = #tpu.dot_dimension_numbers<[1], [0], [0], [1], [0, 0, 1, 1], [], []>} : vector<2x128xf32>, vector<128x512xf32>, vector<2x512xf32> -> vector<2x512xf32>
    %262 = vector.extract_strided_slice %232 {offsets = [2, 0], sizes = [2, 512], strides = [1, 1]} : vector<16x512xf32> to vector<2x512xf32>
    %263 = arith.addf %262, %261 : vector<2x512xf32>
    %264 = arith.addf %263, %8 : vector<2x512xf32>
    %265 = math.tanh %264 : vector<2x512xf32>
    %266 = vector.extract_strided_slice %265 {offsets = [0, 0], sizes = [2, 128], strides = [1, 1]} : vector<2x512xf32> to vector<2x128xf32>
    %cst_98 = arith.constant 1.000000e+00 : f32
    %267 = vector.broadcast %cst_98 : f32 to vector<2x128xf32>
    %268 = arith.addf %266, %267 : vector<2x128xf32>
    %cst_99 = arith.constant 5.000000e-01 : f32
    %269 = vector.broadcast %cst_99 : f32 to vector<2x128xf32>
    %270 = arith.mulf %269, %268 : vector<2x128xf32>
    %271 = vector.extract_strided_slice %265 {offsets = [0, 128], sizes = [2, 128], strides = [1, 1]} : vector<2x512xf32> to vector<2x128xf32>
    %cst_100 = arith.constant 1.000000e+00 : f32
    %272 = vector.broadcast %cst_100 : f32 to vector<2x128xf32>
    %273 = arith.addf %271, %272 : vector<2x128xf32>
    %cst_101 = arith.constant 5.000000e-01 : f32
    %274 = vector.broadcast %cst_101 : f32 to vector<2x128xf32>
    %275 = arith.mulf %274, %273 : vector<2x128xf32>
    %276 = vector.extract_strided_slice %265 {offsets = [0, 256], sizes = [2, 128], strides = [1, 1]} : vector<2x512xf32> to vector<2x128xf32>
    %cst_102 = arith.constant 1.000000e+00 : f32
    %277 = vector.broadcast %cst_102 : f32 to vector<2x128xf32>
    %278 = arith.addf %276, %277 : vector<2x128xf32>
    %cst_103 = arith.constant 5.000000e-01 : f32
    %279 = vector.broadcast %cst_103 : f32 to vector<2x128xf32>
    %280 = arith.mulf %279, %278 : vector<2x128xf32>
    %281 = vector.extract_strided_slice %265 {offsets = [0, 384], sizes = [2, 128], strides = [1, 1]} : vector<2x512xf32> to vector<2x128xf32>
    %282 = arith.mulf %275, %257 : vector<2x128xf32>
    %283 = arith.mulf %270, %281 : vector<2x128xf32>
    %284 = arith.addf %282, %283 : vector<2x128xf32>
    %285 = math.tanh %284 : vector<2x128xf32>
    %286 = arith.mulf %280, %285 : vector<2x128xf32>
    %c0_104 = arith.constant 0 : index
    %c0_105 = arith.constant 0 : index
    %287 = vector.load %arg6[%c0_104, %c0_105] : memref<128x512xf32, #tpu.memory_space<vmem>>, vector<128x512xf32>
    %cst_106 = arith.constant dense<0.000000e+00> : vector<2x512xf32>
    %288 = tpu.matmul %286, %287, %cst_106 {dimension_numbers = #tpu.dot_dimension_numbers<[1], [0], [0], [1], [0, 0, 1, 1], [], []>} : vector<2x128xf32>, vector<128x512xf32>, vector<2x512xf32> -> vector<2x512xf32>
    %289 = vector.extract_strided_slice %232 {offsets = [4, 0], sizes = [2, 512], strides = [1, 1]} : vector<16x512xf32> to vector<2x512xf32>
    %290 = arith.addf %289, %288 : vector<2x512xf32>
    %291 = arith.addf %290, %8 : vector<2x512xf32>
    %292 = math.tanh %291 : vector<2x512xf32>
    %293 = vector.extract_strided_slice %292 {offsets = [0, 0], sizes = [2, 128], strides = [1, 1]} : vector<2x512xf32> to vector<2x128xf32>
    %cst_107 = arith.constant 1.000000e+00 : f32
    %294 = vector.broadcast %cst_107 : f32 to vector<2x128xf32>
    %295 = arith.addf %293, %294 : vector<2x128xf32>
    %cst_108 = arith.constant 5.000000e-01 : f32
    %296 = vector.broadcast %cst_108 : f32 to vector<2x128xf32>
    %297 = arith.mulf %296, %295 : vector<2x128xf32>
    %298 = vector.extract_strided_slice %292 {offsets = [0, 128], sizes = [2, 128], strides = [1, 1]} : vector<2x512xf32> to vector<2x128xf32>
    %cst_109 = arith.constant 1.000000e+00 : f32
    %299 = vector.broadcast %cst_109 : f32 to vector<2x128xf32>
    %300 = arith.addf %298, %299 : vector<2x128xf32>
    %cst_110 = arith.constant 5.000000e-01 : f32
    %301 = vector.broadcast %cst_110 : f32 to vector<2x128xf32>
    %302 = arith.mulf %301, %300 : vector<2x128xf32>
    %303 = vector.extract_strided_slice %292 {offsets = [0, 256], sizes = [2, 128], strides = [1, 1]} : vector<2x512xf32> to vector<2x128xf32>
    %cst_111 = arith.constant 1.000000e+00 : f32
    %304 = vector.broadcast %cst_111 : f32 to vector<2x128xf32>
    %305 = arith.addf %303, %304 : vector<2x128xf32>
    %cst_112 = arith.constant 5.000000e-01 : f32
    %306 = vector.broadcast %cst_112 : f32 to vector<2x128xf32>
    %307 = arith.mulf %306, %305 : vector<2x128xf32>
    %308 = vector.extract_strided_slice %292 {offsets = [0, 384], sizes = [2, 128], strides = [1, 1]} : vector<2x512xf32> to vector<2x128xf32>
    %309 = arith.mulf %302, %284 : vector<2x128xf32>
    %310 = arith.mulf %297, %308 : vector<2x128xf32>
    %311 = arith.addf %309, %310 : vector<2x128xf32>
    %312 = math.tanh %311 : vector<2x128xf32>
    %313 = arith.mulf %307, %312 : vector<2x128xf32>
    %c0_113 = arith.constant 0 : index
    %c0_114 = arith.constant 0 : index
    %314 = vector.load %arg6[%c0_113, %c0_114] : memref<128x512xf32, #tpu.memory_space<vmem>>, vector<128x512xf32>
    %cst_115 = arith.constant dense<0.000000e+00> : vector<2x512xf32>
    %315 = tpu.matmul %313, %314, %cst_115 {dimension_numbers = #tpu.dot_dimension_numbers<[1], [0], [0], [1], [0, 0, 1, 1], [], []>} : vector<2x128xf32>, vector<128x512xf32>, vector<2x512xf32> -> vector<2x512xf32>
    %316 = vector.extract_strided_slice %232 {offsets = [6, 0], sizes = [2, 512], strides = [1, 1]} : vector<16x512xf32> to vector<2x512xf32>
    %317 = arith.addf %316, %315 : vector<2x512xf32>
    %318 = arith.addf %317, %8 : vector<2x512xf32>
    %319 = math.tanh %318 : vector<2x512xf32>
    %320 = vector.extract_strided_slice %319 {offsets = [0, 0], sizes = [2, 128], strides = [1, 1]} : vector<2x512xf32> to vector<2x128xf32>
    %cst_116 = arith.constant 1.000000e+00 : f32
    %321 = vector.broadcast %cst_116 : f32 to vector<2x128xf32>
    %322 = arith.addf %320, %321 : vector<2x128xf32>
    %cst_117 = arith.constant 5.000000e-01 : f32
    %323 = vector.broadcast %cst_117 : f32 to vector<2x128xf32>
    %324 = arith.mulf %323, %322 : vector<2x128xf32>
    %325 = vector.extract_strided_slice %319 {offsets = [0, 128], sizes = [2, 128], strides = [1, 1]} : vector<2x512xf32> to vector<2x128xf32>
    %cst_118 = arith.constant 1.000000e+00 : f32
    %326 = vector.broadcast %cst_118 : f32 to vector<2x128xf32>
    %327 = arith.addf %325, %326 : vector<2x128xf32>
    %cst_119 = arith.constant 5.000000e-01 : f32
    %328 = vector.broadcast %cst_119 : f32 to vector<2x128xf32>
    %329 = arith.mulf %328, %327 : vector<2x128xf32>
    %330 = vector.extract_strided_slice %319 {offsets = [0, 256], sizes = [2, 128], strides = [1, 1]} : vector<2x512xf32> to vector<2x128xf32>
    %cst_120 = arith.constant 1.000000e+00 : f32
    %331 = vector.broadcast %cst_120 : f32 to vector<2x128xf32>
    %332 = arith.addf %330, %331 : vector<2x128xf32>
    %cst_121 = arith.constant 5.000000e-01 : f32
    %333 = vector.broadcast %cst_121 : f32 to vector<2x128xf32>
    %334 = arith.mulf %333, %332 : vector<2x128xf32>
    %335 = vector.extract_strided_slice %319 {offsets = [0, 384], sizes = [2, 128], strides = [1, 1]} : vector<2x512xf32> to vector<2x128xf32>
    %336 = arith.mulf %329, %311 : vector<2x128xf32>
    %337 = arith.mulf %324, %335 : vector<2x128xf32>
    %338 = arith.addf %336, %337 : vector<2x128xf32>
    %339 = math.tanh %338 : vector<2x128xf32>
    %340 = arith.mulf %334, %339 : vector<2x128xf32>
    %c0_122 = arith.constant 0 : index
    %c0_123 = arith.constant 0 : index
    %341 = vector.load %arg6[%c0_122, %c0_123] : memref<128x512xf32, #tpu.memory_space<vmem>>, vector<128x512xf32>
    %cst_124 = arith.constant dense<0.000000e+00> : vector<2x512xf32>
    %342 = tpu.matmul %340, %341, %cst_124 {dimension_numbers = #tpu.dot_dimension_numbers<[1], [0], [0], [1], [0, 0, 1, 1], [], []>} : vector<2x128xf32>, vector<128x512xf32>, vector<2x512xf32> -> vector<2x512xf32>
    %343 = vector.extract_strided_slice %232 {offsets = [8, 0], sizes = [2, 512], strides = [1, 1]} : vector<16x512xf32> to vector<2x512xf32>
    %344 = arith.addf %343, %342 : vector<2x512xf32>
    %345 = arith.addf %344, %8 : vector<2x512xf32>
    %346 = math.tanh %345 : vector<2x512xf32>
    %347 = vector.extract_strided_slice %346 {offsets = [0, 0], sizes = [2, 128], strides = [1, 1]} : vector<2x512xf32> to vector<2x128xf32>
    %cst_125 = arith.constant 1.000000e+00 : f32
    %348 = vector.broadcast %cst_125 : f32 to vector<2x128xf32>
    %349 = arith.addf %347, %348 : vector<2x128xf32>
    %cst_126 = arith.constant 5.000000e-01 : f32
    %350 = vector.broadcast %cst_126 : f32 to vector<2x128xf32>
    %351 = arith.mulf %350, %349 : vector<2x128xf32>
    %352 = vector.extract_strided_slice %346 {offsets = [0, 128], sizes = [2, 128], strides = [1, 1]} : vector<2x512xf32> to vector<2x128xf32>
    %cst_127 = arith.constant 1.000000e+00 : f32
    %353 = vector.broadcast %cst_127 : f32 to vector<2x128xf32>
    %354 = arith.addf %352, %353 : vector<2x128xf32>
    %cst_128 = arith.constant 5.000000e-01 : f32
    %355 = vector.broadcast %cst_128 : f32 to vector<2x128xf32>
    %356 = arith.mulf %355, %354 : vector<2x128xf32>
    %357 = vector.extract_strided_slice %346 {offsets = [0, 256], sizes = [2, 128], strides = [1, 1]} : vector<2x512xf32> to vector<2x128xf32>
    %cst_129 = arith.constant 1.000000e+00 : f32
    %358 = vector.broadcast %cst_129 : f32 to vector<2x128xf32>
    %359 = arith.addf %357, %358 : vector<2x128xf32>
    %cst_130 = arith.constant 5.000000e-01 : f32
    %360 = vector.broadcast %cst_130 : f32 to vector<2x128xf32>
    %361 = arith.mulf %360, %359 : vector<2x128xf32>
    %362 = vector.extract_strided_slice %346 {offsets = [0, 384], sizes = [2, 128], strides = [1, 1]} : vector<2x512xf32> to vector<2x128xf32>
    %363 = arith.mulf %356, %338 : vector<2x128xf32>
    %364 = arith.mulf %351, %362 : vector<2x128xf32>
    %365 = arith.addf %363, %364 : vector<2x128xf32>
    %366 = math.tanh %365 : vector<2x128xf32>
    %367 = arith.mulf %361, %366 : vector<2x128xf32>
    %c0_131 = arith.constant 0 : index
    %c0_132 = arith.constant 0 : index
    %368 = vector.load %arg6[%c0_131, %c0_132] : memref<128x512xf32, #tpu.memory_space<vmem>>, vector<128x512xf32>
    %cst_133 = arith.constant dense<0.000000e+00> : vector<2x512xf32>
    %369 = tpu.matmul %367, %368, %cst_133 {dimension_numbers = #tpu.dot_dimension_numbers<[1], [0], [0], [1], [0, 0, 1, 1], [], []>} : vector<2x128xf32>, vector<128x512xf32>, vector<2x512xf32> -> vector<2x512xf32>
    %370 = vector.extract_strided_slice %232 {offsets = [10, 0], sizes = [2, 512], strides = [1, 1]} : vector<16x512xf32> to vector<2x512xf32>
    %371 = arith.addf %370, %369 : vector<2x512xf32>
    %372 = arith.addf %371, %8 : vector<2x512xf32>
    %373 = math.tanh %372 : vector<2x512xf32>
    %374 = vector.extract_strided_slice %373 {offsets = [0, 0], sizes = [2, 128], strides = [1, 1]} : vector<2x512xf32> to vector<2x128xf32>
    %cst_134 = arith.constant 1.000000e+00 : f32
    %375 = vector.broadcast %cst_134 : f32 to vector<2x128xf32>
    %376 = arith.addf %374, %375 : vector<2x128xf32>
    %cst_135 = arith.constant 5.000000e-01 : f32
    %377 = vector.broadcast %cst_135 : f32 to vector<2x128xf32>
    %378 = arith.mulf %377, %376 : vector<2x128xf32>
    %379 = vector.extract_strided_slice %373 {offsets = [0, 128], sizes = [2, 128], strides = [1, 1]} : vector<2x512xf32> to vector<2x128xf32>
    %cst_136 = arith.constant 1.000000e+00 : f32
    %380 = vector.broadcast %cst_136 : f32 to vector<2x128xf32>
    %381 = arith.addf %379, %380 : vector<2x128xf32>
    %cst_137 = arith.constant 5.000000e-01 : f32
    %382 = vector.broadcast %cst_137 : f32 to vector<2x128xf32>
    %383 = arith.mulf %382, %381 : vector<2x128xf32>
    %384 = vector.extract_strided_slice %373 {offsets = [0, 256], sizes = [2, 128], strides = [1, 1]} : vector<2x512xf32> to vector<2x128xf32>
    %cst_138 = arith.constant 1.000000e+00 : f32
    %385 = vector.broadcast %cst_138 : f32 to vector<2x128xf32>
    %386 = arith.addf %384, %385 : vector<2x128xf32>
    %cst_139 = arith.constant 5.000000e-01 : f32
    %387 = vector.broadcast %cst_139 : f32 to vector<2x128xf32>
    %388 = arith.mulf %387, %386 : vector<2x128xf32>
    %389 = vector.extract_strided_slice %373 {offsets = [0, 384], sizes = [2, 128], strides = [1, 1]} : vector<2x512xf32> to vector<2x128xf32>
    %390 = arith.mulf %383, %365 : vector<2x128xf32>
    %391 = arith.mulf %378, %389 : vector<2x128xf32>
    %392 = arith.addf %390, %391 : vector<2x128xf32>
    %393 = math.tanh %392 : vector<2x128xf32>
    %394 = arith.mulf %388, %393 : vector<2x128xf32>
    %c0_140 = arith.constant 0 : index
    %c0_141 = arith.constant 0 : index
    %395 = vector.load %arg6[%c0_140, %c0_141] : memref<128x512xf32, #tpu.memory_space<vmem>>, vector<128x512xf32>
    %cst_142 = arith.constant dense<0.000000e+00> : vector<2x512xf32>
    %396 = tpu.matmul %394, %395, %cst_142 {dimension_numbers = #tpu.dot_dimension_numbers<[1], [0], [0], [1], [0, 0, 1, 1], [], []>} : vector<2x128xf32>, vector<128x512xf32>, vector<2x512xf32> -> vector<2x512xf32>
    %397 = vector.extract_strided_slice %232 {offsets = [12, 0], sizes = [2, 512], strides = [1, 1]} : vector<16x512xf32> to vector<2x512xf32>
    %398 = arith.addf %397, %396 : vector<2x512xf32>
    %399 = arith.addf %398, %8 : vector<2x512xf32>
    %400 = math.tanh %399 : vector<2x512xf32>
    %401 = vector.extract_strided_slice %400 {offsets = [0, 0], sizes = [2, 128], strides = [1, 1]} : vector<2x512xf32> to vector<2x128xf32>
    %cst_143 = arith.constant 1.000000e+00 : f32
    %402 = vector.broadcast %cst_143 : f32 to vector<2x128xf32>
    %403 = arith.addf %401, %402 : vector<2x128xf32>
    %cst_144 = arith.constant 5.000000e-01 : f32
    %404 = vector.broadcast %cst_144 : f32 to vector<2x128xf32>
    %405 = arith.mulf %404, %403 : vector<2x128xf32>
    %406 = vector.extract_strided_slice %400 {offsets = [0, 128], sizes = [2, 128], strides = [1, 1]} : vector<2x512xf32> to vector<2x128xf32>
    %cst_145 = arith.constant 1.000000e+00 : f32
    %407 = vector.broadcast %cst_145 : f32 to vector<2x128xf32>
    %408 = arith.addf %406, %407 : vector<2x128xf32>
    %cst_146 = arith.constant 5.000000e-01 : f32
    %409 = vector.broadcast %cst_146 : f32 to vector<2x128xf32>
    %410 = arith.mulf %409, %408 : vector<2x128xf32>
    %411 = vector.extract_strided_slice %400 {offsets = [0, 256], sizes = [2, 128], strides = [1, 1]} : vector<2x512xf32> to vector<2x128xf32>
    %cst_147 = arith.constant 1.000000e+00 : f32
    %412 = vector.broadcast %cst_147 : f32 to vector<2x128xf32>
    %413 = arith.addf %411, %412 : vector<2x128xf32>
    %cst_148 = arith.constant 5.000000e-01 : f32
    %414 = vector.broadcast %cst_148 : f32 to vector<2x128xf32>
    %415 = arith.mulf %414, %413 : vector<2x128xf32>
    %416 = vector.extract_strided_slice %400 {offsets = [0, 384], sizes = [2, 128], strides = [1, 1]} : vector<2x512xf32> to vector<2x128xf32>
    %417 = arith.mulf %410, %392 : vector<2x128xf32>
    %418 = arith.mulf %405, %416 : vector<2x128xf32>
    %419 = arith.addf %417, %418 : vector<2x128xf32>
    %420 = math.tanh %419 : vector<2x128xf32>
    %421 = arith.mulf %415, %420 : vector<2x128xf32>
    %c0_149 = arith.constant 0 : index
    %c0_150 = arith.constant 0 : index
    %422 = vector.load %arg6[%c0_149, %c0_150] : memref<128x512xf32, #tpu.memory_space<vmem>>, vector<128x512xf32>
    %cst_151 = arith.constant dense<0.000000e+00> : vector<2x512xf32>
    %423 = tpu.matmul %421, %422, %cst_151 {dimension_numbers = #tpu.dot_dimension_numbers<[1], [0], [0], [1], [0, 0, 1, 1], [], []>} : vector<2x128xf32>, vector<128x512xf32>, vector<2x512xf32> -> vector<2x512xf32>
    %424 = vector.extract_strided_slice %232 {offsets = [14, 0], sizes = [2, 512], strides = [1, 1]} : vector<16x512xf32> to vector<2x512xf32>
    %425 = arith.addf %424, %423 : vector<2x512xf32>
    %426 = arith.addf %425, %8 : vector<2x512xf32>
    %427 = math.tanh %426 : vector<2x512xf32>
    %428 = vector.extract_strided_slice %427 {offsets = [0, 0], sizes = [2, 128], strides = [1, 1]} : vector<2x512xf32> to vector<2x128xf32>
    %cst_152 = arith.constant 1.000000e+00 : f32
    %429 = vector.broadcast %cst_152 : f32 to vector<2x128xf32>
    %430 = arith.addf %428, %429 : vector<2x128xf32>
    %cst_153 = arith.constant 5.000000e-01 : f32
    %431 = vector.broadcast %cst_153 : f32 to vector<2x128xf32>
    %432 = arith.mulf %431, %430 : vector<2x128xf32>
    %433 = vector.extract_strided_slice %427 {offsets = [0, 128], sizes = [2, 128], strides = [1, 1]} : vector<2x512xf32> to vector<2x128xf32>
    %cst_154 = arith.constant 1.000000e+00 : f32
    %434 = vector.broadcast %cst_154 : f32 to vector<2x128xf32>
    %435 = arith.addf %433, %434 : vector<2x128xf32>
    %cst_155 = arith.constant 5.000000e-01 : f32
    %436 = vector.broadcast %cst_155 : f32 to vector<2x128xf32>
    %437 = arith.mulf %436, %435 : vector<2x128xf32>
    %438 = vector.extract_strided_slice %427 {offsets = [0, 256], sizes = [2, 128], strides = [1, 1]} : vector<2x512xf32> to vector<2x128xf32>
    %cst_156 = arith.constant 1.000000e+00 : f32
    %439 = vector.broadcast %cst_156 : f32 to vector<2x128xf32>
    %440 = arith.addf %438, %439 : vector<2x128xf32>
    %cst_157 = arith.constant 5.000000e-01 : f32
    %441 = vector.broadcast %cst_157 : f32 to vector<2x128xf32>
    %442 = arith.mulf %441, %440 : vector<2x128xf32>
    %443 = vector.extract_strided_slice %427 {offsets = [0, 384], sizes = [2, 128], strides = [1, 1]} : vector<2x512xf32> to vector<2x128xf32>
    %444 = arith.mulf %437, %419 : vector<2x128xf32>
    %445 = arith.mulf %432, %443 : vector<2x128xf32>
    %446 = arith.addf %444, %445 : vector<2x128xf32>
    %447 = math.tanh %446 : vector<2x128xf32>
    %448 = arith.mulf %442, %447 : vector<2x128xf32>
    %c0_158 = arith.constant 0 : index
    %c0_159 = arith.constant 0 : index
    %449 = vector.load %arg11[%c0_158, %c0_159] : memref<1x512xf32, #tpu.memory_space<vmem>>, vector<1x512xf32>
    %450 = vector.shape_cast %449 : vector<1x512xf32> to vector<1x512xf32>
    %451 = vector.broadcast %450 : vector<1x512xf32> to vector<2x512xf32>
    %c0_160 = arith.constant 0 : index
    %c0_161 = arith.constant 0 : index
    %452 = vector.load %arg10[%c0_160, %c0_161] : memref<128x1024xf32, #tpu.memory_space<vmem>>, vector<128x1024xf32>
    %cst_162 = arith.constant dense<0.000000e+00> : vector<2x1024xf32>
    %453 = tpu.matmul %448, %452, %cst_162 {dimension_numbers = #tpu.dot_dimension_numbers<[1], [0], [0], [1], [0, 0, 1, 1], [], []>} : vector<2x128xf32>, vector<128x1024xf32>, vector<2x1024xf32> -> vector<2x1024xf32>
    %c0_163 = arith.constant 0 : index
    %c0_164 = arith.constant 0 : index
    %454 = vector.load %arg3[%c0_163, %c0_164] : memref<128x512xf32, #tpu.memory_space<vmem>>, vector<128x512xf32>
    %cst_165 = arith.constant dense<0.000000e+00> : vector<2x512xf32>
    %455 = tpu.matmul %229, %454, %cst_165 {dimension_numbers = #tpu.dot_dimension_numbers<[1], [0], [0], [1], [0, 0, 1, 1], [], []>} : vector<2x128xf32>, vector<128x512xf32>, vector<2x512xf32> -> vector<2x512xf32>
    %456 = vector.extract_strided_slice %453 {offsets = [0, 512], sizes = [2, 512], strides = [1, 1]} : vector<2x1024xf32> to vector<2x512xf32>
    %457 = arith.addf %456, %455 : vector<2x512xf32>
    %458 = arith.addf %457, %451 : vector<2x512xf32>
    %459 = math.tanh %458 : vector<2x512xf32>
    %460 = vector.extract_strided_slice %459 {offsets = [0, 0], sizes = [2, 128], strides = [1, 1]} : vector<2x512xf32> to vector<2x128xf32>
    %cst_166 = arith.constant 1.000000e+00 : f32
    %461 = vector.broadcast %cst_166 : f32 to vector<2x128xf32>
    %462 = arith.addf %460, %461 : vector<2x128xf32>
    %cst_167 = arith.constant 5.000000e-01 : f32
    %463 = vector.broadcast %cst_167 : f32 to vector<2x128xf32>
    %464 = arith.mulf %463, %462 : vector<2x128xf32>
    %465 = vector.extract_strided_slice %459 {offsets = [0, 128], sizes = [2, 128], strides = [1, 1]} : vector<2x512xf32> to vector<2x128xf32>
    %cst_168 = arith.constant 1.000000e+00 : f32
    %466 = vector.broadcast %cst_168 : f32 to vector<2x128xf32>
    %467 = arith.addf %465, %466 : vector<2x128xf32>
    %cst_169 = arith.constant 5.000000e-01 : f32
    %468 = vector.broadcast %cst_169 : f32 to vector<2x128xf32>
    %469 = arith.mulf %468, %467 : vector<2x128xf32>
    %470 = vector.extract_strided_slice %459 {offsets = [0, 256], sizes = [2, 128], strides = [1, 1]} : vector<2x512xf32> to vector<2x128xf32>
    %cst_170 = arith.constant 1.000000e+00 : f32
    %471 = vector.broadcast %cst_170 : f32 to vector<2x128xf32>
    %472 = arith.addf %470, %471 : vector<2x128xf32>
    %cst_171 = arith.constant 5.000000e-01 : f32
    %473 = vector.broadcast %cst_171 : f32 to vector<2x128xf32>
    %474 = arith.mulf %473, %472 : vector<2x128xf32>
    %475 = vector.extract_strided_slice %459 {offsets = [0, 384], sizes = [2, 128], strides = [1, 1]} : vector<2x512xf32> to vector<2x128xf32>
    %476 = arith.mulf %469, %227 : vector<2x128xf32>
    %477 = arith.mulf %464, %475 : vector<2x128xf32>
    %478 = arith.addf %476, %477 : vector<2x128xf32>
    %479 = math.tanh %478 : vector<2x128xf32>
    %480 = arith.mulf %474, %479 : vector<2x128xf32>
    %c0_172 = arith.constant 0 : index
    %c0_173 = arith.constant 0 : index
    %481 = vector.load %arg5[%c0_172, %c0_173] : memref<128x512xf32, #tpu.memory_space<vmem>>, vector<128x512xf32>
    %cst_174 = arith.constant dense<0.000000e+00> : vector<2x512xf32>
    %482 = tpu.matmul %480, %481, %cst_174 {dimension_numbers = #tpu.dot_dimension_numbers<[1], [0], [0], [1], [0, 0, 1, 1], [], []>} : vector<2x128xf32>, vector<128x512xf32>, vector<2x512xf32> -> vector<2x512xf32>
    %483 = vector.extract_strided_slice %453 {offsets = [0, 0], sizes = [2, 512], strides = [1, 1]} : vector<2x1024xf32> to vector<2x512xf32>
    %484 = arith.addf %482, %483 : vector<2x512xf32>
    %485 = arith.addf %484, %8 : vector<2x512xf32>
    %486 = math.tanh %485 : vector<2x512xf32>
    %487 = vector.extract_strided_slice %486 {offsets = [0, 0], sizes = [2, 128], strides = [1, 1]} : vector<2x512xf32> to vector<2x128xf32>
    %cst_175 = arith.constant 1.000000e+00 : f32
    %488 = vector.broadcast %cst_175 : f32 to vector<2x128xf32>
    %489 = arith.addf %487, %488 : vector<2x128xf32>
    %cst_176 = arith.constant 5.000000e-01 : f32
    %490 = vector.broadcast %cst_176 : f32 to vector<2x128xf32>
    %491 = arith.mulf %490, %489 : vector<2x128xf32>
    %492 = vector.extract_strided_slice %486 {offsets = [0, 128], sizes = [2, 128], strides = [1, 1]} : vector<2x512xf32> to vector<2x128xf32>
    %cst_177 = arith.constant 1.000000e+00 : f32
    %493 = vector.broadcast %cst_177 : f32 to vector<2x128xf32>
    %494 = arith.addf %492, %493 : vector<2x128xf32>
    %cst_178 = arith.constant 5.000000e-01 : f32
    %495 = vector.broadcast %cst_178 : f32 to vector<2x128xf32>
    %496 = arith.mulf %495, %494 : vector<2x128xf32>
    %497 = vector.extract_strided_slice %486 {offsets = [0, 256], sizes = [2, 128], strides = [1, 1]} : vector<2x512xf32> to vector<2x128xf32>
    %cst_179 = arith.constant 1.000000e+00 : f32
    %498 = vector.broadcast %cst_179 : f32 to vector<2x128xf32>
    %499 = arith.addf %497, %498 : vector<2x128xf32>
    %cst_180 = arith.constant 5.000000e-01 : f32
    %500 = vector.broadcast %cst_180 : f32 to vector<2x128xf32>
    %501 = arith.mulf %500, %499 : vector<2x128xf32>
    %502 = vector.extract_strided_slice %486 {offsets = [0, 384], sizes = [2, 128], strides = [1, 1]} : vector<2x512xf32> to vector<2x128xf32>
    %503 = arith.mulf %496, %446 : vector<2x128xf32>
    %504 = arith.mulf %491, %502 : vector<2x128xf32>
    %505 = arith.addf %503, %504 : vector<2x128xf32>
    %506 = math.tanh %505 : vector<2x128xf32>
    %507 = arith.mulf %501, %506 : vector<2x128xf32>
    %c0_181 = arith.constant 0 : index
    %c0_182 = arith.constant 0 : index
    %508 = vector.load %arg10[%c0_181, %c0_182] : memref<128x1024xf32, #tpu.memory_space<vmem>>, vector<128x1024xf32>
    %cst_183 = arith.constant dense<0.000000e+00> : vector<2x1024xf32>
    %509 = tpu.matmul %507, %508, %cst_183 {dimension_numbers = #tpu.dot_dimension_numbers<[1], [0], [0], [1], [0, 0, 1, 1], [], []>} : vector<2x128xf32>, vector<128x1024xf32>, vector<2x1024xf32> -> vector<2x1024xf32>
    %c0_184 = arith.constant 0 : index
    %c0_185 = arith.constant 0 : index
    %510 = vector.load %arg3[%c0_184, %c0_185] : memref<128x512xf32, #tpu.memory_space<vmem>>, vector<128x512xf32>
    %cst_186 = arith.constant dense<0.000000e+00> : vector<2x512xf32>
    %511 = tpu.matmul %480, %510, %cst_186 {dimension_numbers = #tpu.dot_dimension_numbers<[1], [0], [0], [1], [0, 0, 1, 1], [], []>} : vector<2x128xf32>, vector<128x512xf32>, vector<2x512xf32> -> vector<2x512xf32>
    %512 = vector.extract_strided_slice %509 {offsets = [0, 512], sizes = [2, 512], strides = [1, 1]} : vector<2x1024xf32> to vector<2x512xf32>
    %513 = arith.addf %512, %511 : vector<2x512xf32>
    %514 = arith.addf %513, %451 : vector<2x512xf32>
    %515 = math.tanh %514 : vector<2x512xf32>
    %516 = vector.extract_strided_slice %515 {offsets = [0, 0], sizes = [2, 128], strides = [1, 1]} : vector<2x512xf32> to vector<2x128xf32>
    %cst_187 = arith.constant 1.000000e+00 : f32
    %517 = vector.broadcast %cst_187 : f32 to vector<2x128xf32>
    %518 = arith.addf %516, %517 : vector<2x128xf32>
    %cst_188 = arith.constant 5.000000e-01 : f32
    %519 = vector.broadcast %cst_188 : f32 to vector<2x128xf32>
    %520 = arith.mulf %519, %518 : vector<2x128xf32>
    %521 = vector.extract_strided_slice %515 {offsets = [0, 128], sizes = [2, 128], strides = [1, 1]} : vector<2x512xf32> to vector<2x128xf32>
    %cst_189 = arith.constant 1.000000e+00 : f32
    %522 = vector.broadcast %cst_189 : f32 to vector<2x128xf32>
    %523 = arith.addf %521, %522 : vector<2x128xf32>
    %cst_190 = arith.constant 5.000000e-01 : f32
    %524 = vector.broadcast %cst_190 : f32 to vector<2x128xf32>
    %525 = arith.mulf %524, %523 : vector<2x128xf32>
    %526 = vector.extract_strided_slice %515 {offsets = [0, 256], sizes = [2, 128], strides = [1, 1]} : vector<2x512xf32> to vector<2x128xf32>
    %cst_191 = arith.constant 1.000000e+00 : f32
    %527 = vector.broadcast %cst_191 : f32 to vector<2x128xf32>
    %528 = arith.addf %526, %527 : vector<2x128xf32>
    %cst_192 = arith.constant 5.000000e-01 : f32
    %529 = vector.broadcast %cst_192 : f32 to vector<2x128xf32>
    %530 = arith.mulf %529, %528 : vector<2x128xf32>
    %531 = vector.extract_strided_slice %515 {offsets = [0, 384], sizes = [2, 128], strides = [1, 1]} : vector<2x512xf32> to vector<2x128xf32>
    %532 = arith.mulf %525, %478 : vector<2x128xf32>
    %533 = arith.mulf %520, %531 : vector<2x128xf32>
    %534 = arith.addf %532, %533 : vector<2x128xf32>
    %535 = math.tanh %534 : vector<2x128xf32>
    %536 = arith.mulf %530, %535 : vector<2x128xf32>
    %c0_193 = arith.constant 0 : index
    %c0_194 = arith.constant 0 : index
    %537 = vector.load %arg5[%c0_193, %c0_194] : memref<128x512xf32, #tpu.memory_space<vmem>>, vector<128x512xf32>
    %cst_195 = arith.constant dense<0.000000e+00> : vector<2x512xf32>
    %538 = tpu.matmul %536, %537, %cst_195 {dimension_numbers = #tpu.dot_dimension_numbers<[1], [0], [0], [1], [0, 0, 1, 1], [], []>} : vector<2x128xf32>, vector<128x512xf32>, vector<2x512xf32> -> vector<2x512xf32>
    %539 = vector.extract_strided_slice %509 {offsets = [0, 0], sizes = [2, 512], strides = [1, 1]} : vector<2x1024xf32> to vector<2x512xf32>
    %540 = arith.addf %538, %539 : vector<2x512xf32>
    %541 = arith.addf %540, %8 : vector<2x512xf32>
    %542 = math.tanh %541 : vector<2x512xf32>
    %543 = vector.extract_strided_slice %542 {offsets = [0, 0], sizes = [2, 128], strides = [1, 1]} : vector<2x512xf32> to vector<2x128xf32>
    %cst_196 = arith.constant 1.000000e+00 : f32
    %544 = vector.broadcast %cst_196 : f32 to vector<2x128xf32>
    %545 = arith.addf %543, %544 : vector<2x128xf32>
    %cst_197 = arith.constant 5.000000e-01 : f32
    %546 = vector.broadcast %cst_197 : f32 to vector<2x128xf32>
    %547 = arith.mulf %546, %545 : vector<2x128xf32>
    %548 = vector.extract_strided_slice %542 {offsets = [0, 128], sizes = [2, 128], strides = [1, 1]} : vector<2x512xf32> to vector<2x128xf32>
    %cst_198 = arith.constant 1.000000e+00 : f32
    %549 = vector.broadcast %cst_198 : f32 to vector<2x128xf32>
    %550 = arith.addf %548, %549 : vector<2x128xf32>
    %cst_199 = arith.constant 5.000000e-01 : f32
    %551 = vector.broadcast %cst_199 : f32 to vector<2x128xf32>
    %552 = arith.mulf %551, %550 : vector<2x128xf32>
    %553 = vector.extract_strided_slice %542 {offsets = [0, 256], sizes = [2, 128], strides = [1, 1]} : vector<2x512xf32> to vector<2x128xf32>
    %cst_200 = arith.constant 1.000000e+00 : f32
    %554 = vector.broadcast %cst_200 : f32 to vector<2x128xf32>
    %555 = arith.addf %553, %554 : vector<2x128xf32>
    %cst_201 = arith.constant 5.000000e-01 : f32
    %556 = vector.broadcast %cst_201 : f32 to vector<2x128xf32>
    %557 = arith.mulf %556, %555 : vector<2x128xf32>
    %558 = vector.extract_strided_slice %542 {offsets = [0, 384], sizes = [2, 128], strides = [1, 1]} : vector<2x512xf32> to vector<2x128xf32>
    %559 = arith.mulf %552, %505 : vector<2x128xf32>
    %560 = arith.mulf %547, %558 : vector<2x128xf32>
    %561 = arith.addf %559, %560 : vector<2x128xf32>
    %562 = math.tanh %561 : vector<2x128xf32>
    %563 = arith.mulf %557, %562 : vector<2x128xf32>
    %c0_202 = arith.constant 0 : index
    %c0_203 = arith.constant 0 : index
    %564 = vector.load %arg10[%c0_202, %c0_203] : memref<128x1024xf32, #tpu.memory_space<vmem>>, vector<128x1024xf32>
    %cst_204 = arith.constant dense<0.000000e+00> : vector<2x1024xf32>
    %565 = tpu.matmul %563, %564, %cst_204 {dimension_numbers = #tpu.dot_dimension_numbers<[1], [0], [0], [1], [0, 0, 1, 1], [], []>} : vector<2x128xf32>, vector<128x1024xf32>, vector<2x1024xf32> -> vector<2x1024xf32>
    %c0_205 = arith.constant 0 : index
    %c0_206 = arith.constant 0 : index
    %566 = vector.load %arg3[%c0_205, %c0_206] : memref<128x512xf32, #tpu.memory_space<vmem>>, vector<128x512xf32>
    %cst_207 = arith.constant dense<0.000000e+00> : vector<2x512xf32>
    %567 = tpu.matmul %536, %566, %cst_207 {dimension_numbers = #tpu.dot_dimension_numbers<[1], [0], [0], [1], [0, 0, 1, 1], [], []>} : vector<2x128xf32>, vector<128x512xf32>, vector<2x512xf32> -> vector<2x512xf32>
    %568 = vector.extract_strided_slice %565 {offsets = [0, 512], sizes = [2, 512], strides = [1, 1]} : vector<2x1024xf32> to vector<2x512xf32>
    %569 = arith.addf %568, %567 : vector<2x512xf32>
    %570 = arith.addf %569, %451 : vector<2x512xf32>
    %571 = math.tanh %570 : vector<2x512xf32>
    %572 = vector.extract_strided_slice %571 {offsets = [0, 0], sizes = [2, 128], strides = [1, 1]} : vector<2x512xf32> to vector<2x128xf32>
    %cst_208 = arith.constant 1.000000e+00 : f32
    %573 = vector.broadcast %cst_208 : f32 to vector<2x128xf32>
    %574 = arith.addf %572, %573 : vector<2x128xf32>
    %cst_209 = arith.constant 5.000000e-01 : f32
    %575 = vector.broadcast %cst_209 : f32 to vector<2x128xf32>
    %576 = arith.mulf %575, %574 : vector<2x128xf32>
    %577 = vector.extract_strided_slice %571 {offsets = [0, 128], sizes = [2, 128], strides = [1, 1]} : vector<2x512xf32> to vector<2x128xf32>
    %cst_210 = arith.constant 1.000000e+00 : f32
    %578 = vector.broadcast %cst_210 : f32 to vector<2x128xf32>
    %579 = arith.addf %577, %578 : vector<2x128xf32>
    %cst_211 = arith.constant 5.000000e-01 : f32
    %580 = vector.broadcast %cst_211 : f32 to vector<2x128xf32>
    %581 = arith.mulf %580, %579 : vector<2x128xf32>
    %582 = vector.extract_strided_slice %571 {offsets = [0, 256], sizes = [2, 128], strides = [1, 1]} : vector<2x512xf32> to vector<2x128xf32>
    %cst_212 = arith.constant 1.000000e+00 : f32
    %583 = vector.broadcast %cst_212 : f32 to vector<2x128xf32>
    %584 = arith.addf %582, %583 : vector<2x128xf32>
    %cst_213 = arith.constant 5.000000e-01 : f32
    %585 = vector.broadcast %cst_213 : f32 to vector<2x128xf32>
    %586 = arith.mulf %585, %584 : vector<2x128xf32>
    %587 = vector.extract_strided_slice %571 {offsets = [0, 384], sizes = [2, 128], strides = [1, 1]} : vector<2x512xf32> to vector<2x128xf32>
    %588 = arith.mulf %581, %534 : vector<2x128xf32>
    %589 = arith.mulf %576, %587 : vector<2x128xf32>
    %590 = arith.addf %588, %589 : vector<2x128xf32>
    %591 = math.tanh %590 : vector<2x128xf32>
    %592 = arith.mulf %586, %591 : vector<2x128xf32>
    %c0_214 = arith.constant 0 : index
    %c0_215 = arith.constant 0 : index
    %593 = vector.load %arg5[%c0_214, %c0_215] : memref<128x512xf32, #tpu.memory_space<vmem>>, vector<128x512xf32>
    %cst_216 = arith.constant dense<0.000000e+00> : vector<2x512xf32>
    %594 = tpu.matmul %592, %593, %cst_216 {dimension_numbers = #tpu.dot_dimension_numbers<[1], [0], [0], [1], [0, 0, 1, 1], [], []>} : vector<2x128xf32>, vector<128x512xf32>, vector<2x512xf32> -> vector<2x512xf32>
    %595 = vector.extract_strided_slice %565 {offsets = [0, 0], sizes = [2, 512], strides = [1, 1]} : vector<2x1024xf32> to vector<2x512xf32>
    %596 = arith.addf %594, %595 : vector<2x512xf32>
    %597 = arith.addf %596, %8 : vector<2x512xf32>
    %598 = math.tanh %597 : vector<2x512xf32>
    %599 = vector.extract_strided_slice %598 {offsets = [0, 0], sizes = [2, 128], strides = [1, 1]} : vector<2x512xf32> to vector<2x128xf32>
    %cst_217 = arith.constant 1.000000e+00 : f32
    %600 = vector.broadcast %cst_217 : f32 to vector<2x128xf32>
    %601 = arith.addf %599, %600 : vector<2x128xf32>
    %cst_218 = arith.constant 5.000000e-01 : f32
    %602 = vector.broadcast %cst_218 : f32 to vector<2x128xf32>
    %603 = arith.mulf %602, %601 : vector<2x128xf32>
    %604 = vector.extract_strided_slice %598 {offsets = [0, 128], sizes = [2, 128], strides = [1, 1]} : vector<2x512xf32> to vector<2x128xf32>
    %cst_219 = arith.constant 1.000000e+00 : f32
    %605 = vector.broadcast %cst_219 : f32 to vector<2x128xf32>
    %606 = arith.addf %604, %605 : vector<2x128xf32>
    %cst_220 = arith.constant 5.000000e-01 : f32
    %607 = vector.broadcast %cst_220 : f32 to vector<2x128xf32>
    %608 = arith.mulf %607, %606 : vector<2x128xf32>
    %609 = vector.extract_strided_slice %598 {offsets = [0, 256], sizes = [2, 128], strides = [1, 1]} : vector<2x512xf32> to vector<2x128xf32>
    %cst_221 = arith.constant 1.000000e+00 : f32
    %610 = vector.broadcast %cst_221 : f32 to vector<2x128xf32>
    %611 = arith.addf %609, %610 : vector<2x128xf32>
    %cst_222 = arith.constant 5.000000e-01 : f32
    %612 = vector.broadcast %cst_222 : f32 to vector<2x128xf32>
    %613 = arith.mulf %612, %611 : vector<2x128xf32>
    %614 = vector.extract_strided_slice %598 {offsets = [0, 384], sizes = [2, 128], strides = [1, 1]} : vector<2x512xf32> to vector<2x128xf32>
    %615 = arith.mulf %608, %561 : vector<2x128xf32>
    %616 = arith.mulf %603, %614 : vector<2x128xf32>
    %617 = arith.addf %615, %616 : vector<2x128xf32>
    %618 = math.tanh %617 : vector<2x128xf32>
    %619 = arith.mulf %613, %618 : vector<2x128xf32>
    %620 = tpu.concatenate %259, %286, %313, %340, %367, %394, %421, %448, %507, %563, %619 in 0 : vector<2x128xf32>, vector<2x128xf32>, vector<2x128xf32>, vector<2x128xf32>, vector<2x128xf32>, vector<2x128xf32>, vector<2x128xf32>, vector<2x128xf32>, vector<2x128xf32>, vector<2x128xf32>, vector<2x128xf32> -> vector<22x128xf32>
    %621 = vector.broadcast %1 : vector<1x128xf32> to vector<22x128xf32>
    %622 = arith.mulf %620, %621 : vector<22x128xf32>
    %cst_223 = arith.constant dense<0.000000e+00> : vector<22xf32>
    %623 = vector.multi_reduction <add>, %622, %cst_223 [1] : vector<22x128xf32> to vector<22xf32>
    %624 = vector.shape_cast %623 : vector<22xf32> to vector<22x1xf32>
    %625 = vector.broadcast %2 : vector<1x1xf32> to vector<22x1xf32>
    %626 = arith.addf %624, %625 : vector<22x1xf32>
    %c0_224 = arith.constant 0 : index
    %c0_225 = arith.constant 0 : index
    %627 = vector.load %arg12[%c0_224, %c0_225] : memref<22x1xf32, #tpu.memory_space<vmem>>, vector<22x1xf32>
    tpu.vector_store %arg12[%c0_224, %c0_225], %626 {strides = array<i32>} : memref<22x1xf32, #tpu.memory_space<vmem>>, vector<22x1xf32>,
    return
  }
  func.func @transform_0(%arg0: i32) -> (i32, i32) {
    %c0_i32 = arith.constant 0 : i32
    %c0_i32_0 = arith.constant 0 : i32
    %c0_i32_1 = arith.constant 0 : i32
    return %c0_i32, %c0_i32_0 : i32, i32
  }
  func.func @transform_1(%arg0: i32) -> (i32, i32) {
    %c0_i32 = arith.constant 0 : i32
    %c0_i32_0 = arith.constant 0 : i32
    %c0_i32_1 = arith.constant 0 : i32
    return %c0_i32, %c0_i32_0 : i32, i32
  }
  func.func @transform_2(%arg0: i32) -> (i32, i32) {
    %c0_i32 = arith.constant 0 : i32
    %c0_i32_0 = arith.constant 0 : i32
    %c0_i32_1 = arith.constant 0 : i32
    return %c0_i32, %c0_i32_0 : i32, i32
  }
  func.func @transform_3(%arg0: i32) -> (i32, i32) {
    %c0_i32 = arith.constant 0 : i32
    %c0_i32_0 = arith.constant 0 : i32
    %c0_i32_1 = arith.constant 0 : i32
    return %c0_i32, %c0_i32_0 : i32, i32
  }
  func.func @transform_4(%arg0: i32) -> (i32, i32) {
    %c0_i32 = arith.constant 0 : i32
    %c0_i32_0 = arith.constant 0 : i32
    %c0_i32_1 = arith.constant 0 : i32
    return %c0_i32, %c0_i32_0 : i32, i32
  }
  func.func @transform_5(%arg0: i32) -> (i32, i32) {
    %c0_i32 = arith.constant 0 : i32
    %c0_i32_0 = arith.constant 0 : i32
    %c0_i32_1 = arith.constant 0 : i32
    return %c0_i32, %c0_i32_0 : i32, i32
  }
  func.func @transform_6(%arg0: i32) -> (i32, i32) {
    %c0_i32 = arith.constant 0 : i32
    %c0_i32_0 = arith.constant 0 : i32
    %c0_i32_1 = arith.constant 0 : i32
    return %c0_i32, %c0_i32_0 : i32, i32
  }
  func.func @transform_7(%arg0: i32) -> (i32, i32) {
    %c0_i32 = arith.constant 0 : i32
    %c0_i32_0 = arith.constant 0 : i32
    %c0_i32_1 = arith.constant 0 : i32
    return %c0_i32, %c0_i32_0 : i32, i32
  }
  func.func @transform_8(%arg0: i32) -> (i32, i32) {
    %c0_i32 = arith.constant 0 : i32
    %c0_i32_0 = arith.constant 0 : i32
    %c0_i32_1 = arith.constant 0 : i32
    return %c0_i32, %c0_i32_0 : i32, i32
  }
  func.func @transform_9(%arg0: i32) -> (i32, i32) {
    %c0_i32 = arith.constant 0 : i32
    %c0_i32_0 = arith.constant 0 : i32
    %c0_i32_1 = arith.constant 0 : i32
    return %c0_i32, %c0_i32_0 : i32, i32
  }
  func.func @transform_10(%arg0: i32) -> (i32, i32) {
    %c0_i32 = arith.constant 0 : i32
    %c0_i32_0 = arith.constant 0 : i32
    %c0_i32_1 = arith.constant 0 : i32
    return %c0_i32, %c0_i32_0 : i32, i32
  }
  func.func @transform_11(%arg0: i32) -> (i32, i32) {
    %c0_i32 = arith.constant 0 : i32
    %c0_i32_0 = arith.constant 0 : i32
    %c0_i32_1 = arith.constant 0 : i32
    return %c0_i32, %c0_i32_0 : i32, i32
  }
}

</mosaic_0001>

<llo_original>
// kernel: lstm_trainer_forward.1
$region0: #{lstm_trainer_forward.1}
  #allocation0 [shape = 'u32[]', space=smem, size = 0x4, offset = 0x4, fixed_abs, tag = 'smem constant byte address 0x4 - core index']
  #allocation1 [shape = 'u32[144,128]{1,0:T(1,128)}', space=vmem, size = 0x12000, scoped, tag = 'internal scratch']
  #allocation2 [shape = 'f32[1,1]{1,0:T(1,128)S(1)}', space=vmem, size = 0x200, scoped, tag = 'scoped memory for lstm_trainer_forward.1']
  %s0 = inlined_call_operand.vmem [shape: f32[16,1], index: 0, kind: input, shape index: {}]
  %s1 = inlined_call_operand.vmem [shape: f32[1,512], index: 1, kind: input, shape index: {}]
  %s2 = inlined_call_operand.hbm [shape: f32[128,512], index: 2, kind: input, shape index: {}]
  %s3 = inlined_call_operand.vmem [shape: f32[1,512], index: 3, kind: input, shape index: {}]
  %s4 = inlined_call_operand.hbm [shape: f32[128,512], index: 4, kind: input, shape index: {}]
  %s5 = inlined_call_operand.hbm [shape: f32[128,512], index: 5, kind: input, shape index: {}]
  %s6 = inlined_call_operand.vmem [shape: f32[1,512], index: 6, kind: input, shape index: {}]
  %s7 = inlined_call_operand.vmem [shape: f32[1,128], index: 7, kind: input, shape index: {}]
  %s8 = inlined_call_operand.<no memory space> [shape: f32[1,1], index: 8, kind: input, shape index: {}]
  %s9 = inlined_call_operand.hbm [shape: f32[128,1024], index: 9, kind: input, shape index: {}]
  %s10 = inlined_call_operand.vmem [shape: f32[1,512], index: 10, kind: input, shape index: {}]
  %s11 = inlined_call_operand.vmem [shape: f32[22,1], index: 11, kind: output, shape index: {}]
  %s12 = sld [smem:[#allocation0]]
  $region70: #{lstm_trainer_forward.1} parent=0
    _
  %s14 = ssub.s32 1, %s12
  %s15 = scalar_select 0, %s14, %s12
  %v16 = vstv %s8
  %17 = vst [vmem:[#allocation2] sm:$0x1] %v16
  $region1: #{lstm_trainer_forward.1} parent=0
    #allocation3 [shape = 'u8[262144]{0}', space=vmem, size = 0x40000, scoped, tag = 'input window, operand 2, single buffered']
    #allocation4 [shape = 's32[1]{0}', space=sflag, size = 0x4, scoped, tag = 'scoped memory for lstm_trainer_forward.1']
    #allocation5 [shape = 'u8[262144]{0}', space=vmem, size = 0x40000, scoped, tag = 'input window, operand 4, single buffered']
    #allocation6 [shape = 's32[1]{0}', space=sflag, size = 0x4, scoped, tag = 'scoped memory for lstm_trainer_forward.1']
    #allocation7 [shape = 'u8[262144]{0}', space=vmem, size = 0x40000, scoped, tag = 'input window, operand 5, single buffered']
    #allocation8 [shape = 'u8[524288]{0}', space=vmem, size = 0x80000, scoped, tag = 'input window, operand 9, single buffered']
    #allocation9 [shape = 's32[1]{0}', space=sflag, size = 0x4, scoped, tag = 'scoped memory for lstm_trainer_forward.1']
    %18 = vsyncpa [#allocation4], 0
    %19 = vsyncpa [#allocation6], 0
    %20 = vsyncpa [#allocation9], 0
    // Predicated region
    $region2: #{lstm_trainer_forward.1} parent=1 // pred_check
      _
    $region3: #{lstm_trainer_forward.1} parent=1 // pred_check_branch
      %22 = sbr.rel (0) target = $region5
    $region4: #{lstm_trainer_forward.1} parent=1 // pred_region
      _
    $region5: #{lstm_trainer_forward.1} parent=1 // pred_fallthru
      _
    // Predicated region
    $region6: #{lstm_trainer_forward.1} parent=1 // pred_check
      _
    $region7: #{lstm_trainer_forward.1} parent=1 // pred_check_branch
      %24 = sbr.rel (0) target = $region9
    $region8: #{lstm_trainer_forward.1} parent=1 // pred_region
      _
    $region9: #{lstm_trainer_forward.1} parent=1 // pred_fallthru
      _
    // Predicated region
    $region10: #{lstm_trainer_forward.1} parent=1 // pred_check
      _
    $region11: #{lstm_trainer_forward.1} parent=1 // pred_check_branch
      %26 = sbr.rel (0) target = $region13
    $region12: #{lstm_trainer_forward.1} parent=1 // pred_region
      %s28 = ssub.s32 8192, 8192
      %29 = vsyncadd [#allocation4], %s28
      %s30 = sshll.u32 [#allocation3], 4
      %s31 = int_to_ptr.vmem [resolvable:$true] %s30
      %36 = dma.hbm_to_vmem [thread:$0]  %s2, 8192, %s31, [#allocation4], 512, 512, 32
    $region13: #{lstm_trainer_forward.1} parent=1 // pred_fallthru
      _
    // Predicated region
    $region14: #{lstm_trainer_forward.1} parent=1 // pred_check
      _
    $region15: #{lstm_trainer_forward.1} parent=1 // pred_check_branch
      %38 = sbr.rel (0) target = $region17
    $region16: #{lstm_trainer_forward.1} parent=1 // pred_region
      _
    $region17: #{lstm_trainer_forward.1} parent=1 // pred_fallthru
      _
    // Predicated region
    $region18: #{lstm_trainer_forward.1} parent=1 // pred_check
      _
    $region19: #{lstm_trainer_forward.1} parent=1 // pred_check_branch
      %40 = sbr.rel (0) target = $region21
    $region20: #{lstm_trainer_forward.1} parent=1 // pred_region
      %s42 = ssub.s32 8192, 8192
      %43 = vsyncadd [#allocation6], %s42
      %s44 = sshll.u32 [#allocation5], 4
      %s45 = int_to_ptr.vmem [resolvable:$true] %s44
      %50 = dma.hbm_to_vmem [thread:$0]  %s4, 8192, %s45, [#allocation6], 512, 512, 32
    $region21: #{lstm_trainer_forward.1} parent=1 // pred_fallthru
      _
    // Predicated region
    $region22: #{lstm_trainer_forward.1} parent=1 // pred_check
      _
    $region23: #{lstm_trainer_forward.1} parent=1 // pred_check_branch
      %52 = sbr.rel (0) target = $region25
    $region24: #{lstm_trainer_forward.1} parent=1 // pred_region
      %s54 = ssub.s32 8192, 8192
      %55 = vsyncadd [#allocation6], %s54
      %s56 = sshll.u32 [#allocation7], 4
      %s57 = int_to_ptr.vmem [resolvable:$true] %s56
      %62 = dma.hbm_to_vmem [thread:$0]  %s5, 8192, %s57, [#allocation6], 512, 512, 32
    $region25: #{lstm_trainer_forward.1} parent=1 // pred_fallthru
      _
    // Predicated region
    $region26: #{lstm_trainer_forward.1} parent=1 // pred_check
      _
    $region27: #{lstm_trainer_forward.1} parent=1 // pred_check_branch
      %64 = sbr.rel (0) target = $region29
    $region28: #{lstm_trainer_forward.1} parent=1 // pred_region
      _
    $region29: #{lstm_trainer_forward.1} parent=1 // pred_fallthru
      _
    // Predicated region
    $region30: #{lstm_trainer_forward.1} parent=1 // pred_check
      _
    $region31: #{lstm_trainer_forward.1} parent=1 // pred_check_branch
      %66 = sbr.rel (0) target = $region33
    $region32: #{lstm_trainer_forward.1} parent=1 // pred_region
      _
    $region33: #{lstm_trainer_forward.1} parent=1 // pred_fallthru
      _
    // Predicated region
    $region34: #{lstm_trainer_forward.1} parent=1 // pred_check
      _
    $region35: #{lstm_trainer_forward.1} parent=1 // pred_check_branch
      %68 = sbr.rel (0) target = $region37
    $region36: #{lstm_trainer_forward.1} parent=1 // pred_region
      _
    $region37: #{lstm_trainer_forward.1} parent=1 // pred_fallthru
      _
    // Predicated region
    $region38: #{lstm_trainer_forward.1} parent=1 // pred_check
      _
    $region39: #{lstm_trainer_forward.1} parent=1 // pred_check_branch
      %70 = sbr.rel (0) target = $region41
    $region40: #{lstm_trainer_forward.1} parent=1 // pred_region
      %s72 = ssub.s32 16384, 16384
      %73 = vsyncadd [#allocation9], %s72
      %s74 = sshll.u32 [#allocation8], 4
      %s75 = int_to_ptr.vmem [resolvable:$true] %s74
      %80 = dma.hbm_to_vmem [thread:$0]  %s9, 16384, %s75, [#allocation9], 1024, 1024, 64
    $region41: #{lstm_trainer_forward.1} parent=1 // pred_fallthru
      _
    // Predicated region
    $region42: #{lstm_trainer_forward.1} parent=1 // pred_check
      _
    $region43: #{lstm_trainer_forward.1} parent=1 // pred_check_branch
      %82 = sbr.rel (0) target = $region45
    $region44: #{lstm_trainer_forward.1} parent=1 // pred_region
      _
    $region45: #{lstm_trainer_forward.1} parent=1 // pred_fallthru
      _
    // Predicated region
    $region46: #{lstm_trainer_forward.1} parent=1 // pred_check
      _
    $region47: #{lstm_trainer_forward.1} parent=1 // pred_check_branch
      %84 = sbr.rel (0) target = $region49
    $region48: #{lstm_trainer_forward.1} parent=1 // pred_region
      %85 = dma.done [#allocation4], 8192
    $region49: #{lstm_trainer_forward.1} parent=1 // pred_fallthru
      _
    // Predicated region
    $region50: #{lstm_trainer_forward.1} parent=1 // pred_check
      _
    $region51: #{lstm_trainer_forward.1} parent=1 // pred_check_branch
      %87 = sbr.rel (0) target = $region53
    $region52: #{lstm_trainer_forward.1} parent=1 // pred_region
      %88 = dma.done [#allocation6], 8192
    $region53: #{lstm_trainer_forward.1} parent=1 // pred_fallthru
      _
    // Predicated region
    $region54: #{lstm_trainer_forward.1} parent=1 // pred_check
      _
    $region55: #{lstm_trainer_forward.1} parent=1 // pred_check_branch
      %90 = sbr.rel (0) target = $region57
    $region56: #{lstm_trainer_forward.1} parent=1 // pred_region
      %91 = dma.done [#allocation6], 8192
    $region57: #{lstm_trainer_forward.1} parent=1 // pred_fallthru
      _
    // Predicated region
    $region58: #{lstm_trainer_forward.1} parent=1 // pred_check
      _
    $region59: #{lstm_trainer_forward.1} parent=1 // pred_check_branch
      %93 = sbr.rel (0) target = $region61
    $region60: #{lstm_trainer_forward.1} parent=1 // pred_region
      %94 = dma.done [#allocation9], 16384
    $region61: #{lstm_trainer_forward.1} parent=1 // pred_fallthru
      _
    %v95 = vld [vmem:[%s1] sm:$0xf]
    %v96 = vld [vmem:[%s7] sm:$0x1]
    %v97 = vld [vmem:[#allocation2] sm:$0x1]
    %v98 = vld [vmem:[%s3] sm:$0xf]
    %v100 = vlaneseq
    %v101 = vshrl.u32 %v100, 7
    %v102 = vsub.s32 0, %v101
    %v103 = vrot.slane %v98, %v102
    %v104 = vlaneseq
    %v105 = vshrl.u32 %v104, 7
    %v106 = vsub.s32 1, %v105
    %v107 = vrot.slane %v98, %v106
    %v108 = vlaneseq
    %v109 = vshrl.u32 %v108, 7
    %v110 = vsub.s32 2, %v109
    %v111 = vrot.slane %v98, %v110
    %v112 = vlaneseq
    %v113 = vshrl.u32 %v112, 7
    %v114 = vsub.s32 3, %v113
    %v115 = vrot.slane %v98, %v114
    %v120 = vld [vmem:[%s6] sm:$0xf]
    %v122 = vlaneseq
    %v123 = vshrl.u32 %v122, 7
    %v124 = vsub.s32 0, %v123
    %v125 = vrot.slane %v120, %v124
    %v126 = vlaneseq
    %v127 = vshrl.u32 %v126, 7
    %v128 = vsub.s32 1, %v127
    %v129 = vrot.slane %v120, %v128
    %v130 = vlaneseq
    %v131 = vshrl.u32 %v130, 7
    %v132 = vsub.s32 2, %v131
    %v133 = vrot.slane %v120, %v132
    %v134 = vlaneseq
    %v135 = vshrl.u32 %v134, 7
    %v136 = vsub.s32 3, %v135
    %v137 = vrot.slane %v120, %v136
    %v142 = vld [vmem:[%s0] sm:$0xff]
    %v143 = vld [vmem:[%s0 + $0x8] sm:$0xff]
    %145 = vset.pattern.permute.xlu0 0
    %146 = vperm.xlu0 %145, %v142
    %v147 = vpop.permute.xlu0 %146
    %150 = vset.pattern.permute.xlu0 0
    %151 = vperm.xlu0 %150, %v143
    %v152 = vpop.permute.xlu0 %151
    %v155 = vlaneseq
    %v156 = vshrl.u32 %v155, 7
    %v157 = vsub.s32 0, %v156
    %v158 = vrot.slane %v95, %v157
    %v159 = vlaneseq
    %v160 = vshrl.u32 %v159, 7
    %v161 = vsub.s32 1, %v160
    %v162 = vrot.slane %v95, %v161
    %v163 = vlaneseq
    %v164 = vshrl.u32 %v163, 7
    %v165 = vsub.s32 2, %v164
    %v166 = vrot.slane %v95, %v165
    %v167 = vlaneseq
    %v168 = vshrl.u32 %v167, 7
    %v169 = vsub.s32 3, %v168
    %v170 = vrot.slane %v95, %v169
    %v175 = vmul.f32 %v147, %v158
    %v176 = vmul.f32 %v147, %v162
    %v177 = vmul.f32 %v147, %v166
    %v178 = vmul.f32 %v147, %v170
    %v179 = vmul.f32 %v152, %v158
    %v180 = vmul.f32 %v152, %v162
    %v181 = vmul.f32 %v152, %v166
    %v182 = vmul.f32 %v152, %v170
    %v183 = vld [vmem:[#allocation3] sm:$0xff]
    %v184 = vld [vmem:[#allocation3 + $0x8] sm:$0xff]
    %v185 = vld [vmem:[#allocation3 + $0x10] sm:$0xff]
    %v186 = vld [vmem:[#allocation3 + $0x18] sm:$0xff]
    %v187 = vld [vmem:[#allocation3 + $0x20] sm:$0xff]
    %v188 = vld [vmem:[#allocation3 + $0x28] sm:$0xff]
    %v189 = vld [vmem:[#allocation3 + $0x30] sm:$0xff]
    %v190 = vld [vmem:[#allocation3 + $0x38] sm:$0xff]
    %v191 = vld [vmem:[#allocation3 + $0x40] sm:$0xff]
    %v192 = vld [vmem:[#allocation3 + $0x48] sm:$0xff]
    %v193 = vld [vmem:[#allocation3 + $0x50] sm:$0xff]
    %v194 = vld [vmem:[#allocation3 + $0x58] sm:$0xff]
    %v195 = vld [vmem:[#allocation3 + $0x60] sm:$0xff]
    %v196 = vld [vmem:[#allocation3 + $0x68] sm:$0xff]
    %v197 = vld [vmem:[#allocation3 + $0x70] sm:$0xff]
    %v198 = vld [vmem:[#allocation3 + $0x78] sm:$0xff]
    %v199 = vld [vmem:[#allocation3 + $0x80] sm:$0xff]
    %v200 = vld [vmem:[#allocation3 + $0x88] sm:$0xff]
    %v201 = vld [vmem:[#allocation3 + $0x90] sm:$0xff]
    %v202 = vld [vmem:[#allocation3 + $0x98] sm:$0xff]
    %v203 = vld [vmem:[#allocation3 + $0xa0] sm:$0xff]
    %v204 = vld [vmem:[#allocation3 + $0xa8] sm:$0xff]
    %v205 = vld [vmem:[#allocation3 + $0xb0] sm:$0xff]
    %v206 = vld [vmem:[#allocation3 + $0xb8] sm:$0xff]
    %v207 = vld [vmem:[#allocation3 + $0xc0] sm:$0xff]
    %v208 = vld [vmem:[#allocation3 + $0xc8] sm:$0xff]
    %v209 = vld [vmem:[#allocation3 + $0xd0] sm:$0xff]
    %v210 = vld [vmem:[#allocation3 + $0xd8] sm:$0xff]
    %v211 = vld [vmem:[#allocation3 + $0xe0] sm:$0xff]
    %v212 = vld [vmem:[#allocation3 + $0xe8] sm:$0xff]
    %v213 = vld [vmem:[#allocation3 + $0xf0] sm:$0xff]
    %v214 = vld [vmem:[#allocation3 + $0xf8] sm:$0xff]
    %v215 = vld [vmem:[#allocation3 + $0x100] sm:$0xff]
    %v216 = vld [vmem:[#allocation3 + $0x108] sm:$0xff]
    %v217 = vld [vmem:[#allocation3 + $0x110] sm:$0xff]
    %v218 = vld [vmem:[#allocation3 + $0x118] sm:$0xff]
    %v219 = vld [vmem:[#allocation3 + $0x120] sm:$0xff]
    %v220 = vld [vmem:[#allocation3 + $0x128] sm:$0xff]
    %v221 = vld [vmem:[#allocation3 + $0x130] sm:$0xff]
    %v222 = vld [vmem:[#allocation3 + $0x138] sm:$0xff]
    %v223 = vld [vmem:[#allocation3 + $0x140] sm:$0xff]
    %v224 = vld [vmem:[#allocation3 + $0x148] sm:$0xff]
    %v225 = vld [vmem:[#allocation3 + $0x150] sm:$0xff]
    %v226 = vld [vmem:[#allocation3 + $0x158] sm:$0xff]
    %v227 = vld [vmem:[#allocation3 + $0x160] sm:$0xff]
    %v228 = vld [vmem:[#allocation3 + $0x168] sm:$0xff]
    %v229 = vld [vmem:[#allocation3 + $0x170] sm:$0xff]
    %v230 = vld [vmem:[#allocation3 + $0x178] sm:$0xff]
    %v231 = vld [vmem:[#allocation3 + $0x180] sm:$0xff]
    %v232 = vld [vmem:[#allocation3 + $0x188] sm:$0xff]
    %v233 = vld [vmem:[#allocation3 + $0x190] sm:$0xff]
    %v234 = vld [vmem:[#allocation3 + $0x198] sm:$0xff]
    %v235 = vld [vmem:[#allocation3 + $0x1a0] sm:$0xff]
    %v236 = vld [vmem:[#allocation3 + $0x1a8] sm:$0xff]
    %v237 = vld [vmem:[#allocation3 + $0x1b0] sm:$0xff]
    %v238 = vld [vmem:[#allocation3 + $0x1b8] sm:$0xff]
    %v239 = vld [vmem:[#allocation3 + $0x1c0] sm:$0xff]
    %v240 = vld [vmem:[#allocation3 + $0x1c8] sm:$0xff]
    %v241 = vld [vmem:[#allocation3 + $0x1d0] sm:$0xff]
    %v242 = vld [vmem:[#allocation3 + $0x1d8] sm:$0xff]
    %v243 = vld [vmem:[#allocation3 + $0x1e0] sm:$0xff]
    %v244 = vld [vmem:[#allocation3 + $0x1e8] sm:$0xff]
    %v245 = vld [vmem:[#allocation3 + $0x1f0] sm:$0xff]
    %v246 = vld [vmem:[#allocation3 + $0x1f8] sm:$0xff]
    %247 = vmatprep.subr.mxu0 %v184
    %248 = vmatpush1.msra.mxu0 %v183
    %249 = vmatprep.subr.mxu0 %v188
    %250 = vmatpush1.msra.mxu0 %v187
    %251 = vmatprep.subr.mxu0 %v192
    %252 = vmatpush1.msra.mxu0 %v191
    %253 = vmatprep.subr.mxu0 %v196
    %254 = vmatpush1.msra.mxu0 %v195
    %255 = vmatprep.subr.mxu0 %v200
    %256 = vmatpush1.msra.mxu0 %v199
    %257 = vmatprep.subr.mxu0 %v204
    %258 = vmatpush1.msra.mxu0 %v203
    %259 = vmatprep.subr.mxu0 %v208
    %260 = vmatpush1.msra.mxu0 %v207
    %261 = vmatprep.subr.mxu0 %v212
    %262 = vmatpush1.msra.mxu0 %v211
    %263 = vmatprep.subr.mxu0 %v216
    %264 = vmatpush1.msra.mxu0 %v215
    %265 = vmatprep.subr.mxu0 %v220
    %266 = vmatpush1.msra.mxu0 %v219
    %267 = vmatprep.subr.mxu0 %v224
    %268 = vmatpush1.msra.mxu0 %v223
    %269 = vmatprep.subr.mxu0 %v228
    %270 = vmatpush1.msra.mxu0 %v227
    %271 = vmatprep.subr.mxu0 %v232
    %272 = vmatpush1.msra.mxu0 %v231
    %273 = vmatprep.subr.mxu0 %v236
    %274 = vmatpush1.msra.mxu0 %v235
    %275 = vmatprep.subr.mxu0 %v240
    %276 = vmatpush1.msra.mxu0 %v239
    %277 = vmatprep.subr.mxu0 %v244
    %278 = vmatpush1.msra.mxu0 %v243
    %279 = vmatprep.subr.mxu0 0.0
    %280 = vmatpush1.msra.mxu0 0.0
    %281 = vmatprep.subr.mxu0 0.0
    %282 = vmatpush1.msra.mxu0 0.0
    %283 = vmatprep.subr.mxu0 0.0
    %284 = vmatpush1.msra.mxu0 0.0
    %285 = vmatprep.subr.mxu0 0.0
    %286 = vmatpush1.msra.mxu0 0.0
    %287 = vmatprep.subr.mxu0 0.0
    %288 = vmatpush1.msra.mxu0 0.0
    %289 = vmatprep.subr.mxu0 0.0
    %290 = vmatpush1.msra.mxu0 0.0
    %291 = vmatprep.subr.mxu0 0.0
    %292 = vmatpush1.msra.mxu0 0.0
    %293 = vmatprep.subr.mxu0 0.0
    %294 = vmatpush1.msra.mxu0 0.0
    %295 = vmatprep.subr.mxu0 0.0
    %296 = vmatpush1.msra.mxu0 0.0
    %297 = vmatprep.subr.mxu0 0.0
    %298 = vmatpush1.msra.mxu0 0.0
    %299 = vmatprep.subr.mxu0 0.0
    %300 = vmatpush1.msra.mxu0 0.0
    %301 = vmatprep.subr.mxu0 0.0
    %302 = vmatpush1.msra.mxu0 0.0
    %303 = vmatprep.subr.mxu0 0.0
    %304 = vmatpush1.msra.mxu0 0.0
    %305 = vmatprep.subr.mxu0 0.0
    %306 = vmatpush1.msra.mxu0 0.0
    %307 = vmatprep.subr.mxu0 0.0
    %308 = vmatpush1.msra.mxu0 0.0
    %309 = vmatprep.subr.mxu0 0.0
    %310 = vmatpush1.msra.mxu0 0.0
    %311 = vmatprep.mubr.f32.mxu0 0.0
    %312 = vmatmul.mubr.f32.gmra.mrb[0].mxu0 0.0
    %v313 = vpop.f32.mrb[0].mxu0
    %v314 = vadd.f32 0.0, %v313
    %v315 = vpop.f32.mrb[0].mxu0
    %v316 = vadd.f32 0.0, %v315
    %317 = vdwg.mxu0
    %318 = vmatprep.subr.mxu0 %v186
    %319 = vmatpush1.msra.mxu0 %v185
    %320 = vmatprep.subr.mxu0 %v190
    %321 = vmatpush1.msra.mxu0 %v189
    %322 = vmatprep.subr.mxu0 %v194
    %323 = vmatpush1.msra.mxu0 %v193
    %324 = vmatprep.subr.mxu0 %v198
    %325 = vmatpush1.msra.mxu0 %v197
    %326 = vmatprep.subr.mxu0 %v202
    %327 = vmatpush1.msra.mxu0 %v201
    %328 = vmatprep.subr.mxu0 %v206
    %329 = vmatpush1.msra.mxu0 %v205
    %330 = vmatprep.subr.mxu0 %v210
    %331 = vmatpush1.msra.mxu0 %v209
    %332 = vmatprep.subr.mxu0 %v214
    %333 = vmatpush1.msra.mxu0 %v213
    %334 = vmatprep.subr.mxu0 %v218
    %335 = vmatpush1.msra.mxu0 %v217
    %336 = vmatprep.subr.mxu0 %v222
    %337 = vmatpush1.msra.mxu0 %v221
    %338 = vmatprep.subr.mxu0 %v226
    %339 = vmatpush1.msra.mxu0 %v225
    %340 = vmatprep.subr.mxu0 %v230
    %341 = vmatpush1.msra.mxu0 %v229
    %342 = vmatprep.subr.mxu0 %v234
    %343 = vmatpush1.msra.mxu0 %v233
    %344 = vmatprep.subr.mxu0 %v238
    %345 = vmatpush1.msra.mxu0 %v237
    %346 = vmatprep.subr.mxu0 %v242
    %347 = vmatpush1.msra.mxu0 %v241
    %348 = vmatprep.subr.mxu0 %v246
    %349 = vmatpush1.msra.mxu0 %v245
    %350 = vmatprep.subr.mxu0 0.0
    %351 = vmatpush1.msra.mxu0 0.0
    %352 = vmatprep.subr.mxu0 0.0
    %353 = vmatpush1.msra.mxu0 0.0
    %354 = vmatprep.subr.mxu0 0.0
    %355 = vmatpush1.msra.mxu0 0.0
    %356 = vmatprep.subr.mxu0 0.0
    %357 = vmatpush1.msra.mxu0 0.0
    %358 = vmatprep.subr.mxu0 0.0
    %359 = vmatpush1.msra.mxu0 0.0
    %360 = vmatprep.subr.mxu0 0.0
    %361 = vmatpush1.msra.mxu0 0.0
    %362 = vmatprep.subr.mxu0 0.0
    %363 = vmatpush1.msra.mxu0 0.0
    %364 = vmatprep.subr.mxu0 0.0
    %365 = vmatpush1.msra.mxu0 0.0
    %366 = vmatprep.subr.mxu0 0.0
    %367 = vmatpush1.msra.mxu0 0.0
    %368 = vmatprep.subr.mxu0 0.0
    %369 = vmatpush1.msra.mxu0 0.0
    %370 = vmatprep.subr.mxu0 0.0
    %371 = vmatpush1.msra.mxu0 0.0
    %372 = vmatprep.subr.mxu0 0.0
    %373 = vmatpush1.msra.mxu0 0.0
    %374 = vmatprep.subr.mxu0 0.0
    %375 = vmatpush1.msra.mxu0 0.0
    %376 = vmatprep.subr.mxu0 0.0
    %377 = vmatpush1.msra.mxu0 0.0
    %378 = vmatprep.subr.mxu0 0.0
    %379 = vmatpush1.msra.mxu0 0.0
    %380 = vmatprep.subr.mxu0 0.0
    %381 = vmatpush1.msra.mxu0 0.0
    %382 = vmatprep.mubr.f32.mxu0 0.0
    %383 = vmatmul.mubr.f32.gmra.mrb[0].mxu0 0.0
    %v384 = vpop.f32.mrb[0].mxu0
    %v385 = vadd.f32 0.0, %v384
    %v386 = vpop.f32.mrb[0].mxu0
    %v387 = vadd.f32 0.0, %v386
    %388 = vdwg.mxu0
    %v389 = vadd.f32 %v175, %v314
    %v390 = vadd.f32 %v176, %v316
    %v391 = vadd.f32 %v177, %v385
    %v392 = vadd.f32 %v178, %v387
    %v393 = vadd.f32 %v389, %v103
    %v394 = vadd.f32 %v390, %v107
    %v395 = vadd.f32 %v391, %v111
    %v396 = vadd.f32 %v392, %v115
    %v397 = vtanh.pop %v393
    %v398 = vtanh.pop %v394
    %v399 = vtanh.pop %v395
    %v400 = vtanh.pop %v396
    %v401 = vadd.f32 %v397, 1.0
    %v402 = vmul.f32 %v401, 0.5
    %v403 = vadd.f32 %v398, 1.0
    %v404 = vmul.f32 %v403, 0.5
    %v405 = vadd.f32 %v399, 1.0
    %v406 = vmul.f32 %v405, 0.5
    %v407 = vmul.f32 %v404, 0.0
    %v408 = vmul.f32 %v402, %v400
    %v409 = vadd.f32 %v407, %v408
    %v410 = vtanh.pop %v409
    %v411 = vmul.f32 %v406, %v410
    %412 = vmatprep.subr.mxu0 %v184
    %413 = vmatpush1.msra.mxu0 %v183
    %414 = vmatprep.subr.mxu0 %v188
    %415 = vmatpush1.msra.mxu0 %v187
    %416 = vmatprep.subr.mxu0 %v192
    %417 = vmatpush1.msra.mxu0 %v191
    %418 = vmatprep.subr.mxu0 %v196
    %419 = vmatpush1.msra.mxu0 %v195
    %420 = vmatprep.subr.mxu0 %v200
    %421 = vmatpush1.msra.mxu0 %v199
    %422 = vmatprep.subr.mxu0 %v204
    %423 = vmatpush1.msra.mxu0 %v203
    %424 = vmatprep.subr.mxu0 %v208
    %425 = vmatpush1.msra.mxu0 %v207
    %426 = vmatprep.subr.mxu0 %v212
    %427 = vmatpush1.msra.mxu0 %v211
    %428 = vmatprep.subr.mxu0 %v216
    %429 = vmatpush1.msra.mxu0 %v215
    %430 = vmatprep.subr.mxu0 %v220
    %431 = vmatpush1.msra.mxu0 %v219
    %432 = vmatprep.subr.mxu0 %v224
    %433 = vmatpush1.msra.mxu0 %v223
    %434 = vmatprep.subr.mxu0 %v228
    %435 = vmatpush1.msra.mxu0 %v227
    %436 = vmatprep.subr.mxu0 %v232
    %437 = vmatpush1.msra.mxu0 %v231
    %438 = vmatprep.subr.mxu0 %v236
    %439 = vmatpush1.msra.mxu0 %v235
    %440 = vmatprep.subr.mxu0 %v240
    %441 = vmatpush1.msra.mxu0 %v239
    %442 = vmatprep.subr.mxu0 %v244
    %443 = vmatpush1.msra.mxu0 %v243
    %444 = vmatprep.subr.mxu0 0.0
    %445 = vmatpush1.msra.mxu0 0.0
    %446 = vmatprep.subr.mxu0 0.0
    %447 = vmatpush1.msra.mxu0 0.0
    %448 = vmatprep.subr.mxu0 0.0
    %449 = vmatpush1.msra.mxu0 0.0
    %450 = vmatprep.subr.mxu0 0.0
    %451 = vmatpush1.msra.mxu0 0.0
    %452 = vmatprep.subr.mxu0 0.0
    %453 = vmatpush1.msra.mxu0 0.0
    %454 = vmatprep.subr.mxu0 0.0
    %455 = vmatpush1.msra.mxu0 0.0
    %456 = vmatprep.subr.mxu0 0.0
    %457 = vmatpush1.msra.mxu0 0.0
    %458 = vmatprep.subr.mxu0 0.0
    %459 = vmatpush1.msra.mxu0 0.0
    %460 = vmatprep.subr.mxu0 0.0
    %461 = vmatpush1.msra.mxu0 0.0
    %462 = vmatprep.subr.mxu0 0.0
    %463 = vmatpush1.msra.mxu0 0.0
    %464 = vmatprep.subr.mxu0 0.0
    %465 = vmatpush1.msra.mxu0 0.0
    %466 = vmatprep.subr.mxu0 0.0
    %467 = vmatpush1.msra.mxu0 0.0
    %468 = vmatprep.subr.mxu0 0.0
    %469 = vmatpush1.msra.mxu0 0.0
    %470 = vmatprep.subr.mxu0 0.0
    %471 = vmatpush1.msra.mxu0 0.0
    %472 = vmatprep.subr.mxu0 0.0
    %473 = vmatpush1.msra.mxu0 0.0
    %474 = vmatprep.subr.mxu0 0.0
    %475 = vmatpush1.msra.mxu0 0.0
    %476 = vmatprep.mubr.f32.mxu0 0.0
    %477 = vmatmul.mubr.f32.gmra.mrb[0].mxu0 %v411
    %v478 = vpop.f32.mrb[0].mxu0
    %v479 = vadd.f32 0.0, %v478
    %v480 = vpop.f32.mrb[0].mxu0
    %v481 = vadd.f32 0.0, %v480
    %482 = vdwg.mxu0
    %483 = vmatprep.subr.mxu0 %v186
    %484 = vmatpush1.msra.mxu0 %v185
    %485 = vmatprep.subr.mxu0 %v190
    %486 = vmatpush1.msra.mxu0 %v189
    %487 = vmatprep.subr.mxu0 %v194
    %488 = vmatpush1.msra.mxu0 %v193
    %489 = vmatprep.subr.mxu0 %v198
    %490 = vmatpush1.msra.mxu0 %v197
    %491 = vmatprep.subr.mxu0 %v202
    %492 = vmatpush1.msra.mxu0 %v201
    %493 = vmatprep.subr.mxu0 %v206
    %494 = vmatpush1.msra.mxu0 %v205
    %495 = vmatprep.subr.mxu0 %v210
    %496 = vmatpush1.msra.mxu0 %v209
    %497 = vmatprep.subr.mxu0 %v214
    %498 = vmatpush1.msra.mxu0 %v213
    %499 = vmatprep.subr.mxu0 %v218
    %500 = vmatpush1.msra.mxu0 %v217
    %501 = vmatprep.subr.mxu0 %v222
    %502 = vmatpush1.msra.mxu0 %v221
    %503 = vmatprep.subr.mxu0 %v226
    %504 = vmatpush1.msra.mxu0 %v225
    %505 = vmatprep.subr.mxu0 %v230
    %506 = vmatpush1.msra.mxu0 %v229
    %507 = vmatprep.subr.mxu0 %v234
    %508 = vmatpush1.msra.mxu0 %v233
    %509 = vmatprep.subr.mxu0 %v238
    %510 = vmatpush1.msra.mxu0 %v237
    %511 = vmatprep.subr.mxu0 %v242
    %512 = vmatpush1.msra.mxu0 %v241
    %513 = vmatprep.subr.mxu0 %v246
    %514 = vmatpush1.msra.mxu0 %v245
    %515 = vmatprep.subr.mxu0 0.0
    %516 = vmatpush1.msra.mxu0 0.0
    %517 = vmatprep.subr.mxu0 0.0
    %518 = vmatpush1.msra.mxu0 0.0
    %519 = vmatprep.subr.mxu0 0.0
    %520 = vmatpush1.msra.mxu0 0.0
    %521 = vmatprep.subr.mxu0 0.0
    %522 = vmatpush1.msra.mxu0 0.0
    %523 = vmatprep.subr.mxu0 0.0
    %524 = vmatpush1.msra.mxu0 0.0
    %525 = vmatprep.subr.mxu0 0.0
    %526 = vmatpush1.msra.mxu0 0.0
    %527 = vmatprep.subr.mxu0 0.0
    %528 = vmatpush1.msra.mxu0 0.0
    %529 = vmatprep.subr.mxu0 0.0
    %530 = vmatpush1.msra.mxu0 0.0
    %531 = vmatprep.subr.mxu0 0.0
    %532 = vmatpush1.msra.mxu0 0.0
    %533 = vmatprep.subr.mxu0 0.0
    %534 = vmatpush1.msra.mxu0 0.0
    %535 = vmatprep.subr.mxu0 0.0
    %536 = vmatpush1.msra.mxu0 0.0
    %537 = vmatprep.subr.mxu0 0.0
    %538 = vmatpush1.msra.mxu0 0.0
    %539 = vmatprep.subr.mxu0 0.0
    %540 = vmatpush1.msra.mxu0 0.0
    %541 = vmatprep.subr.mxu0 0.0
    %542 = vmatpush1.msra.mxu0 0.0
    %543 = vmatprep.subr.mxu0 0.0
    %544 = vmatpush1.msra.mxu0 0.0
    %545 = vmatprep.subr.mxu0 0.0
    %546 = vmatpush1.msra.mxu0 0.0
    %547 = vmatprep.mubr.f32.mxu0 0.0
    %548 = vmatmul.mubr.f32.gmra.mrb[0].mxu0 %v411
    %v549 = vpop.f32.mrb[0].mxu0
    %v550 = vadd.f32 0.0, %v549
    %v551 = vpop.f32.mrb[0].mxu0
    %v552 = vadd.f32 0.0, %v551
    %553 = vdwg.mxu0
    %v558 = vrot.slane %v479, 6
    %v559 = vrot.slane %v481, 6
    %v560 = vrot.slane %v550, 6
    %v561 = vrot.slane %v552, 6
    %v566 = vadd.f32 %v175, %v558
    %v567 = vadd.f32 %v176, %v559
    %v568 = vadd.f32 %v177, %v560
    %v569 = vadd.f32 %v178, %v561
    %v570 = vadd.f32 %v566, %v103
    %v571 = vadd.f32 %v567, %v107
    %v572 = vadd.f32 %v568, %v111
    %v573 = vadd.f32 %v569, %v115
    %v574 = vtanh.pop %v570
    %v575 = vtanh.pop %v571
    %v576 = vtanh.pop %v572
    %v577 = vtanh.pop %v573
    %v578 = vadd.f32 %v574, 1.0
    %v579 = vmul.f32 %v578, 0.5
    %v580 = vadd.f32 %v575, 1.0
    %v581 = vmul.f32 %v580, 0.5
    %v582 = vadd.f32 %v576, 1.0
    %v583 = vmul.f32 %v582, 0.5
    %v585 = vrot.slane %v409, 6
    %v587 = vmul.f32 %v581, %v585
    %v588 = vmul.f32 %v579, %v577
    %v589 = vadd.f32 %v587, %v588
    %v590 = vtanh.pop %v589
    %v591 = vmul.f32 %v583, %v590
    %v593 = vrot.slane %v591, 2
    %595 = vmatprep.subr.mxu0 %v184
    %596 = vmatpush1.msra.mxu0 %v183
    %597 = vmatprep.subr.mxu0 %v188
    %598 = vmatpush1.msra.mxu0 %v187
    %599 = vmatprep.subr.mxu0 %v192
    %600 = vmatpush1.msra.mxu0 %v191
    %601 = vmatprep.subr.mxu0 %v196
    %602 = vmatpush1.msra.mxu0 %v195
    %603 = vmatprep.subr.mxu0 %v200
    %604 = vmatpush1.msra.mxu0 %v199
    %605 = vmatprep.subr.mxu0 %v204
    %606 = vmatpush1.msra.mxu0 %v203
    %607 = vmatprep.subr.mxu0 %v208
    %608 = vmatpush1.msra.mxu0 %v207
    %609 = vmatprep.subr.mxu0 %v212
    %610 = vmatpush1.msra.mxu0 %v211
    %611 = vmatprep.subr.mxu0 %v216
    %612 = vmatpush1.msra.mxu0 %v215
    %613 = vmatprep.subr.mxu0 %v220
    %614 = vmatpush1.msra.mxu0 %v219
    %615 = vmatprep.subr.mxu0 %v224
    %616 = vmatpush1.msra.mxu0 %v223
    %617 = vmatprep.subr.mxu0 %v228
    %618 = vmatpush1.msra.mxu0 %v227
    %619 = vmatprep.subr.mxu0 %v232
    %620 = vmatpush1.msra.mxu0 %v231
    %621 = vmatprep.subr.mxu0 %v236
    %622 = vmatpush1.msra.mxu0 %v235
    %623 = vmatprep.subr.mxu0 %v240
    %624 = vmatpush1.msra.mxu0 %v239
    %625 = vmatprep.subr.mxu0 %v244
    %626 = vmatpush1.msra.mxu0 %v243
    %627 = vmatprep.subr.mxu0 0.0
    %628 = vmatpush1.msra.mxu0 0.0
    %629 = vmatprep.subr.mxu0 0.0
    %630 = vmatpush1.msra.mxu0 0.0
    %631 = vmatprep.subr.mxu0 0.0
    %632 = vmatpush1.msra.mxu0 0.0
    %633 = vmatprep.subr.mxu0 0.0
    %634 = vmatpush1.msra.mxu0 0.0
    %635 = vmatprep.subr.mxu0 0.0
    %636 = vmatpush1.msra.mxu0 0.0
    %637 = vmatprep.subr.mxu0 0.0
    %638 = vmatpush1.msra.mxu0 0.0
    %639 = vmatprep.subr.mxu0 0.0
    %640 = vmatpush1.msra.mxu0 0.0
    %641 = vmatprep.subr.mxu0 0.0
    %642 = vmatpush1.msra.mxu0 0.0
    %643 = vmatprep.subr.mxu0 0.0
    %644 = vmatpush1.msra.mxu0 0.0
    %645 = vmatprep.subr.mxu0 0.0
    %646 = vmatpush1.msra.mxu0 0.0
    %647 = vmatprep.subr.mxu0 0.0
    %648 = vmatpush1.msra.mxu0 0.0
    %649 = vmatprep.subr.mxu0 0.0
    %650 = vmatpush1.msra.mxu0 0.0
    %651 = vmatprep.subr.mxu0 0.0
    %652 = vmatpush1.msra.mxu0 0.0
    %653 = vmatprep.subr.mxu0 0.0
    %654 = vmatpush1.msra.mxu0 0.0
    %655 = vmatprep.subr.mxu0 0.0
    %656 = vmatpush1.msra.mxu0 0.0
    %657 = vmatprep.subr.mxu0 0.0
    %658 = vmatpush1.msra.mxu0 0.0
    %659 = vmatprep.mubr.f32.mxu0 0.0
    %660 = vmatmul.mubr.f32.gmra.mrb[0].mxu0 %v593
    %v661 = vpop.f32.mrb[0].mxu0
    %v662 = vadd.f32 0.0, %v661
    %v663 = vpop.f32.mrb[0].mxu0
    %v664 = vadd.f32 0.0, %v663
    %665 = vdwg.mxu0
    %666 = vmatprep.subr.mxu0 %v186
    %667 = vmatpush1.msra.mxu0 %v185
    %668 = vmatprep.subr.mxu0 %v190
    %669 = vmatpush1.msra.mxu0 %v189
    %670 = vmatprep.subr.mxu0 %v194
    %671 = vmatpush1.msra.mxu0 %v193
    %672 = vmatprep.subr.mxu0 %v198
    %673 = vmatpush1.msra.mxu0 %v197
    %674 = vmatprep.subr.mxu0 %v202
    %675 = vmatpush1.msra.mxu0 %v201
    %676 = vmatprep.subr.mxu0 %v206
    %677 = vmatpush1.msra.mxu0 %v205
    %678 = vmatprep.subr.mxu0 %v210
    %679 = vmatpush1.msra.mxu0 %v209
    %680 = vmatprep.subr.mxu0 %v214
    %681 = vmatpush1.msra.mxu0 %v213
    %682 = vmatprep.subr.mxu0 %v218
    %683 = vmatpush1.msra.mxu0 %v217
    %684 = vmatprep.subr.mxu0 %v222
    %685 = vmatpush1.msra.mxu0 %v221
    %686 = vmatprep.subr.mxu0 %v226
    %687 = vmatpush1.msra.mxu0 %v225
    %688 = vmatprep.subr.mxu0 %v230
    %689 = vmatpush1.msra.mxu0 %v229
    %690 = vmatprep.subr.mxu0 %v234
    %691 = vmatpush1.msra.mxu0 %v233
    %692 = vmatprep.subr.mxu0 %v238
    %693 = vmatpush1.msra.mxu0 %v237
    %694 = vmatprep.subr.mxu0 %v242
    %695 = vmatpush1.msra.mxu0 %v241
    %696 = vmatprep.subr.mxu0 %v246
    %697 = vmatpush1.msra.mxu0 %v245
    %698 = vmatprep.subr.mxu0 0.0
    %699 = vmatpush1.msra.mxu0 0.0
    %700 = vmatprep.subr.mxu0 0.0
    %701 = vmatpush1.msra.mxu0 0.0
    %702 = vmatprep.subr.mxu0 0.0
    %703 = vmatpush1.msra.mxu0 0.0
    %704 = vmatprep.subr.mxu0 0.0
    %705 = vmatpush1.msra.mxu0 0.0
    %706 = vmatprep.subr.mxu0 0.0
    %707 = vmatpush1.msra.mxu0 0.0
    %708 = vmatprep.subr.mxu0 0.0
    %709 = vmatpush1.msra.mxu0 0.0
    %710 = vmatprep.subr.mxu0 0.0
    %711 = vmatpush1.msra.mxu0 0.0
    %712 = vmatprep.subr.mxu0 0.0
    %713 = vmatpush1.msra.mxu0 0.0
    %714 = vmatprep.subr.mxu0 0.0
    %715 = vmatpush1.msra.mxu0 0.0
    %716 = vmatprep.subr.mxu0 0.0
    %717 = vmatpush1.msra.mxu0 0.0
    %718 = vmatprep.subr.mxu0 0.0
    %719 = vmatpush1.msra.mxu0 0.0
    %720 = vmatprep.subr.mxu0 0.0
    %721 = vmatpush1.msra.mxu0 0.0
    %722 = vmatprep.subr.mxu0 0.0
    %723 = vmatpush1.msra.mxu0 0.0
    %724 = vmatprep.subr.mxu0 0.0
    %725 = vmatpush1.msra.mxu0 0.0
    %726 = vmatprep.subr.mxu0 0.0
    %727 = vmatpush1.msra.mxu0 0.0
    %728 = vmatprep.subr.mxu0 0.0
    %729 = vmatpush1.msra.mxu0 0.0
    %730 = vmatprep.mubr.f32.mxu0 0.0
    %731 = vmatmul.mubr.f32.gmra.mrb[0].mxu0 %v593
    %v732 = vpop.f32.mrb[0].mxu0
    %v733 = vadd.f32 0.0, %v732
    %v734 = vpop.f32.mrb[0].mxu0
    %v735 = vadd.f32 0.0, %v734
    %736 = vdwg.mxu0
    %v741 = vrot.slane %v662, 4
    %v742 = vrot.slane %v664, 4
    %v743 = vrot.slane %v733, 4
    %v744 = vrot.slane %v735, 4
    %v749 = vadd.f32 %v175, %v741
    %v750 = vadd.f32 %v176, %v742
    %v751 = vadd.f32 %v177, %v743
    %v752 = vadd.f32 %v178, %v744
    %v753 = vadd.f32 %v749, %v103
    %v754 = vadd.f32 %v750, %v107
    %v755 = vadd.f32 %v751, %v111
    %v756 = vadd.f32 %v752, %v115
    %v757 = vtanh.pop %v753
    %v758 = vtanh.pop %v754
    %v759 = vtanh.pop %v755
    %v760 = vtanh.pop %v756
    %v761 = vadd.f32 %v757, 1.0
    %v762 = vmul.f32 %v761, 0.5
    %v763 = vadd.f32 %v758, 1.0
    %v764 = vmul.f32 %v763, 0.5
    %v765 = vadd.f32 %v759, 1.0
    %v766 = vmul.f32 %v765, 0.5
    %v768 = vrot.slane %v589, 6
    %v770 = vmul.f32 %v764, %v768
    %v771 = vmul.f32 %v762, %v760
    %v772 = vadd.f32 %v770, %v771
    %v773 = vtanh.pop %v772
    %v774 = vmul.f32 %v766, %v773
    %v776 = vrot.slane %v774, 4
    %778 = vmatprep.subr.mxu0 %v184
    %779 = vmatpush1.msra.mxu0 %v183
    %780 = vmatprep.subr.mxu0 %v188
    %781 = vmatpush1.msra.mxu0 %v187
    %782 = vmatprep.subr.mxu0 %v192
    %783 = vmatpush1.msra.mxu0 %v191
    %784 = vmatprep.subr.mxu0 %v196
    %785 = vmatpush1.msra.mxu0 %v195
    %786 = vmatprep.subr.mxu0 %v200
    %787 = vmatpush1.msra.mxu0 %v199
    %788 = vmatprep.subr.mxu0 %v204
    %789 = vmatpush1.msra.mxu0 %v203
    %790 = vmatprep.subr.mxu0 %v208
    %791 = vmatpush1.msra.mxu0 %v207
    %792 = vmatprep.subr.mxu0 %v212
    %793 = vmatpush1.msra.mxu0 %v211
    %794 = vmatprep.subr.mxu0 %v216
    %795 = vmatpush1.msra.mxu0 %v215
    %796 = vmatprep.subr.mxu0 %v220
    %797 = vmatpush1.msra.mxu0 %v219
    %798 = vmatprep.subr.mxu0 %v224
    %799 = vmatpush1.msra.mxu0 %v223
    %800 = vmatprep.subr.mxu0 %v228
    %801 = vmatpush1.msra.mxu0 %v227
    %802 = vmatprep.subr.mxu0 %v232
    %803 = vmatpush1.msra.mxu0 %v231
    %804 = vmatprep.subr.mxu0 %v236
    %805 = vmatpush1.msra.mxu0 %v235
    %806 = vmatprep.subr.mxu0 %v240
    %807 = vmatpush1.msra.mxu0 %v239
    %808 = vmatprep.subr.mxu0 %v244
    %809 = vmatpush1.msra.mxu0 %v243
    %810 = vmatprep.subr.mxu0 0.0
    %811 = vmatpush1.msra.mxu0 0.0
    %812 = vmatprep.subr.mxu0 0.0
    %813 = vmatpush1.msra.mxu0 0.0
    %814 = vmatprep.subr.mxu0 0.0
    %815 = vmatpush1.msra.mxu0 0.0
    %816 = vmatprep.subr.mxu0 0.0
    %817 = vmatpush1.msra.mxu0 0.0
    %818 = vmatprep.subr.mxu0 0.0
    %819 = vmatpush1.msra.mxu0 0.0
    %820 = vmatprep.subr.mxu0 0.0
    %821 = vmatpush1.msra.mxu0 0.0
    %822 = vmatprep.subr.mxu0 0.0
    %823 = vmatpush1.msra.mxu0 0.0
    %824 = vmatprep.subr.mxu0 0.0
    %825 = vmatpush1.msra.mxu0 0.0
    %826 = vmatprep.subr.mxu0 0.0
    %827 = vmatpush1.msra.mxu0 0.0
    %828 = vmatprep.subr.mxu0 0.0
    %829 = vmatpush1.msra.mxu0 0.0
    %830 = vmatprep.subr.mxu0 0.0
    %831 = vmatpush1.msra.mxu0 0.0
    %832 = vmatprep.subr.mxu0 0.0
    %833 = vmatpush1.msra.mxu0 0.0
    %834 = vmatprep.subr.mxu0 0.0
    %835 = vmatpush1.msra.mxu0 0.0
    %836 = vmatprep.subr.mxu0 0.0
    %837 = vmatpush1.msra.mxu0 0.0
    %838 = vmatprep.subr.mxu0 0.0
    %839 = vmatpush1.msra.mxu0 0.0
    %840 = vmatprep.subr.mxu0 0.0
    %841 = vmatpush1.msra.mxu0 0.0
    %842 = vmatprep.mubr.f32.mxu0 0.0
    %843 = vmatmul.mubr.f32.gmra.mrb[0].mxu0 %v776
    %v844 = vpop.f32.mrb[0].mxu0
    %v845 = vadd.f32 0.0, %v844
    %v846 = vpop.f32.mrb[0].mxu0
    %v847 = vadd.f32 0.0, %v846
    %848 = vdwg.mxu0
    %849 = vmatprep.subr.mxu0 %v186
    %850 = vmatpush1.msra.mxu0 %v185
    %851 = vmatprep.subr.mxu0 %v190
    %852 = vmatpush1.msra.mxu0 %v189
    %853 = vmatprep.subr.mxu0 %v194
    %854 = vmatpush1.msra.mxu0 %v193
    %855 = vmatprep.subr.mxu0 %v198
    %856 = vmatpush1.msra.mxu0 %v197
    %857 = vmatprep.subr.mxu0 %v202
    %858 = vmatpush1.msra.mxu0 %v201
    %859 = vmatprep.subr.mxu0 %v206
    %860 = vmatpush1.msra.mxu0 %v205
    %861 = vmatprep.subr.mxu0 %v210
    %862 = vmatpush1.msra.mxu0 %v209
    %863 = vmatprep.subr.mxu0 %v214
    %864 = vmatpush1.msra.mxu0 %v213
    %865 = vmatprep.subr.mxu0 %v218
    %866 = vmatpush1.msra.mxu0 %v217
    %867 = vmatprep.subr.mxu0 %v222
    %868 = vmatpush1.msra.mxu0 %v221
    %869 = vmatprep.subr.mxu0 %v226
    %870 = vmatpush1.msra.mxu0 %v225
    %871 = vmatprep.subr.mxu0 %v230
    %872 = vmatpush1.msra.mxu0 %v229
    %873 = vmatprep.subr.mxu0 %v234
    %874 = vmatpush1.msra.mxu0 %v233
    %875 = vmatprep.subr.mxu0 %v238
    %876 = vmatpush1.msra.mxu0 %v237
    %877 = vmatprep.subr.mxu0 %v242
    %878 = vmatpush1.msra.mxu0 %v241
    %879 = vmatprep.subr.mxu0 %v246
    %880 = vmatpush1.msra.mxu0 %v245
    %881 = vmatprep.subr.mxu0 0.0
    %882 = vmatpush1.msra.mxu0 0.0
    %883 = vmatprep.subr.mxu0 0.0
    %884 = vmatpush1.msra.mxu0 0.0
    %885 = vmatprep.subr.mxu0 0.0
    %886 = vmatpush1.msra.mxu0 0.0
    %887 = vmatprep.subr.mxu0 0.0
    %888 = vmatpush1.msra.mxu0 0.0
    %889 = vmatprep.subr.mxu0 0.0
    %890 = vmatpush1.msra.mxu0 0.0
    %891 = vmatprep.subr.mxu0 0.0
    %892 = vmatpush1.msra.mxu0 0.0
    %893 = vmatprep.subr.mxu0 0.0
    %894 = vmatpush1.msra.mxu0 0.0
    %895 = vmatprep.subr.mxu0 0.0
    %896 = vmatpush1.msra.mxu0 0.0
    %897 = vmatprep.subr.mxu0 0.0
    %898 = vmatpush1.msra.mxu0 0.0
    %899 = vmatprep.subr.mxu0 0.0
    %900 = vmatpush1.msra.mxu0 0.0
    %901 = vmatprep.subr.mxu0 0.0
    %902 = vmatpush1.msra.mxu0 0.0
    %903 = vmatprep.subr.mxu0 0.0
    %904 = vmatpush1.msra.mxu0 0.0
    %905 = vmatprep.subr.mxu0 0.0
    %906 = vmatpush1.msra.mxu0 0.0
    %907 = vmatprep.subr.mxu0 0.0
    %908 = vmatpush1.msra.mxu0 0.0
    %909 = vmatprep.subr.mxu0 0.0
    %910 = vmatpush1.msra.mxu0 0.0
    %911 = vmatprep.subr.mxu0 0.0
    %912 = vmatpush1.msra.mxu0 0.0
    %913 = vmatprep.mubr.f32.mxu0 0.0
    %914 = vmatmul.mubr.f32.gmra.mrb[0].mxu0 %v776
    %v915 = vpop.f32.mrb[0].mxu0
    %v916 = vadd.f32 0.0, %v915
    %v917 = vpop.f32.mrb[0].mxu0
    %v918 = vadd.f32 0.0, %v917
    %919 = vdwg.mxu0
    %v924 = vrot.slane %v845, 2
    %v925 = vrot.slane %v847, 2
    %v926 = vrot.slane %v916, 2
    %v927 = vrot.slane %v918, 2
    %v932 = vadd.f32 %v175, %v924
    %v933 = vadd.f32 %v176, %v925
    %v934 = vadd.f32 %v177, %v926
    %v935 = vadd.f32 %v178, %v927
    %v936 = vadd.f32 %v932, %v103
    %v937 = vadd.f32 %v933, %v107
    %v938 = vadd.f32 %v934, %v111
    %v939 = vadd.f32 %v935, %v115
    %v940 = vtanh.pop %v936
    %v941 = vtanh.pop %v937
    %v942 = vtanh.pop %v938
    %v943 = vtanh.pop %v939
    %v944 = vadd.f32 %v940, 1.0
    %v945 = vmul.f32 %v944, 0.5
    %v946 = vadd.f32 %v941, 1.0
    %v947 = vmul.f32 %v946, 0.5
    %v948 = vadd.f32 %v942, 1.0
    %v949 = vmul.f32 %v948, 0.5
    %v951 = vrot.slane %v772, 6
    %v953 = vmul.f32 %v947, %v951
    %v954 = vmul.f32 %v945, %v943
    %v955 = vadd.f32 %v953, %v954
    %v956 = vtanh.pop %v955
    %v957 = vmul.f32 %v949, %v956
    %v959 = vrot.slane %v957, 6
    %961 = vmatprep.subr.mxu0 %v184
    %962 = vmatpush1.msra.mxu0 %v183
    %963 = vmatprep.subr.mxu0 %v188
    %964 = vmatpush1.msra.mxu0 %v187
    %965 = vmatprep.subr.mxu0 %v192
    %966 = vmatpush1.msra.mxu0 %v191
    %967 = vmatprep.subr.mxu0 %v196
    %968 = vmatpush1.msra.mxu0 %v195
    %969 = vmatprep.subr.mxu0 %v200
    %970 = vmatpush1.msra.mxu0 %v199
    %971 = vmatprep.subr.mxu0 %v204
    %972 = vmatpush1.msra.mxu0 %v203
    %973 = vmatprep.subr.mxu0 %v208
    %974 = vmatpush1.msra.mxu0 %v207
    %975 = vmatprep.subr.mxu0 %v212
    %976 = vmatpush1.msra.mxu0 %v211
    %977 = vmatprep.subr.mxu0 %v216
    %978 = vmatpush1.msra.mxu0 %v215
    %979 = vmatprep.subr.mxu0 %v220
    %980 = vmatpush1.msra.mxu0 %v219
    %981 = vmatprep.subr.mxu0 %v224
    %982 = vmatpush1.msra.mxu0 %v223
    %983 = vmatprep.subr.mxu0 %v228
    %984 = vmatpush1.msra.mxu0 %v227
    %985 = vmatprep.subr.mxu0 %v232
    %986 = vmatpush1.msra.mxu0 %v231
    %987 = vmatprep.subr.mxu0 %v236
    %988 = vmatpush1.msra.mxu0 %v235
    %989 = vmatprep.subr.mxu0 %v240
    %990 = vmatpush1.msra.mxu0 %v239
    %991 = vmatprep.subr.mxu0 %v244
    %992 = vmatpush1.msra.mxu0 %v243
    %993 = vmatprep.subr.mxu0 0.0
    %994 = vmatpush1.msra.mxu0 0.0
    %995 = vmatprep.subr.mxu0 0.0
    %996 = vmatpush1.msra.mxu0 0.0
    %997 = vmatprep.subr.mxu0 0.0
    %998 = vmatpush1.msra.mxu0 0.0
    %999 = vmatprep.subr.mxu0 0.0
    %1000 = vmatpush1.msra.mxu0 0.0
    %1001 = vmatprep.subr.mxu0 0.0
    %1002 = vmatpush1.msra.mxu0 0.0
    %1003 = vmatprep.subr.mxu0 0.0
    %1004 = vmatpush1.msra.mxu0 0.0
    %1005 = vmatprep.subr.mxu0 0.0
    %1006 = vmatpush1.msra.mxu0 0.0
    %1007 = vmatprep.subr.mxu0 0.0
    %1008 = vmatpush1.msra.mxu0 0.0
    %1009 = vmatprep.subr.mxu0 0.0
    %1010 = vmatpush1.msra.mxu0 0.0
    %1011 = vmatprep.subr.mxu0 0.0
    %1012 = vmatpush1.msra.mxu0 0.0
    %1013 = vmatprep.subr.mxu0 0.0
    %1014 = vmatpush1.msra.mxu0 0.0
    %1015 = vmatprep.subr.mxu0 0.0
    %1016 = vmatpush1.msra.mxu0 0.0
    %1017 = vmatprep.subr.mxu0 0.0
    %1018 = vmatpush1.msra.mxu0 0.0
    %1019 = vmatprep.subr.mxu0 0.0
    %1020 = vmatpush1.msra.mxu0 0.0
    %1021 = vmatprep.subr.mxu0 0.0
    %1022 = vmatpush1.msra.mxu0 0.0
    %1023 = vmatprep.subr.mxu0 0.0
    %1024 = vmatpush1.msra.mxu0 0.0
    %1025 = vmatprep.mubr.f32.mxu0 0.0
    %1026 = vmatmul.mubr.f32.gmra.mrb[0].mxu0 %v959
    %v1027 = vpop.f32.mrb[0].mxu0
    %v1028 = vadd.f32 0.0, %v1027
    %v1029 = vpop.f32.mrb[0].mxu0
    %v1030 = vadd.f32 0.0, %v1029
    %1031 = vdwg.mxu0
    %1032 = vmatprep.subr.mxu0 %v186
    %1033 = vmatpush1.msra.mxu0 %v185
    %1034 = vmatprep.subr.mxu0 %v190
    %1035 = vmatpush1.msra.mxu0 %v189
    %1036 = vmatprep.subr.mxu0 %v194
    %1037 = vmatpush1.msra.mxu0 %v193
    %1038 = vmatprep.subr.mxu0 %v198
    %1039 = vmatpush1.msra.mxu0 %v197
    %1040 = vmatprep.subr.mxu0 %v202
    %1041 = vmatpush1.msra.mxu0 %v201
    %1042 = vmatprep.subr.mxu0 %v206
    %1043 = vmatpush1.msra.mxu0 %v205
    %1044 = vmatprep.subr.mxu0 %v210
    %1045 = vmatpush1.msra.mxu0 %v209
    %1046 = vmatprep.subr.mxu0 %v214
    %1047 = vmatpush1.msra.mxu0 %v213
    %1048 = vmatprep.subr.mxu0 %v218
    %1049 = vmatpush1.msra.mxu0 %v217
    %1050 = vmatprep.subr.mxu0 %v222
    %1051 = vmatpush1.msra.mxu0 %v221
    %1052 = vmatprep.subr.mxu0 %v226
    %1053 = vmatpush1.msra.mxu0 %v225
    %1054 = vmatprep.subr.mxu0 %v230
    %1055 = vmatpush1.msra.mxu0 %v229
    %1056 = vmatprep.subr.mxu0 %v234
    %1057 = vmatpush1.msra.mxu0 %v233
    %1058 = vmatprep.subr.mxu0 %v238
    %1059 = vmatpush1.msra.mxu0 %v237
    %1060 = vmatprep.subr.mxu0 %v242
    %1061 = vmatpush1.msra.mxu0 %v241
    %1062 = vmatprep.subr.mxu0 %v246
    %1063 = vmatpush1.msra.mxu0 %v245
    %1064 = vmatprep.subr.mxu0 0.0
    %1065 = vmatpush1.msra.mxu0 0.0
    %1066 = vmatprep.subr.mxu0 0.0
    %1067 = vmatpush1.msra.mxu0 0.0
    %1068 = vmatprep.subr.mxu0 0.0
    %1069 = vmatpush1.msra.mxu0 0.0
    %1070 = vmatprep.subr.mxu0 0.0
    %1071 = vmatpush1.msra.mxu0 0.0
    %1072 = vmatprep.subr.mxu0 0.0
    %1073 = vmatpush1.msra.mxu0 0.0
    %1074 = vmatprep.subr.mxu0 0.0
    %1075 = vmatpush1.msra.mxu0 0.0
    %1076 = vmatprep.subr.mxu0 0.0
    %1077 = vmatpush1.msra.mxu0 0.0
    %1078 = vmatprep.subr.mxu0 0.0
    %1079 = vmatpush1.msra.mxu0 0.0
    %1080 = vmatprep.subr.mxu0 0.0
    %1081 = vmatpush1.msra.mxu0 0.0
    %1082 = vmatprep.subr.mxu0 0.0
    %1083 = vmatpush1.msra.mxu0 0.0
    %1084 = vmatprep.subr.mxu0 0.0
    %1085 = vmatpush1.msra.mxu0 0.0
    %1086 = vmatprep.subr.mxu0 0.0
    %1087 = vmatpush1.msra.mxu0 0.0
    %1088 = vmatprep.subr.mxu0 0.0
    %1089 = vmatpush1.msra.mxu0 0.0
    %1090 = vmatprep.subr.mxu0 0.0
    %1091 = vmatpush1.msra.mxu0 0.0
    %1092 = vmatprep.subr.mxu0 0.0
    %1093 = vmatpush1.msra.mxu0 0.0
    %1094 = vmatprep.subr.mxu0 0.0
    %1095 = vmatpush1.msra.mxu0 0.0
    %1096 = vmatprep.mubr.f32.mxu0 0.0
    %1097 = vmatmul.mubr.f32.gmra.mrb[0].mxu0 %v959
    %v1098 = vpop.f32.mrb[0].mxu0
    %v1099 = vadd.f32 0.0, %v1098
    %v1100 = vpop.f32.mrb[0].mxu0
    %v1101 = vadd.f32 0.0, %v1100
    %1102 = vdwg.mxu0
    %v1103 = vadd.f32 %v179, %v1028
    %v1104 = vadd.f32 %v180, %v1030
    %v1105 = vadd.f32 %v181, %v1099
    %v1106 = vadd.f32 %v182, %v1101
    %v1107 = vadd.f32 %v1103, %v103
    %v1108 = vadd.f32 %v1104, %v107
    %v1109 = vadd.f32 %v1105, %v111
    %v1110 = vadd.f32 %v1106, %v115
    %v1111 = vtanh.pop %v1107
    %v1112 = vtanh.pop %v1108
    %v1113 = vtanh.pop %v1109
    %v1114 = vtanh.pop %v1110
    %v1115 = vadd.f32 %v1111, 1.0
    %v1116 = vmul.f32 %v1115, 0.5
    %v1117 = vadd.f32 %v1112, 1.0
    %v1118 = vmul.f32 %v1117, 0.5
    %v1119 = vadd.f32 %v1113, 1.0
    %v1120 = vmul.f32 %v1119, 0.5
    %v1122 = vrot.slane %v955, 6
    %v1124 = vmul.f32 %v1118, %v1122
    %v1125 = vmul.f32 %v1116, %v1114
    %v1126 = vadd.f32 %v1124, %v1125
    %v1127 = vtanh.pop %v1126
    %v1128 = vmul.f32 %v1120, %v1127
    %1129 = vmatprep.subr.mxu0 %v184
    %1130 = vmatpush1.msra.mxu0 %v183
    %1131 = vmatprep.subr.mxu0 %v188
    %1132 = vmatpush1.msra.mxu0 %v187
    %1133 = vmatprep.subr.mxu0 %v192
    %1134 = vmatpush1.msra.mxu0 %v191
    %1135 = vmatprep.subr.mxu0 %v196
    %1136 = vmatpush1.msra.mxu0 %v195
    %1137 = vmatprep.subr.mxu0 %v200
    %1138 = vmatpush1.msra.mxu0 %v199
    %1139 = vmatprep.subr.mxu0 %v204
    %1140 = vmatpush1.msra.mxu0 %v203
    %1141 = vmatprep.subr.mxu0 %v208
    %1142 = vmatpush1.msra.mxu0 %v207
    %1143 = vmatprep.subr.mxu0 %v212
    %1144 = vmatpush1.msra.mxu0 %v211
    %1145 = vmatprep.subr.mxu0 %v216
    %1146 = vmatpush1.msra.mxu0 %v215
    %1147 = vmatprep.subr.mxu0 %v220
    %1148 = vmatpush1.msra.mxu0 %v219
    %1149 = vmatprep.subr.mxu0 %v224
    %1150 = vmatpush1.msra.mxu0 %v223
    %1151 = vmatprep.subr.mxu0 %v228
    %1152 = vmatpush1.msra.mxu0 %v227
    %1153 = vmatprep.subr.mxu0 %v232
    %1154 = vmatpush1.msra.mxu0 %v231
    %1155 = vmatprep.subr.mxu0 %v236
    %1156 = vmatpush1.msra.mxu0 %v235
    %1157 = vmatprep.subr.mxu0 %v240
    %1158 = vmatpush1.msra.mxu0 %v239
    %1159 = vmatprep.subr.mxu0 %v244
    %1160 = vmatpush1.msra.mxu0 %v243
    %1161 = vmatprep.subr.mxu0 0.0
    %1162 = vmatpush1.msra.mxu0 0.0
    %1163 = vmatprep.subr.mxu0 0.0
    %1164 = vmatpush1.msra.mxu0 0.0
    %1165 = vmatprep.subr.mxu0 0.0
    %1166 = vmatpush1.msra.mxu0 0.0
    %1167 = vmatprep.subr.mxu0 0.0
    %1168 = vmatpush1.msra.mxu0 0.0
    %1169 = vmatprep.subr.mxu0 0.0
    %1170 = vmatpush1.msra.mxu0 0.0
    %1171 = vmatprep.subr.mxu0 0.0
    %1172 = vmatpush1.msra.mxu0 0.0
    %1173 = vmatprep.subr.mxu0 0.0
    %1174 = vmatpush1.msra.mxu0 0.0
    %1175 = vmatprep.subr.mxu0 0.0
    %1176 = vmatpush1.msra.mxu0 0.0
    %1177 = vmatprep.subr.mxu0 0.0
    %1178 = vmatpush1.msra.mxu0 0.0
    %1179 = vmatprep.subr.mxu0 0.0
    %1180 = vmatpush1.msra.mxu0 0.0
    %1181 = vmatprep.subr.mxu0 0.0
    %1182 = vmatpush1.msra.mxu0 0.0
    %1183 = vmatprep.subr.mxu0 0.0
    %1184 = vmatpush1.msra.mxu0 0.0
    %1185 = vmatprep.subr.mxu0 0.0
    %1186 = vmatpush1.msra.mxu0 0.0
    %1187 = vmatprep.subr.mxu0 0.0
    %1188 = vmatpush1.msra.mxu0 0.0
    %1189 = vmatprep.subr.mxu0 0.0
    %1190 = vmatpush1.msra.mxu0 0.0
    %1191 = vmatprep.subr.mxu0 0.0
    %1192 = vmatpush1.msra.mxu0 0.0
    %1193 = vmatprep.mubr.f32.mxu0 0.0
    %1194 = vmatmul.mubr.f32.gmra.mrb[0].mxu0 %v1128
    %v1195 = vpop.f32.mrb[0].mxu0
    %v1196 = vadd.f32 0.0, %v1195
    %v1197 = vpop.f32.mrb[0].mxu0
    %v1198 = vadd.f32 0.0, %v1197
    %1199 = vdwg.mxu0
    %1200 = vmatprep.subr.mxu0 %v186
    %1201 = vmatpush1.msra.mxu0 %v185
    %1202 = vmatprep.subr.mxu0 %v190
    %1203 = vmatpush1.msra.mxu0 %v189
    %1204 = vmatprep.subr.mxu0 %v194
    %1205 = vmatpush1.msra.mxu0 %v193
    %1206 = vmatprep.subr.mxu0 %v198
    %1207 = vmatpush1.msra.mxu0 %v197
    %1208 = vmatprep.subr.mxu0 %v202
    %1209 = vmatpush1.msra.mxu0 %v201
    %1210 = vmatprep.subr.mxu0 %v206
    %1211 = vmatpush1.msra.mxu0 %v205
    %1212 = vmatprep.subr.mxu0 %v210
    %1213 = vmatpush1.msra.mxu0 %v209
    %1214 = vmatprep.subr.mxu0 %v214
    %1215 = vmatpush1.msra.mxu0 %v213
    %1216 = vmatprep.subr.mxu0 %v218
    %1217 = vmatpush1.msra.mxu0 %v217
    %1218 = vmatprep.subr.mxu0 %v222
    %1219 = vmatpush1.msra.mxu0 %v221
    %1220 = vmatprep.subr.mxu0 %v226
    %1221 = vmatpush1.msra.mxu0 %v225
    %1222 = vmatprep.subr.mxu0 %v230
    %1223 = vmatpush1.msra.mxu0 %v229
    %1224 = vmatprep.subr.mxu0 %v234
    %1225 = vmatpush1.msra.mxu0 %v233
    %1226 = vmatprep.subr.mxu0 %v238
    %1227 = vmatpush1.msra.mxu0 %v237
    %1228 = vmatprep.subr.mxu0 %v242
    %1229 = vmatpush1.msra.mxu0 %v241
    %1230 = vmatprep.subr.mxu0 %v246
    %1231 = vmatpush1.msra.mxu0 %v245
    %1232 = vmatprep.subr.mxu0 0.0
    %1233 = vmatpush1.msra.mxu0 0.0
    %1234 = vmatprep.subr.mxu0 0.0
    %1235 = vmatpush1.msra.mxu0 0.0
    %1236 = vmatprep.subr.mxu0 0.0
    %1237 = vmatpush1.msra.mxu0 0.0
    %1238 = vmatprep.subr.mxu0 0.0
    %1239 = vmatpush1.msra.mxu0 0.0
    %1240 = vmatprep.subr.mxu0 0.0
    %1241 = vmatpush1.msra.mxu0 0.0
    %1242 = vmatprep.subr.mxu0 0.0
    %1243 = vmatpush1.msra.mxu0 0.0
    %1244 = vmatprep.subr.mxu0 0.0
    %1245 = vmatpush1.msra.mxu0 0.0
    %1246 = vmatprep.subr.mxu0 0.0
    %1247 = vmatpush1.msra.mxu0 0.0
    %1248 = vmatprep.subr.mxu0 0.0
    %1249 = vmatpush1.msra.mxu0 0.0
    %1250 = vmatprep.subr.mxu0 0.0
    %1251 = vmatpush1.msra.mxu0 0.0
    %1252 = vmatprep.subr.mxu0 0.0
    %1253 = vmatpush1.msra.mxu0 0.0
    %1254 = vmatprep.subr.mxu0 0.0
    %1255 = vmatpush1.msra.mxu0 0.0
    %1256 = vmatprep.subr.mxu0 0.0
    %1257 = vmatpush1.msra.mxu0 0.0
    %1258 = vmatprep.subr.mxu0 0.0
    %1259 = vmatpush1.msra.mxu0 0.0
    %1260 = vmatprep.subr.mxu0 0.0
    %1261 = vmatpush1.msra.mxu0 0.0
    %1262 = vmatprep.subr.mxu0 0.0
    %1263 = vmatpush1.msra.mxu0 0.0
    %1264 = vmatprep.mubr.f32.mxu0 0.0
    %1265 = vmatmul.mubr.f32.gmra.mrb[0].mxu0 %v1128
    %v1266 = vpop.f32.mrb[0].mxu0
    %v1267 = vadd.f32 0.0, %v1266
    %v1268 = vpop.f32.mrb[0].mxu0
    %v1269 = vadd.f32 0.0, %v1268
    %1270 = vdwg.mxu0
    %v1275 = vrot.slane %v1196, 6
    %v1276 = vrot.slane %v1198, 6
    %v1277 = vrot.slane %v1267, 6
    %v1278 = vrot.slane %v1269, 6
    %v1283 = vadd.f32 %v179, %v1275
    %v1284 = vadd.f32 %v180, %v1276
    %v1285 = vadd.f32 %v181, %v1277
    %v1286 = vadd.f32 %v182, %v1278
    %v1287 = vadd.f32 %v1283, %v103
    %v1288 = vadd.f32 %v1284, %v107
    %v1289 = vadd.f32 %v1285, %v111
    %v1290 = vadd.f32 %v1286, %v115
    %v1291 = vtanh.pop %v1287
    %v1292 = vtanh.pop %v1288
    %v1293 = vtanh.pop %v1289
    %v1294 = vtanh.pop %v1290
    %v1295 = vadd.f32 %v1291, 1.0
    %v1296 = vmul.f32 %v1295, 0.5
    %v1297 = vadd.f32 %v1292, 1.0
    %v1298 = vmul.f32 %v1297, 0.5
    %v1299 = vadd.f32 %v1293, 1.0
    %v1300 = vmul.f32 %v1299, 0.5
    %v1302 = vrot.slane %v1126, 6
    %v1304 = vmul.f32 %v1298, %v1302
    %v1305 = vmul.f32 %v1296, %v1294
    %v1306 = vadd.f32 %v1304, %v1305
    %v1307 = vtanh.pop %v1306
    %v1308 = vmul.f32 %v1300, %v1307
    %v1310 = vrot.slane %v1308, 2
    %1312 = vmatprep.subr.mxu0 %v184
    %1313 = vmatpush1.msra.mxu0 %v183
    %1314 = vmatprep.subr.mxu0 %v188
    %1315 = vmatpush1.msra.mxu0 %v187
    %1316 = vmatprep.subr.mxu0 %v192
    %1317 = vmatpush1.msra.mxu0 %v191
    %1318 = vmatprep.subr.mxu0 %v196
    %1319 = vmatpush1.msra.mxu0 %v195
    %1320 = vmatprep.subr.mxu0 %v200
    %1321 = vmatpush1.msra.mxu0 %v199
    %1322 = vmatprep.subr.mxu0 %v204
    %1323 = vmatpush1.msra.mxu0 %v203
    %1324 = vmatprep.subr.mxu0 %v208
    %1325 = vmatpush1.msra.mxu0 %v207
    %1326 = vmatprep.subr.mxu0 %v212
    %1327 = vmatpush1.msra.mxu0 %v211
    %1328 = vmatprep.subr.mxu0 %v216
    %1329 = vmatpush1.msra.mxu0 %v215
    %1330 = vmatprep.subr.mxu0 %v220
    %1331 = vmatpush1.msra.mxu0 %v219
    %1332 = vmatprep.subr.mxu0 %v224
    %1333 = vmatpush1.msra.mxu0 %v223
    %1334 = vmatprep.subr.mxu0 %v228
    %1335 = vmatpush1.msra.mxu0 %v227
    %1336 = vmatprep.subr.mxu0 %v232
    %1337 = vmatpush1.msra.mxu0 %v231
    %1338 = vmatprep.subr.mxu0 %v236
    %1339 = vmatpush1.msra.mxu0 %v235
    %1340 = vmatprep.subr.mxu0 %v240
    %1341 = vmatpush1.msra.mxu0 %v239
    %1342 = vmatprep.subr.mxu0 %v244
    %1343 = vmatpush1.msra.mxu0 %v243
    %1344 = vmatprep.subr.mxu0 0.0
    %1345 = vmatpush1.msra.mxu0 0.0
    %1346 = vmatprep.subr.mxu0 0.0
    %1347 = vmatpush1.msra.mxu0 0.0
    %1348 = vmatprep.subr.mxu0 0.0
    %1349 = vmatpush1.msra.mxu0 0.0
    %1350 = vmatprep.subr.mxu0 0.0
    %1351 = vmatpush1.msra.mxu0 0.0
    %1352 = vmatprep.subr.mxu0 0.0
    %1353 = vmatpush1.msra.mxu0 0.0
    %1354 = vmatprep.subr.mxu0 0.0
    %1355 = vmatpush1.msra.mxu0 0.0
    %1356 = vmatprep.subr.mxu0 0.0
    %1357 = vmatpush1.msra.mxu0 0.0
    %1358 = vmatprep.subr.mxu0 0.0
    %1359 = vmatpush1.msra.mxu0 0.0
    %1360 = vmatprep.subr.mxu0 0.0
    %1361 = vmatpush1.msra.mxu0 0.0
    %1362 = vmatprep.subr.mxu0 0.0
    %1363 = vmatpush1.msra.mxu0 0.0
    %1364 = vmatprep.subr.mxu0 0.0
    %1365 = vmatpush1.msra.mxu0 0.0
    %1366 = vmatprep.subr.mxu0 0.0
    %1367 = vmatpush1.msra.mxu0 0.0
    %1368 = vmatprep.subr.mxu0 0.0
    %1369 = vmatpush1.msra.mxu0 0.0
    %1370 = vmatprep.subr.mxu0 0.0
    %1371 = vmatpush1.msra.mxu0 0.0
    %1372 = vmatprep.subr.mxu0 0.0
    %1373 = vmatpush1.msra.mxu0 0.0
    %1374 = vmatprep.subr.mxu0 0.0
    %1375 = vmatpush1.msra.mxu0 0.0
    %1376 = vmatprep.mubr.f32.mxu0 0.0
    %1377 = vmatmul.mubr.f32.gmra.mrb[0].mxu0 %v1310
    %v1378 = vpop.f32.mrb[0].mxu0
    %v1379 = vadd.f32 0.0, %v1378
    %v1380 = vpop.f32.mrb[0].mxu0
    %v1381 = vadd.f32 0.0, %v1380
    %1382 = vdwg.mxu0
    %1383 = vmatprep.subr.mxu0 %v186
    %1384 = vmatpush1.msra.mxu0 %v185
    %1385 = vmatprep.subr.mxu0 %v190
    %1386 = vmatpush1.msra.mxu0 %v189
    %1387 = vmatprep.subr.mxu0 %v194
    %1388 = vmatpush1.msra.mxu0 %v193
    %1389 = vmatprep.subr.mxu0 %v198
    %1390 = vmatpush1.msra.mxu0 %v197
    %1391 = vmatprep.subr.mxu0 %v202
    %1392 = vmatpush1.msra.mxu0 %v201
    %1393 = vmatprep.subr.mxu0 %v206
    %1394 = vmatpush1.msra.mxu0 %v205
    %1395 = vmatprep.subr.mxu0 %v210
    %1396 = vmatpush1.msra.mxu0 %v209
    %1397 = vmatprep.subr.mxu0 %v214
    %1398 = vmatpush1.msra.mxu0 %v213
    %1399 = vmatprep.subr.mxu0 %v218
    %1400 = vmatpush1.msra.mxu0 %v217
    %1401 = vmatprep.subr.mxu0 %v222
    %1402 = vmatpush1.msra.mxu0 %v221
    %1403 = vmatprep.subr.mxu0 %v226
    %1404 = vmatpush1.msra.mxu0 %v225
    %1405 = vmatprep.subr.mxu0 %v230
    %1406 = vmatpush1.msra.mxu0 %v229
    %1407 = vmatprep.subr.mxu0 %v234
    %1408 = vmatpush1.msra.mxu0 %v233
    %1409 = vmatprep.subr.mxu0 %v238
    %1410 = vmatpush1.msra.mxu0 %v237
    %1411 = vmatprep.subr.mxu0 %v242
    %1412 = vmatpush1.msra.mxu0 %v241
    %1413 = vmatprep.subr.mxu0 %v246
    %1414 = vmatpush1.msra.mxu0 %v245
    %1415 = vmatprep.subr.mxu0 0.0
    %1416 = vmatpush1.msra.mxu0 0.0
    %1417 = vmatprep.subr.mxu0 0.0
    %1418 = vmatpush1.msra.mxu0 0.0
    %1419 = vmatprep.subr.mxu0 0.0
    %1420 = vmatpush1.msra.mxu0 0.0
    %1421 = vmatprep.subr.mxu0 0.0
    %1422 = vmatpush1.msra.mxu0 0.0
    %1423 = vmatprep.subr.mxu0 0.0
    %1424 = vmatpush1.msra.mxu0 0.0
    %1425 = vmatprep.subr.mxu0 0.0
    %1426 = vmatpush1.msra.mxu0 0.0
    %1427 = vmatprep.subr.mxu0 0.0
    %1428 = vmatpush1.msra.mxu0 0.0
    %1429 = vmatprep.subr.mxu0 0.0
    %1430 = vmatpush1.msra.mxu0 0.0
    %1431 = vmatprep.subr.mxu0 0.0
    %1432 = vmatpush1.msra.mxu0 0.0
    %1433 = vmatprep.subr.mxu0 0.0
    %1434 = vmatpush1.msra.mxu0 0.0
    %1435 = vmatprep.subr.mxu0 0.0
    %1436 = vmatpush1.msra.mxu0 0.0
    %1437 = vmatprep.subr.mxu0 0.0
    %1438 = vmatpush1.msra.mxu0 0.0
    %1439 = vmatprep.subr.mxu0 0.0
    %1440 = vmatpush1.msra.mxu0 0.0
    %1441 = vmatprep.subr.mxu0 0.0
    %1442 = vmatpush1.msra.mxu0 0.0
    %1443 = vmatprep.subr.mxu0 0.0
    %1444 = vmatpush1.msra.mxu0 0.0
    %1445 = vmatprep.subr.mxu0 0.0
    %1446 = vmatpush1.msra.mxu0 0.0
    %1447 = vmatprep.mubr.f32.mxu0 0.0
    %1448 = vmatmul.mubr.f32.gmra.mrb[0].mxu0 %v1310
    %v1449 = vpop.f32.mrb[0].mxu0
    %v1450 = vadd.f32 0.0, %v1449
    %v1451 = vpop.f32.mrb[0].mxu0
    %v1452 = vadd.f32 0.0, %v1451
    %1453 = vdwg.mxu0
    %v1458 = vrot.slane %v1379, 4
    %v1459 = vrot.slane %v1381, 4
    %v1460 = vrot.slane %v1450, 4
    %v1461 = vrot.slane %v1452, 4
    %v1466 = vadd.f32 %v179, %v1458
    %v1467 = vadd.f32 %v180, %v1459
    %v1468 = vadd.f32 %v181, %v1460
    %v1469 = vadd.f32 %v182, %v1461
    %v1470 = vadd.f32 %v1466, %v103
    %v1471 = vadd.f32 %v1467, %v107
    %v1472 = vadd.f32 %v1468, %v111
    %v1473 = vadd.f32 %v1469, %v115
    %v1474 = vtanh.pop %v1470
    %v1475 = vtanh.pop %v1471
    %v1476 = vtanh.pop %v1472
    %v1477 = vtanh.pop %v1473
    %v1478 = vadd.f32 %v1474, 1.0
    %v1479 = vmul.f32 %v1478, 0.5
    %v1480 = vadd.f32 %v1475, 1.0
    %v1481 = vmul.f32 %v1480, 0.5
    %v1482 = vadd.f32 %v1476, 1.0
    %v1483 = vmul.f32 %v1482, 0.5
    %v1485 = vrot.slane %v1306, 6
    %v1487 = vmul.f32 %v1481, %v1485
    %v1488 = vmul.f32 %v1479, %v1477
    %v1489 = vadd.f32 %v1487, %v1488
    %v1490 = vtanh.pop %v1489
    %v1491 = vmul.f32 %v1483, %v1490
    %v1493 = vrot.slane %v1491, 4
    %1495 = vmatprep.subr.mxu0 %v184
    %1496 = vmatpush1.msra.mxu0 %v183
    %1497 = vmatprep.subr.mxu0 %v188
    %1498 = vmatpush1.msra.mxu0 %v187
    %1499 = vmatprep.subr.mxu0 %v192
    %1500 = vmatpush1.msra.mxu0 %v191
    %1501 = vmatprep.subr.mxu0 %v196
    %1502 = vmatpush1.msra.mxu0 %v195
    %1503 = vmatprep.subr.mxu0 %v200
    %1504 = vmatpush1.msra.mxu0 %v199
    %1505 = vmatprep.subr.mxu0 %v204
    %1506 = vmatpush1.msra.mxu0 %v203
    %1507 = vmatprep.subr.mxu0 %v208
    %1508 = vmatpush1.msra.mxu0 %v207
    %1509 = vmatprep.subr.mxu0 %v212
    %1510 = vmatpush1.msra.mxu0 %v211
    %1511 = vmatprep.subr.mxu0 %v216
    %1512 = vmatpush1.msra.mxu0 %v215
    %1513 = vmatprep.subr.mxu0 %v220
    %1514 = vmatpush1.msra.mxu0 %v219
    %1515 = vmatprep.subr.mxu0 %v224
    %1516 = vmatpush1.msra.mxu0 %v223
    %1517 = vmatprep.subr.mxu0 %v228
    %1518 = vmatpush1.msra.mxu0 %v227
    %1519 = vmatprep.subr.mxu0 %v232
    %1520 = vmatpush1.msra.mxu0 %v231
    %1521 = vmatprep.subr.mxu0 %v236
    %1522 = vmatpush1.msra.mxu0 %v235
    %1523 = vmatprep.subr.mxu0 %v240
    %1524 = vmatpush1.msra.mxu0 %v239
    %1525 = vmatprep.subr.mxu0 %v244
    %1526 = vmatpush1.msra.mxu0 %v243
    %1527 = vmatprep.subr.mxu0 0.0
    %1528 = vmatpush1.msra.mxu0 0.0
    %1529 = vmatprep.subr.mxu0 0.0
    %1530 = vmatpush1.msra.mxu0 0.0
    %1531 = vmatprep.subr.mxu0 0.0
    %1532 = vmatpush1.msra.mxu0 0.0
    %1533 = vmatprep.subr.mxu0 0.0
    %1534 = vmatpush1.msra.mxu0 0.0
    %1535 = vmatprep.subr.mxu0 0.0
    %1536 = vmatpush1.msra.mxu0 0.0
    %1537 = vmatprep.subr.mxu0 0.0
    %1538 = vmatpush1.msra.mxu0 0.0
    %1539 = vmatprep.subr.mxu0 0.0
    %1540 = vmatpush1.msra.mxu0 0.0
    %1541 = vmatprep.subr.mxu0 0.0
    %1542 = vmatpush1.msra.mxu0 0.0
    %1543 = vmatprep.subr.mxu0 0.0
    %1544 = vmatpush1.msra.mxu0 0.0
    %1545 = vmatprep.subr.mxu0 0.0
    %1546 = vmatpush1.msra.mxu0 0.0
    %1547 = vmatprep.subr.mxu0 0.0
    %1548 = vmatpush1.msra.mxu0 0.0
    %1549 = vmatprep.subr.mxu0 0.0
    %1550 = vmatpush1.msra.mxu0 0.0
    %1551 = vmatprep.subr.mxu0 0.0
    %1552 = vmatpush1.msra.mxu0 0.0
    %1553 = vmatprep.subr.mxu0 0.0
    %1554 = vmatpush1.msra.mxu0 0.0
    %1555 = vmatprep.subr.mxu0 0.0
    %1556 = vmatpush1.msra.mxu0 0.0
    %1557 = vmatprep.subr.mxu0 0.0
    %1558 = vmatpush1.msra.mxu0 0.0
    %1559 = vmatprep.mubr.f32.mxu0 0.0
    %1560 = vmatmul.mubr.f32.gmra.mrb[0].mxu0 %v1493
    %v1561 = vpop.f32.mrb[0].mxu0
    %v1562 = vadd.f32 0.0, %v1561
    %v1563 = vpop.f32.mrb[0].mxu0
    %v1564 = vadd.f32 0.0, %v1563
    %1565 = vdwg.mxu0
    %1566 = vmatprep.subr.mxu0 %v186
    %1567 = vmatpush1.msra.mxu0 %v185
    %1568 = vmatprep.subr.mxu0 %v190
    %1569 = vmatpush1.msra.mxu0 %v189
    %1570 = vmatprep.subr.mxu0 %v194
    %1571 = vmatpush1.msra.mxu0 %v193
    %1572 = vmatprep.subr.mxu0 %v198
    %1573 = vmatpush1.msra.mxu0 %v197
    %1574 = vmatprep.subr.mxu0 %v202
    %1575 = vmatpush1.msra.mxu0 %v201
    %1576 = vmatprep.subr.mxu0 %v206
    %1577 = vmatpush1.msra.mxu0 %v205
    %1578 = vmatprep.subr.mxu0 %v210
    %1579 = vmatpush1.msra.mxu0 %v209
    %1580 = vmatprep.subr.mxu0 %v214
    %1581 = vmatpush1.msra.mxu0 %v213
    %1582 = vmatprep.subr.mxu0 %v218
    %1583 = vmatpush1.msra.mxu0 %v217
    %1584 = vmatprep.subr.mxu0 %v222
    %1585 = vmatpush1.msra.mxu0 %v221
    %1586 = vmatprep.subr.mxu0 %v226
    %1587 = vmatpush1.msra.mxu0 %v225
    %1588 = vmatprep.subr.mxu0 %v230
    %1589 = vmatpush1.msra.mxu0 %v229
    %1590 = vmatprep.subr.mxu0 %v234
    %1591 = vmatpush1.msra.mxu0 %v233
    %1592 = vmatprep.subr.mxu0 %v238
    %1593 = vmatpush1.msra.mxu0 %v237
    %1594 = vmatprep.subr.mxu0 %v242
    %1595 = vmatpush1.msra.mxu0 %v241
    %1596 = vmatprep.subr.mxu0 %v246
    %1597 = vmatpush1.msra.mxu0 %v245
    %1598 = vmatprep.subr.mxu0 0.0
    %1599 = vmatpush1.msra.mxu0 0.0
    %1600 = vmatprep.subr.mxu0 0.0
    %1601 = vmatpush1.msra.mxu0 0.0
    %1602 = vmatprep.subr.mxu0 0.0
    %1603 = vmatpush1.msra.mxu0 0.0
    %1604 = vmatprep.subr.mxu0 0.0
    %1605 = vmatpush1.msra.mxu0 0.0
    %1606 = vmatprep.subr.mxu0 0.0
    %1607 = vmatpush1.msra.mxu0 0.0
    %1608 = vmatprep.subr.mxu0 0.0
    %1609 = vmatpush1.msra.mxu0 0.0
    %1610 = vmatprep.subr.mxu0 0.0
    %1611 = vmatpush1.msra.mxu0 0.0
    %1612 = vmatprep.subr.mxu0 0.0
    %1613 = vmatpush1.msra.mxu0 0.0
    %1614 = vmatprep.subr.mxu0 0.0
    %1615 = vmatpush1.msra.mxu0 0.0
    %1616 = vmatprep.subr.mxu0 0.0
    %1617 = vmatpush1.msra.mxu0 0.0
    %1618 = vmatprep.subr.mxu0 0.0
    %1619 = vmatpush1.msra.mxu0 0.0
    %1620 = vmatprep.subr.mxu0 0.0
    %1621 = vmatpush1.msra.mxu0 0.0
    %1622 = vmatprep.subr.mxu0 0.0
    %1623 = vmatpush1.msra.mxu0 0.0
    %1624 = vmatprep.subr.mxu0 0.0
    %1625 = vmatpush1.msra.mxu0 0.0
    %1626 = vmatprep.subr.mxu0 0.0
    %1627 = vmatpush1.msra.mxu0 0.0
    %1628 = vmatprep.subr.mxu0 0.0
    %1629 = vmatpush1.msra.mxu0 0.0
    %1630 = vmatprep.mubr.f32.mxu0 0.0
    %1631 = vmatmul.mubr.f32.gmra.mrb[0].mxu0 %v1493
    %v1632 = vpop.f32.mrb[0].mxu0
    %v1633 = vadd.f32 0.0, %v1632
    %v1634 = vpop.f32.mrb[0].mxu0
    %v1635 = vadd.f32 0.0, %v1634
    %1636 = vdwg.mxu0
    %v1641 = vrot.slane %v1562, 2
    %v1642 = vrot.slane %v1564, 2
    %v1643 = vrot.slane %v1633, 2
    %v1644 = vrot.slane %v1635, 2
    %v1649 = vadd.f32 %v179, %v1641
    %v1650 = vadd.f32 %v180, %v1642
    %v1651 = vadd.f32 %v181, %v1643
    %v1652 = vadd.f32 %v182, %v1644
    %v1653 = vadd.f32 %v1649, %v103
    %v1654 = vadd.f32 %v1650, %v107
    %v1655 = vadd.f32 %v1651, %v111
    %v1656 = vadd.f32 %v1652, %v115
    %v1657 = vtanh.pop %v1653
    %v1658 = vtanh.pop %v1654
    %v1659 = vtanh.pop %v1655
    %v1660 = vtanh.pop %v1656
    %v1661 = vadd.f32 %v1657, 1.0
    %v1662 = vmul.f32 %v1661, 0.5
    %v1663 = vadd.f32 %v1658, 1.0
    %v1664 = vmul.f32 %v1663, 0.5
    %v1665 = vadd.f32 %v1659, 1.0
    %v1666 = vmul.f32 %v1665, 0.5
    %v1668 = vrot.slane %v1489, 6
    %v1670 = vmul.f32 %v1664, %v1668
    %v1671 = vmul.f32 %v1662, %v1660
    %v1672 = vadd.f32 %v1670, %v1671
    %v1673 = vtanh.pop %v1672
    %v1674 = vmul.f32 %v1666, %v1673
    %vm1675 = vcmask 1041408
    %v1676 = vsel %vm1675, %v411, %v591
    %vm1677 = vcmask 1043456
    %v1678 = vsel %vm1677, %v1676, %v774
    %vm1679 = vcmask 1045504
    %v1680 = vsel %vm1679, %v1678, %v957
    %v1681 = vsel %vm1675, %v1128, %v1308
    %v1682 = vsel %vm1677, %v1681, %v1491
    %v1683 = vsel %vm1679, %v1682, %v1674
    %v1684 = vld [vmem:[#allocation5] sm:$0xff]
    %v1685 = vld [vmem:[#allocation5 + $0x8] sm:$0xff]
    %v1686 = vld [vmem:[#allocation5 + $0x10] sm:$0xff]
    %v1687 = vld [vmem:[#allocation5 + $0x18] sm:$0xff]
    %v1688 = vld [vmem:[#allocation5 + $0x20] sm:$0xff]
    %v1689 = vld [vmem:[#allocation5 + $0x28] sm:$0xff]
    %v1690 = vld [vmem:[#allocation5 + $0x30] sm:$0xff]
    %v1691 = vld [vmem:[#allocation5 + $0x38] sm:$0xff]
    %v1692 = vld [vmem:[#allocation5 + $0x40] sm:$0xff]
    %v1693 = vld [vmem:[#allocation5 + $0x48] sm:$0xff]
    %v1694 = vld [vmem:[#allocation5 + $0x50] sm:$0xff]
    %v1695 = vld [vmem:[#allocation5 + $0x58] sm:$0xff]
    %v1696 = vld [vmem:[#allocation5 + $0x60] sm:$0xff]
    %v1697 = vld [vmem:[#allocation5 + $0x68] sm:$0xff]
    %v1698 = vld [vmem:[#allocation5 + $0x70] sm:$0xff]
    %v1699 = vld [vmem:[#allocation5 + $0x78] sm:$0xff]
    %v1700 = vld [vmem:[#allocation5 + $0x80] sm:$0xff]
    %v1701 = vld [vmem:[#allocation5 + $0x88] sm:$0xff]
    %v1702 = vld [vmem:[#allocation5 + $0x90] sm:$0xff]
    %v1703 = vld [vmem:[#allocation5 + $0x98] sm:$0xff]
    %v1704 = vld [vmem:[#allocation5 + $0xa0] sm:$0xff]
    %v1705 = vld [vmem:[#allocation5 + $0xa8] sm:$0xff]
    %v1706 = vld [vmem:[#allocation5 + $0xb0] sm:$0xff]
    %v1707 = vld [vmem:[#allocation5 + $0xb8] sm:$0xff]
    %v1708 = vld [vmem:[#allocation5 + $0xc0] sm:$0xff]
    %v1709 = vld [vmem:[#allocation5 + $0xc8] sm:$0xff]
    %v1710 = vld [vmem:[#allocation5 + $0xd0] sm:$0xff]
    %v1711 = vld [vmem:[#allocation5 + $0xd8] sm:$0xff]
    %v1712 = vld [vmem:[#allocation5 + $0xe0] sm:$0xff]
    %v1713 = vld [vmem:[#allocation5 + $0xe8] sm:$0xff]
    %v1714 = vld [vmem:[#allocation5 + $0xf0] sm:$0xff]
    %v1715 = vld [vmem:[#allocation5 + $0xf8] sm:$0xff]
    %v1716 = vld [vmem:[#allocation5 + $0x100] sm:$0xff]
    %v1717 = vld [vmem:[#allocation5 + $0x108] sm:$0xff]
    %v1718 = vld [vmem:[#allocation5 + $0x110] sm:$0xff]
    %v1719 = vld [vmem:[#allocation5 + $0x118] sm:$0xff]
    %v1720 = vld [vmem:[#allocation5 + $0x120] sm:$0xff]
    %v1721 = vld [vmem:[#allocation5 + $0x128] sm:$0xff]
    %v1722 = vld [vmem:[#allocation5 + $0x130] sm:$0xff]
    %v1723 = vld [vmem:[#allocation5 + $0x138] sm:$0xff]
    %v1724 = vld [vmem:[#allocation5 + $0x140] sm:$0xff]
    %v1725 = vld [vmem:[#allocation5 + $0x148] sm:$0xff]
    %v1726 = vld [vmem:[#allocation5 + $0x150] sm:$0xff]
    %v1727 = vld [vmem:[#allocation5 + $0x158] sm:$0xff]
    %v1728 = vld [vmem:[#allocation5 + $0x160] sm:$0xff]
    %v1729 = vld [vmem:[#allocation5 + $0x168] sm:$0xff]
    %v1730 = vld [vmem:[#allocation5 + $0x170] sm:$0xff]
    %v1731 = vld [vmem:[#allocation5 + $0x178] sm:$0xff]
    %v1732 = vld [vmem:[#allocation5 + $0x180] sm:$0xff]
    %v1733 = vld [vmem:[#allocation5 + $0x188] sm:$0xff]
    %v1734 = vld [vmem:[#allocation5 + $0x190] sm:$0xff]
    %v1735 = vld [vmem:[#allocation5 + $0x198] sm:$0xff]
    %v1736 = vld [vmem:[#allocation5 + $0x1a0] sm:$0xff]
    %v1737 = vld [vmem:[#allocation5 + $0x1a8] sm:$0xff]
    %v1738 = vld [vmem:[#allocation5 + $0x1b0] sm:$0xff]
    %v1739 = vld [vmem:[#allocation5 + $0x1b8] sm:$0xff]
    %v1740 = vld [vmem:[#allocation5 + $0x1c0] sm:$0xff]
    %v1741 = vld [vmem:[#allocation5 + $0x1c8] sm:$0xff]
    %v1742 = vld [vmem:[#allocation5 + $0x1d0] sm:$0xff]
    %v1743 = vld [vmem:[#allocation5 + $0x1d8] sm:$0xff]
    %v1744 = vld [vmem:[#allocation5 + $0x1e0] sm:$0xff]
    %v1745 = vld [vmem:[#allocation5 + $0x1e8] sm:$0xff]
    %v1746 = vld [vmem:[#allocation5 + $0x1f0] sm:$0xff]
    %v1747 = vld [vmem:[#allocation5 + $0x1f8] sm:$0xff]
    %1748 = vmatprep.subr.mxu0 %v1685
    %1749 = vmatpush1.msra.mxu0 %v1684
    %1750 = vmatprep.subr.mxu0 %v1689
    %1751 = vmatpush1.msra.mxu0 %v1688
    %1752 = vmatprep.subr.mxu0 %v1693
    %1753 = vmatpush1.msra.mxu0 %v1692
    %1754 = vmatprep.subr.mxu0 %v1697
    %1755 = vmatpush1.msra.mxu0 %v1696
    %1756 = vmatprep.subr.mxu0 %v1701
    %1757 = vmatpush1.msra.mxu0 %v1700
    %1758 = vmatprep.subr.mxu0 %v1705
    %1759 = vmatpush1.msra.mxu0 %v1704
    %1760 = vmatprep.subr.mxu0 %v1709
    %1761 = vmatpush1.msra.mxu0 %v1708
    %1762 = vmatprep.subr.mxu0 %v1713
    %1763 = vmatpush1.msra.mxu0 %v1712
    %1764 = vmatprep.subr.mxu0 %v1717
    %1765 = vmatpush1.msra.mxu0 %v1716
    %1766 = vmatprep.subr.mxu0 %v1721
    %1767 = vmatpush1.msra.mxu0 %v1720
    %1768 = vmatprep.subr.mxu0 %v1725
    %1769 = vmatpush1.msra.mxu0 %v1724
    %1770 = vmatprep.subr.mxu0 %v1729
    %1771 = vmatpush1.msra.mxu0 %v1728
    %1772 = vmatprep.subr.mxu0 %v1733
    %1773 = vmatpush1.msra.mxu0 %v1732
    %1774 = vmatprep.subr.mxu0 %v1737
    %1775 = vmatpush1.msra.mxu0 %v1736
    %1776 = vmatprep.subr.mxu0 %v1741
    %1777 = vmatpush1.msra.mxu0 %v1740
    %1778 = vmatprep.subr.mxu0 %v1745
    %1779 = vmatpush1.msra.mxu0 %v1744
    %1780 = vmatprep.subr.mxu0 0.0
    %1781 = vmatpush1.msra.mxu0 0.0
    %1782 = vmatprep.subr.mxu0 0.0
    %1783 = vmatpush1.msra.mxu0 0.0
    %1784 = vmatprep.subr.mxu0 0.0
    %1785 = vmatpush1.msra.mxu0 0.0
    %1786 = vmatprep.subr.mxu0 0.0
    %1787 = vmatpush1.msra.mxu0 0.0
    %1788 = vmatprep.subr.mxu0 0.0
    %1789 = vmatpush1.msra.mxu0 0.0
    %1790 = vmatprep.subr.mxu0 0.0
    %1791 = vmatpush1.msra.mxu0 0.0
    %1792 = vmatprep.subr.mxu0 0.0
    %1793 = vmatpush1.msra.mxu0 0.0
    %1794 = vmatprep.subr.mxu0 0.0
    %1795 = vmatpush1.msra.mxu0 0.0
    %1796 = vmatprep.subr.mxu0 0.0
    %1797 = vmatpush1.msra.mxu0 0.0
    %1798 = vmatprep.subr.mxu0 0.0
    %1799 = vmatpush1.msra.mxu0 0.0
    %1800 = vmatprep.subr.mxu0 0.0
    %1801 = vmatpush1.msra.mxu0 0.0
    %1802 = vmatprep.subr.mxu0 0.0
    %1803 = vmatpush1.msra.mxu0 0.0
    %1804 = vmatprep.subr.mxu0 0.0
    %1805 = vmatpush1.msra.mxu0 0.0
    %1806 = vmatprep.subr.mxu0 0.0
    %1807 = vmatpush1.msra.mxu0 0.0
    %1808 = vmatprep.subr.mxu0 0.0
    %1809 = vmatpush1.msra.mxu0 0.0
    %1810 = vmatprep.subr.mxu0 0.0
    %1811 = vmatpush1.msra.mxu0 0.0
    %1812 = vmatprep.mubr.f32.mxu0 0.0
    %1813 = vmatmul.mubr.f32.gmra.mrb[0].mxu0 %v1680
    %v1814 = vpop.f32.mrb[0].mxu0
    %v1815 = vadd.f32 0.0, %v1814
    %v1816 = vpop.f32.mrb[0].mxu0
    %v1817 = vadd.f32 0.0, %v1816
    %1818 = vmatprep.mubr.f32.mxu0 0.0
    %1819 = vmatmul.mubr.f32.gmra.mrb[0].mxu0 %v1683
    %v1820 = vpop.f32.mrb[0].mxu0
    %v1821 = vadd.f32 0.0, %v1820
    %v1822 = vpop.f32.mrb[0].mxu0
    %v1823 = vadd.f32 0.0, %v1822
    %1824 = vdwg.mxu0
    %1825 = vmatprep.subr.mxu0 %v1687
    %1826 = vmatpush1.msra.mxu0 %v1686
    %1827 = vmatprep.subr.mxu0 %v1691
    %1828 = vmatpush1.msra.mxu0 %v1690
    %1829 = vmatprep.subr.mxu0 %v1695
    %1830 = vmatpush1.msra.mxu0 %v1694
    %1831 = vmatprep.subr.mxu0 %v1699
    %1832 = vmatpush1.msra.mxu0 %v1698
    %1833 = vmatprep.subr.mxu0 %v1703
    %1834 = vmatpush1.msra.mxu0 %v1702
    %1835 = vmatprep.subr.mxu0 %v1707
    %1836 = vmatpush1.msra.mxu0 %v1706
    %1837 = vmatprep.subr.mxu0 %v1711
    %1838 = vmatpush1.msra.mxu0 %v1710
    %1839 = vmatprep.subr.mxu0 %v1715
    %1840 = vmatpush1.msra.mxu0 %v1714
    %1841 = vmatprep.subr.mxu0 %v1719
    %1842 = vmatpush1.msra.mxu0 %v1718
    %1843 = vmatprep.subr.mxu0 %v1723
    %1844 = vmatpush1.msra.mxu0 %v1722
    %1845 = vmatprep.subr.mxu0 %v1727
    %1846 = vmatpush1.msra.mxu0 %v1726
    %1847 = vmatprep.subr.mxu0 %v1731
    %1848 = vmatpush1.msra.mxu0 %v1730
    %1849 = vmatprep.subr.mxu0 %v1735
    %1850 = vmatpush1.msra.mxu0 %v1734
    %1851 = vmatprep.subr.mxu0 %v1739
    %1852 = vmatpush1.msra.mxu0 %v1738
    %1853 = vmatprep.subr.mxu0 %v1743
    %1854 = vmatpush1.msra.mxu0 %v1742
    %1855 = vmatprep.subr.mxu0 %v1747
    %1856 = vmatpush1.msra.mxu0 %v1746
    %1857 = vmatprep.subr.mxu0 0.0
    %1858 = vmatpush1.msra.mxu0 0.0
    %1859 = vmatprep.subr.mxu0 0.0
    %1860 = vmatpush1.msra.mxu0 0.0
    %1861 = vmatprep.subr.mxu0 0.0
    %1862 = vmatpush1.msra.mxu0 0.0
    %1863 = vmatprep.subr.mxu0 0.0
    %1864 = vmatpush1.msra.mxu0 0.0
    %1865 = vmatprep.subr.mxu0 0.0
    %1866 = vmatpush1.msra.mxu0 0.0
    %1867 = vmatprep.subr.mxu0 0.0
    %1868 = vmatpush1.msra.mxu0 0.0
    %1869 = vmatprep.subr.mxu0 0.0
    %1870 = vmatpush1.msra.mxu0 0.0
    %1871 = vmatprep.subr.mxu0 0.0
    %1872 = vmatpush1.msra.mxu0 0.0
    %1873 = vmatprep.subr.mxu0 0.0
    %1874 = vmatpush1.msra.mxu0 0.0
    %1875 = vmatprep.subr.mxu0 0.0
    %1876 = vmatpush1.msra.mxu0 0.0
    %1877 = vmatprep.subr.mxu0 0.0
    %1878 = vmatpush1.msra.mxu0 0.0
    %1879 = vmatprep.subr.mxu0 0.0
    %1880 = vmatpush1.msra.mxu0 0.0
    %1881 = vmatprep.subr.mxu0 0.0
    %1882 = vmatpush1.msra.mxu0 0.0
    %1883 = vmatprep.subr.mxu0 0.0
    %1884 = vmatpush1.msra.mxu0 0.0
    %1885 = vmatprep.subr.mxu0 0.0
    %1886 = vmatpush1.msra.mxu0 0.0
    %1887 = vmatprep.subr.mxu0 0.0
    %1888 = vmatpush1.msra.mxu0 0.0
    %1889 = vmatprep.mubr.f32.mxu0 0.0
    %1890 = vmatmul.mubr.f32.gmra.mrb[0].mxu0 %v1680
    %v1891 = vpop.f32.mrb[0].mxu0
    %v1892 = vadd.f32 0.0, %v1891
    %v1893 = vpop.f32.mrb[0].mxu0
    %v1894 = vadd.f32 0.0, %v1893
    %1895 = vmatprep.mubr.f32.mxu0 0.0
    %1896 = vmatmul.mubr.f32.gmra.mrb[0].mxu0 %v1683
    %v1897 = vpop.f32.mrb[0].mxu0
    %v1898 = vadd.f32 0.0, %v1897
    %v1899 = vpop.f32.mrb[0].mxu0
    %v1900 = vadd.f32 0.0, %v1899
    %1901 = vdwg.mxu0
    %v1902 = vld [vmem:[#allocation7] sm:$0xff]
    %v1903 = vld [vmem:[#allocation7 + $0x8] sm:$0xff]
    %v1904 = vld [vmem:[#allocation7 + $0x10] sm:$0xff]
    %v1905 = vld [vmem:[#allocation7 + $0x18] sm:$0xff]
    %v1906 = vld [vmem:[#allocation7 + $0x20] sm:$0xff]
    %v1907 = vld [vmem:[#allocation7 + $0x28] sm:$0xff]
    %v1908 = vld [vmem:[#allocation7 + $0x30] sm:$0xff]
    %v1909 = vld [vmem:[#allocation7 + $0x38] sm:$0xff]
    %v1910 = vld [vmem:[#allocation7 + $0x40] sm:$0xff]
    %v1911 = vld [vmem:[#allocation7 + $0x48] sm:$0xff]
    %v1912 = vld [vmem:[#allocation7 + $0x50] sm:$0xff]
    %v1913 = vld [vmem:[#allocation7 + $0x58] sm:$0xff]
    %v1914 = vld [vmem:[#allocation7 + $0x60] sm:$0xff]
    %v1915 = vld [vmem:[#allocation7 + $0x68] sm:$0xff]
    %v1916 = vld [vmem:[#allocation7 + $0x70] sm:$0xff]
    %v1917 = vld [vmem:[#allocation7 + $0x78] sm:$0xff]
    %v1918 = vld [vmem:[#allocation7 + $0x80] sm:$0xff]
    %v1919 = vld [vmem:[#allocation7 + $0x88] sm:$0xff]
    %v1920 = vld [vmem:[#allocation7 + $0x90] sm:$0xff]
    %v1921 = vld [vmem:[#allocation7 + $0x98] sm:$0xff]
    %v1922 = vld [vmem:[#allocation7 + $0xa0] sm:$0xff]
    %v1923 = vld [vmem:[#allocation7 + $0xa8] sm:$0xff]
    %v1924 = vld [vmem:[#allocation7 + $0xb0] sm:$0xff]
    %v1925 = vld [vmem:[#allocation7 + $0xb8] sm:$0xff]
    %v1926 = vld [vmem:[#allocation7 + $0xc0] sm:$0xff]
    %v1927 = vld [vmem:[#allocation7 + $0xc8] sm:$0xff]
    %v1928 = vld [vmem:[#allocation7 + $0xd0] sm:$0xff]
    %v1929 = vld [vmem:[#allocation7 + $0xd8] sm:$0xff]
    %v1930 = vld [vmem:[#allocation7 + $0xe0] sm:$0xff]
    %v1931 = vld [vmem:[#allocation7 + $0xe8] sm:$0xff]
    %v1932 = vld [vmem:[#allocation7 + $0xf0] sm:$0xff]
    %v1933 = vld [vmem:[#allocation7 + $0xf8] sm:$0xff]
    %v1934 = vld [vmem:[#allocation7 + $0x100] sm:$0xff]
    %v1935 = vld [vmem:[#allocation7 + $0x108] sm:$0xff]
    %v1936 = vld [vmem:[#allocation7 + $0x110] sm:$0xff]
    %v1937 = vld [vmem:[#allocation7 + $0x118] sm:$0xff]
    %v1938 = vld [vmem:[#allocation7 + $0x120] sm:$0xff]
    %v1939 = vld [vmem:[#allocation7 + $0x128] sm:$0xff]
    %v1940 = vld [vmem:[#allocation7 + $0x130] sm:$0xff]
    %v1941 = vld [vmem:[#allocation7 + $0x138] sm:$0xff]
    %v1942 = vld [vmem:[#allocation7 + $0x140] sm:$0xff]
    %v1943 = vld [vmem:[#allocation7 + $0x148] sm:$0xff]
    %v1944 = vld [vmem:[#allocation7 + $0x150] sm:$0xff]
    %v1945 = vld [vmem:[#allocation7 + $0x158] sm:$0xff]
    %v1946 = vld [vmem:[#allocation7 + $0x160] sm:$0xff]
    %v1947 = vld [vmem:[#allocation7 + $0x168] sm:$0xff]
    %v1948 = vld [vmem:[#allocation7 + $0x170] sm:$0xff]
    %v1949 = vld [vmem:[#allocation7 + $0x178] sm:$0xff]
    %v1950 = vld [vmem:[#allocation7 + $0x180] sm:$0xff]
    %v1951 = vld [vmem:[#allocation7 + $0x188] sm:$0xff]
    %v1952 = vld [vmem:[#allocation7 + $0x190] sm:$0xff]
    %v1953 = vld [vmem:[#allocation7 + $0x198] sm:$0xff]
    %v1954 = vld [vmem:[#allocation7 + $0x1a0] sm:$0xff]
    %v1955 = vld [vmem:[#allocation7 + $0x1a8] sm:$0xff]
    %v1956 = vld [vmem:[#allocation7 + $0x1b0] sm:$0xff]
    %v1957 = vld [vmem:[#allocation7 + $0x1b8] sm:$0xff]
    %v1958 = vld [vmem:[#allocation7 + $0x1c0] sm:$0xff]
    %v1959 = vld [vmem:[#allocation7 + $0x1c8] sm:$0xff]
    %v1960 = vld [vmem:[#allocation7 + $0x1d0] sm:$0xff]
    %v1961 = vld [vmem:[#allocation7 + $0x1d8] sm:$0xff]
    %v1962 = vld [vmem:[#allocation7 + $0x1e0] sm:$0xff]
    %v1963 = vld [vmem:[#allocation7 + $0x1e8] sm:$0xff]
    %v1964 = vld [vmem:[#allocation7 + $0x1f0] sm:$0xff]
    %v1965 = vld [vmem:[#allocation7 + $0x1f8] sm:$0xff]
    %1966 = vmatprep.subr.mxu0 %v1903
    %1967 = vmatpush1.msra.mxu0 %v1902
    %1968 = vmatprep.subr.mxu0 %v1907
    %1969 = vmatpush1.msra.mxu0 %v1906
    %1970 = vmatprep.subr.mxu0 %v1911
    %1971 = vmatpush1.msra.mxu0 %v1910
    %1972 = vmatprep.subr.mxu0 %v1915
    %1973 = vmatpush1.msra.mxu0 %v1914
    %1974 = vmatprep.subr.mxu0 %v1919
    %1975 = vmatpush1.msra.mxu0 %v1918
    %1976 = vmatprep.subr.mxu0 %v1923
    %1977 = vmatpush1.msra.mxu0 %v1922
    %1978 = vmatprep.subr.mxu0 %v1927
    %1979 = vmatpush1.msra.mxu0 %v1926
    %1980 = vmatprep.subr.mxu0 %v1931
    %1981 = vmatpush1.msra.mxu0 %v1930
    %1982 = vmatprep.subr.mxu0 %v1935
    %1983 = vmatpush1.msra.mxu0 %v1934
    %1984 = vmatprep.subr.mxu0 %v1939
    %1985 = vmatpush1.msra.mxu0 %v1938
    %1986 = vmatprep.subr.mxu0 %v1943
    %1987 = vmatpush1.msra.mxu0 %v1942
    %1988 = vmatprep.subr.mxu0 %v1947
    %1989 = vmatpush1.msra.mxu0 %v1946
    %1990 = vmatprep.subr.mxu0 %v1951
    %1991 = vmatpush1.msra.mxu0 %v1950
    %1992 = vmatprep.subr.mxu0 %v1955
    %1993 = vmatpush1.msra.mxu0 %v1954
    %1994 = vmatprep.subr.mxu0 %v1959
    %1995 = vmatpush1.msra.mxu0 %v1958
    %1996 = vmatprep.subr.mxu0 %v1963
    %1997 = vmatpush1.msra.mxu0 %v1962
    %1998 = vmatprep.subr.mxu0 0.0
    %1999 = vmatpush1.msra.mxu0 0.0
    %2000 = vmatprep.subr.mxu0 0.0
    %2001 = vmatpush1.msra.mxu0 0.0
    %2002 = vmatprep.subr.mxu0 0.0
    %2003 = vmatpush1.msra.mxu0 0.0
    %2004 = vmatprep.subr.mxu0 0.0
    %2005 = vmatpush1.msra.mxu0 0.0
    %2006 = vmatprep.subr.mxu0 0.0
    %2007 = vmatpush1.msra.mxu0 0.0
    %2008 = vmatprep.subr.mxu0 0.0
    %2009 = vmatpush1.msra.mxu0 0.0
    %2010 = vmatprep.subr.mxu0 0.0
    %2011 = vmatpush1.msra.mxu0 0.0
    %2012 = vmatprep.subr.mxu0 0.0
    %2013 = vmatpush1.msra.mxu0 0.0
    %2014 = vmatprep.subr.mxu0 0.0
    %2015 = vmatpush1.msra.mxu0 0.0
    %2016 = vmatprep.subr.mxu0 0.0
    %2017 = vmatpush1.msra.mxu0 0.0
    %2018 = vmatprep.subr.mxu0 0.0
    %2019 = vmatpush1.msra.mxu0 0.0
    %2020 = vmatprep.subr.mxu0 0.0
    %2021 = vmatpush1.msra.mxu0 0.0
    %2022 = vmatprep.subr.mxu0 0.0
    %2023 = vmatpush1.msra.mxu0 0.0
    %2024 = vmatprep.subr.mxu0 0.0
    %2025 = vmatpush1.msra.mxu0 0.0
    %2026 = vmatprep.subr.mxu0 0.0
    %2027 = vmatpush1.msra.mxu0 0.0
    %2028 = vmatprep.subr.mxu0 0.0
    %2029 = vmatpush1.msra.mxu0 0.0
    %2030 = vmatprep.mubr.f32.mxu0 0.0
    %2031 = vmatmul.mubr.f32.gmra.mrb[0].mxu0 0.0
    %v2032 = vpop.f32.mrb[0].mxu0
    %v2033 = vadd.f32 0.0, %v2032
    %v2034 = vpop.f32.mrb[0].mxu0
    %v2035 = vadd.f32 0.0, %v2034
    %2036 = vdwg.mxu0
    %2037 = vmatprep.subr.mxu0 %v1905
    %2038 = vmatpush1.msra.mxu0 %v1904
    %2039 = vmatprep.subr.mxu0 %v1909
    %2040 = vmatpush1.msra.mxu0 %v1908
    %2041 = vmatprep.subr.mxu0 %v1913
    %2042 = vmatpush1.msra.mxu0 %v1912
    %2043 = vmatprep.subr.mxu0 %v1917
    %2044 = vmatpush1.msra.mxu0 %v1916
    %2045 = vmatprep.subr.mxu0 %v1921
    %2046 = vmatpush1.msra.mxu0 %v1920
    %2047 = vmatprep.subr.mxu0 %v1925
    %2048 = vmatpush1.msra.mxu0 %v1924
    %2049 = vmatprep.subr.mxu0 %v1929
    %2050 = vmatpush1.msra.mxu0 %v1928
    %2051 = vmatprep.subr.mxu0 %v1933
    %2052 = vmatpush1.msra.mxu0 %v1932
    %2053 = vmatprep.subr.mxu0 %v1937
    %2054 = vmatpush1.msra.mxu0 %v1936
    %2055 = vmatprep.subr.mxu0 %v1941
    %2056 = vmatpush1.msra.mxu0 %v1940
    %2057 = vmatprep.subr.mxu0 %v1945
    %2058 = vmatpush1.msra.mxu0 %v1944
    %2059 = vmatprep.subr.mxu0 %v1949
    %2060 = vmatpush1.msra.mxu0 %v1948
    %2061 = vmatprep.subr.mxu0 %v1953
    %2062 = vmatpush1.msra.mxu0 %v1952
    %2063 = vmatprep.subr.mxu0 %v1957
    %2064 = vmatpush1.msra.mxu0 %v1956
    %2065 = vmatprep.subr.mxu0 %v1961
    %2066 = vmatpush1.msra.mxu0 %v1960
    %2067 = vmatprep.subr.mxu0 %v1965
    %2068 = vmatpush1.msra.mxu0 %v1964
    %2069 = vmatprep.subr.mxu0 0.0
    %2070 = vmatpush1.msra.mxu0 0.0
    %2071 = vmatprep.subr.mxu0 0.0
    %2072 = vmatpush1.msra.mxu0 0.0
    %2073 = vmatprep.subr.mxu0 0.0
    %2074 = vmatpush1.msra.mxu0 0.0
    %2075 = vmatprep.subr.mxu0 0.0
    %2076 = vmatpush1.msra.mxu0 0.0
    %2077 = vmatprep.subr.mxu0 0.0
    %2078 = vmatpush1.msra.mxu0 0.0
    %2079 = vmatprep.subr.mxu0 0.0
    %2080 = vmatpush1.msra.mxu0 0.0
    %2081 = vmatprep.subr.mxu0 0.0
    %2082 = vmatpush1.msra.mxu0 0.0
    %2083 = vmatprep.subr.mxu0 0.0
    %2084 = vmatpush1.msra.mxu0 0.0
    %2085 = vmatprep.subr.mxu0 0.0
    %2086 = vmatpush1.msra.mxu0 0.0
    %2087 = vmatprep.subr.mxu0 0.0
    %2088 = vmatpush1.msra.mxu0 0.0
    %2089 = vmatprep.subr.mxu0 0.0
    %2090 = vmatpush1.msra.mxu0 0.0
    %2091 = vmatprep.subr.mxu0 0.0
    %2092 = vmatpush1.msra.mxu0 0.0
    %2093 = vmatprep.subr.mxu0 0.0
    %2094 = vmatpush1.msra.mxu0 0.0
    %2095 = vmatprep.subr.mxu0 0.0
    %2096 = vmatpush1.msra.mxu0 0.0
    %2097 = vmatprep.subr.mxu0 0.0
    %2098 = vmatpush1.msra.mxu0 0.0
    %2099 = vmatprep.subr.mxu0 0.0
    %2100 = vmatpush1.msra.mxu0 0.0
    %2101 = vmatprep.mubr.f32.mxu0 0.0
    %2102 = vmatmul.mubr.f32.gmra.mrb[0].mxu0 0.0
    %v2103 = vpop.f32.mrb[0].mxu0
    %v2104 = vadd.f32 0.0, %v2103
    %v2105 = vpop.f32.mrb[0].mxu0
    %v2106 = vadd.f32 0.0, %v2105
    %2107 = vdwg.mxu0
    %v2108 = vadd.f32 %v1815, %v2033
    %v2109 = vadd.f32 %v1817, %v2035
    %v2110 = vadd.f32 %v1892, %v2104
    %v2111 = vadd.f32 %v1894, %v2106
    %v2112 = vadd.f32 %v2108, %v125
    %v2113 = vadd.f32 %v2109, %v129
    %v2114 = vadd.f32 %v2110, %v133
    %v2115 = vadd.f32 %v2111, %v137
    %v2116 = vtanh.pop %v2112
    %v2117 = vtanh.pop %v2113
    %v2118 = vtanh.pop %v2114
    %v2119 = vtanh.pop %v2115
    %v2120 = vadd.f32 %v2116, 1.0
    %v2121 = vmul.f32 %v2120, 0.5
    %v2122 = vadd.f32 %v2117, 1.0
    %v2123 = vmul.f32 %v2122, 0.5
    %v2124 = vadd.f32 %v2118, 1.0
    %v2125 = vmul.f32 %v2124, 0.5
    %v2126 = vmul.f32 %v2123, 0.0
    %v2127 = vmul.f32 %v2121, %v2119
    %v2128 = vadd.f32 %v2126, %v2127
    %v2129 = vtanh.pop %v2128
    %v2130 = vmul.f32 %v2125, %v2129
    %2131 = vmatprep.subr.mxu0 %v1903
    %2132 = vmatpush1.msra.mxu0 %v1902
    %2133 = vmatprep.subr.mxu0 %v1907
    %2134 = vmatpush1.msra.mxu0 %v1906
    %2135 = vmatprep.subr.mxu0 %v1911
    %2136 = vmatpush1.msra.mxu0 %v1910
    %2137 = vmatprep.subr.mxu0 %v1915
    %2138 = vmatpush1.msra.mxu0 %v1914
    %2139 = vmatprep.subr.mxu0 %v1919
    %2140 = vmatpush1.msra.mxu0 %v1918
    %2141 = vmatprep.subr.mxu0 %v1923
    %2142 = vmatpush1.msra.mxu0 %v1922
    %2143 = vmatprep.subr.mxu0 %v1927
    %2144 = vmatpush1.msra.mxu0 %v1926
    %2145 = vmatprep.subr.mxu0 %v1931
    %2146 = vmatpush1.msra.mxu0 %v1930
    %2147 = vmatprep.subr.mxu0 %v1935
    %2148 = vmatpush1.msra.mxu0 %v1934
    %2149 = vmatprep.subr.mxu0 %v1939
    %2150 = vmatpush1.msra.mxu0 %v1938
    %2151 = vmatprep.subr.mxu0 %v1943
    %2152 = vmatpush1.msra.mxu0 %v1942
    %2153 = vmatprep.subr.mxu0 %v1947
    %2154 = vmatpush1.msra.mxu0 %v1946
    %2155 = vmatprep.subr.mxu0 %v1951
    %2156 = vmatpush1.msra.mxu0 %v1950
    %2157 = vmatprep.subr.mxu0 %v1955
    %2158 = vmatpush1.msra.mxu0 %v1954
    %2159 = vmatprep.subr.mxu0 %v1959
    %2160 = vmatpush1.msra.mxu0 %v1958
    %2161 = vmatprep.subr.mxu0 %v1963
    %2162 = vmatpush1.msra.mxu0 %v1962
    %2163 = vmatprep.subr.mxu0 0.0
    %2164 = vmatpush1.msra.mxu0 0.0
    %2165 = vmatprep.subr.mxu0 0.0
    %2166 = vmatpush1.msra.mxu0 0.0
    %2167 = vmatprep.subr.mxu0 0.0
    %2168 = vmatpush1.msra.mxu0 0.0
    %2169 = vmatprep.subr.mxu0 0.0
    %2170 = vmatpush1.msra.mxu0 0.0
    %2171 = vmatprep.subr.mxu0 0.0
    %2172 = vmatpush1.msra.mxu0 0.0
    %2173 = vmatprep.subr.mxu0 0.0
    %2174 = vmatpush1.msra.mxu0 0.0
    %2175 = vmatprep.subr.mxu0 0.0
    %2176 = vmatpush1.msra.mxu0 0.0
    %2177 = vmatprep.subr.mxu0 0.0
    %2178 = vmatpush1.msra.mxu0 0.0
    %2179 = vmatprep.subr.mxu0 0.0
    %2180 = vmatpush1.msra.mxu0 0.0
    %2181 = vmatprep.subr.mxu0 0.0
    %2182 = vmatpush1.msra.mxu0 0.0
    %2183 = vmatprep.subr.mxu0 0.0
    %2184 = vmatpush1.msra.mxu0 0.0
    %2185 = vmatprep.subr.mxu0 0.0
    %2186 = vmatpush1.msra.mxu0 0.0
    %2187 = vmatprep.subr.mxu0 0.0
    %2188 = vmatpush1.msra.mxu0 0.0
    %2189 = vmatprep.subr.mxu0 0.0
    %2190 = vmatpush1.msra.mxu0 0.0
    %2191 = vmatprep.subr.mxu0 0.0
    %2192 = vmatpush1.msra.mxu0 0.0
    %2193 = vmatprep.subr.mxu0 0.0
    %2194 = vmatpush1.msra.mxu0 0.0
    %2195 = vmatprep.mubr.f32.mxu0 0.0
    %2196 = vmatmul.mubr.f32.gmra.mrb[0].mxu0 %v2130
    %v2197 = vpop.f32.mrb[0].mxu0
    %v2198 = vadd.f32 0.0, %v2197
    %v2199 = vpop.f32.mrb[0].mxu0
    %v2200 = vadd.f32 0.0, %v2199
    %2201 = vdwg.mxu0
    %2202 = vmatprep.subr.mxu0 %v1905
    %2203 = vmatpush1.msra.mxu0 %v1904
    %2204 = vmatprep.subr.mxu0 %v1909
    %2205 = vmatpush1.msra.mxu0 %v1908
    %2206 = vmatprep.subr.mxu0 %v1913
    %2207 = vmatpush1.msra.mxu0 %v1912
    %2208 = vmatprep.subr.mxu0 %v1917
    %2209 = vmatpush1.msra.mxu0 %v1916
    %2210 = vmatprep.subr.mxu0 %v1921
    %2211 = vmatpush1.msra.mxu0 %v1920
    %2212 = vmatprep.subr.mxu0 %v1925
    %2213 = vmatpush1.msra.mxu0 %v1924
    %2214 = vmatprep.subr.mxu0 %v1929
    %2215 = vmatpush1.msra.mxu0 %v1928
    %2216 = vmatprep.subr.mxu0 %v1933
    %2217 = vmatpush1.msra.mxu0 %v1932
    %2218 = vmatprep.subr.mxu0 %v1937
    %2219 = vmatpush1.msra.mxu0 %v1936
    %2220 = vmatprep.subr.mxu0 %v1941
    %2221 = vmatpush1.msra.mxu0 %v1940
    %2222 = vmatprep.subr.mxu0 %v1945
    %2223 = vmatpush1.msra.mxu0 %v1944
    %2224 = vmatprep.subr.mxu0 %v1949
    %2225 = vmatpush1.msra.mxu0 %v1948
    %2226 = vmatprep.subr.mxu0 %v1953
    %2227 = vmatpush1.msra.mxu0 %v1952
    %2228 = vmatprep.subr.mxu0 %v1957
    %2229 = vmatpush1.msra.mxu0 %v1956
    %2230 = vmatprep.subr.mxu0 %v1961
    %2231 = vmatpush1.msra.mxu0 %v1960
    %2232 = vmatprep.subr.mxu0 %v1965
    %2233 = vmatpush1.msra.mxu0 %v1964
    %2234 = vmatprep.subr.mxu0 0.0
    %2235 = vmatpush1.msra.mxu0 0.0
    %2236 = vmatprep.subr.mxu0 0.0
    %2237 = vmatpush1.msra.mxu0 0.0
    %2238 = vmatprep.subr.mxu0 0.0
    %2239 = vmatpush1.msra.mxu0 0.0
    %2240 = vmatprep.subr.mxu0 0.0
    %2241 = vmatpush1.msra.mxu0 0.0
    %2242 = vmatprep.subr.mxu0 0.0
    %2243 = vmatpush1.msra.mxu0 0.0
    %2244 = vmatprep.subr.mxu0 0.0
    %2245 = vmatpush1.msra.mxu0 0.0
    %2246 = vmatprep.subr.mxu0 0.0
    %2247 = vmatpush1.msra.mxu0 0.0
    %2248 = vmatprep.subr.mxu0 0.0
    %2249 = vmatpush1.msra.mxu0 0.0
    %2250 = vmatprep.subr.mxu0 0.0
    %2251 = vmatpush1.msra.mxu0 0.0
    %2252 = vmatprep.subr.mxu0 0.0
    %2253 = vmatpush1.msra.mxu0 0.0
    %2254 = vmatprep.subr.mxu0 0.0
    %2255 = vmatpush1.msra.mxu0 0.0
    %2256 = vmatprep.subr.mxu0 0.0
    %2257 = vmatpush1.msra.mxu0 0.0
    %2258 = vmatprep.subr.mxu0 0.0
    %2259 = vmatpush1.msra.mxu0 0.0
    %2260 = vmatprep.subr.mxu0 0.0
    %2261 = vmatpush1.msra.mxu0 0.0
    %2262 = vmatprep.subr.mxu0 0.0
    %2263 = vmatpush1.msra.mxu0 0.0
    %2264 = vmatprep.subr.mxu0 0.0
    %2265 = vmatpush1.msra.mxu0 0.0
    %2266 = vmatprep.mubr.f32.mxu0 0.0
    %2267 = vmatmul.mubr.f32.gmra.mrb[0].mxu0 %v2130
    %v2268 = vpop.f32.mrb[0].mxu0
    %v2269 = vadd.f32 0.0, %v2268
    %v2270 = vpop.f32.mrb[0].mxu0
    %v2271 = vadd.f32 0.0, %v2270
    %2272 = vdwg.mxu0
    %v2277 = vrot.slane %v2198, 6
    %v2278 = vrot.slane %v2200, 6
    %v2279 = vrot.slane %v2269, 6
    %v2280 = vrot.slane %v2271, 6
    %v2285 = vadd.f32 %v1815, %v2277
    %v2286 = vadd.f32 %v1817, %v2278
    %v2287 = vadd.f32 %v1892, %v2279
    %v2288 = vadd.f32 %v1894, %v2280
    %v2289 = vadd.f32 %v2285, %v125
    %v2290 = vadd.f32 %v2286, %v129
    %v2291 = vadd.f32 %v2287, %v133
    %v2292 = vadd.f32 %v2288, %v137
    %v2293 = vtanh.pop %v2289
    %v2294 = vtanh.pop %v2290
    %v2295 = vtanh.pop %v2291
    %v2296 = vtanh.pop %v2292
    %v2297 = vadd.f32 %v2293, 1.0
    %v2298 = vmul.f32 %v2297, 0.5
    %v2299 = vadd.f32 %v2294, 1.0
    %v2300 = vmul.f32 %v2299, 0.5
    %v2301 = vadd.f32 %v2295, 1.0
    %v2302 = vmul.f32 %v2301, 0.5
    %v2304 = vrot.slane %v2128, 6
    %v2306 = vmul.f32 %v2300, %v2304
    %v2307 = vmul.f32 %v2298, %v2296
    %v2308 = vadd.f32 %v2306, %v2307
    %v2309 = vtanh.pop %v2308
    %v2310 = vmul.f32 %v2302, %v2309
    %v2312 = vrot.slane %v2310, 2
    %2314 = vmatprep.subr.mxu0 %v1903
    %2315 = vmatpush1.msra.mxu0 %v1902
    %2316 = vmatprep.subr.mxu0 %v1907
    %2317 = vmatpush1.msra.mxu0 %v1906
    %2318 = vmatprep.subr.mxu0 %v1911
    %2319 = vmatpush1.msra.mxu0 %v1910
    %2320 = vmatprep.subr.mxu0 %v1915
    %2321 = vmatpush1.msra.mxu0 %v1914
    %2322 = vmatprep.subr.mxu0 %v1919
    %2323 = vmatpush1.msra.mxu0 %v1918
    %2324 = vmatprep.subr.mxu0 %v1923
    %2325 = vmatpush1.msra.mxu0 %v1922
    %2326 = vmatprep.subr.mxu0 %v1927
    %2327 = vmatpush1.msra.mxu0 %v1926
    %2328 = vmatprep.subr.mxu0 %v1931
    %2329 = vmatpush1.msra.mxu0 %v1930
    %2330 = vmatprep.subr.mxu0 %v1935
    %2331 = vmatpush1.msra.mxu0 %v1934
    %2332 = vmatprep.subr.mxu0 %v1939
    %2333 = vmatpush1.msra.mxu0 %v1938
    %2334 = vmatprep.subr.mxu0 %v1943
    %2335 = vmatpush1.msra.mxu0 %v1942
    %2336 = vmatprep.subr.mxu0 %v1947
    %2337 = vmatpush1.msra.mxu0 %v1946
    %2338 = vmatprep.subr.mxu0 %v1951
    %2339 = vmatpush1.msra.mxu0 %v1950
    %2340 = vmatprep.subr.mxu0 %v1955
    %2341 = vmatpush1.msra.mxu0 %v1954
    %2342 = vmatprep.subr.mxu0 %v1959
    %2343 = vmatpush1.msra.mxu0 %v1958
    %2344 = vmatprep.subr.mxu0 %v1963
    %2345 = vmatpush1.msra.mxu0 %v1962
    %2346 = vmatprep.subr.mxu0 0.0
    %2347 = vmatpush1.msra.mxu0 0.0
    %2348 = vmatprep.subr.mxu0 0.0
    %2349 = vmatpush1.msra.mxu0 0.0
    %2350 = vmatprep.subr.mxu0 0.0
    %2351 = vmatpush1.msra.mxu0 0.0
    %2352 = vmatprep.subr.mxu0 0.0
    %2353 = vmatpush1.msra.mxu0 0.0
    %2354 = vmatprep.subr.mxu0 0.0
    %2355 = vmatpush1.msra.mxu0 0.0
    %2356 = vmatprep.subr.mxu0 0.0
    %2357 = vmatpush1.msra.mxu0 0.0
    %2358 = vmatprep.subr.mxu0 0.0
    %2359 = vmatpush1.msra.mxu0 0.0
    %2360 = vmatprep.subr.mxu0 0.0
    %2361 = vmatpush1.msra.mxu0 0.0
    %2362 = vmatprep.subr.mxu0 0.0
    %2363 = vmatpush1.msra.mxu0 0.0
    %2364 = vmatprep.subr.mxu0 0.0
    %2365 = vmatpush1.msra.mxu0 0.0
    %2366 = vmatprep.subr.mxu0 0.0
    %2367 = vmatpush1.msra.mxu0 0.0
    %2368 = vmatprep.subr.mxu0 0.0
    %2369 = vmatpush1.msra.mxu0 0.0
    %2370 = vmatprep.subr.mxu0 0.0
    %2371 = vmatpush1.msra.mxu0 0.0
    %2372 = vmatprep.subr.mxu0 0.0
    %2373 = vmatpush1.msra.mxu0 0.0
    %2374 = vmatprep.subr.mxu0 0.0
    %2375 = vmatpush1.msra.mxu0 0.0
    %2376 = vmatprep.subr.mxu0 0.0
    %2377 = vmatpush1.msra.mxu0 0.0
    %2378 = vmatprep.mubr.f32.mxu0 0.0
    %2379 = vmatmul.mubr.f32.gmra.mrb[0].mxu0 %v2312
    %v2380 = vpop.f32.mrb[0].mxu0
    %v2381 = vadd.f32 0.0, %v2380
    %v2382 = vpop.f32.mrb[0].mxu0
    %v2383 = vadd.f32 0.0, %v2382
    %2384 = vdwg.mxu0
    %2385 = vmatprep.subr.mxu0 %v1905
    %2386 = vmatpush1.msra.mxu0 %v1904
    %2387 = vmatprep.subr.mxu0 %v1909
    %2388 = vmatpush1.msra.mxu0 %v1908
    %2389 = vmatprep.subr.mxu0 %v1913
    %2390 = vmatpush1.msra.mxu0 %v1912
    %2391 = vmatprep.subr.mxu0 %v1917
    %2392 = vmatpush1.msra.mxu0 %v1916
    %2393 = vmatprep.subr.mxu0 %v1921
    %2394 = vmatpush1.msra.mxu0 %v1920
    %2395 = vmatprep.subr.mxu0 %v1925
    %2396 = vmatpush1.msra.mxu0 %v1924
    %2397 = vmatprep.subr.mxu0 %v1929
    %2398 = vmatpush1.msra.mxu0 %v1928
    %2399 = vmatprep.subr.mxu0 %v1933
    %2400 = vmatpush1.msra.mxu0 %v1932
    %2401 = vmatprep.subr.mxu0 %v1937
    %2402 = vmatpush1.msra.mxu0 %v1936
    %2403 = vmatprep.subr.mxu0 %v1941
    %2404 = vmatpush1.msra.mxu0 %v1940
    %2405 = vmatprep.subr.mxu0 %v1945
    %2406 = vmatpush1.msra.mxu0 %v1944
    %2407 = vmatprep.subr.mxu0 %v1949
    %2408 = vmatpush1.msra.mxu0 %v1948
    %2409 = vmatprep.subr.mxu0 %v1953
    %2410 = vmatpush1.msra.mxu0 %v1952
    %2411 = vmatprep.subr.mxu0 %v1957
    %2412 = vmatpush1.msra.mxu0 %v1956
    %2413 = vmatprep.subr.mxu0 %v1961
    %2414 = vmatpush1.msra.mxu0 %v1960
    %2415 = vmatprep.subr.mxu0 %v1965
    %2416 = vmatpush1.msra.mxu0 %v1964
    %2417 = vmatprep.subr.mxu0 0.0
    %2418 = vmatpush1.msra.mxu0 0.0
    %2419 = vmatprep.subr.mxu0 0.0
    %2420 = vmatpush1.msra.mxu0 0.0
    %2421 = vmatprep.subr.mxu0 0.0
    %2422 = vmatpush1.msra.mxu0 0.0
    %2423 = vmatprep.subr.mxu0 0.0
    %2424 = vmatpush1.msra.mxu0 0.0
    %2425 = vmatprep.subr.mxu0 0.0
    %2426 = vmatpush1.msra.mxu0 0.0
    %2427 = vmatprep.subr.mxu0 0.0
    %2428 = vmatpush1.msra.mxu0 0.0
    %2429 = vmatprep.subr.mxu0 0.0
    %2430 = vmatpush1.msra.mxu0 0.0
    %2431 = vmatprep.subr.mxu0 0.0
    %2432 = vmatpush1.msra.mxu0 0.0
    %2433 = vmatprep.subr.mxu0 0.0
    %2434 = vmatpush1.msra.mxu0 0.0
    %2435 = vmatprep.subr.mxu0 0.0
    %2436 = vmatpush1.msra.mxu0 0.0
    %2437 = vmatprep.subr.mxu0 0.0
    %2438 = vmatpush1.msra.mxu0 0.0
    %2439 = vmatprep.subr.mxu0 0.0
    %2440 = vmatpush1.msra.mxu0 0.0
    %2441 = vmatprep.subr.mxu0 0.0
    %2442 = vmatpush1.msra.mxu0 0.0
    %2443 = vmatprep.subr.mxu0 0.0
    %2444 = vmatpush1.msra.mxu0 0.0
    %2445 = vmatprep.subr.mxu0 0.0
    %2446 = vmatpush1.msra.mxu0 0.0
    %2447 = vmatprep.subr.mxu0 0.0
    %2448 = vmatpush1.msra.mxu0 0.0
    %2449 = vmatprep.mubr.f32.mxu0 0.0
    %2450 = vmatmul.mubr.f32.gmra.mrb[0].mxu0 %v2312
    %v2451 = vpop.f32.mrb[0].mxu0
    %v2452 = vadd.f32 0.0, %v2451
    %v2453 = vpop.f32.mrb[0].mxu0
    %v2454 = vadd.f32 0.0, %v2453
    %2455 = vdwg.mxu0
    %v2460 = vrot.slane %v2381, 4
    %v2461 = vrot.slane %v2383, 4
    %v2462 = vrot.slane %v2452, 4
    %v2463 = vrot.slane %v2454, 4
    %v2468 = vadd.f32 %v1815, %v2460
    %v2469 = vadd.f32 %v1817, %v2461
    %v2470 = vadd.f32 %v1892, %v2462
    %v2471 = vadd.f32 %v1894, %v2463
    %v2472 = vadd.f32 %v2468, %v125
    %v2473 = vadd.f32 %v2469, %v129
    %v2474 = vadd.f32 %v2470, %v133
    %v2475 = vadd.f32 %v2471, %v137
    %v2476 = vtanh.pop %v2472
    %v2477 = vtanh.pop %v2473
    %v2478 = vtanh.pop %v2474
    %v2479 = vtanh.pop %v2475
    %v2480 = vadd.f32 %v2476, 1.0
    %v2481 = vmul.f32 %v2480, 0.5
    %v2482 = vadd.f32 %v2477, 1.0
    %v2483 = vmul.f32 %v2482, 0.5
    %v2484 = vadd.f32 %v2478, 1.0
    %v2485 = vmul.f32 %v2484, 0.5
    %v2487 = vrot.slane %v2308, 6
    %v2489 = vmul.f32 %v2483, %v2487
    %v2490 = vmul.f32 %v2481, %v2479
    %v2491 = vadd.f32 %v2489, %v2490
    %v2492 = vtanh.pop %v2491
    %v2493 = vmul.f32 %v2485, %v2492
    %v2495 = vrot.slane %v2493, 4
    %2497 = vmatprep.subr.mxu0 %v1903
    %2498 = vmatpush1.msra.mxu0 %v1902
    %2499 = vmatprep.subr.mxu0 %v1907
    %2500 = vmatpush1.msra.mxu0 %v1906
    %2501 = vmatprep.subr.mxu0 %v1911
    %2502 = vmatpush1.msra.mxu0 %v1910
    %2503 = vmatprep.subr.mxu0 %v1915
    %2504 = vmatpush1.msra.mxu0 %v1914
    %2505 = vmatprep.subr.mxu0 %v1919
    %2506 = vmatpush1.msra.mxu0 %v1918
    %2507 = vmatprep.subr.mxu0 %v1923
    %2508 = vmatpush1.msra.mxu0 %v1922
    %2509 = vmatprep.subr.mxu0 %v1927
    %2510 = vmatpush1.msra.mxu0 %v1926
    %2511 = vmatprep.subr.mxu0 %v1931
    %2512 = vmatpush1.msra.mxu0 %v1930
    %2513 = vmatprep.subr.mxu0 %v1935
    %2514 = vmatpush1.msra.mxu0 %v1934
    %2515 = vmatprep.subr.mxu0 %v1939
    %2516 = vmatpush1.msra.mxu0 %v1938
    %2517 = vmatprep.subr.mxu0 %v1943
    %2518 = vmatpush1.msra.mxu0 %v1942
    %2519 = vmatprep.subr.mxu0 %v1947
    %2520 = vmatpush1.msra.mxu0 %v1946
    %2521 = vmatprep.subr.mxu0 %v1951
    %2522 = vmatpush1.msra.mxu0 %v1950
    %2523 = vmatprep.subr.mxu0 %v1955
    %2524 = vmatpush1.msra.mxu0 %v1954
    %2525 = vmatprep.subr.mxu0 %v1959
    %2526 = vmatpush1.msra.mxu0 %v1958
    %2527 = vmatprep.subr.mxu0 %v1963
    %2528 = vmatpush1.msra.mxu0 %v1962
    %2529 = vmatprep.subr.mxu0 0.0
    %2530 = vmatpush1.msra.mxu0 0.0
    %2531 = vmatprep.subr.mxu0 0.0
    %2532 = vmatpush1.msra.mxu0 0.0
    %2533 = vmatprep.subr.mxu0 0.0
    %2534 = vmatpush1.msra.mxu0 0.0
    %2535 = vmatprep.subr.mxu0 0.0
    %2536 = vmatpush1.msra.mxu0 0.0
    %2537 = vmatprep.subr.mxu0 0.0
    %2538 = vmatpush1.msra.mxu0 0.0
    %2539 = vmatprep.subr.mxu0 0.0
    %2540 = vmatpush1.msra.mxu0 0.0
    %2541 = vmatprep.subr.mxu0 0.0
    %2542 = vmatpush1.msra.mxu0 0.0
    %2543 = vmatprep.subr.mxu0 0.0
    %2544 = vmatpush1.msra.mxu0 0.0
    %2545 = vmatprep.subr.mxu0 0.0
    %2546 = vmatpush1.msra.mxu0 0.0
    %2547 = vmatprep.subr.mxu0 0.0
    %2548 = vmatpush1.msra.mxu0 0.0
    %2549 = vmatprep.subr.mxu0 0.0
    %2550 = vmatpush1.msra.mxu0 0.0
    %2551 = vmatprep.subr.mxu0 0.0
    %2552 = vmatpush1.msra.mxu0 0.0
    %2553 = vmatprep.subr.mxu0 0.0
    %2554 = vmatpush1.msra.mxu0 0.0
    %2555 = vmatprep.subr.mxu0 0.0
    %2556 = vmatpush1.msra.mxu0 0.0
    %2557 = vmatprep.subr.mxu0 0.0
    %2558 = vmatpush1.msra.mxu0 0.0
    %2559 = vmatprep.subr.mxu0 0.0
    %2560 = vmatpush1.msra.mxu0 0.0
    %2561 = vmatprep.mubr.f32.mxu0 0.0
    %2562 = vmatmul.mubr.f32.gmra.mrb[0].mxu0 %v2495
    %v2563 = vpop.f32.mrb[0].mxu0
    %v2564 = vadd.f32 0.0, %v2563
    %v2565 = vpop.f32.mrb[0].mxu0
    %v2566 = vadd.f32 0.0, %v2565
    %2567 = vdwg.mxu0
    %2568 = vmatprep.subr.mxu0 %v1905
    %2569 = vmatpush1.msra.mxu0 %v1904
    %2570 = vmatprep.subr.mxu0 %v1909
    %2571 = vmatpush1.msra.mxu0 %v1908
    %2572 = vmatprep.subr.mxu0 %v1913
    %2573 = vmatpush1.msra.mxu0 %v1912
    %2574 = vmatprep.subr.mxu0 %v1917
    %2575 = vmatpush1.msra.mxu0 %v1916
    %2576 = vmatprep.subr.mxu0 %v1921
    %2577 = vmatpush1.msra.mxu0 %v1920
    %2578 = vmatprep.subr.mxu0 %v1925
    %2579 = vmatpush1.msra.mxu0 %v1924
    %2580 = vmatprep.subr.mxu0 %v1929
    %2581 = vmatpush1.msra.mxu0 %v1928
    %2582 = vmatprep.subr.mxu0 %v1933
    %2583 = vmatpush1.msra.mxu0 %v1932
    %2584 = vmatprep.subr.mxu0 %v1937
    %2585 = vmatpush1.msra.mxu0 %v1936
    %2586 = vmatprep.subr.mxu0 %v1941
    %2587 = vmatpush1.msra.mxu0 %v1940
    %2588 = vmatprep.subr.mxu0 %v1945
    %2589 = vmatpush1.msra.mxu0 %v1944
    %2590 = vmatprep.subr.mxu0 %v1949
    %2591 = vmatpush1.msra.mxu0 %v1948
    %2592 = vmatprep.subr.mxu0 %v1953
    %2593 = vmatpush1.msra.mxu0 %v1952
    %2594 = vmatprep.subr.mxu0 %v1957
    %2595 = vmatpush1.msra.mxu0 %v1956
    %2596 = vmatprep.subr.mxu0 %v1961
    %2597 = vmatpush1.msra.mxu0 %v1960
    %2598 = vmatprep.subr.mxu0 %v1965
    %2599 = vmatpush1.msra.mxu0 %v1964
    %2600 = vmatprep.subr.mxu0 0.0
    %2601 = vmatpush1.msra.mxu0 0.0
    %2602 = vmatprep.subr.mxu0 0.0
    %2603 = vmatpush1.msra.mxu0 0.0
    %2604 = vmatprep.subr.mxu0 0.0
    %2605 = vmatpush1.msra.mxu0 0.0
    %2606 = vmatprep.subr.mxu0 0.0
    %2607 = vmatpush1.msra.mxu0 0.0
    %2608 = vmatprep.subr.mxu0 0.0
    %2609 = vmatpush1.msra.mxu0 0.0
    %2610 = vmatprep.subr.mxu0 0.0
    %2611 = vmatpush1.msra.mxu0 0.0
    %2612 = vmatprep.subr.mxu0 0.0
    %2613 = vmatpush1.msra.mxu0 0.0
    %2614 = vmatprep.subr.mxu0 0.0
    %2615 = vmatpush1.msra.mxu0 0.0
    %2616 = vmatprep.subr.mxu0 0.0
    %2617 = vmatpush1.msra.mxu0 0.0
    %2618 = vmatprep.subr.mxu0 0.0
    %2619 = vmatpush1.msra.mxu0 0.0
    %2620 = vmatprep.subr.mxu0 0.0
    %2621 = vmatpush1.msra.mxu0 0.0
    %2622 = vmatprep.subr.mxu0 0.0
    %2623 = vmatpush1.msra.mxu0 0.0
    %2624 = vmatprep.subr.mxu0 0.0
    %2625 = vmatpush1.msra.mxu0 0.0
    %2626 = vmatprep.subr.mxu0 0.0
    %2627 = vmatpush1.msra.mxu0 0.0
    %2628 = vmatprep.subr.mxu0 0.0
    %2629 = vmatpush1.msra.mxu0 0.0
    %2630 = vmatprep.subr.mxu0 0.0
    %2631 = vmatpush1.msra.mxu0 0.0
    %2632 = vmatprep.mubr.f32.mxu0 0.0
    %2633 = vmatmul.mubr.f32.gmra.mrb[0].mxu0 %v2495
    %v2634 = vpop.f32.mrb[0].mxu0
    %v2635 = vadd.f32 0.0, %v2634
    %v2636 = vpop.f32.mrb[0].mxu0
    %v2637 = vadd.f32 0.0, %v2636
    %2638 = vdwg.mxu0
    %v2643 = vrot.slane %v2564, 2
    %v2644 = vrot.slane %v2566, 2
    %v2645 = vrot.slane %v2635, 2
    %v2646 = vrot.slane %v2637, 2
    %v2651 = vadd.f32 %v1815, %v2643
    %v2652 = vadd.f32 %v1817, %v2644
    %v2653 = vadd.f32 %v1892, %v2645
    %v2654 = vadd.f32 %v1894, %v2646
    %v2655 = vadd.f32 %v2651, %v125
    %v2656 = vadd.f32 %v2652, %v129
    %v2657 = vadd.f32 %v2653, %v133
    %v2658 = vadd.f32 %v2654, %v137
    %v2659 = vtanh.pop %v2655
    %v2660 = vtanh.pop %v2656
    %v2661 = vtanh.pop %v2657
    %v2662 = vtanh.pop %v2658
    %v2663 = vadd.f32 %v2659, 1.0
    %v2664 = vmul.f32 %v2663, 0.5
    %v2665 = vadd.f32 %v2660, 1.0
    %v2666 = vmul.f32 %v2665, 0.5
    %v2667 = vadd.f32 %v2661, 1.0
    %v2668 = vmul.f32 %v2667, 0.5
    %v2670 = vrot.slane %v2491, 6
    %v2672 = vmul.f32 %v2666, %v2670
    %v2673 = vmul.f32 %v2664, %v2662
    %v2674 = vadd.f32 %v2672, %v2673
    %v2675 = vtanh.pop %v2674
    %v2676 = vmul.f32 %v2668, %v2675
    %v2678 = vrot.slane %v2676, 6
    %2680 = vmatprep.subr.mxu0 %v1903
    %2681 = vmatpush1.msra.mxu0 %v1902
    %2682 = vmatprep.subr.mxu0 %v1907
    %2683 = vmatpush1.msra.mxu0 %v1906
    %2684 = vmatprep.subr.mxu0 %v1911
    %2685 = vmatpush1.msra.mxu0 %v1910
    %2686 = vmatprep.subr.mxu0 %v1915
    %2687 = vmatpush1.msra.mxu0 %v1914
    %2688 = vmatprep.subr.mxu0 %v1919
    %2689 = vmatpush1.msra.mxu0 %v1918
    %2690 = vmatprep.subr.mxu0 %v1923
    %2691 = vmatpush1.msra.mxu0 %v1922
    %2692 = vmatprep.subr.mxu0 %v1927
    %2693 = vmatpush1.msra.mxu0 %v1926
    %2694 = vmatprep.subr.mxu0 %v1931
    %2695 = vmatpush1.msra.mxu0 %v1930
    %2696 = vmatprep.subr.mxu0 %v1935
    %2697 = vmatpush1.msra.mxu0 %v1934
    %2698 = vmatprep.subr.mxu0 %v1939
    %2699 = vmatpush1.msra.mxu0 %v1938
    %2700 = vmatprep.subr.mxu0 %v1943
    %2701 = vmatpush1.msra.mxu0 %v1942
    %2702 = vmatprep.subr.mxu0 %v1947
    %2703 = vmatpush1.msra.mxu0 %v1946
    %2704 = vmatprep.subr.mxu0 %v1951
    %2705 = vmatpush1.msra.mxu0 %v1950
    %2706 = vmatprep.subr.mxu0 %v1955
    %2707 = vmatpush1.msra.mxu0 %v1954
    %2708 = vmatprep.subr.mxu0 %v1959
    %2709 = vmatpush1.msra.mxu0 %v1958
    %2710 = vmatprep.subr.mxu0 %v1963
    %2711 = vmatpush1.msra.mxu0 %v1962
    %2712 = vmatprep.subr.mxu0 0.0
    %2713 = vmatpush1.msra.mxu0 0.0
    %2714 = vmatprep.subr.mxu0 0.0
    %2715 = vmatpush1.msra.mxu0 0.0
    %2716 = vmatprep.subr.mxu0 0.0
    %2717 = vmatpush1.msra.mxu0 0.0
    %2718 = vmatprep.subr.mxu0 0.0
    %2719 = vmatpush1.msra.mxu0 0.0
    %2720 = vmatprep.subr.mxu0 0.0
    %2721 = vmatpush1.msra.mxu0 0.0
    %2722 = vmatprep.subr.mxu0 0.0
    %2723 = vmatpush1.msra.mxu0 0.0
    %2724 = vmatprep.subr.mxu0 0.0
    %2725 = vmatpush1.msra.mxu0 0.0
    %2726 = vmatprep.subr.mxu0 0.0
    %2727 = vmatpush1.msra.mxu0 0.0
    %2728 = vmatprep.subr.mxu0 0.0
    %2729 = vmatpush1.msra.mxu0 0.0
    %2730 = vmatprep.subr.mxu0 0.0
    %2731 = vmatpush1.msra.mxu0 0.0
    %2732 = vmatprep.subr.mxu0 0.0
    %2733 = vmatpush1.msra.mxu0 0.0
    %2734 = vmatprep.subr.mxu0 0.0
    %2735 = vmatpush1.msra.mxu0 0.0
    %2736 = vmatprep.subr.mxu0 0.0
    %2737 = vmatpush1.msra.mxu0 0.0
    %2738 = vmatprep.subr.mxu0 0.0
    %2739 = vmatpush1.msra.mxu0 0.0
    %2740 = vmatprep.subr.mxu0 0.0
    %2741 = vmatpush1.msra.mxu0 0.0
    %2742 = vmatprep.subr.mxu0 0.0
    %2743 = vmatpush1.msra.mxu0 0.0
    %2744 = vmatprep.mubr.f32.mxu0 0.0
    %2745 = vmatmul.mubr.f32.gmra.mrb[0].mxu0 %v2678
    %v2746 = vpop.f32.mrb[0].mxu0
    %v2747 = vadd.f32 0.0, %v2746
    %v2748 = vpop.f32.mrb[0].mxu0
    %v2749 = vadd.f32 0.0, %v2748
    %2750 = vdwg.mxu0
    %2751 = vmatprep.subr.mxu0 %v1905
    %2752 = vmatpush1.msra.mxu0 %v1904
    %2753 = vmatprep.subr.mxu0 %v1909
    %2754 = vmatpush1.msra.mxu0 %v1908
    %2755 = vmatprep.subr.mxu0 %v1913
    %2756 = vmatpush1.msra.mxu0 %v1912
    %2757 = vmatprep.subr.mxu0 %v1917
    %2758 = vmatpush1.msra.mxu0 %v1916
    %2759 = vmatprep.subr.mxu0 %v1921
    %2760 = vmatpush1.msra.mxu0 %v1920
    %2761 = vmatprep.subr.mxu0 %v1925
    %2762 = vmatpush1.msra.mxu0 %v1924
    %2763 = vmatprep.subr.mxu0 %v1929
    %2764 = vmatpush1.msra.mxu0 %v1928
    %2765 = vmatprep.subr.mxu0 %v1933
    %2766 = vmatpush1.msra.mxu0 %v1932
    %2767 = vmatprep.subr.mxu0 %v1937
    %2768 = vmatpush1.msra.mxu0 %v1936
    %2769 = vmatprep.subr.mxu0 %v1941
    %2770 = vmatpush1.msra.mxu0 %v1940
    %2771 = vmatprep.subr.mxu0 %v1945
    %2772 = vmatpush1.msra.mxu0 %v1944
    %2773 = vmatprep.subr.mxu0 %v1949
    %2774 = vmatpush1.msra.mxu0 %v1948
    %2775 = vmatprep.subr.mxu0 %v1953
    %2776 = vmatpush1.msra.mxu0 %v1952
    %2777 = vmatprep.subr.mxu0 %v1957
    %2778 = vmatpush1.msra.mxu0 %v1956
    %2779 = vmatprep.subr.mxu0 %v1961
    %2780 = vmatpush1.msra.mxu0 %v1960
    %2781 = vmatprep.subr.mxu0 %v1965
    %2782 = vmatpush1.msra.mxu0 %v1964
    %2783 = vmatprep.subr.mxu0 0.0
    %2784 = vmatpush1.msra.mxu0 0.0
    %2785 = vmatprep.subr.mxu0 0.0
    %2786 = vmatpush1.msra.mxu0 0.0
    %2787 = vmatprep.subr.mxu0 0.0
    %2788 = vmatpush1.msra.mxu0 0.0
    %2789 = vmatprep.subr.mxu0 0.0
    %2790 = vmatpush1.msra.mxu0 0.0
    %2791 = vmatprep.subr.mxu0 0.0
    %2792 = vmatpush1.msra.mxu0 0.0
    %2793 = vmatprep.subr.mxu0 0.0
    %2794 = vmatpush1.msra.mxu0 0.0
    %2795 = vmatprep.subr.mxu0 0.0
    %2796 = vmatpush1.msra.mxu0 0.0
    %2797 = vmatprep.subr.mxu0 0.0
    %2798 = vmatpush1.msra.mxu0 0.0
    %2799 = vmatprep.subr.mxu0 0.0
    %2800 = vmatpush1.msra.mxu0 0.0
    %2801 = vmatprep.subr.mxu0 0.0
    %2802 = vmatpush1.msra.mxu0 0.0
    %2803 = vmatprep.subr.mxu0 0.0
    %2804 = vmatpush1.msra.mxu0 0.0
    %2805 = vmatprep.subr.mxu0 0.0
    %2806 = vmatpush1.msra.mxu0 0.0
    %2807 = vmatprep.subr.mxu0 0.0
    %2808 = vmatpush1.msra.mxu0 0.0
    %2809 = vmatprep.subr.mxu0 0.0
    %2810 = vmatpush1.msra.mxu0 0.0
    %2811 = vmatprep.subr.mxu0 0.0
    %2812 = vmatpush1.msra.mxu0 0.0
    %2813 = vmatprep.subr.mxu0 0.0
    %2814 = vmatpush1.msra.mxu0 0.0
    %2815 = vmatprep.mubr.f32.mxu0 0.0
    %2816 = vmatmul.mubr.f32.gmra.mrb[0].mxu0 %v2678
    %v2817 = vpop.f32.mrb[0].mxu0
    %v2818 = vadd.f32 0.0, %v2817
    %v2819 = vpop.f32.mrb[0].mxu0
    %v2820 = vadd.f32 0.0, %v2819
    %2821 = vdwg.mxu0
    %v2822 = vadd.f32 %v1821, %v2747
    %v2823 = vadd.f32 %v1823, %v2749
    %v2824 = vadd.f32 %v1898, %v2818
    %v2825 = vadd.f32 %v1900, %v2820
    %v2826 = vadd.f32 %v2822, %v125
    %v2827 = vadd.f32 %v2823, %v129
    %v2828 = vadd.f32 %v2824, %v133
    %v2829 = vadd.f32 %v2825, %v137
    %v2830 = vtanh.pop %v2826
    %v2831 = vtanh.pop %v2827
    %v2832 = vtanh.pop %v2828
    %v2833 = vtanh.pop %v2829
    %v2834 = vadd.f32 %v2830, 1.0
    %v2835 = vmul.f32 %v2834, 0.5
    %v2836 = vadd.f32 %v2831, 1.0
    %v2837 = vmul.f32 %v2836, 0.5
    %v2838 = vadd.f32 %v2832, 1.0
    %v2839 = vmul.f32 %v2838, 0.5
    %v2841 = vrot.slane %v2674, 6
    %v2843 = vmul.f32 %v2837, %v2841
    %v2844 = vmul.f32 %v2835, %v2833
    %v2845 = vadd.f32 %v2843, %v2844
    %v2846 = vtanh.pop %v2845
    %v2847 = vmul.f32 %v2839, %v2846
    %2848 = vmatprep.subr.mxu0 %v1903
    %2849 = vmatpush1.msra.mxu0 %v1902
    %2850 = vmatprep.subr.mxu0 %v1907
    %2851 = vmatpush1.msra.mxu0 %v1906
    %2852 = vmatprep.subr.mxu0 %v1911
    %2853 = vmatpush1.msra.mxu0 %v1910
    %2854 = vmatprep.subr.mxu0 %v1915
    %2855 = vmatpush1.msra.mxu0 %v1914
    %2856 = vmatprep.subr.mxu0 %v1919
    %2857 = vmatpush1.msra.mxu0 %v1918
    %2858 = vmatprep.subr.mxu0 %v1923
    %2859 = vmatpush1.msra.mxu0 %v1922
    %2860 = vmatprep.subr.mxu0 %v1927
    %2861 = vmatpush1.msra.mxu0 %v1926
    %2862 = vmatprep.subr.mxu0 %v1931
    %2863 = vmatpush1.msra.mxu0 %v1930
    %2864 = vmatprep.subr.mxu0 %v1935
    %2865 = vmatpush1.msra.mxu0 %v1934
    %2866 = vmatprep.subr.mxu0 %v1939
    %2867 = vmatpush1.msra.mxu0 %v1938
    %2868 = vmatprep.subr.mxu0 %v1943
    %2869 = vmatpush1.msra.mxu0 %v1942
    %2870 = vmatprep.subr.mxu0 %v1947
    %2871 = vmatpush1.msra.mxu0 %v1946
    %2872 = vmatprep.subr.mxu0 %v1951
    %2873 = vmatpush1.msra.mxu0 %v1950
    %2874 = vmatprep.subr.mxu0 %v1955
    %2875 = vmatpush1.msra.mxu0 %v1954
    %2876 = vmatprep.subr.mxu0 %v1959
    %2877 = vmatpush1.msra.mxu0 %v1958
    %2878 = vmatprep.subr.mxu0 %v1963
    %2879 = vmatpush1.msra.mxu0 %v1962
    %2880 = vmatprep.subr.mxu0 0.0
    %2881 = vmatpush1.msra.mxu0 0.0
    %2882 = vmatprep.subr.mxu0 0.0
    %2883 = vmatpush1.msra.mxu0 0.0
    %2884 = vmatprep.subr.mxu0 0.0
    %2885 = vmatpush1.msra.mxu0 0.0
    %2886 = vmatprep.subr.mxu0 0.0
    %2887 = vmatpush1.msra.mxu0 0.0
    %2888 = vmatprep.subr.mxu0 0.0
    %2889 = vmatpush1.msra.mxu0 0.0
    %2890 = vmatprep.subr.mxu0 0.0
    %2891 = vmatpush1.msra.mxu0 0.0
    %2892 = vmatprep.subr.mxu0 0.0
    %2893 = vmatpush1.msra.mxu0 0.0
    %2894 = vmatprep.subr.mxu0 0.0
    %2895 = vmatpush1.msra.mxu0 0.0
    %2896 = vmatprep.subr.mxu0 0.0
    %2897 = vmatpush1.msra.mxu0 0.0
    %2898 = vmatprep.subr.mxu0 0.0
    %2899 = vmatpush1.msra.mxu0 0.0
    %2900 = vmatprep.subr.mxu0 0.0
    %2901 = vmatpush1.msra.mxu0 0.0
    %2902 = vmatprep.subr.mxu0 0.0
    %2903 = vmatpush1.msra.mxu0 0.0
    %2904 = vmatprep.subr.mxu0 0.0
    %2905 = vmatpush1.msra.mxu0 0.0
    %2906 = vmatprep.subr.mxu0 0.0
    %2907 = vmatpush1.msra.mxu0 0.0
    %2908 = vmatprep.subr.mxu0 0.0
    %2909 = vmatpush1.msra.mxu0 0.0
    %2910 = vmatprep.subr.mxu0 0.0
    %2911 = vmatpush1.msra.mxu0 0.0
    %2912 = vmatprep.mubr.f32.mxu0 0.0
    %2913 = vmatmul.mubr.f32.gmra.mrb[0].mxu0 %v2847
    %v2914 = vpop.f32.mrb[0].mxu0
    %v2915 = vadd.f32 0.0, %v2914
    %v2916 = vpop.f32.mrb[0].mxu0
    %v2917 = vadd.f32 0.0, %v2916
    %2918 = vdwg.mxu0
    %2919 = vmatprep.subr.mxu0 %v1905
    %2920 = vmatpush1.msra.mxu0 %v1904
    %2921 = vmatprep.subr.mxu0 %v1909
    %2922 = vmatpush1.msra.mxu0 %v1908
    %2923 = vmatprep.subr.mxu0 %v1913
    %2924 = vmatpush1.msra.mxu0 %v1912
    %2925 = vmatprep.subr.mxu0 %v1917
    %2926 = vmatpush1.msra.mxu0 %v1916
    %2927 = vmatprep.subr.mxu0 %v1921
    %2928 = vmatpush1.msra.mxu0 %v1920
    %2929 = vmatprep.subr.mxu0 %v1925
    %2930 = vmatpush1.msra.mxu0 %v1924
    %2931 = vmatprep.subr.mxu0 %v1929
    %2932 = vmatpush1.msra.mxu0 %v1928
    %2933 = vmatprep.subr.mxu0 %v1933
    %2934 = vmatpush1.msra.mxu0 %v1932
    %2935 = vmatprep.subr.mxu0 %v1937
    %2936 = vmatpush1.msra.mxu0 %v1936
    %2937 = vmatprep.subr.mxu0 %v1941
    %2938 = vmatpush1.msra.mxu0 %v1940
    %2939 = vmatprep.subr.mxu0 %v1945
    %2940 = vmatpush1.msra.mxu0 %v1944
    %2941 = vmatprep.subr.mxu0 %v1949
    %2942 = vmatpush1.msra.mxu0 %v1948
    %2943 = vmatprep.subr.mxu0 %v1953
    %2944 = vmatpush1.msra.mxu0 %v1952
    %2945 = vmatprep.subr.mxu0 %v1957
    %2946 = vmatpush1.msra.mxu0 %v1956
    %2947 = vmatprep.subr.mxu0 %v1961
    %2948 = vmatpush1.msra.mxu0 %v1960
    %2949 = vmatprep.subr.mxu0 %v1965
    %2950 = vmatpush1.msra.mxu0 %v1964
    %2951 = vmatprep.subr.mxu0 0.0
    %2952 = vmatpush1.msra.mxu0 0.0
    %2953 = vmatprep.subr.mxu0 0.0
    %2954 = vmatpush1.msra.mxu0 0.0
    %2955 = vmatprep.subr.mxu0 0.0
    %2956 = vmatpush1.msra.mxu0 0.0
    %2957 = vmatprep.subr.mxu0 0.0
    %2958 = vmatpush1.msra.mxu0 0.0
    %2959 = vmatprep.subr.mxu0 0.0
    %2960 = vmatpush1.msra.mxu0 0.0
    %2961 = vmatprep.subr.mxu0 0.0
    %2962 = vmatpush1.msra.mxu0 0.0
    %2963 = vmatprep.subr.mxu0 0.0
    %2964 = vmatpush1.msra.mxu0 0.0
    %2965 = vmatprep.subr.mxu0 0.0
    %2966 = vmatpush1.msra.mxu0 0.0
    %2967 = vmatprep.subr.mxu0 0.0
    %2968 = vmatpush1.msra.mxu0 0.0
    %2969 = vmatprep.subr.mxu0 0.0
    %2970 = vmatpush1.msra.mxu0 0.0
    %2971 = vmatprep.subr.mxu0 0.0
    %2972 = vmatpush1.msra.mxu0 0.0
    %2973 = vmatprep.subr.mxu0 0.0
    %2974 = vmatpush1.msra.mxu0 0.0
    %2975 = vmatprep.subr.mxu0 0.0
    %2976 = vmatpush1.msra.mxu0 0.0
    %2977 = vmatprep.subr.mxu0 0.0
    %2978 = vmatpush1.msra.mxu0 0.0
    %2979 = vmatprep.subr.mxu0 0.0
    %2980 = vmatpush1.msra.mxu0 0.0
    %2981 = vmatprep.subr.mxu0 0.0
    %2982 = vmatpush1.msra.mxu0 0.0
    %2983 = vmatprep.mubr.f32.mxu0 0.0
    %2984 = vmatmul.mubr.f32.gmra.mrb[0].mxu0 %v2847
    %v2985 = vpop.f32.mrb[0].mxu0
    %v2986 = vadd.f32 0.0, %v2985
    %v2987 = vpop.f32.mrb[0].mxu0
    %v2988 = vadd.f32 0.0, %v2987
    %2989 = vdwg.mxu0
    %v2994 = vrot.slane %v2915, 6
    %v2995 = vrot.slane %v2917, 6
    %v2996 = vrot.slane %v2986, 6
    %v2997 = vrot.slane %v2988, 6
    %v3002 = vadd.f32 %v1821, %v2994
    %v3003 = vadd.f32 %v1823, %v2995
    %v3004 = vadd.f32 %v1898, %v2996
    %v3005 = vadd.f32 %v1900, %v2997
    %v3006 = vadd.f32 %v3002, %v125
    %v3007 = vadd.f32 %v3003, %v129
    %v3008 = vadd.f32 %v3004, %v133
    %v3009 = vadd.f32 %v3005, %v137
    %v3010 = vtanh.pop %v3006
    %v3011 = vtanh.pop %v3007
    %v3012 = vtanh.pop %v3008
    %v3013 = vtanh.pop %v3009
    %v3014 = vadd.f32 %v3010, 1.0
    %v3015 = vmul.f32 %v3014, 0.5
    %v3016 = vadd.f32 %v3011, 1.0
    %v3017 = vmul.f32 %v3016, 0.5
    %v3018 = vadd.f32 %v3012, 1.0
    %v3019 = vmul.f32 %v3018, 0.5
    %v3021 = vrot.slane %v2845, 6
    %v3023 = vmul.f32 %v3017, %v3021
    %v3024 = vmul.f32 %v3015, %v3013
    %v3025 = vadd.f32 %v3023, %v3024
    %v3026 = vtanh.pop %v3025
    %v3027 = vmul.f32 %v3019, %v3026
    %v3029 = vrot.slane %v3027, 2
    %3031 = vmatprep.subr.mxu0 %v1903
    %3032 = vmatpush1.msra.mxu0 %v1902
    %3033 = vmatprep.subr.mxu0 %v1907
    %3034 = vmatpush1.msra.mxu0 %v1906
    %3035 = vmatprep.subr.mxu0 %v1911
    %3036 = vmatpush1.msra.mxu0 %v1910
    %3037 = vmatprep.subr.mxu0 %v1915
    %3038 = vmatpush1.msra.mxu0 %v1914
    %3039 = vmatprep.subr.mxu0 %v1919
    %3040 = vmatpush1.msra.mxu0 %v1918
    %3041 = vmatprep.subr.mxu0 %v1923
    %3042 = vmatpush1.msra.mxu0 %v1922
    %3043 = vmatprep.subr.mxu0 %v1927
    %3044 = vmatpush1.msra.mxu0 %v1926
    %3045 = vmatprep.subr.mxu0 %v1931
    %3046 = vmatpush1.msra.mxu0 %v1930
    %3047 = vmatprep.subr.mxu0 %v1935
    %3048 = vmatpush1.msra.mxu0 %v1934
    %3049 = vmatprep.subr.mxu0 %v1939
    %3050 = vmatpush1.msra.mxu0 %v1938
    %3051 = vmatprep.subr.mxu0 %v1943
    %3052 = vmatpush1.msra.mxu0 %v1942
    %3053 = vmatprep.subr.mxu0 %v1947
    %3054 = vmatpush1.msra.mxu0 %v1946
    %3055 = vmatprep.subr.mxu0 %v1951
    %3056 = vmatpush1.msra.mxu0 %v1950
    %3057 = vmatprep.subr.mxu0 %v1955
    %3058 = vmatpush1.msra.mxu0 %v1954
    %3059 = vmatprep.subr.mxu0 %v1959
    %3060 = vmatpush1.msra.mxu0 %v1958
    %3061 = vmatprep.subr.mxu0 %v1963
    %3062 = vmatpush1.msra.mxu0 %v1962
    %3063 = vmatprep.subr.mxu0 0.0
    %3064 = vmatpush1.msra.mxu0 0.0
    %3065 = vmatprep.subr.mxu0 0.0
    %3066 = vmatpush1.msra.mxu0 0.0
    %3067 = vmatprep.subr.mxu0 0.0
    %3068 = vmatpush1.msra.mxu0 0.0
    %3069 = vmatprep.subr.mxu0 0.0
    %3070 = vmatpush1.msra.mxu0 0.0
    %3071 = vmatprep.subr.mxu0 0.0
    %3072 = vmatpush1.msra.mxu0 0.0
    %3073 = vmatprep.subr.mxu0 0.0
    %3074 = vmatpush1.msra.mxu0 0.0
    %3075 = vmatprep.subr.mxu0 0.0
    %3076 = vmatpush1.msra.mxu0 0.0
    %3077 = vmatprep.subr.mxu0 0.0
    %3078 = vmatpush1.msra.mxu0 0.0
    %3079 = vmatprep.subr.mxu0 0.0
    %3080 = vmatpush1.msra.mxu0 0.0
    %3081 = vmatprep.subr.mxu0 0.0
    %3082 = vmatpush1.msra.mxu0 0.0
    %3083 = vmatprep.subr.mxu0 0.0
    %3084 = vmatpush1.msra.mxu0 0.0
    %3085 = vmatprep.subr.mxu0 0.0
    %3086 = vmatpush1.msra.mxu0 0.0
    %3087 = vmatprep.subr.mxu0 0.0
    %3088 = vmatpush1.msra.mxu0 0.0
    %3089 = vmatprep.subr.mxu0 0.0
    %3090 = vmatpush1.msra.mxu0 0.0
    %3091 = vmatprep.subr.mxu0 0.0
    %3092 = vmatpush1.msra.mxu0 0.0
    %3093 = vmatprep.subr.mxu0 0.0
    %3094 = vmatpush1.msra.mxu0 0.0
    %3095 = vmatprep.mubr.f32.mxu0 0.0
    %3096 = vmatmul.mubr.f32.gmra.mrb[0].mxu0 %v3029
    %v3097 = vpop.f32.mrb[0].mxu0
    %v3098 = vadd.f32 0.0, %v3097
    %v3099 = vpop.f32.mrb[0].mxu0
    %v3100 = vadd.f32 0.0, %v3099
    %3101 = vdwg.mxu0
    %3102 = vmatprep.subr.mxu0 %v1905
    %3103 = vmatpush1.msra.mxu0 %v1904
    %3104 = vmatprep.subr.mxu0 %v1909
    %3105 = vmatpush1.msra.mxu0 %v1908
    %3106 = vmatprep.subr.mxu0 %v1913
    %3107 = vmatpush1.msra.mxu0 %v1912
    %3108 = vmatprep.subr.mxu0 %v1917
    %3109 = vmatpush1.msra.mxu0 %v1916
    %3110 = vmatprep.subr.mxu0 %v1921
    %3111 = vmatpush1.msra.mxu0 %v1920
    %3112 = vmatprep.subr.mxu0 %v1925
    %3113 = vmatpush1.msra.mxu0 %v1924
    %3114 = vmatprep.subr.mxu0 %v1929
    %3115 = vmatpush1.msra.mxu0 %v1928
    %3116 = vmatprep.subr.mxu0 %v1933
    %3117 = vmatpush1.msra.mxu0 %v1932
    %3118 = vmatprep.subr.mxu0 %v1937
    %3119 = vmatpush1.msra.mxu0 %v1936
    %3120 = vmatprep.subr.mxu0 %v1941
    %3121 = vmatpush1.msra.mxu0 %v1940
    %3122 = vmatprep.subr.mxu0 %v1945
    %3123 = vmatpush1.msra.mxu0 %v1944
    %3124 = vmatprep.subr.mxu0 %v1949
    %3125 = vmatpush1.msra.mxu0 %v1948
    %3126 = vmatprep.subr.mxu0 %v1953
    %3127 = vmatpush1.msra.mxu0 %v1952
    %3128 = vmatprep.subr.mxu0 %v1957
    %3129 = vmatpush1.msra.mxu0 %v1956
    %3130 = vmatprep.subr.mxu0 %v1961
    %3131 = vmatpush1.msra.mxu0 %v1960
    %3132 = vmatprep.subr.mxu0 %v1965
    %3133 = vmatpush1.msra.mxu0 %v1964
    %3134 = vmatprep.subr.mxu0 0.0
    %3135 = vmatpush1.msra.mxu0 0.0
    %3136 = vmatprep.subr.mxu0 0.0
    %3137 = vmatpush1.msra.mxu0 0.0
    %3138 = vmatprep.subr.mxu0 0.0
    %3139 = vmatpush1.msra.mxu0 0.0
    %3140 = vmatprep.subr.mxu0 0.0
    %3141 = vmatpush1.msra.mxu0 0.0
    %3142 = vmatprep.subr.mxu0 0.0
    %3143 = vmatpush1.msra.mxu0 0.0
    %3144 = vmatprep.subr.mxu0 0.0
    %3145 = vmatpush1.msra.mxu0 0.0
    %3146 = vmatprep.subr.mxu0 0.0
    %3147 = vmatpush1.msra.mxu0 0.0
    %3148 = vmatprep.subr.mxu0 0.0
    %3149 = vmatpush1.msra.mxu0 0.0
    %3150 = vmatprep.subr.mxu0 0.0
    %3151 = vmatpush1.msra.mxu0 0.0
    %3152 = vmatprep.subr.mxu0 0.0
    %3153 = vmatpush1.msra.mxu0 0.0
    %3154 = vmatprep.subr.mxu0 0.0
    %3155 = vmatpush1.msra.mxu0 0.0
    %3156 = vmatprep.subr.mxu0 0.0
    %3157 = vmatpush1.msra.mxu0 0.0
    %3158 = vmatprep.subr.mxu0 0.0
    %3159 = vmatpush1.msra.mxu0 0.0
    %3160 = vmatprep.subr.mxu0 0.0
    %3161 = vmatpush1.msra.mxu0 0.0
    %3162 = vmatprep.subr.mxu0 0.0
    %3163 = vmatpush1.msra.mxu0 0.0
    %3164 = vmatprep.subr.mxu0 0.0
    %3165 = vmatpush1.msra.mxu0 0.0
    %3166 = vmatprep.mubr.f32.mxu0 0.0
    %3167 = vmatmul.mubr.f32.gmra.mrb[0].mxu0 %v3029
    %v3168 = vpop.f32.mrb[0].mxu0
    %v3169 = vadd.f32 0.0, %v3168
    %v3170 = vpop.f32.mrb[0].mxu0
    %v3171 = vadd.f32 0.0, %v3170
    %3172 = vdwg.mxu0
    %v3177 = vrot.slane %v3098, 4
    %v3178 = vrot.slane %v3100, 4
    %v3179 = vrot.slane %v3169, 4
    %v3180 = vrot.slane %v3171, 4
    %v3185 = vadd.f32 %v1821, %v3177
    %v3186 = vadd.f32 %v1823, %v3178
    %v3187 = vadd.f32 %v1898, %v3179
    %v3188 = vadd.f32 %v1900, %v3180
    %v3189 = vadd.f32 %v3185, %v125
    %v3190 = vadd.f32 %v3186, %v129
    %v3191 = vadd.f32 %v3187, %v133
    %v3192 = vadd.f32 %v3188, %v137
    %v3193 = vtanh.pop %v3189
    %v3194 = vtanh.pop %v3190
    %v3195 = vtanh.pop %v3191
    %v3196 = vtanh.pop %v3192
    %v3197 = vadd.f32 %v3193, 1.0
    %v3198 = vmul.f32 %v3197, 0.5
    %v3199 = vadd.f32 %v3194, 1.0
    %v3200 = vmul.f32 %v3199, 0.5
    %v3201 = vadd.f32 %v3195, 1.0
    %v3202 = vmul.f32 %v3201, 0.5
    %v3204 = vrot.slane %v3025, 6
    %v3206 = vmul.f32 %v3200, %v3204
    %v3207 = vmul.f32 %v3198, %v3196
    %v3208 = vadd.f32 %v3206, %v3207
    %v3209 = vtanh.pop %v3208
    %v3210 = vmul.f32 %v3202, %v3209
    %v3212 = vrot.slane %v3210, 4
    %3214 = vmatprep.subr.mxu0 %v1903
    %3215 = vmatpush1.msra.mxu0 %v1902
    %3216 = vmatprep.subr.mxu0 %v1907
    %3217 = vmatpush1.msra.mxu0 %v1906
    %3218 = vmatprep.subr.mxu0 %v1911
    %3219 = vmatpush1.msra.mxu0 %v1910
    %3220 = vmatprep.subr.mxu0 %v1915
    %3221 = vmatpush1.msra.mxu0 %v1914
    %3222 = vmatprep.subr.mxu0 %v1919
    %3223 = vmatpush1.msra.mxu0 %v1918
    %3224 = vmatprep.subr.mxu0 %v1923
    %3225 = vmatpush1.msra.mxu0 %v1922
    %3226 = vmatprep.subr.mxu0 %v1927
    %3227 = vmatpush1.msra.mxu0 %v1926
    %3228 = vmatprep.subr.mxu0 %v1931
    %3229 = vmatpush1.msra.mxu0 %v1930
    %3230 = vmatprep.subr.mxu0 %v1935
    %3231 = vmatpush1.msra.mxu0 %v1934
    %3232 = vmatprep.subr.mxu0 %v1939
    %3233 = vmatpush1.msra.mxu0 %v1938
    %3234 = vmatprep.subr.mxu0 %v1943
    %3235 = vmatpush1.msra.mxu0 %v1942
    %3236 = vmatprep.subr.mxu0 %v1947
    %3237 = vmatpush1.msra.mxu0 %v1946
    %3238 = vmatprep.subr.mxu0 %v1951
    %3239 = vmatpush1.msra.mxu0 %v1950
    %3240 = vmatprep.subr.mxu0 %v1955
    %3241 = vmatpush1.msra.mxu0 %v1954
    %3242 = vmatprep.subr.mxu0 %v1959
    %3243 = vmatpush1.msra.mxu0 %v1958
    %3244 = vmatprep.subr.mxu0 %v1963
    %3245 = vmatpush1.msra.mxu0 %v1962
    %3246 = vmatprep.subr.mxu0 0.0
    %3247 = vmatpush1.msra.mxu0 0.0
    %3248 = vmatprep.subr.mxu0 0.0
    %3249 = vmatpush1.msra.mxu0 0.0
    %3250 = vmatprep.subr.mxu0 0.0
    %3251 = vmatpush1.msra.mxu0 0.0
    %3252 = vmatprep.subr.mxu0 0.0
    %3253 = vmatpush1.msra.mxu0 0.0
    %3254 = vmatprep.subr.mxu0 0.0
    %3255 = vmatpush1.msra.mxu0 0.0
    %3256 = vmatprep.subr.mxu0 0.0
    %3257 = vmatpush1.msra.mxu0 0.0
    %3258 = vmatprep.subr.mxu0 0.0
    %3259 = vmatpush1.msra.mxu0 0.0
    %3260 = vmatprep.subr.mxu0 0.0
    %3261 = vmatpush1.msra.mxu0 0.0
    %3262 = vmatprep.subr.mxu0 0.0
    %3263 = vmatpush1.msra.mxu0 0.0
    %3264 = vmatprep.subr.mxu0 0.0
    %3265 = vmatpush1.msra.mxu0 0.0
    %3266 = vmatprep.subr.mxu0 0.0
    %3267 = vmatpush1.msra.mxu0 0.0
    %3268 = vmatprep.subr.mxu0 0.0
    %3269 = vmatpush1.msra.mxu0 0.0
    %3270 = vmatprep.subr.mxu0 0.0
    %3271 = vmatpush1.msra.mxu0 0.0
    %3272 = vmatprep.subr.mxu0 0.0
    %3273 = vmatpush1.msra.mxu0 0.0
    %3274 = vmatprep.subr.mxu0 0.0
    %3275 = vmatpush1.msra.mxu0 0.0
    %3276 = vmatprep.subr.mxu0 0.0
    %3277 = vmatpush1.msra.mxu0 0.0
    %3278 = vmatprep.mubr.f32.mxu0 0.0
    %3279 = vmatmul.mubr.f32.gmra.mrb[0].mxu0 %v3212
    %v3280 = vpop.f32.mrb[0].mxu0
    %v3281 = vadd.f32 0.0, %v3280
    %v3282 = vpop.f32.mrb[0].mxu0
    %v3283 = vadd.f32 0.0, %v3282
    %3284 = vdwg.mxu0
    %3285 = vmatprep.subr.mxu0 %v1905
    %3286 = vmatpush1.msra.mxu0 %v1904
    %3287 = vmatprep.subr.mxu0 %v1909
    %3288 = vmatpush1.msra.mxu0 %v1908
    %3289 = vmatprep.subr.mxu0 %v1913
    %3290 = vmatpush1.msra.mxu0 %v1912
    %3291 = vmatprep.subr.mxu0 %v1917
    %3292 = vmatpush1.msra.mxu0 %v1916
    %3293 = vmatprep.subr.mxu0 %v1921
    %3294 = vmatpush1.msra.mxu0 %v1920
    %3295 = vmatprep.subr.mxu0 %v1925
    %3296 = vmatpush1.msra.mxu0 %v1924
    %3297 = vmatprep.subr.mxu0 %v1929
    %3298 = vmatpush1.msra.mxu0 %v1928
    %3299 = vmatprep.subr.mxu0 %v1933
    %3300 = vmatpush1.msra.mxu0 %v1932
    %3301 = vmatprep.subr.mxu0 %v1937
    %3302 = vmatpush1.msra.mxu0 %v1936
    %3303 = vmatprep.subr.mxu0 %v1941
    %3304 = vmatpush1.msra.mxu0 %v1940
    %3305 = vmatprep.subr.mxu0 %v1945
    %3306 = vmatpush1.msra.mxu0 %v1944
    %3307 = vmatprep.subr.mxu0 %v1949
    %3308 = vmatpush1.msra.mxu0 %v1948
    %3309 = vmatprep.subr.mxu0 %v1953
    %3310 = vmatpush1.msra.mxu0 %v1952
    %3311 = vmatprep.subr.mxu0 %v1957
    %3312 = vmatpush1.msra.mxu0 %v1956
    %3313 = vmatprep.subr.mxu0 %v1961
    %3314 = vmatpush1.msra.mxu0 %v1960
    %3315 = vmatprep.subr.mxu0 %v1965
    %3316 = vmatpush1.msra.mxu0 %v1964
    %3317 = vmatprep.subr.mxu0 0.0
    %3318 = vmatpush1.msra.mxu0 0.0
    %3319 = vmatprep.subr.mxu0 0.0
    %3320 = vmatpush1.msra.mxu0 0.0
    %3321 = vmatprep.subr.mxu0 0.0
    %3322 = vmatpush1.msra.mxu0 0.0
    %3323 = vmatprep.subr.mxu0 0.0
    %3324 = vmatpush1.msra.mxu0 0.0
    %3325 = vmatprep.subr.mxu0 0.0
    %3326 = vmatpush1.msra.mxu0 0.0
    %3327 = vmatprep.subr.mxu0 0.0
    %3328 = vmatpush1.msra.mxu0 0.0
    %3329 = vmatprep.subr.mxu0 0.0
    %3330 = vmatpush1.msra.mxu0 0.0
    %3331 = vmatprep.subr.mxu0 0.0
    %3332 = vmatpush1.msra.mxu0 0.0
    %3333 = vmatprep.subr.mxu0 0.0
    %3334 = vmatpush1.msra.mxu0 0.0
    %3335 = vmatprep.subr.mxu0 0.0
    %3336 = vmatpush1.msra.mxu0 0.0
    %3337 = vmatprep.subr.mxu0 0.0
    %3338 = vmatpush1.msra.mxu0 0.0
    %3339 = vmatprep.subr.mxu0 0.0
    %3340 = vmatpush1.msra.mxu0 0.0
    %3341 = vmatprep.subr.mxu0 0.0
    %3342 = vmatpush1.msra.mxu0 0.0
    %3343 = vmatprep.subr.mxu0 0.0
    %3344 = vmatpush1.msra.mxu0 0.0
    %3345 = vmatprep.subr.mxu0 0.0
    %3346 = vmatpush1.msra.mxu0 0.0
    %3347 = vmatprep.subr.mxu0 0.0
    %3348 = vmatpush1.msra.mxu0 0.0
    %3349 = vmatprep.mubr.f32.mxu0 0.0
    %3350 = vmatmul.mubr.f32.gmra.mrb[0].mxu0 %v3212
    %v3351 = vpop.f32.mrb[0].mxu0
    %v3352 = vadd.f32 0.0, %v3351
    %v3353 = vpop.f32.mrb[0].mxu0
    %v3354 = vadd.f32 0.0, %v3353
    %3355 = vdwg.mxu0
    %v3360 = vrot.slane %v3281, 2
    %v3361 = vrot.slane %v3283, 2
    %v3362 = vrot.slane %v3352, 2
    %v3363 = vrot.slane %v3354, 2
    %v3368 = vadd.f32 %v1821, %v3360
    %v3369 = vadd.f32 %v1823, %v3361
    %v3370 = vadd.f32 %v1898, %v3362
    %v3371 = vadd.f32 %v1900, %v3363
    %v3372 = vadd.f32 %v3368, %v125
    %v3373 = vadd.f32 %v3369, %v129
    %v3374 = vadd.f32 %v3370, %v133
    %v3375 = vadd.f32 %v3371, %v137
    %v3376 = vtanh.pop %v3372
    %v3377 = vtanh.pop %v3373
    %v3378 = vtanh.pop %v3374
    %v3379 = vtanh.pop %v3375
    %v3380 = vadd.f32 %v3376, 1.0
    %v3381 = vmul.f32 %v3380, 0.5
    %v3382 = vadd.f32 %v3377, 1.0
    %v3383 = vmul.f32 %v3382, 0.5
    %v3384 = vadd.f32 %v3378, 1.0
    %v3385 = vmul.f32 %v3384, 0.5
    %v3387 = vrot.slane %v3208, 6
    %v3389 = vmul.f32 %v3383, %v3387
    %v3390 = vmul.f32 %v3381, %v3379
    %v3391 = vadd.f32 %v3389, %v3390
    %v3392 = vtanh.pop %v3391
    %v3393 = vmul.f32 %v3385, %v3392
    %v3394 = vld [vmem:[%s10] sm:$0xf]
    %v3396 = vlaneseq
    %v3397 = vshrl.u32 %v3396, 7
    %v3398 = vsub.s32 0, %v3397
    %v3399 = vrot.slane %v3394, %v3398
    %v3400 = vlaneseq
    %v3401 = vshrl.u32 %v3400, 7
    %v3402 = vsub.s32 1, %v3401
    %v3403 = vrot.slane %v3394, %v3402
    %v3404 = vlaneseq
    %v3405 = vshrl.u32 %v3404, 7
    %v3406 = vsub.s32 2, %v3405
    %v3407 = vrot.slane %v3394, %v3406
    %v3408 = vlaneseq
    %v3409 = vshrl.u32 %v3408, 7
    %v3410 = vsub.s32 3, %v3409
    %v3411 = vrot.slane %v3394, %v3410
    %v3416 = vld [vmem:[#allocation8] sm:$0xff]
    %v3417 = vld [vmem:[#allocation8 + $0x8] sm:$0xff]
    %v3418 = vld [vmem:[#allocation8 + $0x10] sm:$0xff]
    %v3419 = vld [vmem:[#allocation8 + $0x18] sm:$0xff]
    %v3420 = vld [vmem:[#allocation8 + $0x20] sm:$0xff]
    %v3421 = vld [vmem:[#allocation8 + $0x28] sm:$0xff]
    %v3422 = vld [vmem:[#allocation8 + $0x30] sm:$0xff]
    %v3423 = vld [vmem:[#allocation8 + $0x38] sm:$0xff]
    %v3424 = vld [vmem:[#allocation8 + $0x40] sm:$0xff]
    %v3425 = vld [vmem:[#allocation8 + $0x48] sm:$0xff]
    %v3426 = vld [vmem:[#allocation8 + $0x50] sm:$0xff]
    %v3427 = vld [vmem:[#allocation8 + $0x58] sm:$0xff]
    %v3428 = vld [vmem:[#allocation8 + $0x60] sm:$0xff]
    %v3429 = vld [vmem:[#allocation8 + $0x68] sm:$0xff]
    %v3430 = vld [vmem:[#allocation8 + $0x70] sm:$0xff]
    %v3431 = vld [vmem:[#allocation8 + $0x78] sm:$0xff]
    %v3432 = vld [vmem:[#allocation8 + $0x80] sm:$0xff]
    %v3433 = vld [vmem:[#allocation8 + $0x88] sm:$0xff]
    %v3434 = vld [vmem:[#allocation8 + $0x90] sm:$0xff]
    %v3435 = vld [vmem:[#allocation8 + $0x98] sm:$0xff]
    %v3436 = vld [vmem:[#allocation8 + $0xa0] sm:$0xff]
    %v3437 = vld [vmem:[#allocation8 + $0xa8] sm:$0xff]
    %v3438 = vld [vmem:[#allocation8 + $0xb0] sm:$0xff]
    %v3439 = vld [vmem:[#allocation8 + $0xb8] sm:$0xff]
    %v3440 = vld [vmem:[#allocation8 + $0xc0] sm:$0xff]
    %v3441 = vld [vmem:[#allocation8 + $0xc8] sm:$0xff]
    %v3442 = vld [vmem:[#allocation8 + $0xd0] sm:$0xff]
    %v3443 = vld [vmem:[#allocation8 + $0xd8] sm:$0xff]
    %v3444 = vld [vmem:[#allocation8 + $0xe0] sm:$0xff]
    %v3445 = vld [vmem:[#allocation8 + $0xe8] sm:$0xff]
    %v3446 = vld [vmem:[#allocation8 + $0xf0] sm:$0xff]
    %v3447 = vld [vmem:[#allocation8 + $0xf8] sm:$0xff]
    %v3448 = vld [vmem:[#allocation8 + $0x100] sm:$0xff]
    %v3449 = vld [vmem:[#allocation8 + $0x108] sm:$0xff]
    %v3450 = vld [vmem:[#allocation8 + $0x110] sm:$0xff]
    %v3451 = vld [vmem:[#allocation8 + $0x118] sm:$0xff]
    %v3452 = vld [vmem:[#allocation8 + $0x120] sm:$0xff]
    %v3453 = vld [vmem:[#allocation8 + $0x128] sm:$0xff]
    %v3454 = vld [vmem:[#allocation8 + $0x130] sm:$0xff]
    %v3455 = vld [vmem:[#allocation8 + $0x138] sm:$0xff]
    %v3456 = vld [vmem:[#allocation8 + $0x140] sm:$0xff]
    %v3457 = vld [vmem:[#allocation8 + $0x148] sm:$0xff]
    %v3458 = vld [vmem:[#allocation8 + $0x150] sm:$0xff]
    %v3459 = vld [vmem:[#allocation8 + $0x158] sm:$0xff]
    %v3460 = vld [vmem:[#allocation8 + $0x160] sm:$0xff]
    %v3461 = vld [vmem:[#allocation8 + $0x168] sm:$0xff]
    %v3462 = vld [vmem:[#allocation8 + $0x170] sm:$0xff]
    %v3463 = vld [vmem:[#allocation8 + $0x178] sm:$0xff]
    %v3464 = vld [vmem:[#allocation8 + $0x180] sm:$0xff]
    %v3465 = vld [vmem:[#allocation8 + $0x188] sm:$0xff]
    %v3466 = vld [vmem:[#allocation8 + $0x190] sm:$0xff]
    %v3467 = vld [vmem:[#allocation8 + $0x198] sm:$0xff]
    %v3468 = vld [vmem:[#allocation8 + $0x1a0] sm:$0xff]
    %v3469 = vld [vmem:[#allocation8 + $0x1a8] sm:$0xff]
    %v3470 = vld [vmem:[#allocation8 + $0x1b0] sm:$0xff]
    %v3471 = vld [vmem:[#allocation8 + $0x1b8] sm:$0xff]
    %v3472 = vld [vmem:[#allocation8 + $0x1c0] sm:$0xff]
    %v3473 = vld [vmem:[#allocation8 + $0x1c8] sm:$0xff]
    %v3474 = vld [vmem:[#allocation8 + $0x1d0] sm:$0xff]
    %v3475 = vld [vmem:[#allocation8 + $0x1d8] sm:$0xff]
    %v3476 = vld [vmem:[#allocation8 + $0x1e0] sm:$0xff]
    %v3477 = vld [vmem:[#allocation8 + $0x1e8] sm:$0xff]
    %v3478 = vld [vmem:[#allocation8 + $0x1f0] sm:$0xff]
    %v3479 = vld [vmem:[#allocation8 + $0x1f8] sm:$0xff]
    %v3480 = vld [vmem:[#allocation8 + $0x200] sm:$0xff]
    %v3481 = vld [vmem:[#allocation8 + $0x208] sm:$0xff]
    %v3482 = vld [vmem:[#allocation8 + $0x210] sm:$0xff]
    %v3483 = vld [vmem:[#allocation8 + $0x218] sm:$0xff]
    %v3484 = vld [vmem:[#allocation8 + $0x220] sm:$0xff]
    %v3485 = vld [vmem:[#allocation8 + $0x228] sm:$0xff]
    %v3486 = vld [vmem:[#allocation8 + $0x230] sm:$0xff]
    %v3487 = vld [vmem:[#allocation8 + $0x238] sm:$0xff]
    %v3488 = vld [vmem:[#allocation8 + $0x240] sm:$0xff]
    %v3489 = vld [vmem:[#allocation8 + $0x248] sm:$0xff]
    %v3490 = vld [vmem:[#allocation8 + $0x250] sm:$0xff]
    %v3491 = vld [vmem:[#allocation8 + $0x258] sm:$0xff]
    %v3492 = vld [vmem:[#allocation8 + $0x260] sm:$0xff]
    %v3493 = vld [vmem:[#allocation8 + $0x268] sm:$0xff]
    %v3494 = vld [vmem:[#allocation8 + $0x270] sm:$0xff]
    %v3495 = vld [vmem:[#allocation8 + $0x278] sm:$0xff]
    %v3496 = vld [vmem:[#allocation8 + $0x280] sm:$0xff]
    %v3497 = vld [vmem:[#allocation8 + $0x288] sm:$0xff]
    %v3498 = vld [vmem:[#allocation8 + $0x290] sm:$0xff]
    %v3499 = vld [vmem:[#allocation8 + $0x298] sm:$0xff]
    %v3500 = vld [vmem:[#allocation8 + $0x2a0] sm:$0xff]
    %v3501 = vld [vmem:[#allocation8 + $0x2a8] sm:$0xff]
    %v3502 = vld [vmem:[#allocation8 + $0x2b0] sm:$0xff]
    %v3503 = vld [vmem:[#allocation8 + $0x2b8] sm:$0xff]
    %v3504 = vld [vmem:[#allocation8 + $0x2c0] sm:$0xff]
    %v3505 = vld [vmem:[#allocation8 + $0x2c8] sm:$0xff]
    %v3506 = vld [vmem:[#allocation8 + $0x2d0] sm:$0xff]
    %v3507 = vld [vmem:[#allocation8 + $0x2d8] sm:$0xff]
    %v3508 = vld [vmem:[#allocation8 + $0x2e0] sm:$0xff]
    %v3509 = vld [vmem:[#allocation8 + $0x2e8] sm:$0xff]
    %v3510 = vld [vmem:[#allocation8 + $0x2f0] sm:$0xff]
    %v3511 = vld [vmem:[#allocation8 + $0x2f8] sm:$0xff]
    %v3512 = vld [vmem:[#allocation8 + $0x300] sm:$0xff]
    %v3513 = vld [vmem:[#allocation8 + $0x308] sm:$0xff]
    %v3514 = vld [vmem:[#allocation8 + $0x310] sm:$0xff]
    %v3515 = vld [vmem:[#allocation8 + $0x318] sm:$0xff]
    %v3516 = vld [vmem:[#allocation8 + $0x320] sm:$0xff]
    %v3517 = vld [vmem:[#allocation8 + $0x328] sm:$0xff]
    %v3518 = vld [vmem:[#allocation8 + $0x330] sm:$0xff]
    %v3519 = vld [vmem:[#allocation8 + $0x338] sm:$0xff]
    %v3520 = vld [vmem:[#allocation8 + $0x340] sm:$0xff]
    %v3521 = vld [vmem:[#allocation8 + $0x348] sm:$0xff]
    %v3522 = vld [vmem:[#allocation8 + $0x350] sm:$0xff]
    %v3523 = vld [vmem:[#allocation8 + $0x358] sm:$0xff]
    %v3524 = vld [vmem:[#allocation8 + $0x360] sm:$0xff]
    %v3525 = vld [vmem:[#allocation8 + $0x368] sm:$0xff]
    %v3526 = vld [vmem:[#allocation8 + $0x370] sm:$0xff]
    %v3527 = vld [vmem:[#allocation8 + $0x378] sm:$0xff]
    %v3528 = vld [vmem:[#allocation8 + $0x380] sm:$0xff]
    %v3529 = vld [vmem:[#allocation8 + $0x388] sm:$0xff]
    %v3530 = vld [vmem:[#allocation8 + $0x390] sm:$0xff]
    %v3531 = vld [vmem:[#allocation8 + $0x398] sm:$0xff]
    %v3532 = vld [vmem:[#allocation8 + $0x3a0] sm:$0xff]
    %v3533 = vld [vmem:[#allocation8 + $0x3a8] sm:$0xff]
    %v3534 = vld [vmem:[#allocation8 + $0x3b0] sm:$0xff]
    %v3535 = vld [vmem:[#allocation8 + $0x3b8] sm:$0xff]
    %v3536 = vld [vmem:[#allocation8 + $0x3c0] sm:$0xff]
    %v3537 = vld [vmem:[#allocation8 + $0x3c8] sm:$0xff]
    %v3538 = vld [vmem:[#allocation8 + $0x3d0] sm:$0xff]
    %v3539 = vld [vmem:[#allocation8 + $0x3d8] sm:$0xff]
    %v3540 = vld [vmem:[#allocation8 + $0x3e0] sm:$0xff]
    %v3541 = vld [vmem:[#allocation8 + $0x3e8] sm:$0xff]
    %v3542 = vld [vmem:[#allocation8 + $0x3f0] sm:$0xff]
    %v3543 = vld [vmem:[#allocation8 + $0x3f8] sm:$0xff]
    %v3545 = vrot.slane %v3393, 6
    %3547 = vmatprep.subr.mxu0 %v3417
    %3548 = vmatpush1.msra.mxu0 %v3416
    %3549 = vmatprep.subr.mxu0 %v3425
    %3550 = vmatpush1.msra.mxu0 %v3424
    %3551 = vmatprep.subr.mxu0 %v3433
    %3552 = vmatpush1.msra.mxu0 %v3432
    %3553 = vmatprep.subr.mxu0 %v3441
    %3554 = vmatpush1.msra.mxu0 %v3440
    %3555 = vmatprep.subr.mxu0 %v3449
    %3556 = vmatpush1.msra.mxu0 %v3448
    %3557 = vmatprep.subr.mxu0 %v3457
    %3558 = vmatpush1.msra.mxu0 %v3456
    %3559 = vmatprep.subr.mxu0 %v3465
    %3560 = vmatpush1.msra.mxu0 %v3464
    %3561 = vmatprep.subr.mxu0 %v3473
    %3562 = vmatpush1.msra.mxu0 %v3472
    %3563 = vmatprep.subr.mxu0 %v3481
    %3564 = vmatpush1.msra.mxu0 %v3480
    %3565 = vmatprep.subr.mxu0 %v3489
    %3566 = vmatpush1.msra.mxu0 %v3488
    %3567 = vmatprep.subr.mxu0 %v3497
    %3568 = vmatpush1.msra.mxu0 %v3496
    %3569 = vmatprep.subr.mxu0 %v3505
    %3570 = vmatpush1.msra.mxu0 %v3504
    %3571 = vmatprep.subr.mxu0 %v3513
    %3572 = vmatpush1.msra.mxu0 %v3512
    %3573 = vmatprep.subr.mxu0 %v3521
    %3574 = vmatpush1.msra.mxu0 %v3520
    %3575 = vmatprep.subr.mxu0 %v3529
    %3576 = vmatpush1.msra.mxu0 %v3528
    %3577 = vmatprep.subr.mxu0 %v3537
    %3578 = vmatpush1.msra.mxu0 %v3536
    %3579 = vmatprep.subr.mxu0 0.0
    %3580 = vmatpush1.msra.mxu0 0.0
    %3581 = vmatprep.subr.mxu0 0.0
    %3582 = vmatpush1.msra.mxu0 0.0
    %3583 = vmatprep.subr.mxu0 0.0
    %3584 = vmatpush1.msra.mxu0 0.0
    %3585 = vmatprep.subr.mxu0 0.0
    %3586 = vmatpush1.msra.mxu0 0.0
    %3587 = vmatprep.subr.mxu0 0.0
    %3588 = vmatpush1.msra.mxu0 0.0
    %3589 = vmatprep.subr.mxu0 0.0
    %3590 = vmatpush1.msra.mxu0 0.0
    %3591 = vmatprep.subr.mxu0 0.0
    %3592 = vmatpush1.msra.mxu0 0.0
    %3593 = vmatprep.subr.mxu0 0.0
    %3594 = vmatpush1.msra.mxu0 0.0
    %3595 = vmatprep.subr.mxu0 0.0
    %3596 = vmatpush1.msra.mxu0 0.0
    %3597 = vmatprep.subr.mxu0 0.0
    %3598 = vmatpush1.msra.mxu0 0.0
    %3599 = vmatprep.subr.mxu0 0.0
    %3600 = vmatpush1.msra.mxu0 0.0
    %3601 = vmatprep.subr.mxu0 0.0
    %3602 = vmatpush1.msra.mxu0 0.0
    %3603 = vmatprep.subr.mxu0 0.0
    %3604 = vmatpush1.msra.mxu0 0.0
    %3605 = vmatprep.subr.mxu0 0.0
    %3606 = vmatpush1.msra.mxu0 0.0
    %3607 = vmatprep.subr.mxu0 0.0
    %3608 = vmatpush1.msra.mxu0 0.0
    %3609 = vmatprep.subr.mxu0 0.0
    %3610 = vmatpush1.msra.mxu0 0.0
    %3611 = vmatprep.mubr.f32.mxu0 0.0
    %3612 = vmatmul.mubr.f32.gmra.mrb[0].mxu0 %v3545
    %v3613 = vpop.f32.mrb[0].mxu0
    %v3614 = vadd.f32 0.0, %v3613
    %v3615 = vpop.f32.mrb[0].mxu0
    %v3616 = vadd.f32 0.0, %v3615
    %3617 = vdwg.mxu0
    %3618 = vmatprep.subr.mxu0 %v3419
    %3619 = vmatpush1.msra.mxu0 %v3418
    %3620 = vmatprep.subr.mxu0 %v3427
    %3621 = vmatpush1.msra.mxu0 %v3426
    %3622 = vmatprep.subr.mxu0 %v3435
    %3623 = vmatpush1.msra.mxu0 %v3434
    %3624 = vmatprep.subr.mxu0 %v3443
    %3625 = vmatpush1.msra.mxu0 %v3442
    %3626 = vmatprep.subr.mxu0 %v3451
    %3627 = vmatpush1.msra.mxu0 %v3450
    %3628 = vmatprep.subr.mxu0 %v3459
    %3629 = vmatpush1.msra.mxu0 %v3458
    %3630 = vmatprep.subr.mxu0 %v3467
    %3631 = vmatpush1.msra.mxu0 %v3466
    %3632 = vmatprep.subr.mxu0 %v3475
    %3633 = vmatpush1.msra.mxu0 %v3474
    %3634 = vmatprep.subr.mxu0 %v3483
    %3635 = vmatpush1.msra.mxu0 %v3482
    %3636 = vmatprep.subr.mxu0 %v3491
    %3637 = vmatpush1.msra.mxu0 %v3490
    %3638 = vmatprep.subr.mxu0 %v3499
    %3639 = vmatpush1.msra.mxu0 %v3498
    %3640 = vmatprep.subr.mxu0 %v3507
    %3641 = vmatpush1.msra.mxu0 %v3506
    %3642 = vmatprep.subr.mxu0 %v3515
    %3643 = vmatpush1.msra.mxu0 %v3514
    %3644 = vmatprep.subr.mxu0 %v3523
    %3645 = vmatpush1.msra.mxu0 %v3522
    %3646 = vmatprep.subr.mxu0 %v3531
    %3647 = vmatpush1.msra.mxu0 %v3530
    %3648 = vmatprep.subr.mxu0 %v3539
    %3649 = vmatpush1.msra.mxu0 %v3538
    %3650 = vmatprep.subr.mxu0 0.0
    %3651 = vmatpush1.msra.mxu0 0.0
    %3652 = vmatprep.subr.mxu0 0.0
    %3653 = vmatpush1.msra.mxu0 0.0
    %3654 = vmatprep.subr.mxu0 0.0
    %3655 = vmatpush1.msra.mxu0 0.0
    %3656 = vmatprep.subr.mxu0 0.0
    %3657 = vmatpush1.msra.mxu0 0.0
    %3658 = vmatprep.subr.mxu0 0.0
    %3659 = vmatpush1.msra.mxu0 0.0
    %3660 = vmatprep.subr.mxu0 0.0
    %3661 = vmatpush1.msra.mxu0 0.0
    %3662 = vmatprep.subr.mxu0 0.0
    %3663 = vmatpush1.msra.mxu0 0.0
    %3664 = vmatprep.subr.mxu0 0.0
    %3665 = vmatpush1.msra.mxu0 0.0
    %3666 = vmatprep.subr.mxu0 0.0
    %3667 = vmatpush1.msra.mxu0 0.0
    %3668 = vmatprep.subr.mxu0 0.0
    %3669 = vmatpush1.msra.mxu0 0.0
    %3670 = vmatprep.subr.mxu0 0.0
    %3671 = vmatpush1.msra.mxu0 0.0
    %3672 = vmatprep.subr.mxu0 0.0
    %3673 = vmatpush1.msra.mxu0 0.0
    %3674 = vmatprep.subr.mxu0 0.0
    %3675 = vmatpush1.msra.mxu0 0.0
    %3676 = vmatprep.subr.mxu0 0.0
    %3677 = vmatpush1.msra.mxu0 0.0
    %3678 = vmatprep.subr.mxu0 0.0
    %3679 = vmatpush1.msra.mxu0 0.0
    %3680 = vmatprep.subr.mxu0 0.0
    %3681 = vmatpush1.msra.mxu0 0.0
    %3682 = vmatprep.mubr.f32.mxu0 0.0
    %3683 = vmatmul.mubr.f32.gmra.mrb[0].mxu0 %v3545
    %v3684 = vpop.f32.mrb[0].mxu0
    %v3685 = vadd.f32 0.0, %v3684
    %v3686 = vpop.f32.mrb[0].mxu0
    %v3687 = vadd.f32 0.0, %v3686
    %3688 = vdwg.mxu0
    %3689 = vmatprep.subr.mxu0 %v3421
    %3690 = vmatpush1.msra.mxu0 %v3420
    %3691 = vmatprep.subr.mxu0 %v3429
    %3692 = vmatpush1.msra.mxu0 %v3428
    %3693 = vmatprep.subr.mxu0 %v3437
    %3694 = vmatpush1.msra.mxu0 %v3436
    %3695 = vmatprep.subr.mxu0 %v3445
    %3696 = vmatpush1.msra.mxu0 %v3444
    %3697 = vmatprep.subr.mxu0 %v3453
    %3698 = vmatpush1.msra.mxu0 %v3452
    %3699 = vmatprep.subr.mxu0 %v3461
    %3700 = vmatpush1.msra.mxu0 %v3460
    %3701 = vmatprep.subr.mxu0 %v3469
    %3702 = vmatpush1.msra.mxu0 %v3468
    %3703 = vmatprep.subr.mxu0 %v3477
    %3704 = vmatpush1.msra.mxu0 %v3476
    %3705 = vmatprep.subr.mxu0 %v3485
    %3706 = vmatpush1.msra.mxu0 %v3484
    %3707 = vmatprep.subr.mxu0 %v3493
    %3708 = vmatpush1.msra.mxu0 %v3492
    %3709 = vmatprep.subr.mxu0 %v3501
    %3710 = vmatpush1.msra.mxu0 %v3500
    %3711 = vmatprep.subr.mxu0 %v3509
    %3712 = vmatpush1.msra.mxu0 %v3508
    %3713 = vmatprep.subr.mxu0 %v3517
    %3714 = vmatpush1.msra.mxu0 %v3516
    %3715 = vmatprep.subr.mxu0 %v3525
    %3716 = vmatpush1.msra.mxu0 %v3524
    %3717 = vmatprep.subr.mxu0 %v3533
    %3718 = vmatpush1.msra.mxu0 %v3532
    %3719 = vmatprep.subr.mxu0 %v3541
    %3720 = vmatpush1.msra.mxu0 %v3540
    %3721 = vmatprep.subr.mxu0 0.0
    %3722 = vmatpush1.msra.mxu0 0.0
    %3723 = vmatprep.subr.mxu0 0.0
    %3724 = vmatpush1.msra.mxu0 0.0
    %3725 = vmatprep.subr.mxu0 0.0
    %3726 = vmatpush1.msra.mxu0 0.0
    %3727 = vmatprep.subr.mxu0 0.0
    %3728 = vmatpush1.msra.mxu0 0.0
    %3729 = vmatprep.subr.mxu0 0.0
    %3730 = vmatpush1.msra.mxu0 0.0
    %3731 = vmatprep.subr.mxu0 0.0
    %3732 = vmatpush1.msra.mxu0 0.0
    %3733 = vmatprep.subr.mxu0 0.0
    %3734 = vmatpush1.msra.mxu0 0.0
    %3735 = vmatprep.subr.mxu0 0.0
    %3736 = vmatpush1.msra.mxu0 0.0
    %3737 = vmatprep.subr.mxu0 0.0
    %3738 = vmatpush1.msra.mxu0 0.0
    %3739 = vmatprep.subr.mxu0 0.0
    %3740 = vmatpush1.msra.mxu0 0.0
    %3741 = vmatprep.subr.mxu0 0.0
    %3742 = vmatpush1.msra.mxu0 0.0
    %3743 = vmatprep.subr.mxu0 0.0
    %3744 = vmatpush1.msra.mxu0 0.0
    %3745 = vmatprep.subr.mxu0 0.0
    %3746 = vmatpush1.msra.mxu0 0.0
    %3747 = vmatprep.subr.mxu0 0.0
    %3748 = vmatpush1.msra.mxu0 0.0
    %3749 = vmatprep.subr.mxu0 0.0
    %3750 = vmatpush1.msra.mxu0 0.0
    %3751 = vmatprep.subr.mxu0 0.0
    %3752 = vmatpush1.msra.mxu0 0.0
    %3753 = vmatprep.mubr.f32.mxu0 0.0
    %3754 = vmatmul.mubr.f32.gmra.mrb[0].mxu0 %v3545
    %v3755 = vpop.f32.mrb[0].mxu0
    %v3756 = vadd.f32 0.0, %v3755
    %v3757 = vpop.f32.mrb[0].mxu0
    %v3758 = vadd.f32 0.0, %v3757
    %3759 = vdwg.mxu0
    %3760 = vmatprep.subr.mxu0 %v3423
    %3761 = vmatpush1.msra.mxu0 %v3422
    %3762 = vmatprep.subr.mxu0 %v3431
    %3763 = vmatpush1.msra.mxu0 %v3430
    %3764 = vmatprep.subr.mxu0 %v3439
    %3765 = vmatpush1.msra.mxu0 %v3438
    %3766 = vmatprep.subr.mxu0 %v3447
    %3767 = vmatpush1.msra.mxu0 %v3446
    %3768 = vmatprep.subr.mxu0 %v3455
    %3769 = vmatpush1.msra.mxu0 %v3454
    %3770 = vmatprep.subr.mxu0 %v3463
    %3771 = vmatpush1.msra.mxu0 %v3462
    %3772 = vmatprep.subr.mxu0 %v3471
    %3773 = vmatpush1.msra.mxu0 %v3470
    %3774 = vmatprep.subr.mxu0 %v3479
    %3775 = vmatpush1.msra.mxu0 %v3478
    %3776 = vmatprep.subr.mxu0 %v3487
    %3777 = vmatpush1.msra.mxu0 %v3486
    %3778 = vmatprep.subr.mxu0 %v3495
    %3779 = vmatpush1.msra.mxu0 %v3494
    %3780 = vmatprep.subr.mxu0 %v3503
    %3781 = vmatpush1.msra.mxu0 %v3502
    %3782 = vmatprep.subr.mxu0 %v3511
    %3783 = vmatpush1.msra.mxu0 %v3510
    %3784 = vmatprep.subr.mxu0 %v3519
    %3785 = vmatpush1.msra.mxu0 %v3518
    %3786 = vmatprep.subr.mxu0 %v3527
    %3787 = vmatpush1.msra.mxu0 %v3526
    %3788 = vmatprep.subr.mxu0 %v3535
    %3789 = vmatpush1.msra.mxu0 %v3534
    %3790 = vmatprep.subr.mxu0 %v3543
    %3791 = vmatpush1.msra.mxu0 %v3542
    %3792 = vmatprep.subr.mxu0 0.0
    %3793 = vmatpush1.msra.mxu0 0.0
    %3794 = vmatprep.subr.mxu0 0.0
    %3795 = vmatpush1.msra.mxu0 0.0
    %3796 = vmatprep.subr.mxu0 0.0
    %3797 = vmatpush1.msra.mxu0 0.0
    %3798 = vmatprep.subr.mxu0 0.0
    %3799 = vmatpush1.msra.mxu0 0.0
    %3800 = vmatprep.subr.mxu0 0.0
    %3801 = vmatpush1.msra.mxu0 0.0
    %3802 = vmatprep.subr.mxu0 0.0
    %3803 = vmatpush1.msra.mxu0 0.0
    %3804 = vmatprep.subr.mxu0 0.0
    %3805 = vmatpush1.msra.mxu0 0.0
    %3806 = vmatprep.subr.mxu0 0.0
    %3807 = vmatpush1.msra.mxu0 0.0
    %3808 = vmatprep.subr.mxu0 0.0
    %3809 = vmatpush1.msra.mxu0 0.0
    %3810 = vmatprep.subr.mxu0 0.0
    %3811 = vmatpush1.msra.mxu0 0.0
    %3812 = vmatprep.subr.mxu0 0.0
    %3813 = vmatpush1.msra.mxu0 0.0
    %3814 = vmatprep.subr.mxu0 0.0
    %3815 = vmatpush1.msra.mxu0 0.0
    %3816 = vmatprep.subr.mxu0 0.0
    %3817 = vmatpush1.msra.mxu0 0.0
    %3818 = vmatprep.subr.mxu0 0.0
    %3819 = vmatpush1.msra.mxu0 0.0
    %3820 = vmatprep.subr.mxu0 0.0
    %3821 = vmatpush1.msra.mxu0 0.0
    %3822 = vmatprep.subr.mxu0 0.0
    %3823 = vmatpush1.msra.mxu0 0.0
    %3824 = vmatprep.mubr.f32.mxu0 0.0
    %3825 = vmatmul.mubr.f32.gmra.mrb[0].mxu0 %v3545
    %v3826 = vpop.f32.mrb[0].mxu0
    %v3827 = vadd.f32 0.0, %v3826
    %v3828 = vpop.f32.mrb[0].mxu0
    %v3829 = vadd.f32 0.0, %v3828
    %3830 = vdwg.mxu0
    %v3832 = vrot.slane %v1674, 6
    %3834 = vmatprep.subr.mxu0 %v184
    %3835 = vmatpush1.msra.mxu0 %v183
    %3836 = vmatprep.subr.mxu0 %v188
    %3837 = vmatpush1.msra.mxu0 %v187
    %3838 = vmatprep.subr.mxu0 %v192
    %3839 = vmatpush1.msra.mxu0 %v191
    %3840 = vmatprep.subr.mxu0 %v196
    %3841 = vmatpush1.msra.mxu0 %v195
    %3842 = vmatprep.subr.mxu0 %v200
    %3843 = vmatpush1.msra.mxu0 %v199
    %3844 = vmatprep.subr.mxu0 %v204
    %3845 = vmatpush1.msra.mxu0 %v203
    %3846 = vmatprep.subr.mxu0 %v208
    %3847 = vmatpush1.msra.mxu0 %v207
    %3848 = vmatprep.subr.mxu0 %v212
    %3849 = vmatpush1.msra.mxu0 %v211
    %3850 = vmatprep.subr.mxu0 %v216
    %3851 = vmatpush1.msra.mxu0 %v215
    %3852 = vmatprep.subr.mxu0 %v220
    %3853 = vmatpush1.msra.mxu0 %v219
    %3854 = vmatprep.subr.mxu0 %v224
    %3855 = vmatpush1.msra.mxu0 %v223
    %3856 = vmatprep.subr.mxu0 %v228
    %3857 = vmatpush1.msra.mxu0 %v227
    %3858 = vmatprep.subr.mxu0 %v232
    %3859 = vmatpush1.msra.mxu0 %v231
    %3860 = vmatprep.subr.mxu0 %v236
    %3861 = vmatpush1.msra.mxu0 %v235
    %3862 = vmatprep.subr.mxu0 %v240
    %3863 = vmatpush1.msra.mxu0 %v239
    %3864 = vmatprep.subr.mxu0 %v244
    %3865 = vmatpush1.msra.mxu0 %v243
    %3866 = vmatprep.subr.mxu0 0.0
    %3867 = vmatpush1.msra.mxu0 0.0
    %3868 = vmatprep.subr.mxu0 0.0
    %3869 = vmatpush1.msra.mxu0 0.0
    %3870 = vmatprep.subr.mxu0 0.0
    %3871 = vmatpush1.msra.mxu0 0.0
    %3872 = vmatprep.subr.mxu0 0.0
    %3873 = vmatpush1.msra.mxu0 0.0
    %3874 = vmatprep.subr.mxu0 0.0
    %3875 = vmatpush1.msra.mxu0 0.0
    %3876 = vmatprep.subr.mxu0 0.0
    %3877 = vmatpush1.msra.mxu0 0.0
    %3878 = vmatprep.subr.mxu0 0.0
    %3879 = vmatpush1.msra.mxu0 0.0
    %3880 = vmatprep.subr.mxu0 0.0
    %3881 = vmatpush1.msra.mxu0 0.0
    %3882 = vmatprep.subr.mxu0 0.0
    %3883 = vmatpush1.msra.mxu0 0.0
    %3884 = vmatprep.subr.mxu0 0.0
    %3885 = vmatpush1.msra.mxu0 0.0
    %3886 = vmatprep.subr.mxu0 0.0
    %3887 = vmatpush1.msra.mxu0 0.0
    %3888 = vmatprep.subr.mxu0 0.0
    %3889 = vmatpush1.msra.mxu0 0.0
    %3890 = vmatprep.subr.mxu0 0.0
    %3891 = vmatpush1.msra.mxu0 0.0
    %3892 = vmatprep.subr.mxu0 0.0
    %3893 = vmatpush1.msra.mxu0 0.0
    %3894 = vmatprep.subr.mxu0 0.0
    %3895 = vmatpush1.msra.mxu0 0.0
    %3896 = vmatprep.subr.mxu0 0.0
    %3897 = vmatpush1.msra.mxu0 0.0
    %3898 = vmatprep.mubr.f32.mxu0 0.0
    %3899 = vmatmul.mubr.f32.gmra.mrb[0].mxu0 %v3832
    %v3900 = vpop.f32.mrb[0].mxu0
    %v3901 = vadd.f32 0.0, %v3900
    %v3902 = vpop.f32.mrb[0].mxu0
    %v3903 = vadd.f32 0.0, %v3902
    %3904 = vdwg.mxu0
    %3905 = vmatprep.subr.mxu0 %v186
    %3906 = vmatpush1.msra.mxu0 %v185
    %3907 = vmatprep.subr.mxu0 %v190
    %3908 = vmatpush1.msra.mxu0 %v189
    %3909 = vmatprep.subr.mxu0 %v194
    %3910 = vmatpush1.msra.mxu0 %v193
    %3911 = vmatprep.subr.mxu0 %v198
    %3912 = vmatpush1.msra.mxu0 %v197
    %3913 = vmatprep.subr.mxu0 %v202
    %3914 = vmatpush1.msra.mxu0 %v201
    %3915 = vmatprep.subr.mxu0 %v206
    %3916 = vmatpush1.msra.mxu0 %v205
    %3917 = vmatprep.subr.mxu0 %v210
    %3918 = vmatpush1.msra.mxu0 %v209
    %3919 = vmatprep.subr.mxu0 %v214
    %3920 = vmatpush1.msra.mxu0 %v213
    %3921 = vmatprep.subr.mxu0 %v218
    %3922 = vmatpush1.msra.mxu0 %v217
    %3923 = vmatprep.subr.mxu0 %v222
    %3924 = vmatpush1.msra.mxu0 %v221
    %3925 = vmatprep.subr.mxu0 %v226
    %3926 = vmatpush1.msra.mxu0 %v225
    %3927 = vmatprep.subr.mxu0 %v230
    %3928 = vmatpush1.msra.mxu0 %v229
    %3929 = vmatprep.subr.mxu0 %v234
    %3930 = vmatpush1.msra.mxu0 %v233
    %3931 = vmatprep.subr.mxu0 %v238
    %3932 = vmatpush1.msra.mxu0 %v237
    %3933 = vmatprep.subr.mxu0 %v242
    %3934 = vmatpush1.msra.mxu0 %v241
    %3935 = vmatprep.subr.mxu0 %v246
    %3936 = vmatpush1.msra.mxu0 %v245
    %3937 = vmatprep.subr.mxu0 0.0
    %3938 = vmatpush1.msra.mxu0 0.0
    %3939 = vmatprep.subr.mxu0 0.0
    %3940 = vmatpush1.msra.mxu0 0.0
    %3941 = vmatprep.subr.mxu0 0.0
    %3942 = vmatpush1.msra.mxu0 0.0
    %3943 = vmatprep.subr.mxu0 0.0
    %3944 = vmatpush1.msra.mxu0 0.0
    %3945 = vmatprep.subr.mxu0 0.0
    %3946 = vmatpush1.msra.mxu0 0.0
    %3947 = vmatprep.subr.mxu0 0.0
    %3948 = vmatpush1.msra.mxu0 0.0
    %3949 = vmatprep.subr.mxu0 0.0
    %3950 = vmatpush1.msra.mxu0 0.0
    %3951 = vmatprep.subr.mxu0 0.0
    %3952 = vmatpush1.msra.mxu0 0.0
    %3953 = vmatprep.subr.mxu0 0.0
    %3954 = vmatpush1.msra.mxu0 0.0
    %3955 = vmatprep.subr.mxu0 0.0
    %3956 = vmatpush1.msra.mxu0 0.0
    %3957 = vmatprep.subr.mxu0 0.0
    %3958 = vmatpush1.msra.mxu0 0.0
    %3959 = vmatprep.subr.mxu0 0.0
    %3960 = vmatpush1.msra.mxu0 0.0
    %3961 = vmatprep.subr.mxu0 0.0
    %3962 = vmatpush1.msra.mxu0 0.0
    %3963 = vmatprep.subr.mxu0 0.0
    %3964 = vmatpush1.msra.mxu0 0.0
    %3965 = vmatprep.subr.mxu0 0.0
    %3966 = vmatpush1.msra.mxu0 0.0
    %3967 = vmatprep.subr.mxu0 0.0
    %3968 = vmatpush1.msra.mxu0 0.0
    %3969 = vmatprep.mubr.f32.mxu0 0.0
    %3970 = vmatmul.mubr.f32.gmra.mrb[0].mxu0 %v3832
    %v3971 = vpop.f32.mrb[0].mxu0
    %v3972 = vadd.f32 0.0, %v3971
    %v3973 = vpop.f32.mrb[0].mxu0
    %v3974 = vadd.f32 0.0, %v3973
    %3975 = vdwg.mxu0
    %v3976 = vadd.f32 %v3756, %v3901
    %v3977 = vadd.f32 %v3758, %v3903
    %v3978 = vadd.f32 %v3827, %v3972
    %v3979 = vadd.f32 %v3829, %v3974
    %v3980 = vadd.f32 %v3976, %v3399
    %v3981 = vadd.f32 %v3977, %v3403
    %v3982 = vadd.f32 %v3978, %v3407
    %v3983 = vadd.f32 %v3979, %v3411
    %v3984 = vtanh.pop %v3980
    %v3985 = vtanh.pop %v3981
    %v3986 = vtanh.pop %v3982
    %v3987 = vtanh.pop %v3983
    %v3988 = vadd.f32 %v3984, 1.0
    %v3989 = vmul.f32 %v3988, 0.5
    %v3990 = vadd.f32 %v3985, 1.0
    %v3991 = vmul.f32 %v3990, 0.5
    %v3992 = vadd.f32 %v3986, 1.0
    %v3993 = vmul.f32 %v3992, 0.5
    %v3995 = vrot.slane %v1672, 6
    %v3997 = vmul.f32 %v3991, %v3995
    %v3998 = vmul.f32 %v3989, %v3987
    %v3999 = vadd.f32 %v3997, %v3998
    %v4000 = vtanh.pop %v3999
    %v4001 = vmul.f32 %v3993, %v4000
    %4002 = vmatprep.subr.mxu0 %v1685
    %4003 = vmatpush1.msra.mxu0 %v1684
    %4004 = vmatprep.subr.mxu0 %v1689
    %4005 = vmatpush1.msra.mxu0 %v1688
    %4006 = vmatprep.subr.mxu0 %v1693
    %4007 = vmatpush1.msra.mxu0 %v1692
    %4008 = vmatprep.subr.mxu0 %v1697
    %4009 = vmatpush1.msra.mxu0 %v1696
    %4010 = vmatprep.subr.mxu0 %v1701
    %4011 = vmatpush1.msra.mxu0 %v1700
    %4012 = vmatprep.subr.mxu0 %v1705
    %4013 = vmatpush1.msra.mxu0 %v1704
    %4014 = vmatprep.subr.mxu0 %v1709
    %4015 = vmatpush1.msra.mxu0 %v1708
    %4016 = vmatprep.subr.mxu0 %v1713
    %4017 = vmatpush1.msra.mxu0 %v1712
    %4018 = vmatprep.subr.mxu0 %v1717
    %4019 = vmatpush1.msra.mxu0 %v1716
    %4020 = vmatprep.subr.mxu0 %v1721
    %4021 = vmatpush1.msra.mxu0 %v1720
    %4022 = vmatprep.subr.mxu0 %v1725
    %4023 = vmatpush1.msra.mxu0 %v1724
    %4024 = vmatprep.subr.mxu0 %v1729
    %4025 = vmatpush1.msra.mxu0 %v1728
    %4026 = vmatprep.subr.mxu0 %v1733
    %4027 = vmatpush1.msra.mxu0 %v1732
    %4028 = vmatprep.subr.mxu0 %v1737
    %4029 = vmatpush1.msra.mxu0 %v1736
    %4030 = vmatprep.subr.mxu0 %v1741
    %4031 = vmatpush1.msra.mxu0 %v1740
    %4032 = vmatprep.subr.mxu0 %v1745
    %4033 = vmatpush1.msra.mxu0 %v1744
    %4034 = vmatprep.subr.mxu0 0.0
    %4035 = vmatpush1.msra.mxu0 0.0
    %4036 = vmatprep.subr.mxu0 0.0
    %4037 = vmatpush1.msra.mxu0 0.0
    %4038 = vmatprep.subr.mxu0 0.0
    %4039 = vmatpush1.msra.mxu0 0.0
    %4040 = vmatprep.subr.mxu0 0.0
    %4041 = vmatpush1.msra.mxu0 0.0
    %4042 = vmatprep.subr.mxu0 0.0
    %4043 = vmatpush1.msra.mxu0 0.0
    %4044 = vmatprep.subr.mxu0 0.0
    %4045 = vmatpush1.msra.mxu0 0.0
    %4046 = vmatprep.subr.mxu0 0.0
    %4047 = vmatpush1.msra.mxu0 0.0
    %4048 = vmatprep.subr.mxu0 0.0
    %4049 = vmatpush1.msra.mxu0 0.0
    %4050 = vmatprep.subr.mxu0 0.0
    %4051 = vmatpush1.msra.mxu0 0.0
    %4052 = vmatprep.subr.mxu0 0.0
    %4053 = vmatpush1.msra.mxu0 0.0
    %4054 = vmatprep.subr.mxu0 0.0
    %4055 = vmatpush1.msra.mxu0 0.0
    %4056 = vmatprep.subr.mxu0 0.0
    %4057 = vmatpush1.msra.mxu0 0.0
    %4058 = vmatprep.subr.mxu0 0.0
    %4059 = vmatpush1.msra.mxu0 0.0
    %4060 = vmatprep.subr.mxu0 0.0
    %4061 = vmatpush1.msra.mxu0 0.0
    %4062 = vmatprep.subr.mxu0 0.0
    %4063 = vmatpush1.msra.mxu0 0.0
    %4064 = vmatprep.subr.mxu0 0.0
    %4065 = vmatpush1.msra.mxu0 0.0
    %4066 = vmatprep.mubr.f32.mxu0 0.0
    %4067 = vmatmul.mubr.f32.gmra.mrb[0].mxu0 %v4001
    %v4068 = vpop.f32.mrb[0].mxu0
    %v4069 = vadd.f32 %v3614, %v4068
    %v4070 = vpop.f32.mrb[0].mxu0
    %v4071 = vadd.f32 %v3616, %v4070
    %4072 = vdwg.mxu0
    %4073 = vmatprep.subr.mxu0 %v1687
    %4074 = vmatpush1.msra.mxu0 %v1686
    %4075 = vmatprep.subr.mxu0 %v1691
    %4076 = vmatpush1.msra.mxu0 %v1690
    %4077 = vmatprep.subr.mxu0 %v1695
    %4078 = vmatpush1.msra.mxu0 %v1694
    %4079 = vmatprep.subr.mxu0 %v1699
    %4080 = vmatpush1.msra.mxu0 %v1698
    %4081 = vmatprep.subr.mxu0 %v1703
    %4082 = vmatpush1.msra.mxu0 %v1702
    %4083 = vmatprep.subr.mxu0 %v1707
    %4084 = vmatpush1.msra.mxu0 %v1706
    %4085 = vmatprep.subr.mxu0 %v1711
    %4086 = vmatpush1.msra.mxu0 %v1710
    %4087 = vmatprep.subr.mxu0 %v1715
    %4088 = vmatpush1.msra.mxu0 %v1714
    %4089 = vmatprep.subr.mxu0 %v1719
    %4090 = vmatpush1.msra.mxu0 %v1718
    %4091 = vmatprep.subr.mxu0 %v1723
    %4092 = vmatpush1.msra.mxu0 %v1722
    %4093 = vmatprep.subr.mxu0 %v1727
    %4094 = vmatpush1.msra.mxu0 %v1726
    %4095 = vmatprep.subr.mxu0 %v1731
    %4096 = vmatpush1.msra.mxu0 %v1730
    %4097 = vmatprep.subr.mxu0 %v1735
    %4098 = vmatpush1.msra.mxu0 %v1734
    %4099 = vmatprep.subr.mxu0 %v1739
    %4100 = vmatpush1.msra.mxu0 %v1738
    %4101 = vmatprep.subr.mxu0 %v1743
    %4102 = vmatpush1.msra.mxu0 %v1742
    %4103 = vmatprep.subr.mxu0 %v1747
    %4104 = vmatpush1.msra.mxu0 %v1746
    %4105 = vmatprep.subr.mxu0 0.0
    %4106 = vmatpush1.msra.mxu0 0.0
    %4107 = vmatprep.subr.mxu0 0.0
    %4108 = vmatpush1.msra.mxu0 0.0
    %4109 = vmatprep.subr.mxu0 0.0
    %4110 = vmatpush1.msra.mxu0 0.0
    %4111 = vmatprep.subr.mxu0 0.0
    %4112 = vmatpush1.msra.mxu0 0.0
    %4113 = vmatprep.subr.mxu0 0.0
    %4114 = vmatpush1.msra.mxu0 0.0
    %4115 = vmatprep.subr.mxu0 0.0
    %4116 = vmatpush1.msra.mxu0 0.0
    %4117 = vmatprep.subr.mxu0 0.0
    %4118 = vmatpush1.msra.mxu0 0.0
    %4119 = vmatprep.subr.mxu0 0.0
    %4120 = vmatpush1.msra.mxu0 0.0
    %4121 = vmatprep.subr.mxu0 0.0
    %4122 = vmatpush1.msra.mxu0 0.0
    %4123 = vmatprep.subr.mxu0 0.0
    %4124 = vmatpush1.msra.mxu0 0.0
    %4125 = vmatprep.subr.mxu0 0.0
    %4126 = vmatpush1.msra.mxu0 0.0
    %4127 = vmatprep.subr.mxu0 0.0
    %4128 = vmatpush1.msra.mxu0 0.0
    %4129 = vmatprep.subr.mxu0 0.0
    %4130 = vmatpush1.msra.mxu0 0.0
    %4131 = vmatprep.subr.mxu0 0.0
    %4132 = vmatpush1.msra.mxu0 0.0
    %4133 = vmatprep.subr.mxu0 0.0
    %4134 = vmatpush1.msra.mxu0 0.0
    %4135 = vmatprep.subr.mxu0 0.0
    %4136 = vmatpush1.msra.mxu0 0.0
    %4137 = vmatprep.mubr.f32.mxu0 0.0
    %4138 = vmatmul.mubr.f32.gmra.mrb[0].mxu0 %v4001
    %v4139 = vpop.f32.mrb[0].mxu0
    %v4140 = vadd.f32 %v3685, %v4139
    %v4141 = vpop.f32.mrb[0].mxu0
    %v4142 = vadd.f32 %v3687, %v4141
    %4143 = vdwg.mxu0
    %v4144 = vadd.f32 %v4069, %v125
    %v4145 = vadd.f32 %v4071, %v129
    %v4146 = vadd.f32 %v4140, %v133
    %v4147 = vadd.f32 %v4142, %v137
    %v4148 = vtanh.pop %v4144
    %v4149 = vtanh.pop %v4145
    %v4150 = vtanh.pop %v4146
    %v4151 = vtanh.pop %v4147
    %v4152 = vadd.f32 %v4148, 1.0
    %v4153 = vmul.f32 %v4152, 0.5
    %v4154 = vadd.f32 %v4149, 1.0
    %v4155 = vmul.f32 %v4154, 0.5
    %v4156 = vadd.f32 %v4150, 1.0
    %v4157 = vmul.f32 %v4156, 0.5
    %v4159 = vrot.slane %v3391, 6
    %v4161 = vmul.f32 %v4155, %v4159
    %v4162 = vmul.f32 %v4153, %v4151
    %v4163 = vadd.f32 %v4161, %v4162
    %v4164 = vtanh.pop %v4163
    %v4165 = vmul.f32 %v4157, %v4164
    %4166 = vmatprep.subr.mxu0 %v3417
    %4167 = vmatpush1.msra.mxu0 %v3416
    %4168 = vmatprep.subr.mxu0 %v3425
    %4169 = vmatpush1.msra.mxu0 %v3424
    %4170 = vmatprep.subr.mxu0 %v3433
    %4171 = vmatpush1.msra.mxu0 %v3432
    %4172 = vmatprep.subr.mxu0 %v3441
    %4173 = vmatpush1.msra.mxu0 %v3440
    %4174 = vmatprep.subr.mxu0 %v3449
    %4175 = vmatpush1.msra.mxu0 %v3448
    %4176 = vmatprep.subr.mxu0 %v3457
    %4177 = vmatpush1.msra.mxu0 %v3456
    %4178 = vmatprep.subr.mxu0 %v3465
    %4179 = vmatpush1.msra.mxu0 %v3464
    %4180 = vmatprep.subr.mxu0 %v3473
    %4181 = vmatpush1.msra.mxu0 %v3472
    %4182 = vmatprep.subr.mxu0 %v3481
    %4183 = vmatpush1.msra.mxu0 %v3480
    %4184 = vmatprep.subr.mxu0 %v3489
    %4185 = vmatpush1.msra.mxu0 %v3488
    %4186 = vmatprep.subr.mxu0 %v3497
    %4187 = vmatpush1.msra.mxu0 %v3496
    %4188 = vmatprep.subr.mxu0 %v3505
    %4189 = vmatpush1.msra.mxu0 %v3504
    %4190 = vmatprep.subr.mxu0 %v3513
    %4191 = vmatpush1.msra.mxu0 %v3512
    %4192 = vmatprep.subr.mxu0 %v3521
    %4193 = vmatpush1.msra.mxu0 %v3520
    %4194 = vmatprep.subr.mxu0 %v3529
    %4195 = vmatpush1.msra.mxu0 %v3528
    %4196 = vmatprep.subr.mxu0 %v3537
    %4197 = vmatpush1.msra.mxu0 %v3536
    %4198 = vmatprep.subr.mxu0 0.0
    %4199 = vmatpush1.msra.mxu0 0.0
    %4200 = vmatprep.subr.mxu0 0.0
    %4201 = vmatpush1.msra.mxu0 0.0
    %4202 = vmatprep.subr.mxu0 0.0
    %4203 = vmatpush1.msra.mxu0 0.0
    %4204 = vmatprep.subr.mxu0 0.0
    %4205 = vmatpush1.msra.mxu0 0.0
    %4206 = vmatprep.subr.mxu0 0.0
    %4207 = vmatpush1.msra.mxu0 0.0
    %4208 = vmatprep.subr.mxu0 0.0
    %4209 = vmatpush1.msra.mxu0 0.0
    %4210 = vmatprep.subr.mxu0 0.0
    %4211 = vmatpush1.msra.mxu0 0.0
    %4212 = vmatprep.subr.mxu0 0.0
    %4213 = vmatpush1.msra.mxu0 0.0
    %4214 = vmatprep.subr.mxu0 0.0
    %4215 = vmatpush1.msra.mxu0 0.0
    %4216 = vmatprep.subr.mxu0 0.0
    %4217 = vmatpush1.msra.mxu0 0.0
    %4218 = vmatprep.subr.mxu0 0.0
    %4219 = vmatpush1.msra.mxu0 0.0
    %4220 = vmatprep.subr.mxu0 0.0
    %4221 = vmatpush1.msra.mxu0 0.0
    %4222 = vmatprep.subr.mxu0 0.0
    %4223 = vmatpush1.msra.mxu0 0.0
    %4224 = vmatprep.subr.mxu0 0.0
    %4225 = vmatpush1.msra.mxu0 0.0
    %4226 = vmatprep.subr.mxu0 0.0
    %4227 = vmatpush1.msra.mxu0 0.0
    %4228 = vmatprep.subr.mxu0 0.0
    %4229 = vmatpush1.msra.mxu0 0.0
    %4230 = vmatprep.mubr.f32.mxu0 0.0
    %4231 = vmatmul.mubr.f32.gmra.mrb[0].mxu0 %v4165
    %v4232 = vpop.f32.mrb[0].mxu0
    %v4233 = vadd.f32 0.0, %v4232
    %v4234 = vpop.f32.mrb[0].mxu0
    %v4235 = vadd.f32 0.0, %v4234
    %4236 = vdwg.mxu0
    %4237 = vmatprep.subr.mxu0 %v3419
    %4238 = vmatpush1.msra.mxu0 %v3418
    %4239 = vmatprep.subr.mxu0 %v3427
    %4240 = vmatpush1.msra.mxu0 %v3426
    %4241 = vmatprep.subr.mxu0 %v3435
    %4242 = vmatpush1.msra.mxu0 %v3434
    %4243 = vmatprep.subr.mxu0 %v3443
    %4244 = vmatpush1.msra.mxu0 %v3442
    %4245 = vmatprep.subr.mxu0 %v3451
    %4246 = vmatpush1.msra.mxu0 %v3450
    %4247 = vmatprep.subr.mxu0 %v3459
    %4248 = vmatpush1.msra.mxu0 %v3458
    %4249 = vmatprep.subr.mxu0 %v3467
    %4250 = vmatpush1.msra.mxu0 %v3466
    %4251 = vmatprep.subr.mxu0 %v3475
    %4252 = vmatpush1.msra.mxu0 %v3474
    %4253 = vmatprep.subr.mxu0 %v3483
    %4254 = vmatpush1.msra.mxu0 %v3482
    %4255 = vmatprep.subr.mxu0 %v3491
    %4256 = vmatpush1.msra.mxu0 %v3490
    %4257 = vmatprep.subr.mxu0 %v3499
    %4258 = vmatpush1.msra.mxu0 %v3498
    %4259 = vmatprep.subr.mxu0 %v3507
    %4260 = vmatpush1.msra.mxu0 %v3506
    %4261 = vmatprep.subr.mxu0 %v3515
    %4262 = vmatpush1.msra.mxu0 %v3514
    %4263 = vmatprep.subr.mxu0 %v3523
    %4264 = vmatpush1.msra.mxu0 %v3522
    %4265 = vmatprep.subr.mxu0 %v3531
    %4266 = vmatpush1.msra.mxu0 %v3530
    %4267 = vmatprep.subr.mxu0 %v3539
    %4268 = vmatpush1.msra.mxu0 %v3538
    %4269 = vmatprep.subr.mxu0 0.0
    %4270 = vmatpush1.msra.mxu0 0.0
    %4271 = vmatprep.subr.mxu0 0.0
    %4272 = vmatpush1.msra.mxu0 0.0
    %4273 = vmatprep.subr.mxu0 0.0
    %4274 = vmatpush1.msra.mxu0 0.0
    %4275 = vmatprep.subr.mxu0 0.0
    %4276 = vmatpush1.msra.mxu0 0.0
    %4277 = vmatprep.subr.mxu0 0.0
    %4278 = vmatpush1.msra.mxu0 0.0
    %4279 = vmatprep.subr.mxu0 0.0
    %4280 = vmatpush1.msra.mxu0 0.0
    %4281 = vmatprep.subr.mxu0 0.0
    %4282 = vmatpush1.msra.mxu0 0.0
    %4283 = vmatprep.subr.mxu0 0.0
    %4284 = vmatpush1.msra.mxu0 0.0
    %4285 = vmatprep.subr.mxu0 0.0
    %4286 = vmatpush1.msra.mxu0 0.0
    %4287 = vmatprep.subr.mxu0 0.0
    %4288 = vmatpush1.msra.mxu0 0.0
    %4289 = vmatprep.subr.mxu0 0.0
    %4290 = vmatpush1.msra.mxu0 0.0
    %4291 = vmatprep.subr.mxu0 0.0
    %4292 = vmatpush1.msra.mxu0 0.0
    %4293 = vmatprep.subr.mxu0 0.0
    %4294 = vmatpush1.msra.mxu0 0.0
    %4295 = vmatprep.subr.mxu0 0.0
    %4296 = vmatpush1.msra.mxu0 0.0
    %4297 = vmatprep.subr.mxu0 0.0
    %4298 = vmatpush1.msra.mxu0 0.0
    %4299 = vmatprep.subr.mxu0 0.0
    %4300 = vmatpush1.msra.mxu0 0.0
    %4301 = vmatprep.mubr.f32.mxu0 0.0
    %4302 = vmatmul.mubr.f32.gmra.mrb[0].mxu0 %v4165
    %v4303 = vpop.f32.mrb[0].mxu0
    %v4304 = vadd.f32 0.0, %v4303
    %v4305 = vpop.f32.mrb[0].mxu0
    %v4306 = vadd.f32 0.0, %v4305
    %4307 = vdwg.mxu0
    %4308 = vmatprep.subr.mxu0 %v3421
    %4309 = vmatpush1.msra.mxu0 %v3420
    %4310 = vmatprep.subr.mxu0 %v3429
    %4311 = vmatpush1.msra.mxu0 %v3428
    %4312 = vmatprep.subr.mxu0 %v3437
    %4313 = vmatpush1.msra.mxu0 %v3436
    %4314 = vmatprep.subr.mxu0 %v3445
    %4315 = vmatpush1.msra.mxu0 %v3444
    %4316 = vmatprep.subr.mxu0 %v3453
    %4317 = vmatpush1.msra.mxu0 %v3452
    %4318 = vmatprep.subr.mxu0 %v3461
    %4319 = vmatpush1.msra.mxu0 %v3460
    %4320 = vmatprep.subr.mxu0 %v3469
    %4321 = vmatpush1.msra.mxu0 %v3468
    %4322 = vmatprep.subr.mxu0 %v3477
    %4323 = vmatpush1.msra.mxu0 %v3476
    %4324 = vmatprep.subr.mxu0 %v3485
    %4325 = vmatpush1.msra.mxu0 %v3484
    %4326 = vmatprep.subr.mxu0 %v3493
    %4327 = vmatpush1.msra.mxu0 %v3492
    %4328 = vmatprep.subr.mxu0 %v3501
    %4329 = vmatpush1.msra.mxu0 %v3500
    %4330 = vmatprep.subr.mxu0 %v3509
    %4331 = vmatpush1.msra.mxu0 %v3508
    %4332 = vmatprep.subr.mxu0 %v3517
    %4333 = vmatpush1.msra.mxu0 %v3516
    %4334 = vmatprep.subr.mxu0 %v3525
    %4335 = vmatpush1.msra.mxu0 %v3524
    %4336 = vmatprep.subr.mxu0 %v3533
    %4337 = vmatpush1.msra.mxu0 %v3532
    %4338 = vmatprep.subr.mxu0 %v3541
    %4339 = vmatpush1.msra.mxu0 %v3540
    %4340 = vmatprep.subr.mxu0 0.0
    %4341 = vmatpush1.msra.mxu0 0.0
    %4342 = vmatprep.subr.mxu0 0.0
    %4343 = vmatpush1.msra.mxu0 0.0
    %4344 = vmatprep.subr.mxu0 0.0
    %4345 = vmatpush1.msra.mxu0 0.0
    %4346 = vmatprep.subr.mxu0 0.0
    %4347 = vmatpush1.msra.mxu0 0.0
    %4348 = vmatprep.subr.mxu0 0.0
    %4349 = vmatpush1.msra.mxu0 0.0
    %4350 = vmatprep.subr.mxu0 0.0
    %4351 = vmatpush1.msra.mxu0 0.0
    %4352 = vmatprep.subr.mxu0 0.0
    %4353 = vmatpush1.msra.mxu0 0.0
    %4354 = vmatprep.subr.mxu0 0.0
    %4355 = vmatpush1.msra.mxu0 0.0
    %4356 = vmatprep.subr.mxu0 0.0
    %4357 = vmatpush1.msra.mxu0 0.0
    %4358 = vmatprep.subr.mxu0 0.0
    %4359 = vmatpush1.msra.mxu0 0.0
    %4360 = vmatprep.subr.mxu0 0.0
    %4361 = vmatpush1.msra.mxu0 0.0
    %4362 = vmatprep.subr.mxu0 0.0
    %4363 = vmatpush1.msra.mxu0 0.0
    %4364 = vmatprep.subr.mxu0 0.0
    %4365 = vmatpush1.msra.mxu0 0.0
    %4366 = vmatprep.subr.mxu0 0.0
    %4367 = vmatpush1.msra.mxu0 0.0
    %4368 = vmatprep.subr.mxu0 0.0
    %4369 = vmatpush1.msra.mxu0 0.0
    %4370 = vmatprep.subr.mxu0 0.0
    %4371 = vmatpush1.msra.mxu0 0.0
    %4372 = vmatprep.mubr.f32.mxu0 0.0
    %4373 = vmatmul.mubr.f32.gmra.mrb[0].mxu0 %v4165
    %v4374 = vpop.f32.mrb[0].mxu0
    %v4375 = vadd.f32 0.0, %v4374
    %v4376 = vpop.f32.mrb[0].mxu0
    %v4377 = vadd.f32 0.0, %v4376
    %4378 = vdwg.mxu0
    %4379 = vmatprep.subr.mxu0 %v3423
    %4380 = vmatpush1.msra.mxu0 %v3422
    %4381 = vmatprep.subr.mxu0 %v3431
    %4382 = vmatpush1.msra.mxu0 %v3430
    %4383 = vmatprep.subr.mxu0 %v3439
    %4384 = vmatpush1.msra.mxu0 %v3438
    %4385 = vmatprep.subr.mxu0 %v3447
    %4386 = vmatpush1.msra.mxu0 %v3446
    %4387 = vmatprep.subr.mxu0 %v3455
    %4388 = vmatpush1.msra.mxu0 %v3454
    %4389 = vmatprep.subr.mxu0 %v3463
    %4390 = vmatpush1.msra.mxu0 %v3462
    %4391 = vmatprep.subr.mxu0 %v3471
    %4392 = vmatpush1.msra.mxu0 %v3470
    %4393 = vmatprep.subr.mxu0 %v3479
    %4394 = vmatpush1.msra.mxu0 %v3478
    %4395 = vmatprep.subr.mxu0 %v3487
    %4396 = vmatpush1.msra.mxu0 %v3486
    %4397 = vmatprep.subr.mxu0 %v3495
    %4398 = vmatpush1.msra.mxu0 %v3494
    %4399 = vmatprep.subr.mxu0 %v3503
    %4400 = vmatpush1.msra.mxu0 %v3502
    %4401 = vmatprep.subr.mxu0 %v3511
    %4402 = vmatpush1.msra.mxu0 %v3510
    %4403 = vmatprep.subr.mxu0 %v3519
    %4404 = vmatpush1.msra.mxu0 %v3518
    %4405 = vmatprep.subr.mxu0 %v3527
    %4406 = vmatpush1.msra.mxu0 %v3526
    %4407 = vmatprep.subr.mxu0 %v3535
    %4408 = vmatpush1.msra.mxu0 %v3534
    %4409 = vmatprep.subr.mxu0 %v3543
    %4410 = vmatpush1.msra.mxu0 %v3542
    %4411 = vmatprep.subr.mxu0 0.0
    %4412 = vmatpush1.msra.mxu0 0.0
    %4413 = vmatprep.subr.mxu0 0.0
    %4414 = vmatpush1.msra.mxu0 0.0
    %4415 = vmatprep.subr.mxu0 0.0
    %4416 = vmatpush1.msra.mxu0 0.0
    %4417 = vmatprep.subr.mxu0 0.0
    %4418 = vmatpush1.msra.mxu0 0.0
    %4419 = vmatprep.subr.mxu0 0.0
    %4420 = vmatpush1.msra.mxu0 0.0
    %4421 = vmatprep.subr.mxu0 0.0
    %4422 = vmatpush1.msra.mxu0 0.0
    %4423 = vmatprep.subr.mxu0 0.0
    %4424 = vmatpush1.msra.mxu0 0.0
    %4425 = vmatprep.subr.mxu0 0.0
    %4426 = vmatpush1.msra.mxu0 0.0
    %4427 = vmatprep.subr.mxu0 0.0
    %4428 = vmatpush1.msra.mxu0 0.0
    %4429 = vmatprep.subr.mxu0 0.0
    %4430 = vmatpush1.msra.mxu0 0.0
    %4431 = vmatprep.subr.mxu0 0.0
    %4432 = vmatpush1.msra.mxu0 0.0
    %4433 = vmatprep.subr.mxu0 0.0
    %4434 = vmatpush1.msra.mxu0 0.0
    %4435 = vmatprep.subr.mxu0 0.0
    %4436 = vmatpush1.msra.mxu0 0.0
    %4437 = vmatprep.subr.mxu0 0.0
    %4438 = vmatpush1.msra.mxu0 0.0
    %4439 = vmatprep.subr.mxu0 0.0
    %4440 = vmatpush1.msra.mxu0 0.0
    %4441 = vmatprep.subr.mxu0 0.0
    %4442 = vmatpush1.msra.mxu0 0.0
    %4443 = vmatprep.mubr.f32.mxu0 0.0
    %4444 = vmatmul.mubr.f32.gmra.mrb[0].mxu0 %v4165
    %v4445 = vpop.f32.mrb[0].mxu0
    %v4446 = vadd.f32 0.0, %v4445
    %v4447 = vpop.f32.mrb[0].mxu0
    %v4448 = vadd.f32 0.0, %v4447
    %4449 = vdwg.mxu0
    %4450 = vmatprep.subr.mxu0 %v184
    %4451 = vmatpush1.msra.mxu0 %v183
    %4452 = vmatprep.subr.mxu0 %v188
    %4453 = vmatpush1.msra.mxu0 %v187
    %4454 = vmatprep.subr.mxu0 %v192
    %4455 = vmatpush1.msra.mxu0 %v191
    %4456 = vmatprep.subr.mxu0 %v196
    %4457 = vmatpush1.msra.mxu0 %v195
    %4458 = vmatprep.subr.mxu0 %v200
    %4459 = vmatpush1.msra.mxu0 %v199
    %4460 = vmatprep.subr.mxu0 %v204
    %4461 = vmatpush1.msra.mxu0 %v203
    %4462 = vmatprep.subr.mxu0 %v208
    %4463 = vmatpush1.msra.mxu0 %v207
    %4464 = vmatprep.subr.mxu0 %v212
    %4465 = vmatpush1.msra.mxu0 %v211
    %4466 = vmatprep.subr.mxu0 %v216
    %4467 = vmatpush1.msra.mxu0 %v215
    %4468 = vmatprep.subr.mxu0 %v220
    %4469 = vmatpush1.msra.mxu0 %v219
    %4470 = vmatprep.subr.mxu0 %v224
    %4471 = vmatpush1.msra.mxu0 %v223
    %4472 = vmatprep.subr.mxu0 %v228
    %4473 = vmatpush1.msra.mxu0 %v227
    %4474 = vmatprep.subr.mxu0 %v232
    %4475 = vmatpush1.msra.mxu0 %v231
    %4476 = vmatprep.subr.mxu0 %v236
    %4477 = vmatpush1.msra.mxu0 %v235
    %4478 = vmatprep.subr.mxu0 %v240
    %4479 = vmatpush1.msra.mxu0 %v239
    %4480 = vmatprep.subr.mxu0 %v244
    %4481 = vmatpush1.msra.mxu0 %v243
    %4482 = vmatprep.subr.mxu0 0.0
    %4483 = vmatpush1.msra.mxu0 0.0
    %4484 = vmatprep.subr.mxu0 0.0
    %4485 = vmatpush1.msra.mxu0 0.0
    %4486 = vmatprep.subr.mxu0 0.0
    %4487 = vmatpush1.msra.mxu0 0.0
    %4488 = vmatprep.subr.mxu0 0.0
    %4489 = vmatpush1.msra.mxu0 0.0
    %4490 = vmatprep.subr.mxu0 0.0
    %4491 = vmatpush1.msra.mxu0 0.0
    %4492 = vmatprep.subr.mxu0 0.0
    %4493 = vmatpush1.msra.mxu0 0.0
    %4494 = vmatprep.subr.mxu0 0.0
    %4495 = vmatpush1.msra.mxu0 0.0
    %4496 = vmatprep.subr.mxu0 0.0
    %4497 = vmatpush1.msra.mxu0 0.0
    %4498 = vmatprep.subr.mxu0 0.0
    %4499 = vmatpush1.msra.mxu0 0.0
    %4500 = vmatprep.subr.mxu0 0.0
    %4501 = vmatpush1.msra.mxu0 0.0
    %4502 = vmatprep.subr.mxu0 0.0
    %4503 = vmatpush1.msra.mxu0 0.0
    %4504 = vmatprep.subr.mxu0 0.0
    %4505 = vmatpush1.msra.mxu0 0.0
    %4506 = vmatprep.subr.mxu0 0.0
    %4507 = vmatpush1.msra.mxu0 0.0
    %4508 = vmatprep.subr.mxu0 0.0
    %4509 = vmatpush1.msra.mxu0 0.0
    %4510 = vmatprep.subr.mxu0 0.0
    %4511 = vmatpush1.msra.mxu0 0.0
    %4512 = vmatprep.subr.mxu0 0.0
    %4513 = vmatpush1.msra.mxu0 0.0
    %4514 = vmatprep.mubr.f32.mxu0 0.0
    %4515 = vmatmul.mubr.f32.gmra.mrb[0].mxu0 %v4001
    %v4516 = vpop.f32.mrb[0].mxu0
    %v4517 = vadd.f32 0.0, %v4516
    %v4518 = vpop.f32.mrb[0].mxu0
    %v4519 = vadd.f32 0.0, %v4518
    %4520 = vdwg.mxu0
    %4521 = vmatprep.subr.mxu0 %v186
    %4522 = vmatpush1.msra.mxu0 %v185
    %4523 = vmatprep.subr.mxu0 %v190
    %4524 = vmatpush1.msra.mxu0 %v189
    %4525 = vmatprep.subr.mxu0 %v194
    %4526 = vmatpush1.msra.mxu0 %v193
    %4527 = vmatprep.subr.mxu0 %v198
    %4528 = vmatpush1.msra.mxu0 %v197
    %4529 = vmatprep.subr.mxu0 %v202
    %4530 = vmatpush1.msra.mxu0 %v201
    %4531 = vmatprep.subr.mxu0 %v206
    %4532 = vmatpush1.msra.mxu0 %v205
    %4533 = vmatprep.subr.mxu0 %v210
    %4534 = vmatpush1.msra.mxu0 %v209
    %4535 = vmatprep.subr.mxu0 %v214
    %4536 = vmatpush1.msra.mxu0 %v213
    %4537 = vmatprep.subr.mxu0 %v218
    %4538 = vmatpush1.msra.mxu0 %v217
    %4539 = vmatprep.subr.mxu0 %v222
    %4540 = vmatpush1.msra.mxu0 %v221
    %4541 = vmatprep.subr.mxu0 %v226
    %4542 = vmatpush1.msra.mxu0 %v225
    %4543 = vmatprep.subr.mxu0 %v230
    %4544 = vmatpush1.msra.mxu0 %v229
    %4545 = vmatprep.subr.mxu0 %v234
    %4546 = vmatpush1.msra.mxu0 %v233
    %4547 = vmatprep.subr.mxu0 %v238
    %4548 = vmatpush1.msra.mxu0 %v237
    %4549 = vmatprep.subr.mxu0 %v242
    %4550 = vmatpush1.msra.mxu0 %v241
    %4551 = vmatprep.subr.mxu0 %v246
    %4552 = vmatpush1.msra.mxu0 %v245
    %4553 = vmatprep.subr.mxu0 0.0
    %4554 = vmatpush1.msra.mxu0 0.0
    %4555 = vmatprep.subr.mxu0 0.0
    %4556 = vmatpush1.msra.mxu0 0.0
    %4557 = vmatprep.subr.mxu0 0.0
    %4558 = vmatpush1.msra.mxu0 0.0
    %4559 = vmatprep.subr.mxu0 0.0
    %4560 = vmatpush1.msra.mxu0 0.0
    %4561 = vmatprep.subr.mxu0 0.0
    %4562 = vmatpush1.msra.mxu0 0.0
    %4563 = vmatprep.subr.mxu0 0.0
    %4564 = vmatpush1.msra.mxu0 0.0
    %4565 = vmatprep.subr.mxu0 0.0
    %4566 = vmatpush1.msra.mxu0 0.0
    %4567 = vmatprep.subr.mxu0 0.0
    %4568 = vmatpush1.msra.mxu0 0.0
    %4569 = vmatprep.subr.mxu0 0.0
    %4570 = vmatpush1.msra.mxu0 0.0
    %4571 = vmatprep.subr.mxu0 0.0
    %4572 = vmatpush1.msra.mxu0 0.0
    %4573 = vmatprep.subr.mxu0 0.0
    %4574 = vmatpush1.msra.mxu0 0.0
    %4575 = vmatprep.subr.mxu0 0.0
    %4576 = vmatpush1.msra.mxu0 0.0
    %4577 = vmatprep.subr.mxu0 0.0
    %4578 = vmatpush1.msra.mxu0 0.0
    %4579 = vmatprep.subr.mxu0 0.0
    %4580 = vmatpush1.msra.mxu0 0.0
    %4581 = vmatprep.subr.mxu0 0.0
    %4582 = vmatpush1.msra.mxu0 0.0
    %4583 = vmatprep.subr.mxu0 0.0
    %4584 = vmatpush1.msra.mxu0 0.0
    %4585 = vmatprep.mubr.f32.mxu0 0.0
    %4586 = vmatmul.mubr.f32.gmra.mrb[0].mxu0 %v4001
    %v4587 = vpop.f32.mrb[0].mxu0
    %v4588 = vadd.f32 0.0, %v4587
    %v4589 = vpop.f32.mrb[0].mxu0
    %v4590 = vadd.f32 0.0, %v4589
    %4591 = vdwg.mxu0
    %v4592 = vadd.f32 %v4375, %v4517
    %v4593 = vadd.f32 %v4377, %v4519
    %v4594 = vadd.f32 %v4446, %v4588
    %v4595 = vadd.f32 %v4448, %v4590
    %v4596 = vadd.f32 %v4592, %v3399
    %v4597 = vadd.f32 %v4593, %v3403
    %v4598 = vadd.f32 %v4594, %v3407
    %v4599 = vadd.f32 %v4595, %v3411
    %v4600 = vtanh.pop %v4596
    %v4601 = vtanh.pop %v4597
    %v4602 = vtanh.pop %v4598
    %v4603 = vtanh.pop %v4599
    %v4604 = vadd.f32 %v4600, 1.0
    %v4605 = vmul.f32 %v4604, 0.5
    %v4606 = vadd.f32 %v4601, 1.0
    %v4607 = vmul.f32 %v4606, 0.5
    %v4608 = vadd.f32 %v4602, 1.0
    %v4609 = vmul.f32 %v4608, 0.5
    %v4610 = vmul.f32 %v4607, %v3999
    %v4611 = vmul.f32 %v4605, %v4603
    %v4612 = vadd.f32 %v4610, %v4611
    %v4613 = vtanh.pop %v4612
    %v4614 = vmul.f32 %v4609, %v4613
    %4615 = vmatprep.subr.mxu0 %v1685
    %4616 = vmatpush1.msra.mxu0 %v1684
    %4617 = vmatprep.subr.mxu0 %v1689
    %4618 = vmatpush1.msra.mxu0 %v1688
    %4619 = vmatprep.subr.mxu0 %v1693
    %4620 = vmatpush1.msra.mxu0 %v1692
    %4621 = vmatprep.subr.mxu0 %v1697
    %4622 = vmatpush1.msra.mxu0 %v1696
    %4623 = vmatprep.subr.mxu0 %v1701
    %4624 = vmatpush1.msra.mxu0 %v1700
    %4625 = vmatprep.subr.mxu0 %v1705
    %4626 = vmatpush1.msra.mxu0 %v1704
    %4627 = vmatprep.subr.mxu0 %v1709
    %4628 = vmatpush1.msra.mxu0 %v1708
    %4629 = vmatprep.subr.mxu0 %v1713
    %4630 = vmatpush1.msra.mxu0 %v1712
    %4631 = vmatprep.subr.mxu0 %v1717
    %4632 = vmatpush1.msra.mxu0 %v1716
    %4633 = vmatprep.subr.mxu0 %v1721
    %4634 = vmatpush1.msra.mxu0 %v1720
    %4635 = vmatprep.subr.mxu0 %v1725
    %4636 = vmatpush1.msra.mxu0 %v1724
    %4637 = vmatprep.subr.mxu0 %v1729
    %4638 = vmatpush1.msra.mxu0 %v1728
    %4639 = vmatprep.subr.mxu0 %v1733
    %4640 = vmatpush1.msra.mxu0 %v1732
    %4641 = vmatprep.subr.mxu0 %v1737
    %4642 = vmatpush1.msra.mxu0 %v1736
    %4643 = vmatprep.subr.mxu0 %v1741
    %4644 = vmatpush1.msra.mxu0 %v1740
    %4645 = vmatprep.subr.mxu0 %v1745
    %4646 = vmatpush1.msra.mxu0 %v1744
    %4647 = vmatprep.subr.mxu0 0.0
    %4648 = vmatpush1.msra.mxu0 0.0
    %4649 = vmatprep.subr.mxu0 0.0
    %4650 = vmatpush1.msra.mxu0 0.0
    %4651 = vmatprep.subr.mxu0 0.0
    %4652 = vmatpush1.msra.mxu0 0.0
    %4653 = vmatprep.subr.mxu0 0.0
    %4654 = vmatpush1.msra.mxu0 0.0
    %4655 = vmatprep.subr.mxu0 0.0
    %4656 = vmatpush1.msra.mxu0 0.0
    %4657 = vmatprep.subr.mxu0 0.0
    %4658 = vmatpush1.msra.mxu0 0.0
    %4659 = vmatprep.subr.mxu0 0.0
    %4660 = vmatpush1.msra.mxu0 0.0
    %4661 = vmatprep.subr.mxu0 0.0
    %4662 = vmatpush1.msra.mxu0 0.0
    %4663 = vmatprep.subr.mxu0 0.0
    %4664 = vmatpush1.msra.mxu0 0.0
    %4665 = vmatprep.subr.mxu0 0.0
    %4666 = vmatpush1.msra.mxu0 0.0
    %4667 = vmatprep.subr.mxu0 0.0
    %4668 = vmatpush1.msra.mxu0 0.0
    %4669 = vmatprep.subr.mxu0 0.0
    %4670 = vmatpush1.msra.mxu0 0.0
    %4671 = vmatprep.subr.mxu0 0.0
    %4672 = vmatpush1.msra.mxu0 0.0
    %4673 = vmatprep.subr.mxu0 0.0
    %4674 = vmatpush1.msra.mxu0 0.0
    %4675 = vmatprep.subr.mxu0 0.0
    %4676 = vmatpush1.msra.mxu0 0.0
    %4677 = vmatprep.subr.mxu0 0.0
    %4678 = vmatpush1.msra.mxu0 0.0
    %4679 = vmatprep.mubr.f32.mxu0 0.0
    %4680 = vmatmul.mubr.f32.gmra.mrb[0].mxu0 %v4614
    %v4681 = vpop.f32.mrb[0].mxu0
    %v4682 = vadd.f32 %v4233, %v4681
    %v4683 = vpop.f32.mrb[0].mxu0
    %v4684 = vadd.f32 %v4235, %v4683
    %4685 = vdwg.mxu0
    %4686 = vmatprep.subr.mxu0 %v1687
    %4687 = vmatpush1.msra.mxu0 %v1686
    %4688 = vmatprep.subr.mxu0 %v1691
    %4689 = vmatpush1.msra.mxu0 %v1690
    %4690 = vmatprep.subr.mxu0 %v1695
    %4691 = vmatpush1.msra.mxu0 %v1694
    %4692 = vmatprep.subr.mxu0 %v1699
    %4693 = vmatpush1.msra.mxu0 %v1698
    %4694 = vmatprep.subr.mxu0 %v1703
    %4695 = vmatpush1.msra.mxu0 %v1702
    %4696 = vmatprep.subr.mxu0 %v1707
    %4697 = vmatpush1.msra.mxu0 %v1706
    %4698 = vmatprep.subr.mxu0 %v1711
    %4699 = vmatpush1.msra.mxu0 %v1710
    %4700 = vmatprep.subr.mxu0 %v1715
    %4701 = vmatpush1.msra.mxu0 %v1714
    %4702 = vmatprep.subr.mxu0 %v1719
    %4703 = vmatpush1.msra.mxu0 %v1718
    %4704 = vmatprep.subr.mxu0 %v1723
    %4705 = vmatpush1.msra.mxu0 %v1722
    %4706 = vmatprep.subr.mxu0 %v1727
    %4707 = vmatpush1.msra.mxu0 %v1726
    %4708 = vmatprep.subr.mxu0 %v1731
    %4709 = vmatpush1.msra.mxu0 %v1730
    %4710 = vmatprep.subr.mxu0 %v1735
    %4711 = vmatpush1.msra.mxu0 %v1734
    %4712 = vmatprep.subr.mxu0 %v1739
    %4713 = vmatpush1.msra.mxu0 %v1738
    %4714 = vmatprep.subr.mxu0 %v1743
    %4715 = vmatpush1.msra.mxu0 %v1742
    %4716 = vmatprep.subr.mxu0 %v1747
    %4717 = vmatpush1.msra.mxu0 %v1746
    %4718 = vmatprep.subr.mxu0 0.0
    %4719 = vmatpush1.msra.mxu0 0.0
    %4720 = vmatprep.subr.mxu0 0.0
    %4721 = vmatpush1.msra.mxu0 0.0
    %4722 = vmatprep.subr.mxu0 0.0
    %4723 = vmatpush1.msra.mxu0 0.0
    %4724 = vmatprep.subr.mxu0 0.0
    %4725 = vmatpush1.msra.mxu0 0.0
    %4726 = vmatprep.subr.mxu0 0.0
    %4727 = vmatpush1.msra.mxu0 0.0
    %4728 = vmatprep.subr.mxu0 0.0
    %4729 = vmatpush1.msra.mxu0 0.0
    %4730 = vmatprep.subr.mxu0 0.0
    %4731 = vmatpush1.msra.mxu0 0.0
    %4732 = vmatprep.subr.mxu0 0.0
    %4733 = vmatpush1.msra.mxu0 0.0
    %4734 = vmatprep.subr.mxu0 0.0
    %4735 = vmatpush1.msra.mxu0 0.0
    %4736 = vmatprep.subr.mxu0 0.0
    %4737 = vmatpush1.msra.mxu0 0.0
    %4738 = vmatprep.subr.mxu0 0.0
    %4739 = vmatpush1.msra.mxu0 0.0
    %4740 = vmatprep.subr.mxu0 0.0
    %4741 = vmatpush1.msra.mxu0 0.0
    %4742 = vmatprep.subr.mxu0 0.0
    %4743 = vmatpush1.msra.mxu0 0.0
    %4744 = vmatprep.subr.mxu0 0.0
    %4745 = vmatpush1.msra.mxu0 0.0
    %4746 = vmatprep.subr.mxu0 0.0
    %4747 = vmatpush1.msra.mxu0 0.0
    %4748 = vmatprep.subr.mxu0 0.0
    %4749 = vmatpush1.msra.mxu0 0.0
    %4750 = vmatprep.mubr.f32.mxu0 0.0
    %4751 = vmatmul.mubr.f32.gmra.mrb[0].mxu0 %v4614
    %v4752 = vpop.f32.mrb[0].mxu0
    %v4753 = vadd.f32 %v4304, %v4752
    %v4754 = vpop.f32.mrb[0].mxu0
    %v4755 = vadd.f32 %v4306, %v4754
    %4756 = vdwg.mxu0
    %v4757 = vadd.f32 %v4682, %v125
    %v4758 = vadd.f32 %v4684, %v129
    %v4759 = vadd.f32 %v4753, %v133
    %v4760 = vadd.f32 %v4755, %v137
    %v4761 = vtanh.pop %v4757
    %v4762 = vtanh.pop %v4758
    %v4763 = vtanh.pop %v4759
    %v4764 = vtanh.pop %v4760
    %v4765 = vadd.f32 %v4761, 1.0
    %v4766 = vmul.f32 %v4765, 0.5
    %v4767 = vadd.f32 %v4762, 1.0
    %v4768 = vmul.f32 %v4767, 0.5
    %v4769 = vadd.f32 %v4763, 1.0
    %v4770 = vmul.f32 %v4769, 0.5
    %v4771 = vmul.f32 %v4768, %v4163
    %v4772 = vmul.f32 %v4766, %v4764
    %v4773 = vadd.f32 %v4771, %v4772
    %v4774 = vtanh.pop %v4773
    %v4775 = vmul.f32 %v4770, %v4774
    %4776 = vmatprep.subr.mxu0 %v3417
    %4777 = vmatpush1.msra.mxu0 %v3416
    %4778 = vmatprep.subr.mxu0 %v3425
    %4779 = vmatpush1.msra.mxu0 %v3424
    %4780 = vmatprep.subr.mxu0 %v3433
    %4781 = vmatpush1.msra.mxu0 %v3432
    %4782 = vmatprep.subr.mxu0 %v3441
    %4783 = vmatpush1.msra.mxu0 %v3440
    %4784 = vmatprep.subr.mxu0 %v3449
    %4785 = vmatpush1.msra.mxu0 %v3448
    %4786 = vmatprep.subr.mxu0 %v3457
    %4787 = vmatpush1.msra.mxu0 %v3456
    %4788 = vmatprep.subr.mxu0 %v3465
    %4789 = vmatpush1.msra.mxu0 %v3464
    %4790 = vmatprep.subr.mxu0 %v3473
    %4791 = vmatpush1.msra.mxu0 %v3472
    %4792 = vmatprep.subr.mxu0 %v3481
    %4793 = vmatpush1.msra.mxu0 %v3480
    %4794 = vmatprep.subr.mxu0 %v3489
    %4795 = vmatpush1.msra.mxu0 %v3488
    %4796 = vmatprep.subr.mxu0 %v3497
    %4797 = vmatpush1.msra.mxu0 %v3496
    %4798 = vmatprep.subr.mxu0 %v3505
    %4799 = vmatpush1.msra.mxu0 %v3504
    %4800 = vmatprep.subr.mxu0 %v3513
    %4801 = vmatpush1.msra.mxu0 %v3512
    %4802 = vmatprep.subr.mxu0 %v3521
    %4803 = vmatpush1.msra.mxu0 %v3520
    %4804 = vmatprep.subr.mxu0 %v3529
    %4805 = vmatpush1.msra.mxu0 %v3528
    %4806 = vmatprep.subr.mxu0 %v3537
    %4807 = vmatpush1.msra.mxu0 %v3536
    %4808 = vmatprep.subr.mxu0 0.0
    %4809 = vmatpush1.msra.mxu0 0.0
    %4810 = vmatprep.subr.mxu0 0.0
    %4811 = vmatpush1.msra.mxu0 0.0
    %4812 = vmatprep.subr.mxu0 0.0
    %4813 = vmatpush1.msra.mxu0 0.0
    %4814 = vmatprep.subr.mxu0 0.0
    %4815 = vmatpush1.msra.mxu0 0.0
    %4816 = vmatprep.subr.mxu0 0.0
    %4817 = vmatpush1.msra.mxu0 0.0
    %4818 = vmatprep.subr.mxu0 0.0
    %4819 = vmatpush1.msra.mxu0 0.0
    %4820 = vmatprep.subr.mxu0 0.0
    %4821 = vmatpush1.msra.mxu0 0.0
    %4822 = vmatprep.subr.mxu0 0.0
    %4823 = vmatpush1.msra.mxu0 0.0
    %4824 = vmatprep.subr.mxu0 0.0
    %4825 = vmatpush1.msra.mxu0 0.0
    %4826 = vmatprep.subr.mxu0 0.0
    %4827 = vmatpush1.msra.mxu0 0.0
    %4828 = vmatprep.subr.mxu0 0.0
    %4829 = vmatpush1.msra.mxu0 0.0
    %4830 = vmatprep.subr.mxu0 0.0
    %4831 = vmatpush1.msra.mxu0 0.0
    %4832 = vmatprep.subr.mxu0 0.0
    %4833 = vmatpush1.msra.mxu0 0.0
    %4834 = vmatprep.subr.mxu0 0.0
    %4835 = vmatpush1.msra.mxu0 0.0
    %4836 = vmatprep.subr.mxu0 0.0
    %4837 = vmatpush1.msra.mxu0 0.0
    %4838 = vmatprep.subr.mxu0 0.0
    %4839 = vmatpush1.msra.mxu0 0.0
    %4840 = vmatprep.mubr.f32.mxu0 0.0
    %4841 = vmatmul.mubr.f32.gmra.mrb[0].mxu0 %v4775
    %v4842 = vpop.f32.mrb[0].mxu0
    %v4843 = vadd.f32 0.0, %v4842
    %v4844 = vpop.f32.mrb[0].mxu0
    %v4845 = vadd.f32 0.0, %v4844
    %4846 = vdwg.mxu0
    %4847 = vmatprep.subr.mxu0 %v3419
    %4848 = vmatpush1.msra.mxu0 %v3418
    %4849 = vmatprep.subr.mxu0 %v3427
    %4850 = vmatpush1.msra.mxu0 %v3426
    %4851 = vmatprep.subr.mxu0 %v3435
    %4852 = vmatpush1.msra.mxu0 %v3434
    %4853 = vmatprep.subr.mxu0 %v3443
    %4854 = vmatpush1.msra.mxu0 %v3442
    %4855 = vmatprep.subr.mxu0 %v3451
    %4856 = vmatpush1.msra.mxu0 %v3450
    %4857 = vmatprep.subr.mxu0 %v3459
    %4858 = vmatpush1.msra.mxu0 %v3458
    %4859 = vmatprep.subr.mxu0 %v3467
    %4860 = vmatpush1.msra.mxu0 %v3466
    %4861 = vmatprep.subr.mxu0 %v3475
    %4862 = vmatpush1.msra.mxu0 %v3474
    %4863 = vmatprep.subr.mxu0 %v3483
    %4864 = vmatpush1.msra.mxu0 %v3482
    %4865 = vmatprep.subr.mxu0 %v3491
    %4866 = vmatpush1.msra.mxu0 %v3490
    %4867 = vmatprep.subr.mxu0 %v3499
    %4868 = vmatpush1.msra.mxu0 %v3498
    %4869 = vmatprep.subr.mxu0 %v3507
    %4870 = vmatpush1.msra.mxu0 %v3506
    %4871 = vmatprep.subr.mxu0 %v3515
    %4872 = vmatpush1.msra.mxu0 %v3514
    %4873 = vmatprep.subr.mxu0 %v3523
    %4874 = vmatpush1.msra.mxu0 %v3522
    %4875 = vmatprep.subr.mxu0 %v3531
    %4876 = vmatpush1.msra.mxu0 %v3530
    %4877 = vmatprep.subr.mxu0 %v3539
    %4878 = vmatpush1.msra.mxu0 %v3538
    %4879 = vmatprep.subr.mxu0 0.0
    %4880 = vmatpush1.msra.mxu0 0.0
    %4881 = vmatprep.subr.mxu0 0.0
    %4882 = vmatpush1.msra.mxu0 0.0
    %4883 = vmatprep.subr.mxu0 0.0
    %4884 = vmatpush1.msra.mxu0 0.0
    %4885 = vmatprep.subr.mxu0 0.0
    %4886 = vmatpush1.msra.mxu0 0.0
    %4887 = vmatprep.subr.mxu0 0.0
    %4888 = vmatpush1.msra.mxu0 0.0
    %4889 = vmatprep.subr.mxu0 0.0
    %4890 = vmatpush1.msra.mxu0 0.0
    %4891 = vmatprep.subr.mxu0 0.0
    %4892 = vmatpush1.msra.mxu0 0.0
    %4893 = vmatprep.subr.mxu0 0.0
    %4894 = vmatpush1.msra.mxu0 0.0
    %4895 = vmatprep.subr.mxu0 0.0
    %4896 = vmatpush1.msra.mxu0 0.0
    %4897 = vmatprep.subr.mxu0 0.0
    %4898 = vmatpush1.msra.mxu0 0.0
    %4899 = vmatprep.subr.mxu0 0.0
    %4900 = vmatpush1.msra.mxu0 0.0
    %4901 = vmatprep.subr.mxu0 0.0
    %4902 = vmatpush1.msra.mxu0 0.0
    %4903 = vmatprep.subr.mxu0 0.0
    %4904 = vmatpush1.msra.mxu0 0.0
    %4905 = vmatprep.subr.mxu0 0.0
    %4906 = vmatpush1.msra.mxu0 0.0
    %4907 = vmatprep.subr.mxu0 0.0
    %4908 = vmatpush1.msra.mxu0 0.0
    %4909 = vmatprep.subr.mxu0 0.0
    %4910 = vmatpush1.msra.mxu0 0.0
    %4911 = vmatprep.mubr.f32.mxu0 0.0
    %4912 = vmatmul.mubr.f32.gmra.mrb[0].mxu0 %v4775
    %v4913 = vpop.f32.mrb[0].mxu0
    %v4914 = vadd.f32 0.0, %v4913
    %v4915 = vpop.f32.mrb[0].mxu0
    %v4916 = vadd.f32 0.0, %v4915
    %4917 = vdwg.mxu0
    %4918 = vmatprep.subr.mxu0 %v3421
    %4919 = vmatpush1.msra.mxu0 %v3420
    %4920 = vmatprep.subr.mxu0 %v3429
    %4921 = vmatpush1.msra.mxu0 %v3428
    %4922 = vmatprep.subr.mxu0 %v3437
    %4923 = vmatpush1.msra.mxu0 %v3436
    %4924 = vmatprep.subr.mxu0 %v3445
    %4925 = vmatpush1.msra.mxu0 %v3444
    %4926 = vmatprep.subr.mxu0 %v3453
    %4927 = vmatpush1.msra.mxu0 %v3452
    %4928 = vmatprep.subr.mxu0 %v3461
    %4929 = vmatpush1.msra.mxu0 %v3460
    %4930 = vmatprep.subr.mxu0 %v3469
    %4931 = vmatpush1.msra.mxu0 %v3468
    %4932 = vmatprep.subr.mxu0 %v3477
    %4933 = vmatpush1.msra.mxu0 %v3476
    %4934 = vmatprep.subr.mxu0 %v3485
    %4935 = vmatpush1.msra.mxu0 %v3484
    %4936 = vmatprep.subr.mxu0 %v3493
    %4937 = vmatpush1.msra.mxu0 %v3492
    %4938 = vmatprep.subr.mxu0 %v3501
    %4939 = vmatpush1.msra.mxu0 %v3500
    %4940 = vmatprep.subr.mxu0 %v3509
    %4941 = vmatpush1.msra.mxu0 %v3508
    %4942 = vmatprep.subr.mxu0 %v3517
    %4943 = vmatpush1.msra.mxu0 %v3516
    %4944 = vmatprep.subr.mxu0 %v3525
    %4945 = vmatpush1.msra.mxu0 %v3524
    %4946 = vmatprep.subr.mxu0 %v3533
    %4947 = vmatpush1.msra.mxu0 %v3532
    %4948 = vmatprep.subr.mxu0 %v3541
    %4949 = vmatpush1.msra.mxu0 %v3540
    %4950 = vmatprep.subr.mxu0 0.0
    %4951 = vmatpush1.msra.mxu0 0.0
    %4952 = vmatprep.subr.mxu0 0.0
    %4953 = vmatpush1.msra.mxu0 0.0
    %4954 = vmatprep.subr.mxu0 0.0
    %4955 = vmatpush1.msra.mxu0 0.0
    %4956 = vmatprep.subr.mxu0 0.0
    %4957 = vmatpush1.msra.mxu0 0.0
    %4958 = vmatprep.subr.mxu0 0.0
    %4959 = vmatpush1.msra.mxu0 0.0
    %4960 = vmatprep.subr.mxu0 0.0
    %4961 = vmatpush1.msra.mxu0 0.0
    %4962 = vmatprep.subr.mxu0 0.0
    %4963 = vmatpush1.msra.mxu0 0.0
    %4964 = vmatprep.subr.mxu0 0.0
    %4965 = vmatpush1.msra.mxu0 0.0
    %4966 = vmatprep.subr.mxu0 0.0
    %4967 = vmatpush1.msra.mxu0 0.0
    %4968 = vmatprep.subr.mxu0 0.0
    %4969 = vmatpush1.msra.mxu0 0.0
    %4970 = vmatprep.subr.mxu0 0.0
    %4971 = vmatpush1.msra.mxu0 0.0
    %4972 = vmatprep.subr.mxu0 0.0
    %4973 = vmatpush1.msra.mxu0 0.0
    %4974 = vmatprep.subr.mxu0 0.0
    %4975 = vmatpush1.msra.mxu0 0.0
    %4976 = vmatprep.subr.mxu0 0.0
    %4977 = vmatpush1.msra.mxu0 0.0
    %4978 = vmatprep.subr.mxu0 0.0
    %4979 = vmatpush1.msra.mxu0 0.0
    %4980 = vmatprep.subr.mxu0 0.0
    %4981 = vmatpush1.msra.mxu0 0.0
    %4982 = vmatprep.mubr.f32.mxu0 0.0
    %4983 = vmatmul.mubr.f32.gmra.mrb[0].mxu0 %v4775
    %v4984 = vpop.f32.mrb[0].mxu0
    %v4985 = vadd.f32 0.0, %v4984
    %v4986 = vpop.f32.mrb[0].mxu0
    %v4987 = vadd.f32 0.0, %v4986
    %4988 = vdwg.mxu0
    %4989 = vmatprep.subr.mxu0 %v3423
    %4990 = vmatpush1.msra.mxu0 %v3422
    %4991 = vmatprep.subr.mxu0 %v3431
    %4992 = vmatpush1.msra.mxu0 %v3430
    %4993 = vmatprep.subr.mxu0 %v3439
    %4994 = vmatpush1.msra.mxu0 %v3438
    %4995 = vmatprep.subr.mxu0 %v3447
    %4996 = vmatpush1.msra.mxu0 %v3446
    %4997 = vmatprep.subr.mxu0 %v3455
    %4998 = vmatpush1.msra.mxu0 %v3454
    %4999 = vmatprep.subr.mxu0 %v3463
    %5000 = vmatpush1.msra.mxu0 %v3462
    %5001 = vmatprep.subr.mxu0 %v3471
    %5002 = vmatpush1.msra.mxu0 %v3470
    %5003 = vmatprep.subr.mxu0 %v3479
    %5004 = vmatpush1.msra.mxu0 %v3478
    %5005 = vmatprep.subr.mxu0 %v3487
    %5006 = vmatpush1.msra.mxu0 %v3486
    %5007 = vmatprep.subr.mxu0 %v3495
    %5008 = vmatpush1.msra.mxu0 %v3494
    %5009 = vmatprep.subr.mxu0 %v3503
    %5010 = vmatpush1.msra.mxu0 %v3502
    %5011 = vmatprep.subr.mxu0 %v3511
    %5012 = vmatpush1.msra.mxu0 %v3510
    %5013 = vmatprep.subr.mxu0 %v3519
    %5014 = vmatpush1.msra.mxu0 %v3518
    %5015 = vmatprep.subr.mxu0 %v3527
    %5016 = vmatpush1.msra.mxu0 %v3526
    %5017 = vmatprep.subr.mxu0 %v3535
    %5018 = vmatpush1.msra.mxu0 %v3534
    %5019 = vmatprep.subr.mxu0 %v3543
    %5020 = vmatpush1.msra.mxu0 %v3542
    %5021 = vmatprep.subr.mxu0 0.0
    %5022 = vmatpush1.msra.mxu0 0.0
    %5023 = vmatprep.subr.mxu0 0.0
    %5024 = vmatpush1.msra.mxu0 0.0
    %5025 = vmatprep.subr.mxu0 0.0
    %5026 = vmatpush1.msra.mxu0 0.0
    %5027 = vmatprep.subr.mxu0 0.0
    %5028 = vmatpush1.msra.mxu0 0.0
    %5029 = vmatprep.subr.mxu0 0.0
    %5030 = vmatpush1.msra.mxu0 0.0
    %5031 = vmatprep.subr.mxu0 0.0
    %5032 = vmatpush1.msra.mxu0 0.0
    %5033 = vmatprep.subr.mxu0 0.0
    %5034 = vmatpush1.msra.mxu0 0.0
    %5035 = vmatprep.subr.mxu0 0.0
    %5036 = vmatpush1.msra.mxu0 0.0
    %5037 = vmatprep.subr.mxu0 0.0
    %5038 = vmatpush1.msra.mxu0 0.0
    %5039 = vmatprep.subr.mxu0 0.0
    %5040 = vmatpush1.msra.mxu0 0.0
    %5041 = vmatprep.subr.mxu0 0.0
    %5042 = vmatpush1.msra.mxu0 0.0
    %5043 = vmatprep.subr.mxu0 0.0
    %5044 = vmatpush1.msra.mxu0 0.0
    %5045 = vmatprep.subr.mxu0 0.0
    %5046 = vmatpush1.msra.mxu0 0.0
    %5047 = vmatprep.subr.mxu0 0.0
    %5048 = vmatpush1.msra.mxu0 0.0
    %5049 = vmatprep.subr.mxu0 0.0
    %5050 = vmatpush1.msra.mxu0 0.0
    %5051 = vmatprep.subr.mxu0 0.0
    %5052 = vmatpush1.msra.mxu0 0.0
    %5053 = vmatprep.mubr.f32.mxu0 0.0
    %5054 = vmatmul.mubr.f32.gmra.mrb[0].mxu0 %v4775
    %v5055 = vpop.f32.mrb[0].mxu0
    %v5056 = vadd.f32 0.0, %v5055
    %v5057 = vpop.f32.mrb[0].mxu0
    %v5058 = vadd.f32 0.0, %v5057
    %5059 = vdwg.mxu0
    %5060 = vmatprep.subr.mxu0 %v184
    %5061 = vmatpush1.msra.mxu0 %v183
    %5062 = vmatprep.subr.mxu0 %v188
    %5063 = vmatpush1.msra.mxu0 %v187
    %5064 = vmatprep.subr.mxu0 %v192
    %5065 = vmatpush1.msra.mxu0 %v191
    %5066 = vmatprep.subr.mxu0 %v196
    %5067 = vmatpush1.msra.mxu0 %v195
    %5068 = vmatprep.subr.mxu0 %v200
    %5069 = vmatpush1.msra.mxu0 %v199
    %5070 = vmatprep.subr.mxu0 %v204
    %5071 = vmatpush1.msra.mxu0 %v203
    %5072 = vmatprep.subr.mxu0 %v208
    %5073 = vmatpush1.msra.mxu0 %v207
    %5074 = vmatprep.subr.mxu0 %v212
    %5075 = vmatpush1.msra.mxu0 %v211
    %5076 = vmatprep.subr.mxu0 %v216
    %5077 = vmatpush1.msra.mxu0 %v215
    %5078 = vmatprep.subr.mxu0 %v220
    %5079 = vmatpush1.msra.mxu0 %v219
    %5080 = vmatprep.subr.mxu0 %v224
    %5081 = vmatpush1.msra.mxu0 %v223
    %5082 = vmatprep.subr.mxu0 %v228
    %5083 = vmatpush1.msra.mxu0 %v227
    %5084 = vmatprep.subr.mxu0 %v232
    %5085 = vmatpush1.msra.mxu0 %v231
    %5086 = vmatprep.subr.mxu0 %v236
    %5087 = vmatpush1.msra.mxu0 %v235
    %5088 = vmatprep.subr.mxu0 %v240
    %5089 = vmatpush1.msra.mxu0 %v239
    %5090 = vmatprep.subr.mxu0 %v244
    %5091 = vmatpush1.msra.mxu0 %v243
    %5092 = vmatprep.subr.mxu0 0.0
    %5093 = vmatpush1.msra.mxu0 0.0
    %5094 = vmatprep.subr.mxu0 0.0
    %5095 = vmatpush1.msra.mxu0 0.0
    %5096 = vmatprep.subr.mxu0 0.0
    %5097 = vmatpush1.msra.mxu0 0.0
    %5098 = vmatprep.subr.mxu0 0.0
    %5099 = vmatpush1.msra.mxu0 0.0
    %5100 = vmatprep.subr.mxu0 0.0
    %5101 = vmatpush1.msra.mxu0 0.0
    %5102 = vmatprep.subr.mxu0 0.0
    %5103 = vmatpush1.msra.mxu0 0.0
    %5104 = vmatprep.subr.mxu0 0.0
    %5105 = vmatpush1.msra.mxu0 0.0
    %5106 = vmatprep.subr.mxu0 0.0
    %5107 = vmatpush1.msra.mxu0 0.0
    %5108 = vmatprep.subr.mxu0 0.0
    %5109 = vmatpush1.msra.mxu0 0.0
    %5110 = vmatprep.subr.mxu0 0.0
    %5111 = vmatpush1.msra.mxu0 0.0
    %5112 = vmatprep.subr.mxu0 0.0
    %5113 = vmatpush1.msra.mxu0 0.0
    %5114 = vmatprep.subr.mxu0 0.0
    %5115 = vmatpush1.msra.mxu0 0.0
    %5116 = vmatprep.subr.mxu0 0.0
    %5117 = vmatpush1.msra.mxu0 0.0
    %5118 = vmatprep.subr.mxu0 0.0
    %5119 = vmatpush1.msra.mxu0 0.0
    %5120 = vmatprep.subr.mxu0 0.0
    %5121 = vmatpush1.msra.mxu0 0.0
    %5122 = vmatprep.subr.mxu0 0.0
    %5123 = vmatpush1.msra.mxu0 0.0
    %5124 = vmatprep.mubr.f32.mxu0 0.0
    %5125 = vmatmul.mubr.f32.gmra.mrb[0].mxu0 %v4614
    %v5126 = vpop.f32.mrb[0].mxu0
    %v5127 = vadd.f32 0.0, %v5126
    %v5128 = vpop.f32.mrb[0].mxu0
    %v5129 = vadd.f32 0.0, %v5128
    %5130 = vdwg.mxu0
    %5131 = vmatprep.subr.mxu0 %v186
    %5132 = vmatpush1.msra.mxu0 %v185
    %5133 = vmatprep.subr.mxu0 %v190
    %5134 = vmatpush1.msra.mxu0 %v189
    %5135 = vmatprep.subr.mxu0 %v194
    %5136 = vmatpush1.msra.mxu0 %v193
    %5137 = vmatprep.subr.mxu0 %v198
    %5138 = vmatpush1.msra.mxu0 %v197
    %5139 = vmatprep.subr.mxu0 %v202
    %5140 = vmatpush1.msra.mxu0 %v201
    %5141 = vmatprep.subr.mxu0 %v206
    %5142 = vmatpush1.msra.mxu0 %v205
    %5143 = vmatprep.subr.mxu0 %v210
    %5144 = vmatpush1.msra.mxu0 %v209
    %5145 = vmatprep.subr.mxu0 %v214
    %5146 = vmatpush1.msra.mxu0 %v213
    %5147 = vmatprep.subr.mxu0 %v218
    %5148 = vmatpush1.msra.mxu0 %v217
    %5149 = vmatprep.subr.mxu0 %v222
    %5150 = vmatpush1.msra.mxu0 %v221
    %5151 = vmatprep.subr.mxu0 %v226
    %5152 = vmatpush1.msra.mxu0 %v225
    %5153 = vmatprep.subr.mxu0 %v230
    %5154 = vmatpush1.msra.mxu0 %v229
    %5155 = vmatprep.subr.mxu0 %v234
    %5156 = vmatpush1.msra.mxu0 %v233
    %5157 = vmatprep.subr.mxu0 %v238
    %5158 = vmatpush1.msra.mxu0 %v237
    %5159 = vmatprep.subr.mxu0 %v242
    %5160 = vmatpush1.msra.mxu0 %v241
    %5161 = vmatprep.subr.mxu0 %v246
    %5162 = vmatpush1.msra.mxu0 %v245
    %5163 = vmatprep.subr.mxu0 0.0
    %5164 = vmatpush1.msra.mxu0 0.0
    %5165 = vmatprep.subr.mxu0 0.0
    %5166 = vmatpush1.msra.mxu0 0.0
    %5167 = vmatprep.subr.mxu0 0.0
    %5168 = vmatpush1.msra.mxu0 0.0
    %5169 = vmatprep.subr.mxu0 0.0
    %5170 = vmatpush1.msra.mxu0 0.0
    %5171 = vmatprep.subr.mxu0 0.0
    %5172 = vmatpush1.msra.mxu0 0.0
    %5173 = vmatprep.subr.mxu0 0.0
    %5174 = vmatpush1.msra.mxu0 0.0
    %5175 = vmatprep.subr.mxu0 0.0
    %5176 = vmatpush1.msra.mxu0 0.0
    %5177 = vmatprep.subr.mxu0 0.0
    %5178 = vmatpush1.msra.mxu0 0.0
    %5179 = vmatprep.subr.mxu0 0.0
    %5180 = vmatpush1.msra.mxu0 0.0
    %5181 = vmatprep.subr.mxu0 0.0
    %5182 = vmatpush1.msra.mxu0 0.0
    %5183 = vmatprep.subr.mxu0 0.0
    %5184 = vmatpush1.msra.mxu0 0.0
    %5185 = vmatprep.subr.mxu0 0.0
    %5186 = vmatpush1.msra.mxu0 0.0
    %5187 = vmatprep.subr.mxu0 0.0
    %5188 = vmatpush1.msra.mxu0 0.0
    %5189 = vmatprep.subr.mxu0 0.0
    %5190 = vmatpush1.msra.mxu0 0.0
    %5191 = vmatprep.subr.mxu0 0.0
    %5192 = vmatpush1.msra.mxu0 0.0
    %5193 = vmatprep.subr.mxu0 0.0
    %5194 = vmatpush1.msra.mxu0 0.0
    %5195 = vmatprep.mubr.f32.mxu0 0.0
    %5196 = vmatmul.mubr.f32.gmra.mrb[0].mxu0 %v4614
    %v5197 = vpop.f32.mrb[0].mxu0
    %v5198 = vadd.f32 0.0, %v5197
    %v5199 = vpop.f32.mrb[0].mxu0
    %v5200 = vadd.f32 0.0, %v5199
    %5201 = vdwg.mxu0
    %v5202 = vadd.f32 %v4985, %v5127
    %v5203 = vadd.f32 %v4987, %v5129
    %v5204 = vadd.f32 %v5056, %v5198
    %v5205 = vadd.f32 %v5058, %v5200
    %v5206 = vadd.f32 %v5202, %v3399
    %v5207 = vadd.f32 %v5203, %v3403
    %v5208 = vadd.f32 %v5204, %v3407
    %v5209 = vadd.f32 %v5205, %v3411
    %v5210 = vtanh.pop %v5206
    %v5211 = vtanh.pop %v5207
    %v5212 = vtanh.pop %v5208
    %v5213 = vtanh.pop %v5209
    %v5214 = vadd.f32 %v5210, 1.0
    %v5215 = vmul.f32 %v5214, 0.5
    %v5216 = vadd.f32 %v5211, 1.0
    %v5217 = vmul.f32 %v5216, 0.5
    %v5218 = vadd.f32 %v5212, 1.0
    %v5219 = vmul.f32 %v5218, 0.5
    %v5220 = vmul.f32 %v5217, %v4612
    %v5221 = vmul.f32 %v5215, %v5213
    %v5222 = vadd.f32 %v5220, %v5221
    %v5223 = vtanh.pop %v5222
    %v5224 = vmul.f32 %v5219, %v5223
    %5225 = vmatprep.subr.mxu0 %v1685
    %5226 = vmatpush1.msra.mxu0 %v1684
    %5227 = vmatprep.subr.mxu0 %v1689
    %5228 = vmatpush1.msra.mxu0 %v1688
    %5229 = vmatprep.subr.mxu0 %v1693
    %5230 = vmatpush1.msra.mxu0 %v1692
    %5231 = vmatprep.subr.mxu0 %v1697
    %5232 = vmatpush1.msra.mxu0 %v1696
    %5233 = vmatprep.subr.mxu0 %v1701
    %5234 = vmatpush1.msra.mxu0 %v1700
    %5235 = vmatprep.subr.mxu0 %v1705
    %5236 = vmatpush1.msra.mxu0 %v1704
    %5237 = vmatprep.subr.mxu0 %v1709
    %5238 = vmatpush1.msra.mxu0 %v1708
    %5239 = vmatprep.subr.mxu0 %v1713
    %5240 = vmatpush1.msra.mxu0 %v1712
    %5241 = vmatprep.subr.mxu0 %v1717
    %5242 = vmatpush1.msra.mxu0 %v1716
    %5243 = vmatprep.subr.mxu0 %v1721
    %5244 = vmatpush1.msra.mxu0 %v1720
    %5245 = vmatprep.subr.mxu0 %v1725
    %5246 = vmatpush1.msra.mxu0 %v1724
    %5247 = vmatprep.subr.mxu0 %v1729
    %5248 = vmatpush1.msra.mxu0 %v1728
    %5249 = vmatprep.subr.mxu0 %v1733
    %5250 = vmatpush1.msra.mxu0 %v1732
    %5251 = vmatprep.subr.mxu0 %v1737
    %5252 = vmatpush1.msra.mxu0 %v1736
    %5253 = vmatprep.subr.mxu0 %v1741
    %5254 = vmatpush1.msra.mxu0 %v1740
    %5255 = vmatprep.subr.mxu0 %v1745
    %5256 = vmatpush1.msra.mxu0 %v1744
    %5257 = vmatprep.subr.mxu0 0.0
    %5258 = vmatpush1.msra.mxu0 0.0
    %5259 = vmatprep.subr.mxu0 0.0
    %5260 = vmatpush1.msra.mxu0 0.0
    %5261 = vmatprep.subr.mxu0 0.0
    %5262 = vmatpush1.msra.mxu0 0.0
    %5263 = vmatprep.subr.mxu0 0.0
    %5264 = vmatpush1.msra.mxu0 0.0
    %5265 = vmatprep.subr.mxu0 0.0
    %5266 = vmatpush1.msra.mxu0 0.0
    %5267 = vmatprep.subr.mxu0 0.0
    %5268 = vmatpush1.msra.mxu0 0.0
    %5269 = vmatprep.subr.mxu0 0.0
    %5270 = vmatpush1.msra.mxu0 0.0
    %5271 = vmatprep.subr.mxu0 0.0
    %5272 = vmatpush1.msra.mxu0 0.0
    %5273 = vmatprep.subr.mxu0 0.0
    %5274 = vmatpush1.msra.mxu0 0.0
    %5275 = vmatprep.subr.mxu0 0.0
    %5276 = vmatpush1.msra.mxu0 0.0
    %5277 = vmatprep.subr.mxu0 0.0
    %5278 = vmatpush1.msra.mxu0 0.0
    %5279 = vmatprep.subr.mxu0 0.0
    %5280 = vmatpush1.msra.mxu0 0.0
    %5281 = vmatprep.subr.mxu0 0.0
    %5282 = vmatpush1.msra.mxu0 0.0
    %5283 = vmatprep.subr.mxu0 0.0
    %5284 = vmatpush1.msra.mxu0 0.0
    %5285 = vmatprep.subr.mxu0 0.0
    %5286 = vmatpush1.msra.mxu0 0.0
    %5287 = vmatprep.subr.mxu0 0.0
    %5288 = vmatpush1.msra.mxu0 0.0
    %5289 = vmatprep.mubr.f32.mxu0 0.0
    %5290 = vmatmul.mubr.f32.gmra.mrb[0].mxu0 %v5224
    %v5291 = vpop.f32.mrb[0].mxu0
    %v5292 = vadd.f32 %v4843, %v5291
    %v5293 = vpop.f32.mrb[0].mxu0
    %v5294 = vadd.f32 %v4845, %v5293
    %5295 = vdwg.mxu0
    %5296 = vmatprep.subr.mxu0 %v1687
    %5297 = vmatpush1.msra.mxu0 %v1686
    %5298 = vmatprep.subr.mxu0 %v1691
    %5299 = vmatpush1.msra.mxu0 %v1690
    %5300 = vmatprep.subr.mxu0 %v1695
    %5301 = vmatpush1.msra.mxu0 %v1694
    %5302 = vmatprep.subr.mxu0 %v1699
    %5303 = vmatpush1.msra.mxu0 %v1698
    %5304 = vmatprep.subr.mxu0 %v1703
    %5305 = vmatpush1.msra.mxu0 %v1702
    %5306 = vmatprep.subr.mxu0 %v1707
    %5307 = vmatpush1.msra.mxu0 %v1706
    %5308 = vmatprep.subr.mxu0 %v1711
    %5309 = vmatpush1.msra.mxu0 %v1710
    %5310 = vmatprep.subr.mxu0 %v1715
    %5311 = vmatpush1.msra.mxu0 %v1714
    %5312 = vmatprep.subr.mxu0 %v1719
    %5313 = vmatpush1.msra.mxu0 %v1718
    %5314 = vmatprep.subr.mxu0 %v1723
    %5315 = vmatpush1.msra.mxu0 %v1722
    %5316 = vmatprep.subr.mxu0 %v1727
    %5317 = vmatpush1.msra.mxu0 %v1726
    %5318 = vmatprep.subr.mxu0 %v1731
    %5319 = vmatpush1.msra.mxu0 %v1730
    %5320 = vmatprep.subr.mxu0 %v1735
    %5321 = vmatpush1.msra.mxu0 %v1734
    %5322 = vmatprep.subr.mxu0 %v1739
    %5323 = vmatpush1.msra.mxu0 %v1738
    %5324 = vmatprep.subr.mxu0 %v1743
    %5325 = vmatpush1.msra.mxu0 %v1742
    %5326 = vmatprep.subr.mxu0 %v1747
    %5327 = vmatpush1.msra.mxu0 %v1746
    %5328 = vmatprep.subr.mxu0 0.0
    %5329 = vmatpush1.msra.mxu0 0.0
    %5330 = vmatprep.subr.mxu0 0.0
    %5331 = vmatpush1.msra.mxu0 0.0
    %5332 = vmatprep.subr.mxu0 0.0
    %5333 = vmatpush1.msra.mxu0 0.0
    %5334 = vmatprep.subr.mxu0 0.0
    %5335 = vmatpush1.msra.mxu0 0.0
    %5336 = vmatprep.subr.mxu0 0.0
    %5337 = vmatpush1.msra.mxu0 0.0
    %5338 = vmatprep.subr.mxu0 0.0
    %5339 = vmatpush1.msra.mxu0 0.0
    %5340 = vmatprep.subr.mxu0 0.0
    %5341 = vmatpush1.msra.mxu0 0.0
    %5342 = vmatprep.subr.mxu0 0.0
    %5343 = vmatpush1.msra.mxu0 0.0
    %5344 = vmatprep.subr.mxu0 0.0
    %5345 = vmatpush1.msra.mxu0 0.0
    %5346 = vmatprep.subr.mxu0 0.0
    %5347 = vmatpush1.msra.mxu0 0.0
    %5348 = vmatprep.subr.mxu0 0.0
    %5349 = vmatpush1.msra.mxu0 0.0
    %5350 = vmatprep.subr.mxu0 0.0
    %5351 = vmatpush1.msra.mxu0 0.0
    %5352 = vmatprep.subr.mxu0 0.0
    %5353 = vmatpush1.msra.mxu0 0.0
    %5354 = vmatprep.subr.mxu0 0.0
    %5355 = vmatpush1.msra.mxu0 0.0
    %5356 = vmatprep.subr.mxu0 0.0
    %5357 = vmatpush1.msra.mxu0 0.0
    %5358 = vmatprep.subr.mxu0 0.0
    %5359 = vmatpush1.msra.mxu0 0.0
    %5360 = vmatprep.mubr.f32.mxu0 0.0
    %5361 = vmatmul.mubr.f32.gmra.mrb[0].mxu0 %v5224
    %v5362 = vpop.f32.mrb[0].mxu0
    %v5363 = vadd.f32 %v4914, %v5362
    %v5364 = vpop.f32.mrb[0].mxu0
    %v5365 = vadd.f32 %v4916, %v5364
    %5366 = vdwg.mxu0
    %v5367 = vadd.f32 %v5292, %v125
    %v5368 = vadd.f32 %v5294, %v129
    %v5369 = vadd.f32 %v5363, %v133
    %v5370 = vadd.f32 %v5365, %v137
    %v5371 = vtanh.pop %v5367
    %v5372 = vtanh.pop %v5368
    %v5373 = vtanh.pop %v5369
    %v5374 = vtanh.pop %v5370
    %v5375 = vadd.f32 %v5371, 1.0
    %v5376 = vmul.f32 %v5375, 0.5
    %v5377 = vadd.f32 %v5372, 1.0
    %v5378 = vmul.f32 %v5377, 0.5
    %v5379 = vadd.f32 %v5373, 1.0
    %v5380 = vmul.f32 %v5379, 0.5
    %v5381 = vmul.f32 %v5378, %v4773
    %v5382 = vmul.f32 %v5376, %v5374
    %v5383 = vadd.f32 %v5381, %v5382
    %v5384 = vtanh.pop %v5383
    %v5385 = vmul.f32 %v5380, %v5384
    %v5387 = vrot.slane %v4775, 6
    %v5390 = vrot.slane %v5385, 4
    %v5392 = vsel %vm1675, %v2130, %v2310
    %v5393 = vsel %vm1677, %v5392, %v2493
    %v5394 = vsel %vm1679, %v5393, %v2676
    %v5395 = vsel %vm1675, %v2847, %v3027
    %v5396 = vsel %vm1677, %v5395, %v3210
    %v5397 = vsel %vm1679, %v5396, %v3393
    %v5398 = vsel %vm1675, %v4165, %v5387
    %v5399 = vsel %vm1677, %v5398, %v5390
    %v5401 = vlaneseq
    %v5402 = vshrl.u32 %v5401, 7
    %v5403 = vsub.s32 0, %v5402
    %v5404 = vrot.slane %v96, %v5403
    %v5406 = vmul.f32 %v5394, %v5404
    %v5407 = vmul.f32 %v5397, %v5404
    %v5408 = vmul.f32 %v5399, %v5404
    %5409 = vadd.xlane.f32.xlu0 %v5406
    %v5410 = vpop.xlane.xlu0 %5409
    %5411 = vadd.xlane.f32.xlu0 %v5407
    %v5412 = vpop.xlane.xlu0 %5411
    %v5413 = vsel %vm1679, %v5408, 0.0
    %5414 = vadd.xlane.f32.xlu0 %v5413
    %v5415 = vpop.xlane.xlu0 %5414
    %v5417 = vlaneseq
    %v5418 = vshrl.u32 %v5417, 7
    %v5419 = vsub.s32 0, %v5418
    %v5420 = vrot.slane %v97, %v5419
    %v5422 = vadd.f32 %v5410, %v5420
    %v5423 = vadd.f32 %v5412, %v5420
    %v5424 = vadd.f32 %v5415, %v5420
    %vm5425 = vcmask 7168
    %5426 = vst.msk [vmem:[%s11] sm:$0xff] %vm5425, %v5422
    %5427 = vst.msk [vmem:[%s11 + $0x8] sm:$0xff] %vm5425, %v5423
    %vm5428 = vcmask 5120
    %5429 = vst.msk [vmem:[%s11 + $0x10] sm:$0x3f] %vm5428, %v5424
    // Predicated region
    $region62: #{lstm_trainer_forward.1} parent=1 // pred_check
      _
    $region63: #{lstm_trainer_forward.1} parent=1 // pred_check_branch
      %5431 = sbr.rel (0) target = $region65
    $region64: #{lstm_trainer_forward.1} parent=1 // pred_region
      _
    $region65: #{lstm_trainer_forward.1} parent=1 // pred_fallthru
      _
    // Predicated region
    $region66: #{lstm_trainer_forward.1} parent=1 // pred_check
      _
    $region67: #{lstm_trainer_forward.1} parent=1 // pred_check_branch
      %5433 = sbr.rel (0) target = $region69
    $region68: #{lstm_trainer_forward.1} parent=1 // pred_region
      _
    $region69: #{lstm_trainer_forward.1} parent=1 // pred_fallthru
      _
    %5434 = vsyncpa [#allocation4], 1
    %5435 = vsyncpa [#allocation6], 1
    %5436 = vsyncpa [#allocation9], 1

</llo_original>
